<compile_context>
chip_gen: v7x
topology: tpu7x:2x2x1
jax: 0.10.0
libtpu: 0.0.40
codegen_flags: <defaults>
</compile_context>

<pallas_src>
import functools
import math

import jax
import jax.numpy as jnp
from jax.experimental import pallas as pl
from jax.experimental.pallas import tpu as pltpu

F_OUT = 29 * 3  # 87 pose features


def _align8(n):
    return -(-n // 8) * 8


# ------------------------------------------------------------------ helpers

def _gates(g, c_prev, H):
    """LSTM gate math with [i|f|o|g]-packed pre-activations g: (B, 4H)."""
    sig = jax.nn.sigmoid(g[:, :3 * H])          # one EUP pass over 3H lanes
    i = sig[:, 0:H]
    f = sig[:, H:2 * H]
    o = sig[:, 2 * H:3 * H]
    cand = jnp.tanh(g[:, 3 * H:4 * H])          # one tanh over H lanes
    c = f * c_prev + i * cand
    h = o * jnp.tanh(c)
    return h, c


def make_layout(F, D, L, U):
    """Static row/col offsets for the two packed weight slabs (host + kernel)."""
    lay = {}
    r = 0
    for name, nrows in (('enc_lin_w', F), ('enc_wih1', D), ('w_qkv', D),
                        ('wo', D), ('enc_head_w', D), ('dec_lin_w', L),
                        ('dec_wih1', U), ('biases', 9)):
        lay[name] = r
        r += _align8(nrows)
    lay['narrow_rows'] = r
    lay['narrow_cols'] = max(4 * D, 4 * U, 3 * D, 2 * L, D, U)
    r = 0
    for name, nrows in (('enc_block', 2 * D), ('dec_block', 2 * U)):
        lay[name] = r
        r += _align8(nrows)
    lay['wide_rows'] = r
    lay['wide_cols'] = max(8 * D, 8 * U)
    return lay


# ------------------------------------------------------------------ fused kernel

def _vae_fused_kernel(
        x_ref, pe_ref, eps_ref, nw_ref, wd_ref, conv_hbm,   # inputs
        out_ref,                                            # output slab
        conv_buf, conv_sem,                                 # scratch
        *, n_head, F, D, L, U, S, out_pad, lay):
    B = x_ref.shape[0]
    S_enc = x_ref.shape[1]
    hd = D // n_head
    out_cols = F * S

    # ---- kick off the conv-slab DMA; it completes behind encoder compute.
    conv_cp = pltpu.make_async_copy(conv_hbm, conv_buf, conv_sem.at[0])
    conv_cp.start()

    def wslice(name, nrows, ncols, ref):
        r0 = lay[name]
        return ref[r0:r0 + nrows, 0:ncols]

    def bias(k, ncols):
        r0 = lay['biases'] + k
        return nw_ref[r0:r0 + 1, 0:ncols]

    # -------- encoder: input linear + (batch-indexed) positional encoding quirk
    x = x_ref[...]                                                  # (B, S_enc, 87)
    h = jnp.einsum('bsf,fd->bsd', x, wslice('enc_lin_w', F, D, nw_ref),
                   preferred_element_type=jnp.float32) + bias(0, D)
    h = h + pe_ref[...][:, None, :]            # pe row chosen by BATCH index (torch quirk)

    # -------- multi-head self-attention: fused QKV matmul + one batched softmax
    qkv = jnp.einsum('bsd,de->bse', h, wslice('w_qkv', D, 3 * D, nw_ref),
                     preferred_element_type=jnp.float32) + bias(1, 3 * D)   # (B,S,3D)
    scale = 1.0 / math.sqrt(hd)
    q_all = jnp.concatenate([qkv[:, :, i * hd:(i + 1) * hd]
                             for i in range(n_head)], axis=0)               # (HB,S,hd)
    k_all = jnp.concatenate([qkv[:, :, D + i * hd:D + (i + 1) * hd]
                             for i in range(n_head)], axis=0)
    v_all = jnp.concatenate([qkv[:, :, 2 * D + i * hd:2 * D + (i + 1) * hd]
                             for i in range(n_head)], axis=0)
    s = jnp.einsum('bqd,bkd->bqk', q_all * scale, k_all,
                   preferred_element_type=jnp.float32)                      # (HB,S,S)
    s = s - jnp.max(s, axis=-1, keepdims=True)
    p = jnp.exp(s)
    p = p * pl.reciprocal(jnp.sum(p, axis=-1, keepdims=True), approx=True)
    o_all = jnp.einsum('bqk,bkd->bqd', p, v_all,
                       preferred_element_type=jnp.float32)                  # (HB,S,hd)
    o_cat = jnp.concatenate([o_all[i * B:(i + 1) * B] for i in range(n_head)],
                            axis=-1)                                        # (B,S,D)
    attn = jnp.einsum('bsd,de->bse', o_cat, wslice('wo', D, D, nw_ref),
                      preferred_element_type=jnp.float32) + bias(2, D)

    # -------- encoder 2-layer LSTM, wavefront form:
    #   ONE (B,2D)@(2D,8D) matmul per wave instead of 3 dependent (B,D)@(D,4D).
    xproj1 = jnp.einsum('bsd,dh->bsh', attn, wslice('enc_wih1', D, 4 * D, nw_ref),
                        preferred_element_type=jnp.float32) + bias(3, 4 * D)  # (B,S,4D)
    e_block = wslice('enc_block', 2 * D, 8 * D, wd_ref)
    e_b2 = bias(4, 4 * D)

    zeros_bd = jnp.zeros((B, D), jnp.float32)
    h1, c1 = _gates(xproj1[:, 0, :], zeros_bd, D)      # wave 0: layer-1 step 0
    h2 = c2 = zeros_bd
    for w in range(1, S_enc + 1):                      # waves 1..S, fully unrolled
        lhs = jnp.concatenate([h1, h2], axis=-1)       # [h1_{w-1} | h2_{w-2}]
        g = jnp.dot(lhs, e_block, preferred_element_type=jnp.float32)   # (B,8D)
        h2, c2 = _gates(g[:, 4 * D:] + e_b2, c2, D)    # layer-2, time w-1
        if w < S_enc:
            h1, c1 = _gates(g[:, :4 * D] + xproj1[:, w, :], c1, D)      # layer-1, time w

    # -------- z mean / log_var + reparameterization (eps supplied by caller)
    zstats = (jnp.dot(h2, wslice('enc_head_w', D, 2 * L, nw_ref),
                      preferred_element_type=jnp.float32) + bias(5, 2 * L))  # (B,2L)
    z_mean = zstats[:, :L]
    z_log_var = zstats[:, L:2 * L]
    z = z_mean + jnp.exp(0.5 * z_log_var) * eps_ref[...]

    # -------- decoder linear + ReLU (repeat-vector => constant per step), hoisted x-proj
    xlin = jnp.maximum(
        jnp.dot(z, wslice('dec_lin_w', L, U, nw_ref),
                preferred_element_type=jnp.float32) + bias(6, U), 0.0)       # (B,U)
    xin1 = jnp.dot(xlin, wslice('dec_wih1', U, 4 * U, nw_ref),
                   preferred_element_type=jnp.float32) + bias(7, 4 * U)      # (B,4U)
    d_block = wslice('dec_block', 2 * U, 8 * U, wd_ref)
    d_b2 = bias(8, 4 * U)

    # conv slab is first needed in wave 1 -> wait as late as possible
    conv_cp.wait()

    # -------- decoder 2-layer LSTM (wavefront) with per-step conv accumulation
    zeros_bu = jnp.zeros((B, U), jnp.float32)
    acc = jnp.zeros((B, out_pad), jnp.float32)
    h1, c1 = _gates(xin1, zeros_bu, U)                 # wave 0: layer-1 step 0
    h2 = c2 = zeros_bu
    for w in range(1, S + 1):
        lhs = jnp.concatenate([h1, h2], axis=-1)       # [h1_{w-1} | h2_{w-2}]
        g = jnp.dot(lhs, d_block, preferred_element_type=jnp.float32)   # (B,8U)
        h2, c2 = _gates(g[:, 4 * U:] + d_b2, c2, U)    # layer-2, time w-1
        # conv-head partial for step w-1: independent of the recurrence,
        # fills MXU bubbles while the next wave's block matmul drains.
        acc = acc + jnp.dot(h2, conv_buf[(w - 1) * U:w * U, :],
                            preferred_element_type=jnp.float32)
        if w < S:
            h1, c1 = _gates(g[:, :4 * U] + xin1, c1, U)                 # layer-1, time w

    # -------- single lane-dense output slab: [recon | z_mean,z_log_var | pad]
    conv_bias = conv_buf[S * U:S * U + 1, :]           # (1, out_pad); 0 past out_cols
    recon = (acc + conv_bias)[:, :out_cols]
    pieces = [recon, zstats]
    tail = out_pad - out_cols - 2 * L
    if tail > 0:
        pieces.append(jnp.zeros((B, tail), jnp.float32))
    out_ref[...] = jnp.concatenate(pieces, axis=-1)


# ------------------------------------------------------------------ wrapper

def vae_forward(x, eps, kp, *, n_head, d_model, latent_dim, n_units, seq_len):
    """x: (B, S, 29, 3); eps: (B, L). Returns (recon (B,S,87), z_mean, z_log_var)."""
    B, S_in = x.shape[0], x.shape[1]
    F, D, L, U = F_OUT, d_model, latent_dim, n_units
    out_cols = F * seq_len
    out_pad = -(-(out_cols + 2 * L) // 128) * 128
    lay = make_layout(F, D, L, U)
    x_flat = x.reshape(B, S_in, F)

    vmem = pl.BlockSpec(memory_space=pltpu.MemorySpace.VMEM)
    slab = pl.pallas_call(
        functools.partial(_vae_fused_kernel, n_head=n_head, F=F, D=D, L=L,
                          U=U, S=seq_len, out_pad=out_pad, lay=lay),
        out_shape=jax.ShapeDtypeStruct((B, out_pad), jnp.float32),
        in_specs=[vmem, vmem, vmem, vmem, vmem,
                  pl.BlockSpec(memory_space=pl.ANY)],   # conv slab: manual async DMA
        out_specs=vmem,
        scratch_shapes=[pltpu.VMEM(kp['conv_slab'].shape, jnp.float32),
                        pltpu.SemaphoreType.DMA((1,))],
        compiler_params=pltpu.CompilerParams(vmem_limit_bytes=8 * 1024 * 1024),
    )(x_flat, kp['pe_b'], eps, kp['narrow'], kp['wide'], kp['conv_slab'])

    # out_flat[b, s*87 + f] already matches torch's final reshape semantics;
    # these slices/reshape are pure metadata ops in the wrapper.
    out = slab[:, :out_cols].reshape(B, seq_len, F)
    z_mean = slab[:, out_cols:out_cols + L]
    z_log_var = slab[:, out_cols + L:out_cols + 2 * L]
    return out, z_mean, z_log_var


# ------------------------------------------------------------------ parameter prep

def positional_encoding(n_rows, d_model):
    position = jnp.arange(n_rows, dtype=jnp.float32)[:, None]
    div_term = jnp.exp(jnp.arange(0, d_model, 2, dtype=jnp.float32)
                       * (-math.log(10000.0) / d_model))
    pe = jnp.zeros((n_rows, d_model), jnp.float32)
    pe = pe.at[:, 0::2].set(jnp.sin(position * div_term))
    pe = pe.at[:, 1::2].set(jnp.cos(position * div_term))
    return pe


def _repack_gates(w, H):
    """torch gate order [i|f|g|o] (last dim 4H) -> kernel order [i|f|o|g]."""
    return jnp.concatenate([w[..., 0:2 * H], w[..., 3 * H:4 * H],
                            w[..., 2 * H:3 * H]], axis=-1)


def build_conv_matrix(conv_w, conv_b, S):
    """Fold reshape(B,S,U)->(B,U,S), Conv1d(k=3,pad=1), reshape(B,O,S)->(B,S,O)
    (all raw row-major reshapes, exactly as in the torch module) into one
    (S*U, O*S) matrix M and a flat bias so that
      out_flat[b, s*O + f] = g_flat[b, :] @ M[:, s*O + f] + bias_flat[s*O + f]
    with g_flat the row-major (S, U) flattening of the decoder LSTM output."""
    O, U, K = conv_w.shape                      # torch Conv1d weight layout (O, U, 3)
    j = jnp.arange(S * U)                       # g_flat index: c = j//S, t0 = j%S (NCW)
    m = jnp.arange(O * S)                       # conv NCW output flat: o = m//S, t = m%S
    c_j = j // S
    t_j = j % S
    o_m = m // S
    t_m = m % S
    M = jnp.zeros((S * U, O * S), jnp.float32)
    for k in range(K):
        match = (t_j[:, None] == (t_m[None, :] + (k - 1)))
        wk = conv_w[:, :, k]                    # (O, U)
        wmat = wk[o_m[None, :], c_j[:, None]]   # (S*U, O*S): W[o(m), c(j), k]
        M = M + jnp.where(match, wmat, 0.0)
    bias_flat = conv_b[o_m][None, :]            # (1, O*S)
    return M, bias_flat


def prepare_kernel_params(p, batch, seq_len):
    """Pack torch-layout params into 3 kernel-ready slabs + the per-batch PE rows."""
    F, D = p['enc_lin_w'].shape
    L, U = p['dec_lin_w'].shape
    lay = make_layout(F, D, L, U)

    # LSTM gate repack ([i|f|g|o] -> [i|f|o|g]) + b_ih/b_hh fold
    e_wih1 = _repack_gates(p['enc_wih1'], D)
    e_whh1 = _repack_gates(p['enc_whh1'], D)
    e_b1 = _repack_gates(p['enc_bih1'] + p['enc_bhh1'], D)
    e_wih2 = _repack_gates(p['enc_wih2'], D)
    e_whh2 = _repack_gates(p['enc_whh2'], D)
    e_b2 = _repack_gates(p['enc_bih2'] + p['enc_bhh2'], D)
    d_wih1 = _repack_gates(p['dec_wih1'], U)
    d_whh1 = _repack_gates(p['dec_whh1'], U)
    d_b1 = _repack_gates(p['dec_bih1'] + p['dec_bhh1'], U)
    d_wih2 = _repack_gates(p['dec_wih2'], U)
    d_whh2 = _repack_gates(p['dec_whh2'], U)
    d_b2 = _repack_gates(p['dec_bih2'] + p['dec_bhh2'], U)

    # wavefront block matrices: [h1_{w-1} | h2_{w-2}] @ [[Whh1, Wih2], [0, Whh2]]
    enc_block = jnp.concatenate(
        [jnp.concatenate([e_whh1, e_wih2], axis=1),
         jnp.concatenate([jnp.zeros((D, 4 * D), jnp.float32), e_whh2], axis=1)],
        axis=0)
    dec_block = jnp.concatenate(
        [jnp.concatenate([d_whh1, d_wih2], axis=1),
         jnp.concatenate([jnp.zeros((U, 4 * U), jnp.float32), d_whh2], axis=1)],
        axis=0)

    w_qkv = jnp.concatenate([p['wq'], p['wk'], p['wv']], axis=1)   # (D, 3D)
    b_qkv = jnp.concatenate([p['bq'], p['bk'], p['bv']], axis=1)   # (1, 3D)
    head_w = jnp.concatenate([p['enc_mean_w'], p['enc_lv_w']], axis=1)
    head_b = jnp.concatenate([p['enc_mean_b'], p['enc_lv_b']], axis=1)

    # narrow slab: everything that is <=128 lanes wide, row-stacked (8-aligned)
    narrow = jnp.zeros((lay['narrow_rows'], lay['narrow_cols']), jnp.float32)
    for name, arr in (('enc_lin_w', p['enc_lin_w']), ('enc_wih1', e_wih1),
                      ('w_qkv', w_qkv), ('wo', p['wo']), ('enc_head_w', head_w),
                      ('dec_lin_w', p['dec_lin_w']), ('dec_wih1', d_wih1)):
        r0 = lay[name]
        narrow = narrow.at[r0:r0 + arr.shape[0], :arr.shape[1]].set(arr)
    rb = lay['biases']
    for k, b in enumerate((p['enc_lin_b'], b_qkv, p['bo'], e_b1, e_b2, head_b,
                           p['dec_lin_b'], d_b1, d_b2)):
        narrow = narrow.at[rb + k:rb + k + 1, :b.shape[1]].set(b)

    # wide slab: the two wavefront block matrices
    wide = jnp.zeros((lay['wide_rows'], lay['wide_cols']), jnp.float32)
    wide = wide.at[lay['enc_block']:lay['enc_block'] + 2 * D, :8 * D].set(enc_block)
    wide = wide.at[lay['dec_block']:lay['dec_block'] + 2 * U, :8 * U].set(dec_block)

    # conv slab: folded conv matrix padded to a lane-dense (…, out_pad) width,
    # plus the conv bias as one extra (8-aligned) row at S*U.
    conv_m, conv_bflat = build_conv_matrix(p['conv_w'], p['conv_b'], seq_len)
    out_cols = F * seq_len
    out_pad = -(-(out_cols + 2 * L) // 128) * 128
    conv_slab = jnp.zeros((seq_len * U + 8, out_pad), jnp.float32)
    conv_slab = conv_slab.at[:seq_len * U, :out_cols].set(conv_m)
    conv_slab = conv_slab.at[seq_len * U:seq_len * U + 1, :out_cols].set(conv_bflat)

    return {'pe_b': positional_encoding(batch, D),   # batch-indexed PE (torch quirk)
            'narrow': narrow, 'wide': wide, 'conv_slab': conv_slab}


def init_params(key, D, n_head, L, U):
    """Random params in torch layout (linear weights pre-transposed to (in, out),
    LSTM gate column order i,f,g,o with separate b_ih/b_hh, Conv1d weight (O, U, 3))."""
    F = F_OUT
    keys = iter(jax.random.split(key, 40))

    def u(shape, fan_in):
        s = 1.0 / math.sqrt(fan_in)
        return jax.random.uniform(next(keys), shape, jnp.float32, minval=-s, maxval=s)

    p = {}
    p['enc_lin_w'] = u((F, D), F); p['enc_lin_b'] = u((1, D), F)
    p['wq'] = u((D, D), D); p['bq'] = u((1, D), D)
    p['wk'] = u((D, D), D); p['bk'] = u((1, D), D)
    p['wv'] = u((D, D), D); p['bv'] = u((1, D), D)
    p['wo'] = u((D, D), D); p['bo'] = u((1, D), D)
    p['enc_wih1'] = u((D, 4 * D), D); p['enc_whh1'] = u((D, 4 * D), D)
    p['enc_bih1'] = u((1, 4 * D), D); p['enc_bhh1'] = u((1, 4 * D), D)
    p['enc_wih2'] = u((D, 4 * D), D); p['enc_whh2'] = u((D, 4 * D), D)
    p['enc_bih2'] = u((1, 4 * D), D); p['enc_bhh2'] = u((1, 4 * D), D)
    p['enc_mean_w'] = u((D, L), D); p['enc_mean_b'] = u((1, L), D)
    p['enc_lv_w'] = u((D, L), D);   p['enc_lv_b'] = u((1, L), D)
    p['dec_lin_w'] = u((L, U), L); p['dec_lin_b'] = u((1, U), L)
    p['dec_wih1'] = u((U, 4 * U), U); p['dec_whh1'] = u((U, 4 * U), U)
    p['dec_bih1'] = u((1, 4 * U), U); p['dec_bhh1'] = u((1, 4 * U), U)
    p['dec_wih2'] = u((U, 4 * U), U); p['dec_whh2'] = u((U, 4 * U), U)
    p['dec_bih2'] = u((1, 4 * U), U); p['dec_bhh2'] = u((1, 4 * U), U)
    p['conv_w'] = u((F, U, 3), U * 3)                    # (O, U, K) torch layout
    p['conv_b'] = u((F,), U * 3)
    return p


# ------------------------------------------------------------------ main

if __name__ == "__main__":
    B, S = 2, 8            # batch, seq_len
    D = 32                 # linear_num_features
    n_head = 4
    L = 16                 # latent_dim
    U = 32                 # n_units

    key = jax.random.PRNGKey(0)
    kparam, kx, ke = jax.random.split(key, 3)
    raw_params = init_params(kparam, D, n_head, L, U)
    kernel_params = prepare_kernel_params(raw_params, B, S)   # one-time host prep

    x = jax.random.normal(kx, (B, S, 29, 3), jnp.float32)
    # deterministic stand-in for torch.randn inside sample_z
    eps = jax.random.normal(ke, (B, L), jnp.float32)

    fwd = jax.jit(functools.partial(vae_forward, n_head=n_head, d_model=D,
                                    latent_dim=L, n_units=U, seq_len=S))
    out, z_mean, z_log_var = fwd(x, eps, kernel_params)
    jax.block_until_ready((out, z_mean, z_log_var))

    assert out.shape == (B, S, 29 * 3)
    assert z_mean.shape == (B, L) and z_log_var.shape == (B, L)
    print("KERNEL_OK")
</pallas_src>

<mosaic_0001>
module attributes {stable_mosaic.version = 11 : i64} {
  func.func @_vae_fused_kernel(%arg0: memref<2x8x87xf32, #tpu.memory_space<vmem>>, %arg1: memref<2x32xf32, #tpu.memory_space<vmem>>, %arg2: memref<2x16xf32, #tpu.memory_space<vmem>>, %arg3: memref<280x128xf32, #tpu.memory_space<vmem>>, %arg4: memref<128x256xf32, #tpu.memory_space<vmem>>, %arg5: memref<264x768xf32, #tpu.memory_space<any>>, %arg6: memref<2x768xf32, #tpu.memory_space<vmem>>, %arg7: memref<264x768xf32, #tpu.memory_space<vmem>>, %arg8: memref<1x!tpu.dma_semaphore, #tpu.memory_space<semaphore_mem>>) attributes {dimension_semantics = [], scalar_prefetch = 0 : i64, scratch_operands = 2 : i64, tpu.core_type = #tpu.core_type<tc>} {
    %c0_i32 = arith.constant 0 : i32
    %0 = tpu.memref_slice %arg8[%c0_i32] : memref<1x!tpu.dma_semaphore, #tpu.memory_space<semaphore_mem>> -> memref<1x!tpu.dma_semaphore, #tpu.memory_space<semaphore_mem>>
    %1 = tpu.memref_squeeze %0 : memref<1x!tpu.dma_semaphore, #tpu.memory_space<semaphore_mem>> -> memref<!tpu.dma_semaphore, #tpu.memory_space<semaphore_mem>>
    tpu.enqueue_dma source(%arg5 : memref<264x768xf32, #tpu.memory_space<any>>) target(%arg7 : memref<264x768xf32, #tpu.memory_space<vmem>>) target_semaphore(%1 : memref<!tpu.dma_semaphore, #tpu.memory_space<semaphore_mem>>)
    %c0 = arith.constant 0 : index
    %c0_0 = arith.constant 0 : index
    %c0_1 = arith.constant 0 : index
    %2 = vector.load %arg0[%c0, %c0_0, %c0_1] : memref<2x8x87xf32, #tpu.memory_space<vmem>>, vector<2x8x87xf32>
    %c0_2 = arith.constant 0 : index
    %c0_3 = arith.constant 0 : index
    %3 = vector.load %arg3[%c0_2, %c0_3] : memref<280x128xf32, #tpu.memory_space<vmem>>, vector<87x32xf32>
    "tpu.trace_start"() <{level = 10 : i32, message = "bsf,fd->bsd"}> : () -> ()
    %cst = arith.constant dense<0.000000e+00> : vector<2x8x32xf32>
    %4 = tpu.matmul %2, %3, %cst {dimension_numbers = #tpu.dot_dimension_numbers<[2], [0], [0, 1], [1], [0, 0, 0, 1, 1, 1], [], []>} : vector<2x8x87xf32>, vector<87x32xf32>, vector<2x8x32xf32> -> vector<2x8x32xf32>
    "tpu.trace_stop"() : () -> ()
    %c264 = arith.constant 264 : index
    %c0_4 = arith.constant 0 : index
    %5 = vector.load %arg3[%c264, %c0_4] : memref<280x128xf32, #tpu.memory_space<vmem>>, vector<1x32xf32>
    %6 = vector.shape_cast %5 : vector<1x32xf32> to vector<1x1x32xf32>
    %7 = vector.broadcast %6 : vector<1x1x32xf32> to vector<2x8x32xf32>
    %8 = arith.addf %4, %7 : vector<2x8x32xf32>
    %c0_5 = arith.constant 0 : index
    %c0_6 = arith.constant 0 : index
    %9 = vector.load %arg1[%c0_5, %c0_6] : memref<2x32xf32, #tpu.memory_space<vmem>>, vector<2x32xf32>
    %10 = vector.shape_cast %9 : vector<2x32xf32> to vector<2x1x32xf32>
    %11 = vector.broadcast %10 : vector<2x1x32xf32> to vector<2x8x32xf32>
    %12 = arith.addf %8, %11 : vector<2x8x32xf32>
    %c120 = arith.constant 120 : index
    %c0_7 = arith.constant 0 : index
    %13 = vector.load %arg3[%c120, %c0_7] : memref<280x128xf32, #tpu.memory_space<vmem>>, vector<32x96xf32>
    "tpu.trace_start"() <{level = 10 : i32, message = "bsd,de->bse"}> : () -> ()
    %cst_8 = arith.constant dense<0.000000e+00> : vector<2x8x96xf32>
    %14 = tpu.matmul %12, %13, %cst_8 {dimension_numbers = #tpu.dot_dimension_numbers<[2], [0], [0, 1], [1], [0, 0, 0, 1, 1, 1], [], []>} : vector<2x8x32xf32>, vector<32x96xf32>, vector<2x8x96xf32> -> vector<2x8x96xf32>
    "tpu.trace_stop"() : () -> ()
    %c265 = arith.constant 265 : index
    %c0_9 = arith.constant 0 : index
    %15 = vector.load %arg3[%c265, %c0_9] : memref<280x128xf32, #tpu.memory_space<vmem>>, vector<1x96xf32>
    %16 = vector.shape_cast %15 : vector<1x96xf32> to vector<1x1x96xf32>
    %17 = vector.broadcast %16 : vector<1x1x96xf32> to vector<2x8x96xf32>
    %18 = arith.addf %14, %17 : vector<2x8x96xf32>
    %19 = vector.extract_strided_slice %18 {offsets = [0, 0, 0], sizes = [2, 8, 8], strides = [1, 1, 1]} : vector<2x8x96xf32> to vector<2x8x8xf32>
    %20 = vector.extract_strided_slice %18 {offsets = [0, 0, 8], sizes = [2, 8, 8], strides = [1, 1, 1]} : vector<2x8x96xf32> to vector<2x8x8xf32>
    %21 = vector.extract_strided_slice %18 {offsets = [0, 0, 16], sizes = [2, 8, 8], strides = [1, 1, 1]} : vector<2x8x96xf32> to vector<2x8x8xf32>
    %22 = vector.extract_strided_slice %18 {offsets = [0, 0, 24], sizes = [2, 8, 8], strides = [1, 1, 1]} : vector<2x8x96xf32> to vector<2x8x8xf32>
    %23 = tpu.concatenate %19, %20, %21, %22 in 0 : vector<2x8x8xf32>, vector<2x8x8xf32>, vector<2x8x8xf32>, vector<2x8x8xf32> -> vector<8x8x8xf32>
    %24 = vector.extract_strided_slice %18 {offsets = [0, 0, 32], sizes = [2, 8, 8], strides = [1, 1, 1]} : vector<2x8x96xf32> to vector<2x8x8xf32>
    %25 = vector.extract_strided_slice %18 {offsets = [0, 0, 40], sizes = [2, 8, 8], strides = [1, 1, 1]} : vector<2x8x96xf32> to vector<2x8x8xf32>
    %26 = vector.extract_strided_slice %18 {offsets = [0, 0, 48], sizes = [2, 8, 8], strides = [1, 1, 1]} : vector<2x8x96xf32> to vector<2x8x8xf32>
    %27 = vector.extract_strided_slice %18 {offsets = [0, 0, 56], sizes = [2, 8, 8], strides = [1, 1, 1]} : vector<2x8x96xf32> to vector<2x8x8xf32>
    %28 = tpu.concatenate %24, %25, %26, %27 in 0 : vector<2x8x8xf32>, vector<2x8x8xf32>, vector<2x8x8xf32>, vector<2x8x8xf32> -> vector<8x8x8xf32>
    %29 = vector.extract_strided_slice %18 {offsets = [0, 0, 64], sizes = [2, 8, 8], strides = [1, 1, 1]} : vector<2x8x96xf32> to vector<2x8x8xf32>
    %30 = vector.extract_strided_slice %18 {offsets = [0, 0, 72], sizes = [2, 8, 8], strides = [1, 1, 1]} : vector<2x8x96xf32> to vector<2x8x8xf32>
    %31 = vector.extract_strided_slice %18 {offsets = [0, 0, 80], sizes = [2, 8, 8], strides = [1, 1, 1]} : vector<2x8x96xf32> to vector<2x8x8xf32>
    %32 = vector.extract_strided_slice %18 {offsets = [0, 0, 88], sizes = [2, 8, 8], strides = [1, 1, 1]} : vector<2x8x96xf32> to vector<2x8x8xf32>
    %33 = tpu.concatenate %29, %30, %31, %32 in 0 : vector<2x8x8xf32>, vector<2x8x8xf32>, vector<2x8x8xf32>, vector<2x8x8xf32> -> vector<8x8x8xf32>
    %cst_10 = arith.constant 0.353553385 : f32
    %34 = vector.broadcast %cst_10 : f32 to vector<8x8x8xf32>
    %35 = arith.mulf %23, %34 : vector<8x8x8xf32>
    "tpu.trace_start"() <{level = 10 : i32, message = "bqd,bkd->bqk"}> : () -> ()
    %cst_11 = arith.constant dense<0.000000e+00> : vector<8x8x8xf32>
    %36 = tpu.matmul %35, %28, %cst_11 {dimension_numbers = #tpu.dot_dimension_numbers<[2], [2], [1], [1], [0, 0, 0, 1, 1, 1], [0], [0]>} : vector<8x8x8xf32>, vector<8x8x8xf32>, vector<8x8x8xf32> -> vector<8x8x8xf32>
    "tpu.trace_stop"() : () -> ()
    %cst_12 = arith.constant dense<0xFF800000> : vector<8x8xf32>
    %37 = vector.multi_reduction <maximumf>, %36, %cst_12 [2] : vector<8x8x8xf32> to vector<8x8xf32>
    %38 = vector.shape_cast %37 : vector<8x8xf32> to vector<8x8x1xf32>
    %39 = vector.broadcast %38 : vector<8x8x1xf32> to vector<8x8x8xf32>
    %40 = arith.subf %36, %39 : vector<8x8x8xf32>
    %41 = math.exp %40 : vector<8x8x8xf32>
    %cst_13 = arith.constant dense<0.000000e+00> : vector<8x8xf32>
    %42 = vector.multi_reduction <add>, %41, %cst_13 [2] : vector<8x8x8xf32> to vector<8x8xf32>
    %43 = vector.shape_cast %42 : vector<8x8xf32> to vector<8x8x1xf32>
    %44 = tpu.reciprocal %43 {approx = true} : vector<8x8x1xf32> -> vector<8x8x1xf32>
    %45 = vector.broadcast %44 : vector<8x8x1xf32> to vector<8x8x8xf32>
    %46 = arith.mulf %41, %45 : vector<8x8x8xf32>
    "tpu.trace_start"() <{level = 10 : i32, message = "bqk,bkd->bqd"}> : () -> ()
    %cst_14 = arith.constant dense<0.000000e+00> : vector<8x8x8xf32>
    %47 = tpu.matmul %46, %33, %cst_14 {dimension_numbers = #tpu.dot_dimension_numbers<[2], [1], [1], [2], [0, 0, 0, 1, 1, 2], [0], [0]>} : vector<8x8x8xf32>, vector<8x8x8xf32>, vector<8x8x8xf32> -> vector<8x8x8xf32>
    "tpu.trace_stop"() : () -> ()
    %48 = vector.extract_strided_slice %47 {offsets = [0, 0, 0], sizes = [2, 8, 8], strides = [1, 1, 1]} : vector<8x8x8xf32> to vector<2x8x8xf32>
    %49 = vector.extract_strided_slice %47 {offsets = [2, 0, 0], sizes = [2, 8, 8], strides = [1, 1, 1]} : vector<8x8x8xf32> to vector<2x8x8xf32>
    %50 = vector.extract_strided_slice %47 {offsets = [4, 0, 0], sizes = [2, 8, 8], strides = [1, 1, 1]} : vector<8x8x8xf32> to vector<2x8x8xf32>
    %51 = vector.extract_strided_slice %47 {offsets = [6, 0, 0], sizes = [2, 8, 8], strides = [1, 1, 1]} : vector<8x8x8xf32> to vector<2x8x8xf32>
    %52 = tpu.concatenate %48, %49, %50, %51 in 2 : vector<2x8x8xf32>, vector<2x8x8xf32>, vector<2x8x8xf32>, vector<2x8x8xf32> -> vector<2x8x32xf32>
    %c152 = arith.constant 152 : index
    %c0_15 = arith.constant 0 : index
    %53 = vector.load %arg3[%c152, %c0_15] : memref<280x128xf32, #tpu.memory_space<vmem>>, vector<32x32xf32>
    "tpu.trace_start"() <{level = 10 : i32, message = "bsd,de->bse"}> : () -> ()
    %cst_16 = arith.constant dense<0.000000e+00> : vector<2x8x32xf32>
    %54 = tpu.matmul %52, %53, %cst_16 {dimension_numbers = #tpu.dot_dimension_numbers<[2], [0], [0, 1], [1], [0, 0, 0, 1, 1, 1], [], []>} : vector<2x8x32xf32>, vector<32x32xf32>, vector<2x8x32xf32> -> vector<2x8x32xf32>
    "tpu.trace_stop"() : () -> ()
    %c266 = arith.constant 266 : index
    %c0_17 = arith.constant 0 : index
    %55 = vector.load %arg3[%c266, %c0_17] : memref<280x128xf32, #tpu.memory_space<vmem>>, vector<1x32xf32>
    %56 = vector.shape_cast %55 : vector<1x32xf32> to vector<1x1x32xf32>
    %57 = vector.broadcast %56 : vector<1x1x32xf32> to vector<2x8x32xf32>
    %58 = arith.addf %54, %57 : vector<2x8x32xf32>
    %c88 = arith.constant 88 : index
    %c0_18 = arith.constant 0 : index
    %59 = vector.load %arg3[%c88, %c0_18] : memref<280x128xf32, #tpu.memory_space<vmem>>, vector<32x128xf32>
    "tpu.trace_start"() <{level = 10 : i32, message = "bsd,dh->bsh"}> : () -> ()
    %cst_19 = arith.constant dense<0.000000e+00> : vector<2x8x128xf32>
    %60 = tpu.matmul %58, %59, %cst_19 {dimension_numbers = #tpu.dot_dimension_numbers<[2], [0], [0, 1], [1], [0, 0, 0, 1, 1, 1], [], []>} : vector<2x8x32xf32>, vector<32x128xf32>, vector<2x8x128xf32> -> vector<2x8x128xf32>
    "tpu.trace_stop"() : () -> ()
    %c267 = arith.constant 267 : index
    %c0_20 = arith.constant 0 : index
    %61 = vector.load %arg3[%c267, %c0_20] : memref<280x128xf32, #tpu.memory_space<vmem>>, vector<1x128xf32>
    %62 = vector.shape_cast %61 : vector<1x128xf32> to vector<1x1x128xf32>
    %63 = vector.broadcast %62 : vector<1x1x128xf32> to vector<2x8x128xf32>
    %64 = arith.addf %60, %63 : vector<2x8x128xf32>
    %c0_21 = arith.constant 0 : index
    %c0_22 = arith.constant 0 : index
    %65 = vector.load %arg4[%c0_21, %c0_22] : memref<128x256xf32, #tpu.memory_space<vmem>>, vector<64x256xf32>
    %c268 = arith.constant 268 : index
    %c0_23 = arith.constant 0 : index
    %66 = vector.load %arg3[%c268, %c0_23] : memref<280x128xf32, #tpu.memory_space<vmem>>, vector<1x128xf32>
    %cst_24 = arith.constant 0.000000e+00 : f32
    %67 = vector.broadcast %cst_24 : f32 to vector<2x32xf32>
    %68 = vector.extract_strided_slice %64 {offsets = [0, 0, 0], sizes = [2, 1, 128], strides = [1, 1, 1]} : vector<2x8x128xf32> to vector<2x1x128xf32>
    %69 = vector.shape_cast %68 : vector<2x1x128xf32> to vector<2x128xf32>
    %70 = vector.extract_strided_slice %69 {offsets = [0, 0], sizes = [2, 96], strides = [1, 1]} : vector<2x128xf32> to vector<2x96xf32>
    %71 = arith.negf %70 : vector<2x96xf32>
    %72 = math.exp %71 : vector<2x96xf32>
    %cst_25 = arith.constant 1.000000e+00 : f32
    %73 = vector.broadcast %cst_25 : f32 to vector<2x96xf32>
    %74 = arith.addf %73, %72 : vector<2x96xf32>
    %75 = arith.divf %73, %74 : vector<2x96xf32>
    %76 = vector.extract_strided_slice %75 {offsets = [0, 0], sizes = [2, 32], strides = [1, 1]} : vector<2x96xf32> to vector<2x32xf32>
    %77 = vector.extract_strided_slice %75 {offsets = [0, 32], sizes = [2, 32], strides = [1, 1]} : vector<2x96xf32> to vector<2x32xf32>
    %78 = vector.extract_strided_slice %75 {offsets = [0, 64], sizes = [2, 32], strides = [1, 1]} : vector<2x96xf32> to vector<2x32xf32>
    %79 = vector.extract_strided_slice %69 {offsets = [0, 96], sizes = [2, 32], strides = [1, 1]} : vector<2x128xf32> to vector<2x32xf32>
    %80 = math.tanh %79 : vector<2x32xf32>
    %81 = arith.mulf %77, %67 : vector<2x32xf32>
    %82 = arith.mulf %76, %80 : vector<2x32xf32>
    %83 = arith.addf %81, %82 : vector<2x32xf32>
    %84 = math.tanh %83 : vector<2x32xf32>
    %85 = arith.mulf %78, %84 : vector<2x32xf32>
    %86 = tpu.concatenate %85, %67 in 1 : vector<2x32xf32>, vector<2x32xf32> -> vector<2x64xf32>
    %cst_26 = arith.constant dense<0.000000e+00> : vector<2x256xf32>
    %87 = tpu.matmul %86, %65, %cst_26 {dimension_numbers = #tpu.dot_dimension_numbers<[1], [0], [0], [1], [0, 0, 1, 1], [], []>} : vector<2x64xf32>, vector<64x256xf32>, vector<2x256xf32> -> vector<2x256xf32>
    %88 = vector.extract_strided_slice %87 {offsets = [0, 128], sizes = [2, 128], strides = [1, 1]} : vector<2x256xf32> to vector<2x128xf32>
    %89 = vector.broadcast %66 : vector<1x128xf32> to vector<2x128xf32>
    %90 = arith.addf %88, %89 : vector<2x128xf32>
    %91 = vector.extract_strided_slice %90 {offsets = [0, 0], sizes = [2, 96], strides = [1, 1]} : vector<2x128xf32> to vector<2x96xf32>
    %92 = arith.negf %91 : vector<2x96xf32>
    %93 = math.exp %92 : vector<2x96xf32>
    %cst_27 = arith.constant 1.000000e+00 : f32
    %94 = vector.broadcast %cst_27 : f32 to vector<2x96xf32>
    %95 = arith.addf %94, %93 : vector<2x96xf32>
    %96 = arith.divf %94, %95 : vector<2x96xf32>
    %97 = vector.extract_strided_slice %96 {offsets = [0, 0], sizes = [2, 32], strides = [1, 1]} : vector<2x96xf32> to vector<2x32xf32>
    %98 = vector.extract_strided_slice %96 {offsets = [0, 32], sizes = [2, 32], strides = [1, 1]} : vector<2x96xf32> to vector<2x32xf32>
    %99 = vector.extract_strided_slice %96 {offsets = [0, 64], sizes = [2, 32], strides = [1, 1]} : vector<2x96xf32> to vector<2x32xf32>
    %100 = vector.extract_strided_slice %90 {offsets = [0, 96], sizes = [2, 32], strides = [1, 1]} : vector<2x128xf32> to vector<2x32xf32>
    %101 = math.tanh %100 : vector<2x32xf32>
    %102 = arith.mulf %98, %67 : vector<2x32xf32>
    %103 = arith.mulf %97, %101 : vector<2x32xf32>
    %104 = arith.addf %102, %103 : vector<2x32xf32>
    %105 = math.tanh %104 : vector<2x32xf32>
    %106 = arith.mulf %99, %105 : vector<2x32xf32>
    %107 = vector.extract_strided_slice %87 {offsets = [0, 0], sizes = [2, 128], strides = [1, 1]} : vector<2x256xf32> to vector<2x128xf32>
    %108 = vector.extract_strided_slice %64 {offsets = [0, 1, 0], sizes = [2, 1, 128], strides = [1, 1, 1]} : vector<2x8x128xf32> to vector<2x1x128xf32>
    %109 = vector.shape_cast %108 : vector<2x1x128xf32> to vector<2x128xf32>
    %110 = arith.addf %107, %109 : vector<2x128xf32>
    %111 = vector.extract_strided_slice %110 {offsets = [0, 0], sizes = [2, 96], strides = [1, 1]} : vector<2x128xf32> to vector<2x96xf32>
    %112 = arith.negf %111 : vector<2x96xf32>
    %113 = math.exp %112 : vector<2x96xf32>
    %cst_28 = arith.constant 1.000000e+00 : f32
    %114 = vector.broadcast %cst_28 : f32 to vector<2x96xf32>
    %115 = arith.addf %114, %113 : vector<2x96xf32>
    %116 = arith.divf %114, %115 : vector<2x96xf32>
    %117 = vector.extract_strided_slice %116 {offsets = [0, 0], sizes = [2, 32], strides = [1, 1]} : vector<2x96xf32> to vector<2x32xf32>
    %118 = vector.extract_strided_slice %116 {offsets = [0, 32], sizes = [2, 32], strides = [1, 1]} : vector<2x96xf32> to vector<2x32xf32>
    %119 = vector.extract_strided_slice %116 {offsets = [0, 64], sizes = [2, 32], strides = [1, 1]} : vector<2x96xf32> to vector<2x32xf32>
    %120 = vector.extract_strided_slice %110 {offsets = [0, 96], sizes = [2, 32], strides = [1, 1]} : vector<2x128xf32> to vector<2x32xf32>
    %121 = math.tanh %120 : vector<2x32xf32>
    %122 = arith.mulf %118, %83 : vector<2x32xf32>
    %123 = arith.mulf %117, %121 : vector<2x32xf32>
    %124 = arith.addf %122, %123 : vector<2x32xf32>
    %125 = math.tanh %124 : vector<2x32xf32>
    %126 = arith.mulf %119, %125 : vector<2x32xf32>
    %127 = tpu.concatenate %126, %106 in 1 : vector<2x32xf32>, vector<2x32xf32> -> vector<2x64xf32>
    %cst_29 = arith.constant dense<0.000000e+00> : vector<2x256xf32>
    %128 = tpu.matmul %127, %65, %cst_29 {dimension_numbers = #tpu.dot_dimension_numbers<[1], [0], [0], [1], [0, 0, 1, 1], [], []>} : vector<2x64xf32>, vector<64x256xf32>, vector<2x256xf32> -> vector<2x256xf32>
    %129 = vector.extract_strided_slice %128 {offsets = [0, 128], sizes = [2, 128], strides = [1, 1]} : vector<2x256xf32> to vector<2x128xf32>
    %130 = vector.broadcast %66 : vector<1x128xf32> to vector<2x128xf32>
    %131 = arith.addf %129, %130 : vector<2x128xf32>
    %132 = vector.extract_strided_slice %131 {offsets = [0, 0], sizes = [2, 96], strides = [1, 1]} : vector<2x128xf32> to vector<2x96xf32>
    %133 = arith.negf %132 : vector<2x96xf32>
    %134 = math.exp %133 : vector<2x96xf32>
    %cst_30 = arith.constant 1.000000e+00 : f32
    %135 = vector.broadcast %cst_30 : f32 to vector<2x96xf32>
    %136 = arith.addf %135, %134 : vector<2x96xf32>
    %137 = arith.divf %135, %136 : vector<2x96xf32>
    %138 = vector.extract_strided_slice %137 {offsets = [0, 0], sizes = [2, 32], strides = [1, 1]} : vector<2x96xf32> to vector<2x32xf32>
    %139 = vector.extract_strided_slice %137 {offsets = [0, 32], sizes = [2, 32], strides = [1, 1]} : vector<2x96xf32> to vector<2x32xf32>
    %140 = vector.extract_strided_slice %137 {offsets = [0, 64], sizes = [2, 32], strides = [1, 1]} : vector<2x96xf32> to vector<2x32xf32>
    %141 = vector.extract_strided_slice %131 {offsets = [0, 96], sizes = [2, 32], strides = [1, 1]} : vector<2x128xf32> to vector<2x32xf32>
    %142 = math.tanh %141 : vector<2x32xf32>
    %143 = arith.mulf %139, %104 : vector<2x32xf32>
    %144 = arith.mulf %138, %142 : vector<2x32xf32>
    %145 = arith.addf %143, %144 : vector<2x32xf32>
    %146 = math.tanh %145 : vector<2x32xf32>
    %147 = arith.mulf %140, %146 : vector<2x32xf32>
    %148 = vector.extract_strided_slice %128 {offsets = [0, 0], sizes = [2, 128], strides = [1, 1]} : vector<2x256xf32> to vector<2x128xf32>
    %149 = vector.extract_strided_slice %64 {offsets = [0, 2, 0], sizes = [2, 1, 128], strides = [1, 1, 1]} : vector<2x8x128xf32> to vector<2x1x128xf32>
    %150 = vector.shape_cast %149 : vector<2x1x128xf32> to vector<2x128xf32>
    %151 = arith.addf %148, %150 : vector<2x128xf32>
    %152 = vector.extract_strided_slice %151 {offsets = [0, 0], sizes = [2, 96], strides = [1, 1]} : vector<2x128xf32> to vector<2x96xf32>
    %153 = arith.negf %152 : vector<2x96xf32>
    %154 = math.exp %153 : vector<2x96xf32>
    %cst_31 = arith.constant 1.000000e+00 : f32
    %155 = vector.broadcast %cst_31 : f32 to vector<2x96xf32>
    %156 = arith.addf %155, %154 : vector<2x96xf32>
    %157 = arith.divf %155, %156 : vector<2x96xf32>
    %158 = vector.extract_strided_slice %157 {offsets = [0, 0], sizes = [2, 32], strides = [1, 1]} : vector<2x96xf32> to vector<2x32xf32>
    %159 = vector.extract_strided_slice %157 {offsets = [0, 32], sizes = [2, 32], strides = [1, 1]} : vector<2x96xf32> to vector<2x32xf32>
    %160 = vector.extract_strided_slice %157 {offsets = [0, 64], sizes = [2, 32], strides = [1, 1]} : vector<2x96xf32> to vector<2x32xf32>
    %161 = vector.extract_strided_slice %151 {offsets = [0, 96], sizes = [2, 32], strides = [1, 1]} : vector<2x128xf32> to vector<2x32xf32>
    %162 = math.tanh %161 : vector<2x32xf32>
    %163 = arith.mulf %159, %124 : vector<2x32xf32>
    %164 = arith.mulf %158, %162 : vector<2x32xf32>
    %165 = arith.addf %163, %164 : vector<2x32xf32>
    %166 = math.tanh %165 : vector<2x32xf32>
    %167 = arith.mulf %160, %166 : vector<2x32xf32>
    %168 = tpu.concatenate %167, %147 in 1 : vector<2x32xf32>, vector<2x32xf32> -> vector<2x64xf32>
    %cst_32 = arith.constant dense<0.000000e+00> : vector<2x256xf32>
    %169 = tpu.matmul %168, %65, %cst_32 {dimension_numbers = #tpu.dot_dimension_numbers<[1], [0], [0], [1], [0, 0, 1, 1], [], []>} : vector<2x64xf32>, vector<64x256xf32>, vector<2x256xf32> -> vector<2x256xf32>
    %170 = vector.extract_strided_slice %169 {offsets = [0, 128], sizes = [2, 128], strides = [1, 1]} : vector<2x256xf32> to vector<2x128xf32>
    %171 = vector.broadcast %66 : vector<1x128xf32> to vector<2x128xf32>
    %172 = arith.addf %170, %171 : vector<2x128xf32>
    %173 = vector.extract_strided_slice %172 {offsets = [0, 0], sizes = [2, 96], strides = [1, 1]} : vector<2x128xf32> to vector<2x96xf32>
    %174 = arith.negf %173 : vector<2x96xf32>
    %175 = math.exp %174 : vector<2x96xf32>
    %cst_33 = arith.constant 1.000000e+00 : f32
    %176 = vector.broadcast %cst_33 : f32 to vector<2x96xf32>
    %177 = arith.addf %176, %175 : vector<2x96xf32>
    %178 = arith.divf %176, %177 : vector<2x96xf32>
    %179 = vector.extract_strided_slice %178 {offsets = [0, 0], sizes = [2, 32], strides = [1, 1]} : vector<2x96xf32> to vector<2x32xf32>
    %180 = vector.extract_strided_slice %178 {offsets = [0, 32], sizes = [2, 32], strides = [1, 1]} : vector<2x96xf32> to vector<2x32xf32>
    %181 = vector.extract_strided_slice %178 {offsets = [0, 64], sizes = [2, 32], strides = [1, 1]} : vector<2x96xf32> to vector<2x32xf32>
    %182 = vector.extract_strided_slice %172 {offsets = [0, 96], sizes = [2, 32], strides = [1, 1]} : vector<2x128xf32> to vector<2x32xf32>
    %183 = math.tanh %182 : vector<2x32xf32>
    %184 = arith.mulf %180, %145 : vector<2x32xf32>
    %185 = arith.mulf %179, %183 : vector<2x32xf32>
    %186 = arith.addf %184, %185 : vector<2x32xf32>
    %187 = math.tanh %186 : vector<2x32xf32>
    %188 = arith.mulf %181, %187 : vector<2x32xf32>
    %189 = vector.extract_strided_slice %169 {offsets = [0, 0], sizes = [2, 128], strides = [1, 1]} : vector<2x256xf32> to vector<2x128xf32>
    %190 = vector.extract_strided_slice %64 {offsets = [0, 3, 0], sizes = [2, 1, 128], strides = [1, 1, 1]} : vector<2x8x128xf32> to vector<2x1x128xf32>
    %191 = vector.shape_cast %190 : vector<2x1x128xf32> to vector<2x128xf32>
    %192 = arith.addf %189, %191 : vector<2x128xf32>
    %193 = vector.extract_strided_slice %192 {offsets = [0, 0], sizes = [2, 96], strides = [1, 1]} : vector<2x128xf32> to vector<2x96xf32>
    %194 = arith.negf %193 : vector<2x96xf32>
    %195 = math.exp %194 : vector<2x96xf32>
    %cst_34 = arith.constant 1.000000e+00 : f32
    %196 = vector.broadcast %cst_34 : f32 to vector<2x96xf32>
    %197 = arith.addf %196, %195 : vector<2x96xf32>
    %198 = arith.divf %196, %197 : vector<2x96xf32>
    %199 = vector.extract_strided_slice %198 {offsets = [0, 0], sizes = [2, 32], strides = [1, 1]} : vector<2x96xf32> to vector<2x32xf32>
    %200 = vector.extract_strided_slice %198 {offsets = [0, 32], sizes = [2, 32], strides = [1, 1]} : vector<2x96xf32> to vector<2x32xf32>
    %201 = vector.extract_strided_slice %198 {offsets = [0, 64], sizes = [2, 32], strides = [1, 1]} : vector<2x96xf32> to vector<2x32xf32>
    %202 = vector.extract_strided_slice %192 {offsets = [0, 96], sizes = [2, 32], strides = [1, 1]} : vector<2x128xf32> to vector<2x32xf32>
    %203 = math.tanh %202 : vector<2x32xf32>
    %204 = arith.mulf %200, %165 : vector<2x32xf32>
    %205 = arith.mulf %199, %203 : vector<2x32xf32>
    %206 = arith.addf %204, %205 : vector<2x32xf32>
    %207 = math.tanh %206 : vector<2x32xf32>
    %208 = arith.mulf %201, %207 : vector<2x32xf32>
    %209 = tpu.concatenate %208, %188 in 1 : vector<2x32xf32>, vector<2x32xf32> -> vector<2x64xf32>
    %cst_35 = arith.constant dense<0.000000e+00> : vector<2x256xf32>
    %210 = tpu.matmul %209, %65, %cst_35 {dimension_numbers = #tpu.dot_dimension_numbers<[1], [0], [0], [1], [0, 0, 1, 1], [], []>} : vector<2x64xf32>, vector<64x256xf32>, vector<2x256xf32> -> vector<2x256xf32>
    %211 = vector.extract_strided_slice %210 {offsets = [0, 128], sizes = [2, 128], strides = [1, 1]} : vector<2x256xf32> to vector<2x128xf32>
    %212 = vector.broadcast %66 : vector<1x128xf32> to vector<2x128xf32>
    %213 = arith.addf %211, %212 : vector<2x128xf32>
    %214 = vector.extract_strided_slice %213 {offsets = [0, 0], sizes = [2, 96], strides = [1, 1]} : vector<2x128xf32> to vector<2x96xf32>
    %215 = arith.negf %214 : vector<2x96xf32>
    %216 = math.exp %215 : vector<2x96xf32>
    %cst_36 = arith.constant 1.000000e+00 : f32
    %217 = vector.broadcast %cst_36 : f32 to vector<2x96xf32>
    %218 = arith.addf %217, %216 : vector<2x96xf32>
    %219 = arith.divf %217, %218 : vector<2x96xf32>
    %220 = vector.extract_strided_slice %219 {offsets = [0, 0], sizes = [2, 32], strides = [1, 1]} : vector<2x96xf32> to vector<2x32xf32>
    %221 = vector.extract_strided_slice %219 {offsets = [0, 32], sizes = [2, 32], strides = [1, 1]} : vector<2x96xf32> to vector<2x32xf32>
    %222 = vector.extract_strided_slice %219 {offsets = [0, 64], sizes = [2, 32], strides = [1, 1]} : vector<2x96xf32> to vector<2x32xf32>
    %223 = vector.extract_strided_slice %213 {offsets = [0, 96], sizes = [2, 32], strides = [1, 1]} : vector<2x128xf32> to vector<2x32xf32>
    %224 = math.tanh %223 : vector<2x32xf32>
    %225 = arith.mulf %221, %186 : vector<2x32xf32>
    %226 = arith.mulf %220, %224 : vector<2x32xf32>
    %227 = arith.addf %225, %226 : vector<2x32xf32>
    %228 = math.tanh %227 : vector<2x32xf32>
    %229 = arith.mulf %222, %228 : vector<2x32xf32>
    %230 = vector.extract_strided_slice %210 {offsets = [0, 0], sizes = [2, 128], strides = [1, 1]} : vector<2x256xf32> to vector<2x128xf32>
    %231 = vector.extract_strided_slice %64 {offsets = [0, 4, 0], sizes = [2, 1, 128], strides = [1, 1, 1]} : vector<2x8x128xf32> to vector<2x1x128xf32>
    %232 = vector.shape_cast %231 : vector<2x1x128xf32> to vector<2x128xf32>
    %233 = arith.addf %230, %232 : vector<2x128xf32>
    %234 = vector.extract_strided_slice %233 {offsets = [0, 0], sizes = [2, 96], strides = [1, 1]} : vector<2x128xf32> to vector<2x96xf32>
    %235 = arith.negf %234 : vector<2x96xf32>
    %236 = math.exp %235 : vector<2x96xf32>
    %cst_37 = arith.constant 1.000000e+00 : f32
    %237 = vector.broadcast %cst_37 : f32 to vector<2x96xf32>
    %238 = arith.addf %237, %236 : vector<2x96xf32>
    %239 = arith.divf %237, %238 : vector<2x96xf32>
    %240 = vector.extract_strided_slice %239 {offsets = [0, 0], sizes = [2, 32], strides = [1, 1]} : vector<2x96xf32> to vector<2x32xf32>
    %241 = vector.extract_strided_slice %239 {offsets = [0, 32], sizes = [2, 32], strides = [1, 1]} : vector<2x96xf32> to vector<2x32xf32>
    %242 = vector.extract_strided_slice %239 {offsets = [0, 64], sizes = [2, 32], strides = [1, 1]} : vector<2x96xf32> to vector<2x32xf32>
    %243 = vector.extract_strided_slice %233 {offsets = [0, 96], sizes = [2, 32], strides = [1, 1]} : vector<2x128xf32> to vector<2x32xf32>
    %244 = math.tanh %243 : vector<2x32xf32>
    %245 = arith.mulf %241, %206 : vector<2x32xf32>
    %246 = arith.mulf %240, %244 : vector<2x32xf32>
    %247 = arith.addf %245, %246 : vector<2x32xf32>
    %248 = math.tanh %247 : vector<2x32xf32>
    %249 = arith.mulf %242, %248 : vector<2x32xf32>
    %250 = tpu.concatenate %249, %229 in 1 : vector<2x32xf32>, vector<2x32xf32> -> vector<2x64xf32>
    %cst_38 = arith.constant dense<0.000000e+00> : vector<2x256xf32>
    %251 = tpu.matmul %250, %65, %cst_38 {dimension_numbers = #tpu.dot_dimension_numbers<[1], [0], [0], [1], [0, 0, 1, 1], [], []>} : vector<2x64xf32>, vector<64x256xf32>, vector<2x256xf32> -> vector<2x256xf32>
    %252 = vector.extract_strided_slice %251 {offsets = [0, 128], sizes = [2, 128], strides = [1, 1]} : vector<2x256xf32> to vector<2x128xf32>
    %253 = vector.broadcast %66 : vector<1x128xf32> to vector<2x128xf32>
    %254 = arith.addf %252, %253 : vector<2x128xf32>
    %255 = vector.extract_strided_slice %254 {offsets = [0, 0], sizes = [2, 96], strides = [1, 1]} : vector<2x128xf32> to vector<2x96xf32>
    %256 = arith.negf %255 : vector<2x96xf32>
    %257 = math.exp %256 : vector<2x96xf32>
    %cst_39 = arith.constant 1.000000e+00 : f32
    %258 = vector.broadcast %cst_39 : f32 to vector<2x96xf32>
    %259 = arith.addf %258, %257 : vector<2x96xf32>
    %260 = arith.divf %258, %259 : vector<2x96xf32>
    %261 = vector.extract_strided_slice %260 {offsets = [0, 0], sizes = [2, 32], strides = [1, 1]} : vector<2x96xf32> to vector<2x32xf32>
    %262 = vector.extract_strided_slice %260 {offsets = [0, 32], sizes = [2, 32], strides = [1, 1]} : vector<2x96xf32> to vector<2x32xf32>
    %263 = vector.extract_strided_slice %260 {offsets = [0, 64], sizes = [2, 32], strides = [1, 1]} : vector<2x96xf32> to vector<2x32xf32>
    %264 = vector.extract_strided_slice %254 {offsets = [0, 96], sizes = [2, 32], strides = [1, 1]} : vector<2x128xf32> to vector<2x32xf32>
    %265 = math.tanh %264 : vector<2x32xf32>
    %266 = arith.mulf %262, %227 : vector<2x32xf32>
    %267 = arith.mulf %261, %265 : vector<2x32xf32>
    %268 = arith.addf %266, %267 : vector<2x32xf32>
    %269 = math.tanh %268 : vector<2x32xf32>
    %270 = arith.mulf %263, %269 : vector<2x32xf32>
    %271 = vector.extract_strided_slice %251 {offsets = [0, 0], sizes = [2, 128], strides = [1, 1]} : vector<2x256xf32> to vector<2x128xf32>
    %272 = vector.extract_strided_slice %64 {offsets = [0, 5, 0], sizes = [2, 1, 128], strides = [1, 1, 1]} : vector<2x8x128xf32> to vector<2x1x128xf32>
    %273 = vector.shape_cast %272 : vector<2x1x128xf32> to vector<2x128xf32>
    %274 = arith.addf %271, %273 : vector<2x128xf32>
    %275 = vector.extract_strided_slice %274 {offsets = [0, 0], sizes = [2, 96], strides = [1, 1]} : vector<2x128xf32> to vector<2x96xf32>
    %276 = arith.negf %275 : vector<2x96xf32>
    %277 = math.exp %276 : vector<2x96xf32>
    %cst_40 = arith.constant 1.000000e+00 : f32
    %278 = vector.broadcast %cst_40 : f32 to vector<2x96xf32>
    %279 = arith.addf %278, %277 : vector<2x96xf32>
    %280 = arith.divf %278, %279 : vector<2x96xf32>
    %281 = vector.extract_strided_slice %280 {offsets = [0, 0], sizes = [2, 32], strides = [1, 1]} : vector<2x96xf32> to vector<2x32xf32>
    %282 = vector.extract_strided_slice %280 {offsets = [0, 32], sizes = [2, 32], strides = [1, 1]} : vector<2x96xf32> to vector<2x32xf32>
    %283 = vector.extract_strided_slice %280 {offsets = [0, 64], sizes = [2, 32], strides = [1, 1]} : vector<2x96xf32> to vector<2x32xf32>
    %284 = vector.extract_strided_slice %274 {offsets = [0, 96], sizes = [2, 32], strides = [1, 1]} : vector<2x128xf32> to vector<2x32xf32>
    %285 = math.tanh %284 : vector<2x32xf32>
    %286 = arith.mulf %282, %247 : vector<2x32xf32>
    %287 = arith.mulf %281, %285 : vector<2x32xf32>
    %288 = arith.addf %286, %287 : vector<2x32xf32>
    %289 = math.tanh %288 : vector<2x32xf32>
    %290 = arith.mulf %283, %289 : vector<2x32xf32>
    %291 = tpu.concatenate %290, %270 in 1 : vector<2x32xf32>, vector<2x32xf32> -> vector<2x64xf32>
    %cst_41 = arith.constant dense<0.000000e+00> : vector<2x256xf32>
    %292 = tpu.matmul %291, %65, %cst_41 {dimension_numbers = #tpu.dot_dimension_numbers<[1], [0], [0], [1], [0, 0, 1, 1], [], []>} : vector<2x64xf32>, vector<64x256xf32>, vector<2x256xf32> -> vector<2x256xf32>
    %293 = vector.extract_strided_slice %292 {offsets = [0, 128], sizes = [2, 128], strides = [1, 1]} : vector<2x256xf32> to vector<2x128xf32>
    %294 = vector.broadcast %66 : vector<1x128xf32> to vector<2x128xf32>
    %295 = arith.addf %293, %294 : vector<2x128xf32>
    %296 = vector.extract_strided_slice %295 {offsets = [0, 0], sizes = [2, 96], strides = [1, 1]} : vector<2x128xf32> to vector<2x96xf32>
    %297 = arith.negf %296 : vector<2x96xf32>
    %298 = math.exp %297 : vector<2x96xf32>
    %cst_42 = arith.constant 1.000000e+00 : f32
    %299 = vector.broadcast %cst_42 : f32 to vector<2x96xf32>
    %300 = arith.addf %299, %298 : vector<2x96xf32>
    %301 = arith.divf %299, %300 : vector<2x96xf32>
    %302 = vector.extract_strided_slice %301 {offsets = [0, 0], sizes = [2, 32], strides = [1, 1]} : vector<2x96xf32> to vector<2x32xf32>
    %303 = vector.extract_strided_slice %301 {offsets = [0, 32], sizes = [2, 32], strides = [1, 1]} : vector<2x96xf32> to vector<2x32xf32>
    %304 = vector.extract_strided_slice %301 {offsets = [0, 64], sizes = [2, 32], strides = [1, 1]} : vector<2x96xf32> to vector<2x32xf32>
    %305 = vector.extract_strided_slice %295 {offsets = [0, 96], sizes = [2, 32], strides = [1, 1]} : vector<2x128xf32> to vector<2x32xf32>
    %306 = math.tanh %305 : vector<2x32xf32>
    %307 = arith.mulf %303, %268 : vector<2x32xf32>
    %308 = arith.mulf %302, %306 : vector<2x32xf32>
    %309 = arith.addf %307, %308 : vector<2x32xf32>
    %310 = math.tanh %309 : vector<2x32xf32>
    %311 = arith.mulf %304, %310 : vector<2x32xf32>
    %312 = vector.extract_strided_slice %292 {offsets = [0, 0], sizes = [2, 128], strides = [1, 1]} : vector<2x256xf32> to vector<2x128xf32>
    %313 = vector.extract_strided_slice %64 {offsets = [0, 6, 0], sizes = [2, 1, 128], strides = [1, 1, 1]} : vector<2x8x128xf32> to vector<2x1x128xf32>
    %314 = vector.shape_cast %313 : vector<2x1x128xf32> to vector<2x128xf32>
    %315 = arith.addf %312, %314 : vector<2x128xf32>
    %316 = vector.extract_strided_slice %315 {offsets = [0, 0], sizes = [2, 96], strides = [1, 1]} : vector<2x128xf32> to vector<2x96xf32>
    %317 = arith.negf %316 : vector<2x96xf32>
    %318 = math.exp %317 : vector<2x96xf32>
    %cst_43 = arith.constant 1.000000e+00 : f32
    %319 = vector.broadcast %cst_43 : f32 to vector<2x96xf32>
    %320 = arith.addf %319, %318 : vector<2x96xf32>
    %321 = arith.divf %319, %320 : vector<2x96xf32>
    %322 = vector.extract_strided_slice %321 {offsets = [0, 0], sizes = [2, 32], strides = [1, 1]} : vector<2x96xf32> to vector<2x32xf32>
    %323 = vector.extract_strided_slice %321 {offsets = [0, 32], sizes = [2, 32], strides = [1, 1]} : vector<2x96xf32> to vector<2x32xf32>
    %324 = vector.extract_strided_slice %321 {offsets = [0, 64], sizes = [2, 32], strides = [1, 1]} : vector<2x96xf32> to vector<2x32xf32>
    %325 = vector.extract_strided_slice %315 {offsets = [0, 96], sizes = [2, 32], strides = [1, 1]} : vector<2x128xf32> to vector<2x32xf32>
    %326 = math.tanh %325 : vector<2x32xf32>
    %327 = arith.mulf %323, %288 : vector<2x32xf32>
    %328 = arith.mulf %322, %326 : vector<2x32xf32>
    %329 = arith.addf %327, %328 : vector<2x32xf32>
    %330 = math.tanh %329 : vector<2x32xf32>
    %331 = arith.mulf %324, %330 : vector<2x32xf32>
    %332 = tpu.concatenate %331, %311 in 1 : vector<2x32xf32>, vector<2x32xf32> -> vector<2x64xf32>
    %cst_44 = arith.constant dense<0.000000e+00> : vector<2x256xf32>
    %333 = tpu.matmul %332, %65, %cst_44 {dimension_numbers = #tpu.dot_dimension_numbers<[1], [0], [0], [1], [0, 0, 1, 1], [], []>} : vector<2x64xf32>, vector<64x256xf32>, vector<2x256xf32> -> vector<2x256xf32>
    %334 = vector.extract_strided_slice %333 {offsets = [0, 128], sizes = [2, 128], strides = [1, 1]} : vector<2x256xf32> to vector<2x128xf32>
    %335 = vector.broadcast %66 : vector<1x128xf32> to vector<2x128xf32>
    %336 = arith.addf %334, %335 : vector<2x128xf32>
    %337 = vector.extract_strided_slice %336 {offsets = [0, 0], sizes = [2, 96], strides = [1, 1]} : vector<2x128xf32> to vector<2x96xf32>
    %338 = arith.negf %337 : vector<2x96xf32>
    %339 = math.exp %338 : vector<2x96xf32>
    %cst_45 = arith.constant 1.000000e+00 : f32
    %340 = vector.broadcast %cst_45 : f32 to vector<2x96xf32>
    %341 = arith.addf %340, %339 : vector<2x96xf32>
    %342 = arith.divf %340, %341 : vector<2x96xf32>
    %343 = vector.extract_strided_slice %342 {offsets = [0, 0], sizes = [2, 32], strides = [1, 1]} : vector<2x96xf32> to vector<2x32xf32>
    %344 = vector.extract_strided_slice %342 {offsets = [0, 32], sizes = [2, 32], strides = [1, 1]} : vector<2x96xf32> to vector<2x32xf32>
    %345 = vector.extract_strided_slice %342 {offsets = [0, 64], sizes = [2, 32], strides = [1, 1]} : vector<2x96xf32> to vector<2x32xf32>
    %346 = vector.extract_strided_slice %336 {offsets = [0, 96], sizes = [2, 32], strides = [1, 1]} : vector<2x128xf32> to vector<2x32xf32>
    %347 = math.tanh %346 : vector<2x32xf32>
    %348 = arith.mulf %344, %309 : vector<2x32xf32>
    %349 = arith.mulf %343, %347 : vector<2x32xf32>
    %350 = arith.addf %348, %349 : vector<2x32xf32>
    %351 = math.tanh %350 : vector<2x32xf32>
    %352 = arith.mulf %345, %351 : vector<2x32xf32>
    %353 = vector.extract_strided_slice %333 {offsets = [0, 0], sizes = [2, 128], strides = [1, 1]} : vector<2x256xf32> to vector<2x128xf32>
    %354 = vector.extract_strided_slice %64 {offsets = [0, 7, 0], sizes = [2, 1, 128], strides = [1, 1, 1]} : vector<2x8x128xf32> to vector<2x1x128xf32>
    %355 = vector.shape_cast %354 : vector<2x1x128xf32> to vector<2x128xf32>
    %356 = arith.addf %353, %355 : vector<2x128xf32>
    %357 = vector.extract_strided_slice %356 {offsets = [0, 0], sizes = [2, 96], strides = [1, 1]} : vector<2x128xf32> to vector<2x96xf32>
    %358 = arith.negf %357 : vector<2x96xf32>
    %359 = math.exp %358 : vector<2x96xf32>
    %cst_46 = arith.constant 1.000000e+00 : f32
    %360 = vector.broadcast %cst_46 : f32 to vector<2x96xf32>
    %361 = arith.addf %360, %359 : vector<2x96xf32>
    %362 = arith.divf %360, %361 : vector<2x96xf32>
    %363 = vector.extract_strided_slice %362 {offsets = [0, 0], sizes = [2, 32], strides = [1, 1]} : vector<2x96xf32> to vector<2x32xf32>
    %364 = vector.extract_strided_slice %362 {offsets = [0, 32], sizes = [2, 32], strides = [1, 1]} : vector<2x96xf32> to vector<2x32xf32>
    %365 = vector.extract_strided_slice %362 {offsets = [0, 64], sizes = [2, 32], strides = [1, 1]} : vector<2x96xf32> to vector<2x32xf32>
    %366 = vector.extract_strided_slice %356 {offsets = [0, 96], sizes = [2, 32], strides = [1, 1]} : vector<2x128xf32> to vector<2x32xf32>
    %367 = math.tanh %366 : vector<2x32xf32>
    %368 = arith.mulf %364, %329 : vector<2x32xf32>
    %369 = arith.mulf %363, %367 : vector<2x32xf32>
    %370 = arith.addf %368, %369 : vector<2x32xf32>
    %371 = math.tanh %370 : vector<2x32xf32>
    %372 = arith.mulf %365, %371 : vector<2x32xf32>
    %373 = tpu.concatenate %372, %352 in 1 : vector<2x32xf32>, vector<2x32xf32> -> vector<2x64xf32>
    %cst_47 = arith.constant dense<0.000000e+00> : vector<2x256xf32>
    %374 = tpu.matmul %373, %65, %cst_47 {dimension_numbers = #tpu.dot_dimension_numbers<[1], [0], [0], [1], [0, 0, 1, 1], [], []>} : vector<2x64xf32>, vector<64x256xf32>, vector<2x256xf32> -> vector<2x256xf32>
    %375 = vector.extract_strided_slice %374 {offsets = [0, 128], sizes = [2, 128], strides = [1, 1]} : vector<2x256xf32> to vector<2x128xf32>
    %376 = vector.broadcast %66 : vector<1x128xf32> to vector<2x128xf32>
    %377 = arith.addf %375, %376 : vector<2x128xf32>
    %378 = vector.extract_strided_slice %377 {offsets = [0, 0], sizes = [2, 96], strides = [1, 1]} : vector<2x128xf32> to vector<2x96xf32>
    %379 = arith.negf %378 : vector<2x96xf32>
    %380 = math.exp %379 : vector<2x96xf32>
    %cst_48 = arith.constant 1.000000e+00 : f32
    %381 = vector.broadcast %cst_48 : f32 to vector<2x96xf32>
    %382 = arith.addf %381, %380 : vector<2x96xf32>
    %383 = arith.divf %381, %382 : vector<2x96xf32>
    %384 = vector.extract_strided_slice %383 {offsets = [0, 0], sizes = [2, 32], strides = [1, 1]} : vector<2x96xf32> to vector<2x32xf32>
    %385 = vector.extract_strided_slice %383 {offsets = [0, 32], sizes = [2, 32], strides = [1, 1]} : vector<2x96xf32> to vector<2x32xf32>
    %386 = vector.extract_strided_slice %383 {offsets = [0, 64], sizes = [2, 32], strides = [1, 1]} : vector<2x96xf32> to vector<2x32xf32>
    %387 = vector.extract_strided_slice %377 {offsets = [0, 96], sizes = [2, 32], strides = [1, 1]} : vector<2x128xf32> to vector<2x32xf32>
    %388 = math.tanh %387 : vector<2x32xf32>
    %389 = arith.mulf %385, %350 : vector<2x32xf32>
    %390 = arith.mulf %384, %388 : vector<2x32xf32>
    %391 = arith.addf %389, %390 : vector<2x32xf32>
    %392 = math.tanh %391 : vector<2x32xf32>
    %393 = arith.mulf %386, %392 : vector<2x32xf32>
    %c184 = arith.constant 184 : index
    %c0_49 = arith.constant 0 : index
    %394 = vector.load %arg3[%c184, %c0_49] : memref<280x128xf32, #tpu.memory_space<vmem>>, vector<32x32xf32>
    %cst_50 = arith.constant dense<0.000000e+00> : vector<2x32xf32>
    %395 = tpu.matmul %393, %394, %cst_50 {dimension_numbers = #tpu.dot_dimension_numbers<[1], [0], [0], [1], [0, 0, 1, 1], [], []>} : vector<2x32xf32>, vector<32x32xf32>, vector<2x32xf32> -> vector<2x32xf32>
    %c269 = arith.constant 269 : index
    %c0_51 = arith.constant 0 : index
    %396 = vector.load %arg3[%c269, %c0_51] : memref<280x128xf32, #tpu.memory_space<vmem>>, vector<1x32xf32>
    %397 = vector.broadcast %396 : vector<1x32xf32> to vector<2x32xf32>
    %398 = arith.addf %395, %397 : vector<2x32xf32>
    %399 = vector.extract_strided_slice %398 {offsets = [0, 0], sizes = [2, 16], strides = [1, 1]} : vector<2x32xf32> to vector<2x16xf32>
    %400 = vector.extract_strided_slice %398 {offsets = [0, 16], sizes = [2, 16], strides = [1, 1]} : vector<2x32xf32> to vector<2x16xf32>
    %cst_52 = arith.constant 5.000000e-01 : f32
    %401 = vector.broadcast %cst_52 : f32 to vector<2x16xf32>
    %402 = arith.mulf %401, %400 : vector<2x16xf32>
    %403 = math.exp %402 : vector<2x16xf32>
    %c0_53 = arith.constant 0 : index
    %c0_54 = arith.constant 0 : index
    %404 = vector.load %arg2[%c0_53, %c0_54] : memref<2x16xf32, #tpu.memory_space<vmem>>, vector<2x16xf32>
    %405 = arith.mulf %403, %404 : vector<2x16xf32>
    %406 = arith.addf %399, %405 : vector<2x16xf32>
    %c216 = arith.constant 216 : index
    %c0_55 = arith.constant 0 : index
    %407 = vector.load %arg3[%c216, %c0_55] : memref<280x128xf32, #tpu.memory_space<vmem>>, vector<16x32xf32>
    %cst_56 = arith.constant dense<0.000000e+00> : vector<2x32xf32>
    %408 = tpu.matmul %406, %407, %cst_56 {dimension_numbers = #tpu.dot_dimension_numbers<[1], [0], [0], [1], [0, 0, 1, 1], [], []>} : vector<2x16xf32>, vector<16x32xf32>, vector<2x32xf32> -> vector<2x32xf32>
    %c270 = arith.constant 270 : index
    %c0_57 = arith.constant 0 : index
    %409 = vector.load %arg3[%c270, %c0_57] : memref<280x128xf32, #tpu.memory_space<vmem>>, vector<1x32xf32>
    %410 = vector.broadcast %409 : vector<1x32xf32> to vector<2x32xf32>
    %411 = arith.addf %408, %410 : vector<2x32xf32>
    %cst_58 = arith.constant 0.000000e+00 : f32
    %412 = vector.broadcast %cst_58 : f32 to vector<2x32xf32>
    %413 = arith.maximumf %411, %412 : vector<2x32xf32>
    %c232 = arith.constant 232 : index
    %c0_59 = arith.constant 0 : index
    %414 = vector.load %arg3[%c232, %c0_59] : memref<280x128xf32, #tpu.memory_space<vmem>>, vector<32x128xf32>
    %cst_60 = arith.constant dense<0.000000e+00> : vector<2x128xf32>
    %415 = tpu.matmul %413, %414, %cst_60 {dimension_numbers = #tpu.dot_dimension_numbers<[1], [0], [0], [1], [0, 0, 1, 1], [], []>} : vector<2x32xf32>, vector<32x128xf32>, vector<2x128xf32> -> vector<2x128xf32>
    %c271 = arith.constant 271 : index
    %c0_61 = arith.constant 0 : index
    %416 = vector.load %arg3[%c271, %c0_61] : memref<280x128xf32, #tpu.memory_space<vmem>>, vector<1x128xf32>
    %417 = vector.broadcast %416 : vector<1x128xf32> to vector<2x128xf32>
    %418 = arith.addf %415, %417 : vector<2x128xf32>
    %c64 = arith.constant 64 : index
    %c0_62 = arith.constant 0 : index
    %419 = vector.load %arg4[%c64, %c0_62] : memref<128x256xf32, #tpu.memory_space<vmem>>, vector<64x256xf32>
    %c272 = arith.constant 272 : index
    %c0_63 = arith.constant 0 : index
    %420 = vector.load %arg3[%c272, %c0_63] : memref<280x128xf32, #tpu.memory_space<vmem>>, vector<1x128xf32>
    %c0_i32_64 = arith.constant 0 : i32
    %421 = tpu.memref_slice %arg8[%c0_i32_64] : memref<1x!tpu.dma_semaphore, #tpu.memory_space<semaphore_mem>> -> memref<1x!tpu.dma_semaphore, #tpu.memory_space<semaphore_mem>>
    %422 = tpu.memref_squeeze %421 : memref<1x!tpu.dma_semaphore, #tpu.memory_space<semaphore_mem>> -> memref<!tpu.dma_semaphore, #tpu.memory_space<semaphore_mem>>
    tpu.wait_dma2 semaphore(%422 : memref<!tpu.dma_semaphore, #tpu.memory_space<semaphore_mem>>) src(%arg5 : memref<264x768xf32, #tpu.memory_space<any>>) dst(%arg7 : memref<264x768xf32, #tpu.memory_space<vmem>>)
    %cst_65 = arith.constant 0.000000e+00 : f32
    %423 = vector.broadcast %cst_65 : f32 to vector<2x32xf32>
    %cst_66 = arith.constant 0.000000e+00 : f32
    %424 = vector.broadcast %cst_66 : f32 to vector<2x768xf32>
    %425 = vector.extract_strided_slice %418 {offsets = [0, 0], sizes = [2, 96], strides = [1, 1]} : vector<2x128xf32> to vector<2x96xf32>
    %426 = arith.negf %425 : vector<2x96xf32>
    %427 = math.exp %426 : vector<2x96xf32>
    %cst_67 = arith.constant 1.000000e+00 : f32
    %428 = vector.broadcast %cst_67 : f32 to vector<2x96xf32>
    %429 = arith.addf %428, %427 : vector<2x96xf32>
    %430 = arith.divf %428, %429 : vector<2x96xf32>
    %431 = vector.extract_strided_slice %430 {offsets = [0, 0], sizes = [2, 32], strides = [1, 1]} : vector<2x96xf32> to vector<2x32xf32>
    %432 = vector.extract_strided_slice %430 {offsets = [0, 32], sizes = [2, 32], strides = [1, 1]} : vector<2x96xf32> to vector<2x32xf32>
    %433 = vector.extract_strided_slice %430 {offsets = [0, 64], sizes = [2, 32], strides = [1, 1]} : vector<2x96xf32> to vector<2x32xf32>
    %434 = vector.extract_strided_slice %418 {offsets = [0, 96], sizes = [2, 32], strides = [1, 1]} : vector<2x128xf32> to vector<2x32xf32>
    %435 = math.tanh %434 : vector<2x32xf32>
    %436 = arith.mulf %432, %423 : vector<2x32xf32>
    %437 = arith.mulf %431, %435 : vector<2x32xf32>
    %438 = arith.addf %436, %437 : vector<2x32xf32>
    %439 = math.tanh %438 : vector<2x32xf32>
    %440 = arith.mulf %433, %439 : vector<2x32xf32>
    %441 = tpu.concatenate %440, %423 in 1 : vector<2x32xf32>, vector<2x32xf32> -> vector<2x64xf32>
    %cst_68 = arith.constant dense<0.000000e+00> : vector<2x256xf32>
    %442 = tpu.matmul %441, %419, %cst_68 {dimension_numbers = #tpu.dot_dimension_numbers<[1], [0], [0], [1], [0, 0, 1, 1], [], []>} : vector<2x64xf32>, vector<64x256xf32>, vector<2x256xf32> -> vector<2x256xf32>
    %443 = vector.extract_strided_slice %442 {offsets = [0, 128], sizes = [2, 128], strides = [1, 1]} : vector<2x256xf32> to vector<2x128xf32>
    %444 = vector.broadcast %420 : vector<1x128xf32> to vector<2x128xf32>
    %445 = arith.addf %443, %444 : vector<2x128xf32>
    %446 = vector.extract_strided_slice %445 {offsets = [0, 0], sizes = [2, 96], strides = [1, 1]} : vector<2x128xf32> to vector<2x96xf32>
    %447 = arith.negf %446 : vector<2x96xf32>
    %448 = math.exp %447 : vector<2x96xf32>
    %cst_69 = arith.constant 1.000000e+00 : f32
    %449 = vector.broadcast %cst_69 : f32 to vector<2x96xf32>
    %450 = arith.addf %449, %448 : vector<2x96xf32>
    %451 = arith.divf %449, %450 : vector<2x96xf32>
    %452 = vector.extract_strided_slice %451 {offsets = [0, 0], sizes = [2, 32], strides = [1, 1]} : vector<2x96xf32> to vector<2x32xf32>
    %453 = vector.extract_strided_slice %451 {offsets = [0, 32], sizes = [2, 32], strides = [1, 1]} : vector<2x96xf32> to vector<2x32xf32>
    %454 = vector.extract_strided_slice %451 {offsets = [0, 64], sizes = [2, 32], strides = [1, 1]} : vector<2x96xf32> to vector<2x32xf32>
    %455 = vector.extract_strided_slice %445 {offsets = [0, 96], sizes = [2, 32], strides = [1, 1]} : vector<2x128xf32> to vector<2x32xf32>
    %456 = math.tanh %455 : vector<2x32xf32>
    %457 = arith.mulf %453, %423 : vector<2x32xf32>
    %458 = arith.mulf %452, %456 : vector<2x32xf32>
    %459 = arith.addf %457, %458 : vector<2x32xf32>
    %460 = math.tanh %459 : vector<2x32xf32>
    %461 = arith.mulf %454, %460 : vector<2x32xf32>
    %c0_70 = arith.constant 0 : index
    %c0_71 = arith.constant 0 : index
    %462 = vector.load %arg7[%c0_70, %c0_71] : memref<264x768xf32, #tpu.memory_space<vmem>>, vector<32x768xf32>
    %cst_72 = arith.constant dense<0.000000e+00> : vector<2x768xf32>
    %463 = tpu.matmul %461, %462, %cst_72 {dimension_numbers = #tpu.dot_dimension_numbers<[1], [0], [0], [1], [0, 0, 1, 1], [], []>} : vector<2x32xf32>, vector<32x768xf32>, vector<2x768xf32> -> vector<2x768xf32>
    %464 = arith.addf %424, %463 : vector<2x768xf32>
    %465 = vector.extract_strided_slice %442 {offsets = [0, 0], sizes = [2, 128], strides = [1, 1]} : vector<2x256xf32> to vector<2x128xf32>
    %466 = arith.addf %465, %418 : vector<2x128xf32>
    %467 = vector.extract_strided_slice %466 {offsets = [0, 0], sizes = [2, 96], strides = [1, 1]} : vector<2x128xf32> to vector<2x96xf32>
    %468 = arith.negf %467 : vector<2x96xf32>
    %469 = math.exp %468 : vector<2x96xf32>
    %cst_73 = arith.constant 1.000000e+00 : f32
    %470 = vector.broadcast %cst_73 : f32 to vector<2x96xf32>
    %471 = arith.addf %470, %469 : vector<2x96xf32>
    %472 = arith.divf %470, %471 : vector<2x96xf32>
    %473 = vector.extract_strided_slice %472 {offsets = [0, 0], sizes = [2, 32], strides = [1, 1]} : vector<2x96xf32> to vector<2x32xf32>
    %474 = vector.extract_strided_slice %472 {offsets = [0, 32], sizes = [2, 32], strides = [1, 1]} : vector<2x96xf32> to vector<2x32xf32>
    %475 = vector.extract_strided_slice %472 {offsets = [0, 64], sizes = [2, 32], strides = [1, 1]} : vector<2x96xf32> to vector<2x32xf32>
    %476 = vector.extract_strided_slice %466 {offsets = [0, 96], sizes = [2, 32], strides = [1, 1]} : vector<2x128xf32> to vector<2x32xf32>
    %477 = math.tanh %476 : vector<2x32xf32>
    %478 = arith.mulf %474, %438 : vector<2x32xf32>
    %479 = arith.mulf %473, %477 : vector<2x32xf32>
    %480 = arith.addf %478, %479 : vector<2x32xf32>
    %481 = math.tanh %480 : vector<2x32xf32>
    %482 = arith.mulf %475, %481 : vector<2x32xf32>
    %483 = tpu.concatenate %482, %461 in 1 : vector<2x32xf32>, vector<2x32xf32> -> vector<2x64xf32>
    %cst_74 = arith.constant dense<0.000000e+00> : vector<2x256xf32>
    %484 = tpu.matmul %483, %419, %cst_74 {dimension_numbers = #tpu.dot_dimension_numbers<[1], [0], [0], [1], [0, 0, 1, 1], [], []>} : vector<2x64xf32>, vector<64x256xf32>, vector<2x256xf32> -> vector<2x256xf32>
    %485 = vector.extract_strided_slice %484 {offsets = [0, 128], sizes = [2, 128], strides = [1, 1]} : vector<2x256xf32> to vector<2x128xf32>
    %486 = vector.broadcast %420 : vector<1x128xf32> to vector<2x128xf32>
    %487 = arith.addf %485, %486 : vector<2x128xf32>
    %488 = vector.extract_strided_slice %487 {offsets = [0, 0], sizes = [2, 96], strides = [1, 1]} : vector<2x128xf32> to vector<2x96xf32>
    %489 = arith.negf %488 : vector<2x96xf32>
    %490 = math.exp %489 : vector<2x96xf32>
    %cst_75 = arith.constant 1.000000e+00 : f32
    %491 = vector.broadcast %cst_75 : f32 to vector<2x96xf32>
    %492 = arith.addf %491, %490 : vector<2x96xf32>
    %493 = arith.divf %491, %492 : vector<2x96xf32>
    %494 = vector.extract_strided_slice %493 {offsets = [0, 0], sizes = [2, 32], strides = [1, 1]} : vector<2x96xf32> to vector<2x32xf32>
    %495 = vector.extract_strided_slice %493 {offsets = [0, 32], sizes = [2, 32], strides = [1, 1]} : vector<2x96xf32> to vector<2x32xf32>
    %496 = vector.extract_strided_slice %493 {offsets = [0, 64], sizes = [2, 32], strides = [1, 1]} : vector<2x96xf32> to vector<2x32xf32>
    %497 = vector.extract_strided_slice %487 {offsets = [0, 96], sizes = [2, 32], strides = [1, 1]} : vector<2x128xf32> to vector<2x32xf32>
    %498 = math.tanh %497 : vector<2x32xf32>
    %499 = arith.mulf %495, %459 : vector<2x32xf32>
    %500 = arith.mulf %494, %498 : vector<2x32xf32>
    %501 = arith.addf %499, %500 : vector<2x32xf32>
    %502 = math.tanh %501 : vector<2x32xf32>
    %503 = arith.mulf %496, %502 : vector<2x32xf32>
    %c32 = arith.constant 32 : index
    %c0_76 = arith.constant 0 : index
    %504 = vector.load %arg7[%c32, %c0_76] : memref<264x768xf32, #tpu.memory_space<vmem>>, vector<32x768xf32>
    %cst_77 = arith.constant dense<0.000000e+00> : vector<2x768xf32>
    %505 = tpu.matmul %503, %504, %cst_77 {dimension_numbers = #tpu.dot_dimension_numbers<[1], [0], [0], [1], [0, 0, 1, 1], [], []>} : vector<2x32xf32>, vector<32x768xf32>, vector<2x768xf32> -> vector<2x768xf32>
    %506 = arith.addf %464, %505 : vector<2x768xf32>
    %507 = vector.extract_strided_slice %484 {offsets = [0, 0], sizes = [2, 128], strides = [1, 1]} : vector<2x256xf32> to vector<2x128xf32>
    %508 = arith.addf %507, %418 : vector<2x128xf32>
    %509 = vector.extract_strided_slice %508 {offsets = [0, 0], sizes = [2, 96], strides = [1, 1]} : vector<2x128xf32> to vector<2x96xf32>
    %510 = arith.negf %509 : vector<2x96xf32>
    %511 = math.exp %510 : vector<2x96xf32>
    %cst_78 = arith.constant 1.000000e+00 : f32
    %512 = vector.broadcast %cst_78 : f32 to vector<2x96xf32>
    %513 = arith.addf %512, %511 : vector<2x96xf32>
    %514 = arith.divf %512, %513 : vector<2x96xf32>
    %515 = vector.extract_strided_slice %514 {offsets = [0, 0], sizes = [2, 32], strides = [1, 1]} : vector<2x96xf32> to vector<2x32xf32>
    %516 = vector.extract_strided_slice %514 {offsets = [0, 32], sizes = [2, 32], strides = [1, 1]} : vector<2x96xf32> to vector<2x32xf32>
    %517 = vector.extract_strided_slice %514 {offsets = [0, 64], sizes = [2, 32], strides = [1, 1]} : vector<2x96xf32> to vector<2x32xf32>
    %518 = vector.extract_strided_slice %508 {offsets = [0, 96], sizes = [2, 32], strides = [1, 1]} : vector<2x128xf32> to vector<2x32xf32>
    %519 = math.tanh %518 : vector<2x32xf32>
    %520 = arith.mulf %516, %480 : vector<2x32xf32>
    %521 = arith.mulf %515, %519 : vector<2x32xf32>
    %522 = arith.addf %520, %521 : vector<2x32xf32>
    %523 = math.tanh %522 : vector<2x32xf32>
    %524 = arith.mulf %517, %523 : vector<2x32xf32>
    %525 = tpu.concatenate %524, %503 in 1 : vector<2x32xf32>, vector<2x32xf32> -> vector<2x64xf32>
    %cst_79 = arith.constant dense<0.000000e+00> : vector<2x256xf32>
    %526 = tpu.matmul %525, %419, %cst_79 {dimension_numbers = #tpu.dot_dimension_numbers<[1], [0], [0], [1], [0, 0, 1, 1], [], []>} : vector<2x64xf32>, vector<64x256xf32>, vector<2x256xf32> -> vector<2x256xf32>
    %527 = vector.extract_strided_slice %526 {offsets = [0, 128], sizes = [2, 128], strides = [1, 1]} : vector<2x256xf32> to vector<2x128xf32>
    %528 = vector.broadcast %420 : vector<1x128xf32> to vector<2x128xf32>
    %529 = arith.addf %527, %528 : vector<2x128xf32>
    %530 = vector.extract_strided_slice %529 {offsets = [0, 0], sizes = [2, 96], strides = [1, 1]} : vector<2x128xf32> to vector<2x96xf32>
    %531 = arith.negf %530 : vector<2x96xf32>
    %532 = math.exp %531 : vector<2x96xf32>
    %cst_80 = arith.constant 1.000000e+00 : f32
    %533 = vector.broadcast %cst_80 : f32 to vector<2x96xf32>
    %534 = arith.addf %533, %532 : vector<2x96xf32>
    %535 = arith.divf %533, %534 : vector<2x96xf32>
    %536 = vector.extract_strided_slice %535 {offsets = [0, 0], sizes = [2, 32], strides = [1, 1]} : vector<2x96xf32> to vector<2x32xf32>
    %537 = vector.extract_strided_slice %535 {offsets = [0, 32], sizes = [2, 32], strides = [1, 1]} : vector<2x96xf32> to vector<2x32xf32>
    %538 = vector.extract_strided_slice %535 {offsets = [0, 64], sizes = [2, 32], strides = [1, 1]} : vector<2x96xf32> to vector<2x32xf32>
    %539 = vector.extract_strided_slice %529 {offsets = [0, 96], sizes = [2, 32], strides = [1, 1]} : vector<2x128xf32> to vector<2x32xf32>
    %540 = math.tanh %539 : vector<2x32xf32>
    %541 = arith.mulf %537, %501 : vector<2x32xf32>
    %542 = arith.mulf %536, %540 : vector<2x32xf32>
    %543 = arith.addf %541, %542 : vector<2x32xf32>
    %544 = math.tanh %543 : vector<2x32xf32>
    %545 = arith.mulf %538, %544 : vector<2x32xf32>
    %c64_81 = arith.constant 64 : index
    %c0_82 = arith.constant 0 : index
    %546 = vector.load %arg7[%c64_81, %c0_82] : memref<264x768xf32, #tpu.memory_space<vmem>>, vector<32x768xf32>
    %cst_83 = arith.constant dense<0.000000e+00> : vector<2x768xf32>
    %547 = tpu.matmul %545, %546, %cst_83 {dimension_numbers = #tpu.dot_dimension_numbers<[1], [0], [0], [1], [0, 0, 1, 1], [], []>} : vector<2x32xf32>, vector<32x768xf32>, vector<2x768xf32> -> vector<2x768xf32>
    %548 = arith.addf %506, %547 : vector<2x768xf32>
    %549 = vector.extract_strided_slice %526 {offsets = [0, 0], sizes = [2, 128], strides = [1, 1]} : vector<2x256xf32> to vector<2x128xf32>
    %550 = arith.addf %549, %418 : vector<2x128xf32>
    %551 = vector.extract_strided_slice %550 {offsets = [0, 0], sizes = [2, 96], strides = [1, 1]} : vector<2x128xf32> to vector<2x96xf32>
    %552 = arith.negf %551 : vector<2x96xf32>
    %553 = math.exp %552 : vector<2x96xf32>
    %cst_84 = arith.constant 1.000000e+00 : f32
    %554 = vector.broadcast %cst_84 : f32 to vector<2x96xf32>
    %555 = arith.addf %554, %553 : vector<2x96xf32>
    %556 = arith.divf %554, %555 : vector<2x96xf32>
    %557 = vector.extract_strided_slice %556 {offsets = [0, 0], sizes = [2, 32], strides = [1, 1]} : vector<2x96xf32> to vector<2x32xf32>
    %558 = vector.extract_strided_slice %556 {offsets = [0, 32], sizes = [2, 32], strides = [1, 1]} : vector<2x96xf32> to vector<2x32xf32>
    %559 = vector.extract_strided_slice %556 {offsets = [0, 64], sizes = [2, 32], strides = [1, 1]} : vector<2x96xf32> to vector<2x32xf32>
    %560 = vector.extract_strided_slice %550 {offsets = [0, 96], sizes = [2, 32], strides = [1, 1]} : vector<2x128xf32> to vector<2x32xf32>
    %561 = math.tanh %560 : vector<2x32xf32>
    %562 = arith.mulf %558, %522 : vector<2x32xf32>
    %563 = arith.mulf %557, %561 : vector<2x32xf32>
    %564 = arith.addf %562, %563 : vector<2x32xf32>
    %565 = math.tanh %564 : vector<2x32xf32>
    %566 = arith.mulf %559, %565 : vector<2x32xf32>
    %567 = tpu.concatenate %566, %545 in 1 : vector<2x32xf32>, vector<2x32xf32> -> vector<2x64xf32>
    %cst_85 = arith.constant dense<0.000000e+00> : vector<2x256xf32>
    %568 = tpu.matmul %567, %419, %cst_85 {dimension_numbers = #tpu.dot_dimension_numbers<[1], [0], [0], [1], [0, 0, 1, 1], [], []>} : vector<2x64xf32>, vector<64x256xf32>, vector<2x256xf32> -> vector<2x256xf32>
    %569 = vector.extract_strided_slice %568 {offsets = [0, 128], sizes = [2, 128], strides = [1, 1]} : vector<2x256xf32> to vector<2x128xf32>
    %570 = vector.broadcast %420 : vector<1x128xf32> to vector<2x128xf32>
    %571 = arith.addf %569, %570 : vector<2x128xf32>
    %572 = vector.extract_strided_slice %571 {offsets = [0, 0], sizes = [2, 96], strides = [1, 1]} : vector<2x128xf32> to vector<2x96xf32>
    %573 = arith.negf %572 : vector<2x96xf32>
    %574 = math.exp %573 : vector<2x96xf32>
    %cst_86 = arith.constant 1.000000e+00 : f32
    %575 = vector.broadcast %cst_86 : f32 to vector<2x96xf32>
    %576 = arith.addf %575, %574 : vector<2x96xf32>
    %577 = arith.divf %575, %576 : vector<2x96xf32>
    %578 = vector.extract_strided_slice %577 {offsets = [0, 0], sizes = [2, 32], strides = [1, 1]} : vector<2x96xf32> to vector<2x32xf32>
    %579 = vector.extract_strided_slice %577 {offsets = [0, 32], sizes = [2, 32], strides = [1, 1]} : vector<2x96xf32> to vector<2x32xf32>
    %580 = vector.extract_strided_slice %577 {offsets = [0, 64], sizes = [2, 32], strides = [1, 1]} : vector<2x96xf32> to vector<2x32xf32>
    %581 = vector.extract_strided_slice %571 {offsets = [0, 96], sizes = [2, 32], strides = [1, 1]} : vector<2x128xf32> to vector<2x32xf32>
    %582 = math.tanh %581 : vector<2x32xf32>
    %583 = arith.mulf %579, %543 : vector<2x32xf32>
    %584 = arith.mulf %578, %582 : vector<2x32xf32>
    %585 = arith.addf %583, %584 : vector<2x32xf32>
    %586 = math.tanh %585 : vector<2x32xf32>
    %587 = arith.mulf %580, %586 : vector<2x32xf32>
    %c96 = arith.constant 96 : index
    %c0_87 = arith.constant 0 : index
    %588 = vector.load %arg7[%c96, %c0_87] : memref<264x768xf32, #tpu.memory_space<vmem>>, vector<32x768xf32>
    %cst_88 = arith.constant dense<0.000000e+00> : vector<2x768xf32>
    %589 = tpu.matmul %587, %588, %cst_88 {dimension_numbers = #tpu.dot_dimension_numbers<[1], [0], [0], [1], [0, 0, 1, 1], [], []>} : vector<2x32xf32>, vector<32x768xf32>, vector<2x768xf32> -> vector<2x768xf32>
    %590 = arith.addf %548, %589 : vector<2x768xf32>
    %591 = vector.extract_strided_slice %568 {offsets = [0, 0], sizes = [2, 128], strides = [1, 1]} : vector<2x256xf32> to vector<2x128xf32>
    %592 = arith.addf %591, %418 : vector<2x128xf32>
    %593 = vector.extract_strided_slice %592 {offsets = [0, 0], sizes = [2, 96], strides = [1, 1]} : vector<2x128xf32> to vector<2x96xf32>
    %594 = arith.negf %593 : vector<2x96xf32>
    %595 = math.exp %594 : vector<2x96xf32>
    %cst_89 = arith.constant 1.000000e+00 : f32
    %596 = vector.broadcast %cst_89 : f32 to vector<2x96xf32>
    %597 = arith.addf %596, %595 : vector<2x96xf32>
    %598 = arith.divf %596, %597 : vector<2x96xf32>
    %599 = vector.extract_strided_slice %598 {offsets = [0, 0], sizes = [2, 32], strides = [1, 1]} : vector<2x96xf32> to vector<2x32xf32>
    %600 = vector.extract_strided_slice %598 {offsets = [0, 32], sizes = [2, 32], strides = [1, 1]} : vector<2x96xf32> to vector<2x32xf32>
    %601 = vector.extract_strided_slice %598 {offsets = [0, 64], sizes = [2, 32], strides = [1, 1]} : vector<2x96xf32> to vector<2x32xf32>
    %602 = vector.extract_strided_slice %592 {offsets = [0, 96], sizes = [2, 32], strides = [1, 1]} : vector<2x128xf32> to vector<2x32xf32>
    %603 = math.tanh %602 : vector<2x32xf32>
    %604 = arith.mulf %600, %564 : vector<2x32xf32>
    %605 = arith.mulf %599, %603 : vector<2x32xf32>
    %606 = arith.addf %604, %605 : vector<2x32xf32>
    %607 = math.tanh %606 : vector<2x32xf32>
    %608 = arith.mulf %601, %607 : vector<2x32xf32>
    %609 = tpu.concatenate %608, %587 in 1 : vector<2x32xf32>, vector<2x32xf32> -> vector<2x64xf32>
    %cst_90 = arith.constant dense<0.000000e+00> : vector<2x256xf32>
    %610 = tpu.matmul %609, %419, %cst_90 {dimension_numbers = #tpu.dot_dimension_numbers<[1], [0], [0], [1], [0, 0, 1, 1], [], []>} : vector<2x64xf32>, vector<64x256xf32>, vector<2x256xf32> -> vector<2x256xf32>
    %611 = vector.extract_strided_slice %610 {offsets = [0, 128], sizes = [2, 128], strides = [1, 1]} : vector<2x256xf32> to vector<2x128xf32>
    %612 = vector.broadcast %420 : vector<1x128xf32> to vector<2x128xf32>
    %613 = arith.addf %611, %612 : vector<2x128xf32>
    %614 = vector.extract_strided_slice %613 {offsets = [0, 0], sizes = [2, 96], strides = [1, 1]} : vector<2x128xf32> to vector<2x96xf32>
    %615 = arith.negf %614 : vector<2x96xf32>
    %616 = math.exp %615 : vector<2x96xf32>
    %cst_91 = arith.constant 1.000000e+00 : f32
    %617 = vector.broadcast %cst_91 : f32 to vector<2x96xf32>
    %618 = arith.addf %617, %616 : vector<2x96xf32>
    %619 = arith.divf %617, %618 : vector<2x96xf32>
    %620 = vector.extract_strided_slice %619 {offsets = [0, 0], sizes = [2, 32], strides = [1, 1]} : vector<2x96xf32> to vector<2x32xf32>
    %621 = vector.extract_strided_slice %619 {offsets = [0, 32], sizes = [2, 32], strides = [1, 1]} : vector<2x96xf32> to vector<2x32xf32>
    %622 = vector.extract_strided_slice %619 {offsets = [0, 64], sizes = [2, 32], strides = [1, 1]} : vector<2x96xf32> to vector<2x32xf32>
    %623 = vector.extract_strided_slice %613 {offsets = [0, 96], sizes = [2, 32], strides = [1, 1]} : vector<2x128xf32> to vector<2x32xf32>
    %624 = math.tanh %623 : vector<2x32xf32>
    %625 = arith.mulf %621, %585 : vector<2x32xf32>
    %626 = arith.mulf %620, %624 : vector<2x32xf32>
    %627 = arith.addf %625, %626 : vector<2x32xf32>
    %628 = math.tanh %627 : vector<2x32xf32>
    %629 = arith.mulf %622, %628 : vector<2x32xf32>
    %c128 = arith.constant 128 : index
    %c0_92 = arith.constant 0 : index
    %630 = vector.load %arg7[%c128, %c0_92] : memref<264x768xf32, #tpu.memory_space<vmem>>, vector<32x768xf32>
    %cst_93 = arith.constant dense<0.000000e+00> : vector<2x768xf32>
    %631 = tpu.matmul %629, %630, %cst_93 {dimension_numbers = #tpu.dot_dimension_numbers<[1], [0], [0], [1], [0, 0, 1, 1], [], []>} : vector<2x32xf32>, vector<32x768xf32>, vector<2x768xf32> -> vector<2x768xf32>
    %632 = arith.addf %590, %631 : vector<2x768xf32>
    %633 = vector.extract_strided_slice %610 {offsets = [0, 0], sizes = [2, 128], strides = [1, 1]} : vector<2x256xf32> to vector<2x128xf32>
    %634 = arith.addf %633, %418 : vector<2x128xf32>
    %635 = vector.extract_strided_slice %634 {offsets = [0, 0], sizes = [2, 96], strides = [1, 1]} : vector<2x128xf32> to vector<2x96xf32>
    %636 = arith.negf %635 : vector<2x96xf32>
    %637 = math.exp %636 : vector<2x96xf32>
    %cst_94 = arith.constant 1.000000e+00 : f32
    %638 = vector.broadcast %cst_94 : f32 to vector<2x96xf32>
    %639 = arith.addf %638, %637 : vector<2x96xf32>
    %640 = arith.divf %638, %639 : vector<2x96xf32>
    %641 = vector.extract_strided_slice %640 {offsets = [0, 0], sizes = [2, 32], strides = [1, 1]} : vector<2x96xf32> to vector<2x32xf32>
    %642 = vector.extract_strided_slice %640 {offsets = [0, 32], sizes = [2, 32], strides = [1, 1]} : vector<2x96xf32> to vector<2x32xf32>
    %643 = vector.extract_strided_slice %640 {offsets = [0, 64], sizes = [2, 32], strides = [1, 1]} : vector<2x96xf32> to vector<2x32xf32>
    %644 = vector.extract_strided_slice %634 {offsets = [0, 96], sizes = [2, 32], strides = [1, 1]} : vector<2x128xf32> to vector<2x32xf32>
    %645 = math.tanh %644 : vector<2x32xf32>
    %646 = arith.mulf %642, %606 : vector<2x32xf32>
    %647 = arith.mulf %641, %645 : vector<2x32xf32>
    %648 = arith.addf %646, %647 : vector<2x32xf32>
    %649 = math.tanh %648 : vector<2x32xf32>
    %650 = arith.mulf %643, %649 : vector<2x32xf32>
    %651 = tpu.concatenate %650, %629 in 1 : vector<2x32xf32>, vector<2x32xf32> -> vector<2x64xf32>
    %cst_95 = arith.constant dense<0.000000e+00> : vector<2x256xf32>
    %652 = tpu.matmul %651, %419, %cst_95 {dimension_numbers = #tpu.dot_dimension_numbers<[1], [0], [0], [1], [0, 0, 1, 1], [], []>} : vector<2x64xf32>, vector<64x256xf32>, vector<2x256xf32> -> vector<2x256xf32>
    %653 = vector.extract_strided_slice %652 {offsets = [0, 128], sizes = [2, 128], strides = [1, 1]} : vector<2x256xf32> to vector<2x128xf32>
    %654 = vector.broadcast %420 : vector<1x128xf32> to vector<2x128xf32>
    %655 = arith.addf %653, %654 : vector<2x128xf32>
    %656 = vector.extract_strided_slice %655 {offsets = [0, 0], sizes = [2, 96], strides = [1, 1]} : vector<2x128xf32> to vector<2x96xf32>
    %657 = arith.negf %656 : vector<2x96xf32>
    %658 = math.exp %657 : vector<2x96xf32>
    %cst_96 = arith.constant 1.000000e+00 : f32
    %659 = vector.broadcast %cst_96 : f32 to vector<2x96xf32>
    %660 = arith.addf %659, %658 : vector<2x96xf32>
    %661 = arith.divf %659, %660 : vector<2x96xf32>
    %662 = vector.extract_strided_slice %661 {offsets = [0, 0], sizes = [2, 32], strides = [1, 1]} : vector<2x96xf32> to vector<2x32xf32>
    %663 = vector.extract_strided_slice %661 {offsets = [0, 32], sizes = [2, 32], strides = [1, 1]} : vector<2x96xf32> to vector<2x32xf32>
    %664 = vector.extract_strided_slice %661 {offsets = [0, 64], sizes = [2, 32], strides = [1, 1]} : vector<2x96xf32> to vector<2x32xf32>
    %665 = vector.extract_strided_slice %655 {offsets = [0, 96], sizes = [2, 32], strides = [1, 1]} : vector<2x128xf32> to vector<2x32xf32>
    %666 = math.tanh %665 : vector<2x32xf32>
    %667 = arith.mulf %663, %627 : vector<2x32xf32>
    %668 = arith.mulf %662, %666 : vector<2x32xf32>
    %669 = arith.addf %667, %668 : vector<2x32xf32>
    %670 = math.tanh %669 : vector<2x32xf32>
    %671 = arith.mulf %664, %670 : vector<2x32xf32>
    %c160 = arith.constant 160 : index
    %c0_97 = arith.constant 0 : index
    %672 = vector.load %arg7[%c160, %c0_97] : memref<264x768xf32, #tpu.memory_space<vmem>>, vector<32x768xf32>
    %cst_98 = arith.constant dense<0.000000e+00> : vector<2x768xf32>
    %673 = tpu.matmul %671, %672, %cst_98 {dimension_numbers = #tpu.dot_dimension_numbers<[1], [0], [0], [1], [0, 0, 1, 1], [], []>} : vector<2x32xf32>, vector<32x768xf32>, vector<2x768xf32> -> vector<2x768xf32>
    %674 = arith.addf %632, %673 : vector<2x768xf32>
    %675 = vector.extract_strided_slice %652 {offsets = [0, 0], sizes = [2, 128], strides = [1, 1]} : vector<2x256xf32> to vector<2x128xf32>
    %676 = arith.addf %675, %418 : vector<2x128xf32>
    %677 = vector.extract_strided_slice %676 {offsets = [0, 0], sizes = [2, 96], strides = [1, 1]} : vector<2x128xf32> to vector<2x96xf32>
    %678 = arith.negf %677 : vector<2x96xf32>
    %679 = math.exp %678 : vector<2x96xf32>
    %cst_99 = arith.constant 1.000000e+00 : f32
    %680 = vector.broadcast %cst_99 : f32 to vector<2x96xf32>
    %681 = arith.addf %680, %679 : vector<2x96xf32>
    %682 = arith.divf %680, %681 : vector<2x96xf32>
    %683 = vector.extract_strided_slice %682 {offsets = [0, 0], sizes = [2, 32], strides = [1, 1]} : vector<2x96xf32> to vector<2x32xf32>
    %684 = vector.extract_strided_slice %682 {offsets = [0, 32], sizes = [2, 32], strides = [1, 1]} : vector<2x96xf32> to vector<2x32xf32>
    %685 = vector.extract_strided_slice %682 {offsets = [0, 64], sizes = [2, 32], strides = [1, 1]} : vector<2x96xf32> to vector<2x32xf32>
    %686 = vector.extract_strided_slice %676 {offsets = [0, 96], sizes = [2, 32], strides = [1, 1]} : vector<2x128xf32> to vector<2x32xf32>
    %687 = math.tanh %686 : vector<2x32xf32>
    %688 = arith.mulf %684, %648 : vector<2x32xf32>
    %689 = arith.mulf %683, %687 : vector<2x32xf32>
    %690 = arith.addf %688, %689 : vector<2x32xf32>
    %691 = math.tanh %690 : vector<2x32xf32>
    %692 = arith.mulf %685, %691 : vector<2x32xf32>
    %693 = tpu.concatenate %692, %671 in 1 : vector<2x32xf32>, vector<2x32xf32> -> vector<2x64xf32>
    %cst_100 = arith.constant dense<0.000000e+00> : vector<2x256xf32>
    %694 = tpu.matmul %693, %419, %cst_100 {dimension_numbers = #tpu.dot_dimension_numbers<[1], [0], [0], [1], [0, 0, 1, 1], [], []>} : vector<2x64xf32>, vector<64x256xf32>, vector<2x256xf32> -> vector<2x256xf32>
    %695 = vector.extract_strided_slice %694 {offsets = [0, 128], sizes = [2, 128], strides = [1, 1]} : vector<2x256xf32> to vector<2x128xf32>
    %696 = vector.broadcast %420 : vector<1x128xf32> to vector<2x128xf32>
    %697 = arith.addf %695, %696 : vector<2x128xf32>
    %698 = vector.extract_strided_slice %697 {offsets = [0, 0], sizes = [2, 96], strides = [1, 1]} : vector<2x128xf32> to vector<2x96xf32>
    %699 = arith.negf %698 : vector<2x96xf32>
    %700 = math.exp %699 : vector<2x96xf32>
    %cst_101 = arith.constant 1.000000e+00 : f32
    %701 = vector.broadcast %cst_101 : f32 to vector<2x96xf32>
    %702 = arith.addf %701, %700 : vector<2x96xf32>
    %703 = arith.divf %701, %702 : vector<2x96xf32>
    %704 = vector.extract_strided_slice %703 {offsets = [0, 0], sizes = [2, 32], strides = [1, 1]} : vector<2x96xf32> to vector<2x32xf32>
    %705 = vector.extract_strided_slice %703 {offsets = [0, 32], sizes = [2, 32], strides = [1, 1]} : vector<2x96xf32> to vector<2x32xf32>
    %706 = vector.extract_strided_slice %703 {offsets = [0, 64], sizes = [2, 32], strides = [1, 1]} : vector<2x96xf32> to vector<2x32xf32>
    %707 = vector.extract_strided_slice %697 {offsets = [0, 96], sizes = [2, 32], strides = [1, 1]} : vector<2x128xf32> to vector<2x32xf32>
    %708 = math.tanh %707 : vector<2x32xf32>
    %709 = arith.mulf %705, %669 : vector<2x32xf32>
    %710 = arith.mulf %704, %708 : vector<2x32xf32>
    %711 = arith.addf %709, %710 : vector<2x32xf32>
    %712 = math.tanh %711 : vector<2x32xf32>
    %713 = arith.mulf %706, %712 : vector<2x32xf32>
    %c192 = arith.constant 192 : index
    %c0_102 = arith.constant 0 : index
    %714 = vector.load %arg7[%c192, %c0_102] : memref<264x768xf32, #tpu.memory_space<vmem>>, vector<32x768xf32>
    %cst_103 = arith.constant dense<0.000000e+00> : vector<2x768xf32>
    %715 = tpu.matmul %713, %714, %cst_103 {dimension_numbers = #tpu.dot_dimension_numbers<[1], [0], [0], [1], [0, 0, 1, 1], [], []>} : vector<2x32xf32>, vector<32x768xf32>, vector<2x768xf32> -> vector<2x768xf32>
    %716 = arith.addf %674, %715 : vector<2x768xf32>
    %717 = vector.extract_strided_slice %694 {offsets = [0, 0], sizes = [2, 128], strides = [1, 1]} : vector<2x256xf32> to vector<2x128xf32>
    %718 = arith.addf %717, %418 : vector<2x128xf32>
    %719 = vector.extract_strided_slice %718 {offsets = [0, 0], sizes = [2, 96], strides = [1, 1]} : vector<2x128xf32> to vector<2x96xf32>
    %720 = arith.negf %719 : vector<2x96xf32>
    %721 = math.exp %720 : vector<2x96xf32>
    %cst_104 = arith.constant 1.000000e+00 : f32
    %722 = vector.broadcast %cst_104 : f32 to vector<2x96xf32>
    %723 = arith.addf %722, %721 : vector<2x96xf32>
    %724 = arith.divf %722, %723 : vector<2x96xf32>
    %725 = vector.extract_strided_slice %724 {offsets = [0, 0], sizes = [2, 32], strides = [1, 1]} : vector<2x96xf32> to vector<2x32xf32>
    %726 = vector.extract_strided_slice %724 {offsets = [0, 32], sizes = [2, 32], strides = [1, 1]} : vector<2x96xf32> to vector<2x32xf32>
    %727 = vector.extract_strided_slice %724 {offsets = [0, 64], sizes = [2, 32], strides = [1, 1]} : vector<2x96xf32> to vector<2x32xf32>
    %728 = vector.extract_strided_slice %718 {offsets = [0, 96], sizes = [2, 32], strides = [1, 1]} : vector<2x128xf32> to vector<2x32xf32>
    %729 = math.tanh %728 : vector<2x32xf32>
    %730 = arith.mulf %726, %690 : vector<2x32xf32>
    %731 = arith.mulf %725, %729 : vector<2x32xf32>
    %732 = arith.addf %730, %731 : vector<2x32xf32>
    %733 = math.tanh %732 : vector<2x32xf32>
    %734 = arith.mulf %727, %733 : vector<2x32xf32>
    %735 = tpu.concatenate %734, %713 in 1 : vector<2x32xf32>, vector<2x32xf32> -> vector<2x64xf32>
    %cst_105 = arith.constant dense<0.000000e+00> : vector<2x256xf32>
    %736 = tpu.matmul %735, %419, %cst_105 {dimension_numbers = #tpu.dot_dimension_numbers<[1], [0], [0], [1], [0, 0, 1, 1], [], []>} : vector<2x64xf32>, vector<64x256xf32>, vector<2x256xf32> -> vector<2x256xf32>
    %737 = vector.extract_strided_slice %736 {offsets = [0, 128], sizes = [2, 128], strides = [1, 1]} : vector<2x256xf32> to vector<2x128xf32>
    %738 = vector.broadcast %420 : vector<1x128xf32> to vector<2x128xf32>
    %739 = arith.addf %737, %738 : vector<2x128xf32>
    %740 = vector.extract_strided_slice %739 {offsets = [0, 0], sizes = [2, 96], strides = [1, 1]} : vector<2x128xf32> to vector<2x96xf32>
    %741 = arith.negf %740 : vector<2x96xf32>
    %742 = math.exp %741 : vector<2x96xf32>
    %cst_106 = arith.constant 1.000000e+00 : f32
    %743 = vector.broadcast %cst_106 : f32 to vector<2x96xf32>
    %744 = arith.addf %743, %742 : vector<2x96xf32>
    %745 = arith.divf %743, %744 : vector<2x96xf32>
    %746 = vector.extract_strided_slice %745 {offsets = [0, 0], sizes = [2, 32], strides = [1, 1]} : vector<2x96xf32> to vector<2x32xf32>
    %747 = vector.extract_strided_slice %745 {offsets = [0, 32], sizes = [2, 32], strides = [1, 1]} : vector<2x96xf32> to vector<2x32xf32>
    %748 = vector.extract_strided_slice %745 {offsets = [0, 64], sizes = [2, 32], strides = [1, 1]} : vector<2x96xf32> to vector<2x32xf32>
    %749 = vector.extract_strided_slice %739 {offsets = [0, 96], sizes = [2, 32], strides = [1, 1]} : vector<2x128xf32> to vector<2x32xf32>
    %750 = math.tanh %749 : vector<2x32xf32>
    %751 = arith.mulf %747, %711 : vector<2x32xf32>
    %752 = arith.mulf %746, %750 : vector<2x32xf32>
    %753 = arith.addf %751, %752 : vector<2x32xf32>
    %754 = math.tanh %753 : vector<2x32xf32>
    %755 = arith.mulf %748, %754 : vector<2x32xf32>
    %c224 = arith.constant 224 : index
    %c0_107 = arith.constant 0 : index
    %756 = vector.load %arg7[%c224, %c0_107] : memref<264x768xf32, #tpu.memory_space<vmem>>, vector<32x768xf32>
    %cst_108 = arith.constant dense<0.000000e+00> : vector<2x768xf32>
    %757 = tpu.matmul %755, %756, %cst_108 {dimension_numbers = #tpu.dot_dimension_numbers<[1], [0], [0], [1], [0, 0, 1, 1], [], []>} : vector<2x32xf32>, vector<32x768xf32>, vector<2x768xf32> -> vector<2x768xf32>
    %758 = arith.addf %716, %757 : vector<2x768xf32>
    %c256 = arith.constant 256 : index
    %c0_109 = arith.constant 0 : index
    %759 = vector.load %arg7[%c256, %c0_109] : memref<264x768xf32, #tpu.memory_space<vmem>>, vector<1x768xf32>
    %760 = vector.broadcast %759 : vector<1x768xf32> to vector<2x768xf32>
    %761 = arith.addf %758, %760 : vector<2x768xf32>
    %762 = vector.extract_strided_slice %761 {offsets = [0, 0], sizes = [2, 696], strides = [1, 1]} : vector<2x768xf32> to vector<2x696xf32>
    %cst_110 = arith.constant 0.000000e+00 : f32
    %763 = vector.broadcast %cst_110 : f32 to vector<2x40xf32>
    %764 = tpu.concatenate %762, %398, %763 in 1 : vector<2x696xf32>, vector<2x32xf32>, vector<2x40xf32> -> vector<2x768xf32>
    %c0_111 = arith.constant 0 : index
    %c0_112 = arith.constant 0 : index
    %765 = vector.load %arg6[%c0_111, %c0_112] : memref<2x768xf32, #tpu.memory_space<vmem>>, vector<2x768xf32>
    tpu.vector_store %arg6[%c0_111, %c0_112], %764 {strides = array<i32>} : memref<2x768xf32, #tpu.memory_space<vmem>>, vector<2x768xf32>,
    return
  }
}

</mosaic_0001>

<llo_original>
// kernel: vae_forward.1
$region0: #{vae_forward.1}
  #allocation0 [shape = 'u32[]', space=smem, size = 0x4, offset = 0x4, fixed_abs, tag = 'smem constant byte address 0x4 - core index']
  #allocation1 [shape = 'u32[144,128]{1,0:T(1,128)}', space=vmem, size = 0x12000, scoped, tag = 'internal scratch']
  #allocation2 [shape = 'f32[264,768]{1,0:T(8,128)}', space=vmem, size = 0xc6000, scoped, tag = 'scratch operand']
  #allocation3 [shape = 's32[1]{0}', space=sflag, size = 0x4, scoped, tag = 'scratch operand']
  #allocation6 [shape = 's32[]', space=sflag, size = 0x4, offset = 0, fixed_abs, tag = 'sflag constant byte address 0x0 - dummy sync flag']
  #allocation7 [shape = 's32[]', space=sflag, size = 0x4, offset = 0, fixed_abs, tag = 'sflag constant byte address 0x0 - dummy sync flag']
  #allocation8 [shape = 'u32[]', space=smem, size = 0x4, offset = 0x44, fixed_abs, tag = 'smem constant byte address 0x44 - assertion arg 0']
  #allocation9 [shape = 'u32[]', space=smem, size = 0x4, offset = 0x48, fixed_abs, tag = 'smem constant byte address 0x48 - assertion arg 1']
  %s0 = inlined_call_operand.vmem [shape: f32[2,8,87], index: 0, kind: input, shape index: {}]
  %s1 = inlined_call_operand.vmem [shape: f32[2,32], index: 1, kind: input, shape index: {}]
  %s2 = inlined_call_operand.vmem [shape: f32[2,16], index: 2, kind: input, shape index: {}]
  %s3 = inlined_call_operand.vmem [shape: f32[280,128], index: 3, kind: input, shape index: {}]
  %s4 = inlined_call_operand.hbm [shape: f32[128,256], index: 4, kind: input, shape index: {}]
  %s5 = inlined_call_operand.hbm [shape: f32[264,768], index: 5, kind: input, shape index: {}]
  %s6 = inlined_call_operand.vmem [shape: f32[2,768], index: 6, kind: output, shape index: {}]
  %s7 = sld [smem:[#allocation0]]
  $region38: #{vae_forward.1} parent=0
    _
  %s9 = ssub.s32 1, %s7
  %s10 = scalar_select 0, %s9, %s7
  $region1: #{vae_forward.1} parent=0
    #allocation4 [shape = 'u8[131072]{0}', space=vmem, size = 0x20000, scoped, tag = 'input window, operand 4, single buffered']
    #allocation5 [shape = 's32[1]{0}', space=sflag, size = 0x4, scoped, tag = 'scoped memory for vae_forward.1']
    %11 = vsyncpa [#allocation5], 0
    // Predicated region
    $region2: #{vae_forward.1} parent=1 // pred_check
      _
    $region3: #{vae_forward.1} parent=1 // pred_check_branch
      %13 = sbr.rel (0) target = $region5
    $region4: #{vae_forward.1} parent=1 // pred_region
      _
    $region5: #{vae_forward.1} parent=1 // pred_fallthru
      _
    // Predicated region
    $region6: #{vae_forward.1} parent=1 // pred_check
      _
    $region7: #{vae_forward.1} parent=1 // pred_check_branch
      %15 = sbr.rel (0) target = $region9
    $region8: #{vae_forward.1} parent=1 // pred_region
      _
    $region9: #{vae_forward.1} parent=1 // pred_fallthru
      _
    // Predicated region
    $region10: #{vae_forward.1} parent=1 // pred_check
      _
    $region11: #{vae_forward.1} parent=1 // pred_check_branch
      %17 = sbr.rel (0) target = $region13
    $region12: #{vae_forward.1} parent=1 // pred_region
      _
    $region13: #{vae_forward.1} parent=1 // pred_fallthru
      _
    // Predicated region
    $region14: #{vae_forward.1} parent=1 // pred_check
      _
    $region15: #{vae_forward.1} parent=1 // pred_check_branch
      %19 = sbr.rel (0) target = $region17
    $region16: #{vae_forward.1} parent=1 // pred_region
      _
    $region17: #{vae_forward.1} parent=1 // pred_fallthru
      _
    // Predicated region
    $region18: #{vae_forward.1} parent=1 // pred_check
      _
    $region19: #{vae_forward.1} parent=1 // pred_check_branch
      %21 = sbr.rel (0) target = $region21
    $region20: #{vae_forward.1} parent=1 // pred_region
      %s23 = ssub.s32 4096, 4096
      %24 = vsyncadd [#allocation5], %s23
      %s25 = sshll.u32 [#allocation4], 4
      %s26 = int_to_ptr.vmem [resolvable:$true] %s25
      %31 = dma.hbm_to_vmem [thread:$0]  %s4, 4096, %s26, [#allocation5], 256, 256, 16
    $region21: #{vae_forward.1} parent=1 // pred_fallthru
      _
    // Predicated region
    $region22: #{vae_forward.1} parent=1 // pred_check
      _
    $region23: #{vae_forward.1} parent=1 // pred_check_branch
      %33 = sbr.rel (0) target = $region25
    $region24: #{vae_forward.1} parent=1 // pred_region
      %34 = dma.done [#allocation5], 4096
    $region25: #{vae_forward.1} parent=1 // pred_fallthru
      _
    // Predicated region
    $region26: #{vae_forward.1} parent=1 // pred_check
      _
    $region27: #{vae_forward.1} parent=1 // pred_check_branch
      %36 = sbr.rel target = $region29
    $region28: #{vae_forward.1} parent=1 // pred_region
      %37 = sst [smem:[#allocation8]] [#allocation7]
      %38 = sst [smem:[#allocation9]] [#allocation6]
    $region29: #{vae_forward.1} parent=1 // pred_fallthru
      _
    %40 = shalt.err (0)
    %s42 = sshll.u32 [#allocation2], 4
    %s43 = int_to_ptr.vmem [resolvable:$true] %s42
    %45 = dma.hbm_to_vmem [thread:$0]  %s5, 25344, %s43, [#allocation3]
    %v46 = vld [vmem:[%s0] sm:$0xff]
    %v47 = vld [vmem:[%s0 + $0x8] sm:$0xff]
    %v48 = vld [vmem:[%s3] sm:$0xff]
    %v49 = vld [vmem:[%s3 + $0x8] sm:$0xff]
    %v50 = vld [vmem:[%s3 + $0x10] sm:$0xff]
    %v51 = vld [vmem:[%s3 + $0x18] sm:$0xff]
    %v52 = vld [vmem:[%s3 + $0x20] sm:$0xff]
    %v53 = vld [vmem:[%s3 + $0x28] sm:$0xff]
    %v54 = vld [vmem:[%s3 + $0x30] sm:$0xff]
    %v55 = vld [vmem:[%s3 + $0x38] sm:$0xff]
    %v56 = vld [vmem:[%s3 + $0x40] sm:$0xff]
    %v57 = vld [vmem:[%s3 + $0x48] sm:$0xff]
    %v58 = vld [vmem:[%s3 + $0x50] sm:$0x7f]
    %v59 = vld [vmem:[%s3 + $0x108] sm:$0x1]
    %v60 = vlaneseq
    %v61 = vshrl.u32 %v60, 7
    %v62 = vsub.s32 0, %v61
    %v63 = vrot.slane %v59, %v62
    %vm64 = vcmask 711680
    %v66 = vsel %vm64, %v46, 0
    %v69 = vsel %vm64, %v47, 0
    %vm71 = vcmask 1046528
    %v73 = vsel %vm71, %v58, 0
    %75 = vmatprep.subr.mxu0 0.0
    %76 = vmatpush1.msra.mxu0 %v48
    %77 = vmatprep.subr.mxu0 0.0
    %78 = vmatpush1.msra.mxu0 %v49
    %79 = vmatprep.subr.mxu0 0.0
    %80 = vmatpush1.msra.mxu0 %v50
    %81 = vmatprep.subr.mxu0 0.0
    %82 = vmatpush1.msra.mxu0 %v51
    %83 = vmatprep.subr.mxu0 0.0
    %84 = vmatpush1.msra.mxu0 %v52
    %85 = vmatprep.subr.mxu0 0.0
    %86 = vmatpush1.msra.mxu0 %v53
    %87 = vmatprep.subr.mxu0 0.0
    %88 = vmatpush1.msra.mxu0 %v54
    %89 = vmatprep.subr.mxu0 0.0
    %90 = vmatpush1.msra.mxu0 %v55
    %91 = vmatprep.subr.mxu0 0.0
    %92 = vmatpush1.msra.mxu0 %v56
    %93 = vmatprep.subr.mxu0 0.0
    %94 = vmatpush1.msra.mxu0 %v57
    %95 = vmatprep.subr.mxu0 0.0
    %96 = vmatpush1.msra.mxu0 %v73
    %97 = vmatprep.subr.mxu0 0.0
    %98 = vmatpush1.msra.mxu0 0.0
    %99 = vmatprep.subr.mxu0 0.0
    %100 = vmatpush1.msra.mxu0 0.0
    %101 = vmatprep.subr.mxu0 0.0
    %102 = vmatpush1.msra.mxu0 0.0
    %103 = vmatprep.subr.mxu0 0.0
    %104 = vmatpush1.msra.mxu0 0.0
    %105 = vmatprep.subr.mxu0 0.0
    %106 = vmatpush1.msra.mxu0 0.0
    %107 = vmatprep.subr.mxu0 0.0
    %108 = vmatpush1.msra.mxu0 0.0
    %109 = vmatprep.subr.mxu0 0.0
    %110 = vmatpush1.msra.mxu0 0.0
    %111 = vmatprep.subr.mxu0 0.0
    %112 = vmatpush1.msra.mxu0 0.0
    %113 = vmatprep.subr.mxu0 0.0
    %114 = vmatpush1.msra.mxu0 0.0
    %115 = vmatprep.subr.mxu0 0.0
    %116 = vmatpush1.msra.mxu0 0.0
    %117 = vmatprep.subr.mxu0 0.0
    %118 = vmatpush1.msra.mxu0 0.0
    %119 = vmatprep.subr.mxu0 0.0
    %120 = vmatpush1.msra.mxu0 0.0
    %121 = vmatprep.subr.mxu0 0.0
    %122 = vmatpush1.msra.mxu0 0.0
    %123 = vmatprep.subr.mxu0 0.0
    %124 = vmatpush1.msra.mxu0 0.0
    %125 = vmatprep.subr.mxu0 0.0
    %126 = vmatpush1.msra.mxu0 0.0
    %127 = vmatprep.subr.mxu0 0.0
    %128 = vmatpush1.msra.mxu0 0.0
    %129 = vmatprep.subr.mxu0 0.0
    %130 = vmatpush1.msra.mxu0 0.0
    %131 = vmatprep.subr.mxu0 0.0
    %132 = vmatpush1.msra.mxu0 0.0
    %133 = vmatprep.subr.mxu0 0.0
    %134 = vmatpush1.msra.mxu0 0.0
    %135 = vmatprep.subr.mxu0 0.0
    %136 = vmatpush1.msra.mxu0 0.0
    %137 = vmatprep.subr.mxu0 0.0
    %138 = vmatpush1.msra.mxu0 0.0
    %139 = vmatprep.mubr.f32.mxu0 0.0
    %140 = vmatmul.mubr.f32.gmra.mrb[0].mxu0 %v66
    %v141 = vpop.f32.mrb[0].mxu0
    %v142 = vadd.f32 %v63, %v141
    %v143 = vpop.f32.mrb[0].mxu0
    %144 = vmatprep.mubr.f32.mxu0 0.0
    %145 = vmatmul.mubr.f32.gmra.mrb[0].mxu0 %v69
    %v146 = vpop.f32.mrb[0].mxu0
    %v147 = vadd.f32 %v63, %v146
    %v148 = vpop.f32.mrb[0].mxu0
    %149 = vdwg.mxu0
    %v150 = vld [vmem:[%s1] sm:$0x3]
    %v153 = vunpack.c.l.s4 1966171168
    %v154 = vunpack.c.0.s8 %v153
    %v155 = vlaneseq
    %v156 = vshrl.u32 %v155, 7
    %v157 = vsub.s32 %v154, %v156
    %v158 = vrot.slane %v150, %v157
    %v159 = vcombine.high %v158, %v158
    %v161 = vunpack.c.l.s4 1966171168
    %v162 = vunpack.c.0.s8 %v161
    %v163 = vlaneseq
    %v164 = vshrl.u32 %v163, 7
    %v165 = vsub.s32 %v162, %v164
    %v166 = vrot.slane %v158, %v165
    %v168 = vunpack.c.l.s4 1966171168
    %v169 = vunpack.c.0.s8 %v168
    %v170 = vlaneseq
    %v171 = vshrl.u32 %v170, 7
    %v172 = vsub.s32 %v169, %v171
    %v173 = vrot.slane %v159, %v172
    %v174 = vlaneseq
    %v175 = vshrl.u32 %v174, 7
    %v176 = vsub.s32 0, %v175
    %v177 = vrot.slane %v166, %v176
    %v178 = vlaneseq
    %v179 = vshrl.u32 %v178, 7
    %v180 = vsub.s32 0, %v179
    %v181 = vrot.slane %v173, %v180
    %v184 = vadd.f32 %v142, %v177
    %v185 = vadd.f32 %v147, %v181
    %v186 = vld [vmem:[%s3 + $0x78] sm:$0xff]
    %v187 = vld [vmem:[%s3 + $0x80] sm:$0xff]
    %v188 = vld [vmem:[%s3 + $0x88] sm:$0xff]
    %v189 = vld [vmem:[%s3 + $0x90] sm:$0xff]
    %v190 = vld [vmem:[%s3 + $0x109] sm:$0x1]
    %v191 = vlaneseq
    %v192 = vshrl.u32 %v191, 7
    %v193 = vsub.s32 0, %v192
    %v194 = vrot.slane %v190, %v193
    %vm195 = vcmask 261120
    %v197 = vsel %vm195, %v184, 0
    %v200 = vsel %vm195, %v185, 0
    %202 = vmatprep.subr.mxu0 0.0
    %203 = vmatpush1.msra.mxu0 %v186
    %204 = vmatprep.subr.mxu0 0.0
    %205 = vmatpush1.msra.mxu0 %v187
    %206 = vmatprep.subr.mxu0 0.0
    %207 = vmatpush1.msra.mxu0 %v188
    %208 = vmatprep.subr.mxu0 0.0
    %209 = vmatpush1.msra.mxu0 %v189
    %210 = vmatprep.subr.mxu0 0.0
    %211 = vmatpush1.msra.mxu0 0.0
    %212 = vmatprep.subr.mxu0 0.0
    %213 = vmatpush1.msra.mxu0 0.0
    %214 = vmatprep.subr.mxu0 0.0
    %215 = vmatpush1.msra.mxu0 0.0
    %216 = vmatprep.subr.mxu0 0.0
    %217 = vmatpush1.msra.mxu0 0.0
    %218 = vmatprep.subr.mxu0 0.0
    %219 = vmatpush1.msra.mxu0 0.0
    %220 = vmatprep.subr.mxu0 0.0
    %221 = vmatpush1.msra.mxu0 0.0
    %222 = vmatprep.subr.mxu0 0.0
    %223 = vmatpush1.msra.mxu0 0.0
    %224 = vmatprep.subr.mxu0 0.0
    %225 = vmatpush1.msra.mxu0 0.0
    %226 = vmatprep.subr.mxu0 0.0
    %227 = vmatpush1.msra.mxu0 0.0
    %228 = vmatprep.subr.mxu0 0.0
    %229 = vmatpush1.msra.mxu0 0.0
    %230 = vmatprep.subr.mxu0 0.0
    %231 = vmatpush1.msra.mxu0 0.0
    %232 = vmatprep.subr.mxu0 0.0
    %233 = vmatpush1.msra.mxu0 0.0
    %234 = vmatprep.subr.mxu0 0.0
    %235 = vmatpush1.msra.mxu0 0.0
    %236 = vmatprep.subr.mxu0 0.0
    %237 = vmatpush1.msra.mxu0 0.0
    %238 = vmatprep.subr.mxu0 0.0
    %239 = vmatpush1.msra.mxu0 0.0
    %240 = vmatprep.subr.mxu0 0.0
    %241 = vmatpush1.msra.mxu0 0.0
    %242 = vmatprep.subr.mxu0 0.0
    %243 = vmatpush1.msra.mxu0 0.0
    %244 = vmatprep.subr.mxu0 0.0
    %245 = vmatpush1.msra.mxu0 0.0
    %246 = vmatprep.subr.mxu0 0.0
    %247 = vmatpush1.msra.mxu0 0.0
    %248 = vmatprep.subr.mxu0 0.0
    %249 = vmatpush1.msra.mxu0 0.0
    %250 = vmatprep.subr.mxu0 0.0
    %251 = vmatpush1.msra.mxu0 0.0
    %252 = vmatprep.subr.mxu0 0.0
    %253 = vmatpush1.msra.mxu0 0.0
    %254 = vmatprep.subr.mxu0 0.0
    %255 = vmatpush1.msra.mxu0 0.0
    %256 = vmatprep.subr.mxu0 0.0
    %257 = vmatpush1.msra.mxu0 0.0
    %258 = vmatprep.subr.mxu0 0.0
    %259 = vmatpush1.msra.mxu0 0.0
    %260 = vmatprep.subr.mxu0 0.0
    %261 = vmatpush1.msra.mxu0 0.0
    %262 = vmatprep.subr.mxu0 0.0
    %263 = vmatpush1.msra.mxu0 0.0
    %264 = vmatprep.subr.mxu0 0.0
    %265 = vmatpush1.msra.mxu0 0.0
    %266 = vmatprep.mubr.f32.mxu0 0.0
    %267 = vmatmul.mubr.f32.gmra.mrb[0].mxu0 %v197
    %v268 = vpop.f32.mrb[0].mxu0
    %v269 = vadd.f32 %v194, %v268
    %v270 = vpop.f32.mrb[0].mxu0
    %271 = vmatprep.mubr.f32.mxu0 0.0
    %272 = vmatmul.mubr.f32.gmra.mrb[0].mxu0 %v200
    %v273 = vpop.f32.mrb[0].mxu0
    %v274 = vadd.f32 %v194, %v273
    %v275 = vpop.f32.mrb[0].mxu0
    %276 = vdwg.mxu0
    %279 = vrot.lane.b32.xlu0 %v269, 120
    %v280 = vpop.permute.xlu0 %279
    %281 = vrot.lane.b32.xlu0 %v274, 120
    %v282 = vpop.permute.xlu0 %281
    %285 = vrot.lane.b32.xlu0 %v269, 112
    %v286 = vpop.permute.xlu0 %285
    %287 = vrot.lane.b32.xlu0 %v274, 112
    %v288 = vpop.permute.xlu0 %287
    %291 = vrot.lane.b32.xlu0 %v269, 104
    %v292 = vpop.permute.xlu0 %291
    %293 = vrot.lane.b32.xlu0 %v274, 104
    %v294 = vpop.permute.xlu0 %293
    %v297 = vmul.f32 %v269, 0.35355338
    %v298 = vmul.f32 %v274, 0.35355338
    %v299 = vmul.f32 %v280, 0.35355338
    %v300 = vmul.f32 %v282, 0.35355338
    %v301 = vmul.f32 %v286, 0.35355338
    %v302 = vmul.f32 %v288, 0.35355338
    %v303 = vmul.f32 %v292, 0.35355338
    %v304 = vmul.f32 %v294, 0.35355338
    %305 = vrot.lane.b32.xlu0 %v269, 96
    %v306 = vpop.permute.xlu0 %305
    %vm307 = vcmask 64512
    %v309 = vsel %vm307, %v297, 0
    %v311 = vsel %vm307, %v306, 0
    %313 = vmatprep.subr.mxu0 0.0
    %314 = vmatpush1.xpose.msra.mxu0 %v311
    %315 = vmatprep.subr.mxu0 0.0
    %316 = vmatpush1.xpose.msra.mxu0 0.0
    %317 = vmatprep.subr.mxu0 0.0
    %318 = vmatpush1.xpose.msra.mxu0 0.0
    %319 = vmatprep.subr.mxu0 0.0
    %320 = vmatpush1.xpose.msra.mxu0 0.0
    %321 = vmatprep.subr.mxu0 0.0
    %322 = vmatpush1.xpose.msra.mxu0 0.0
    %323 = vmatprep.subr.mxu0 0.0
    %324 = vmatpush1.xpose.msra.mxu0 0.0
    %325 = vmatprep.subr.mxu0 0.0
    %326 = vmatpush1.xpose.msra.mxu0 0.0
    %327 = vmatprep.subr.mxu0 0.0
    %328 = vmatpush1.xpose.msra.mxu0 0.0
    %329 = vmatprep.subr.mxu0 0.0
    %330 = vmatpush1.xpose.msra.mxu0 0.0
    %331 = vmatprep.subr.mxu0 0.0
    %332 = vmatpush1.xpose.msra.mxu0 0.0
    %333 = vmatprep.subr.mxu0 0.0
    %334 = vmatpush1.xpose.msra.mxu0 0.0
    %335 = vmatprep.subr.mxu0 0.0
    %336 = vmatpush1.xpose.msra.mxu0 0.0
    %337 = vmatprep.subr.mxu0 0.0
    %338 = vmatpush1.xpose.msra.mxu0 0.0
    %339 = vmatprep.subr.mxu0 0.0
    %340 = vmatpush1.xpose.msra.mxu0 0.0
    %341 = vmatprep.subr.mxu0 0.0
    %342 = vmatpush1.xpose.msra.mxu0 0.0
    %343 = vmatprep.subr.mxu0 0.0
    %344 = vmatpush1.xpose.msra.mxu0 0.0
    %345 = vmatprep.subr.mxu0 0.0
    %346 = vmatpush1.xpose.msra.mxu0 0.0
    %347 = vmatprep.subr.mxu0 0.0
    %348 = vmatpush1.xpose.msra.mxu0 0.0
    %349 = vmatprep.subr.mxu0 0.0
    %350 = vmatpush1.xpose.msra.mxu0 0.0
    %351 = vmatprep.subr.mxu0 0.0
    %352 = vmatpush1.xpose.msra.mxu0 0.0
    %353 = vmatprep.subr.mxu0 0.0
    %354 = vmatpush1.xpose.msra.mxu0 0.0
    %355 = vmatprep.subr.mxu0 0.0
    %356 = vmatpush1.xpose.msra.mxu0 0.0
    %357 = vmatprep.subr.mxu0 0.0
    %358 = vmatpush1.xpose.msra.mxu0 0.0
    %359 = vmatprep.subr.mxu0 0.0
    %360 = vmatpush1.xpose.msra.mxu0 0.0
    %361 = vmatprep.subr.mxu0 0.0
    %362 = vmatpush1.xpose.msra.mxu0 0.0
    %363 = vmatprep.subr.mxu0 0.0
    %364 = vmatpush1.xpose.msra.mxu0 0.0
    %365 = vmatprep.subr.mxu0 0.0
    %366 = vmatpush1.xpose.msra.mxu0 0.0
    %367 = vmatprep.subr.mxu0 0.0
    %368 = vmatpush1.xpose.msra.mxu0 0.0
    %369 = vmatprep.subr.mxu0 0.0
    %370 = vmatpush1.xpose.msra.mxu0 0.0
    %371 = vmatprep.subr.mxu0 0.0
    %372 = vmatpush1.xpose.msra.mxu0 0.0
    %373 = vmatprep.subr.mxu0 0.0
    %374 = vmatpush1.xpose.msra.mxu0 0.0
    %375 = vmatprep.subr.mxu0 0.0
    %376 = vmatpush1.xpose.msra.mxu0 0.0
    %377 = vmatprep.mubr.f32.mxu0 0.0
    %378 = vmatmul.mubr.f32.gmra.mrb[0].mxu0 %v309
    %v379 = vpop.f32.mrb[0].mxu0
    %v380 = vadd.f32 0.0, %v379
    %v381 = vpop.f32.mrb[0].mxu0
    %382 = vdwg.mxu0
    %383 = vrot.lane.b32.xlu0 %v274, 96
    %v384 = vpop.permute.xlu0 %383
    %v386 = vsel %vm307, %v298, 0
    %v388 = vsel %vm307, %v384, 0
    %390 = vmatprep.subr.mxu0 0.0
    %391 = vmatpush1.xpose.msra.mxu0 %v388
    %392 = vmatprep.subr.mxu0 0.0
    %393 = vmatpush1.xpose.msra.mxu0 0.0
    %394 = vmatprep.subr.mxu0 0.0
    %395 = vmatpush1.xpose.msra.mxu0 0.0
    %396 = vmatprep.subr.mxu0 0.0
    %397 = vmatpush1.xpose.msra.mxu0 0.0
    %398 = vmatprep.subr.mxu0 0.0
    %399 = vmatpush1.xpose.msra.mxu0 0.0
    %400 = vmatprep.subr.mxu0 0.0
    %401 = vmatpush1.xpose.msra.mxu0 0.0
    %402 = vmatprep.subr.mxu0 0.0
    %403 = vmatpush1.xpose.msra.mxu0 0.0
    %404 = vmatprep.subr.mxu0 0.0
    %405 = vmatpush1.xpose.msra.mxu0 0.0
    %406 = vmatprep.subr.mxu0 0.0
    %407 = vmatpush1.xpose.msra.mxu0 0.0
    %408 = vmatprep.subr.mxu0 0.0
    %409 = vmatpush1.xpose.msra.mxu0 0.0
    %410 = vmatprep.subr.mxu0 0.0
    %411 = vmatpush1.xpose.msra.mxu0 0.0
    %412 = vmatprep.subr.mxu0 0.0
    %413 = vmatpush1.xpose.msra.mxu0 0.0
    %414 = vmatprep.subr.mxu0 0.0
    %415 = vmatpush1.xpose.msra.mxu0 0.0
    %416 = vmatprep.subr.mxu0 0.0
    %417 = vmatpush1.xpose.msra.mxu0 0.0
    %418 = vmatprep.subr.mxu0 0.0
    %419 = vmatpush1.xpose.msra.mxu0 0.0
    %420 = vmatprep.subr.mxu0 0.0
    %421 = vmatpush1.xpose.msra.mxu0 0.0
    %422 = vmatprep.subr.mxu0 0.0
    %423 = vmatpush1.xpose.msra.mxu0 0.0
    %424 = vmatprep.subr.mxu0 0.0
    %425 = vmatpush1.xpose.msra.mxu0 0.0
    %426 = vmatprep.subr.mxu0 0.0
    %427 = vmatpush1.xpose.msra.mxu0 0.0
    %428 = vmatprep.subr.mxu0 0.0
    %429 = vmatpush1.xpose.msra.mxu0 0.0
    %430 = vmatprep.subr.mxu0 0.0
    %431 = vmatpush1.xpose.msra.mxu0 0.0
    %432 = vmatprep.subr.mxu0 0.0
    %433 = vmatpush1.xpose.msra.mxu0 0.0
    %434 = vmatprep.subr.mxu0 0.0
    %435 = vmatpush1.xpose.msra.mxu0 0.0
    %436 = vmatprep.subr.mxu0 0.0
    %437 = vmatpush1.xpose.msra.mxu0 0.0
    %438 = vmatprep.subr.mxu0 0.0
    %439 = vmatpush1.xpose.msra.mxu0 0.0
    %440 = vmatprep.subr.mxu0 0.0
    %441 = vmatpush1.xpose.msra.mxu0 0.0
    %442 = vmatprep.subr.mxu0 0.0
    %443 = vmatpush1.xpose.msra.mxu0 0.0
    %444 = vmatprep.subr.mxu0 0.0
    %445 = vmatpush1.xpose.msra.mxu0 0.0
    %446 = vmatprep.subr.mxu0 0.0
    %447 = vmatpush1.xpose.msra.mxu0 0.0
    %448 = vmatprep.subr.mxu0 0.0
    %449 = vmatpush1.xpose.msra.mxu0 0.0
    %450 = vmatprep.subr.mxu0 0.0
    %451 = vmatpush1.xpose.msra.mxu0 0.0
    %452 = vmatprep.subr.mxu0 0.0
    %453 = vmatpush1.xpose.msra.mxu0 0.0
    %454 = vmatprep.mubr.f32.mxu0 0.0
    %455 = vmatmul.mubr.f32.gmra.mrb[0].mxu0 %v386
    %v456 = vpop.f32.mrb[0].mxu0
    %v457 = vadd.f32 0.0, %v456
    %v458 = vpop.f32.mrb[0].mxu0
    %459 = vdwg.mxu0
    %460 = vrot.lane.b32.xlu0 %v280, 96
    %v461 = vpop.permute.xlu0 %460
    %v463 = vsel %vm307, %v299, 0
    %v465 = vsel %vm307, %v461, 0
    %467 = vmatprep.subr.mxu0 0.0
    %468 = vmatpush1.xpose.msra.mxu0 %v465
    %469 = vmatprep.subr.mxu0 0.0
    %470 = vmatpush1.xpose.msra.mxu0 0.0
    %471 = vmatprep.subr.mxu0 0.0
    %472 = vmatpush1.xpose.msra.mxu0 0.0
    %473 = vmatprep.subr.mxu0 0.0
    %474 = vmatpush1.xpose.msra.mxu0 0.0
    %475 = vmatprep.subr.mxu0 0.0
    %476 = vmatpush1.xpose.msra.mxu0 0.0
    %477 = vmatprep.subr.mxu0 0.0
    %478 = vmatpush1.xpose.msra.mxu0 0.0
    %479 = vmatprep.subr.mxu0 0.0
    %480 = vmatpush1.xpose.msra.mxu0 0.0
    %481 = vmatprep.subr.mxu0 0.0
    %482 = vmatpush1.xpose.msra.mxu0 0.0
    %483 = vmatprep.subr.mxu0 0.0
    %484 = vmatpush1.xpose.msra.mxu0 0.0
    %485 = vmatprep.subr.mxu0 0.0
    %486 = vmatpush1.xpose.msra.mxu0 0.0
    %487 = vmatprep.subr.mxu0 0.0
    %488 = vmatpush1.xpose.msra.mxu0 0.0
    %489 = vmatprep.subr.mxu0 0.0
    %490 = vmatpush1.xpose.msra.mxu0 0.0
    %491 = vmatprep.subr.mxu0 0.0
    %492 = vmatpush1.xpose.msra.mxu0 0.0
    %493 = vmatprep.subr.mxu0 0.0
    %494 = vmatpush1.xpose.msra.mxu0 0.0
    %495 = vmatprep.subr.mxu0 0.0
    %496 = vmatpush1.xpose.msra.mxu0 0.0
    %497 = vmatprep.subr.mxu0 0.0
    %498 = vmatpush1.xpose.msra.mxu0 0.0
    %499 = vmatprep.subr.mxu0 0.0
    %500 = vmatpush1.xpose.msra.mxu0 0.0
    %501 = vmatprep.subr.mxu0 0.0
    %502 = vmatpush1.xpose.msra.mxu0 0.0
    %503 = vmatprep.subr.mxu0 0.0
    %504 = vmatpush1.xpose.msra.mxu0 0.0
    %505 = vmatprep.subr.mxu0 0.0
    %506 = vmatpush1.xpose.msra.mxu0 0.0
    %507 = vmatprep.subr.mxu0 0.0
    %508 = vmatpush1.xpose.msra.mxu0 0.0
    %509 = vmatprep.subr.mxu0 0.0
    %510 = vmatpush1.xpose.msra.mxu0 0.0
    %511 = vmatprep.subr.mxu0 0.0
    %512 = vmatpush1.xpose.msra.mxu0 0.0
    %513 = vmatprep.subr.mxu0 0.0
    %514 = vmatpush1.xpose.msra.mxu0 0.0
    %515 = vmatprep.subr.mxu0 0.0
    %516 = vmatpush1.xpose.msra.mxu0 0.0
    %517 = vmatprep.subr.mxu0 0.0
    %518 = vmatpush1.xpose.msra.mxu0 0.0
    %519 = vmatprep.subr.mxu0 0.0
    %520 = vmatpush1.xpose.msra.mxu0 0.0
    %521 = vmatprep.subr.mxu0 0.0
    %522 = vmatpush1.xpose.msra.mxu0 0.0
    %523 = vmatprep.subr.mxu0 0.0
    %524 = vmatpush1.xpose.msra.mxu0 0.0
    %525 = vmatprep.subr.mxu0 0.0
    %526 = vmatpush1.xpose.msra.mxu0 0.0
    %527 = vmatprep.subr.mxu0 0.0
    %528 = vmatpush1.xpose.msra.mxu0 0.0
    %529 = vmatprep.subr.mxu0 0.0
    %530 = vmatpush1.xpose.msra.mxu0 0.0
    %531 = vmatprep.mubr.f32.mxu0 0.0
    %532 = vmatmul.mubr.f32.gmra.mrb[0].mxu0 %v463
    %v533 = vpop.f32.mrb[0].mxu0
    %v534 = vadd.f32 0.0, %v533
    %v535 = vpop.f32.mrb[0].mxu0
    %536 = vdwg.mxu0
    %537 = vrot.lane.b32.xlu0 %v282, 96
    %v538 = vpop.permute.xlu0 %537
    %v540 = vsel %vm307, %v300, 0
    %v542 = vsel %vm307, %v538, 0
    %544 = vmatprep.subr.mxu0 0.0
    %545 = vmatpush1.xpose.msra.mxu0 %v542
    %546 = vmatprep.subr.mxu0 0.0
    %547 = vmatpush1.xpose.msra.mxu0 0.0
    %548 = vmatprep.subr.mxu0 0.0
    %549 = vmatpush1.xpose.msra.mxu0 0.0
    %550 = vmatprep.subr.mxu0 0.0
    %551 = vmatpush1.xpose.msra.mxu0 0.0
    %552 = vmatprep.subr.mxu0 0.0
    %553 = vmatpush1.xpose.msra.mxu0 0.0
    %554 = vmatprep.subr.mxu0 0.0
    %555 = vmatpush1.xpose.msra.mxu0 0.0
    %556 = vmatprep.subr.mxu0 0.0
    %557 = vmatpush1.xpose.msra.mxu0 0.0
    %558 = vmatprep.subr.mxu0 0.0
    %559 = vmatpush1.xpose.msra.mxu0 0.0
    %560 = vmatprep.subr.mxu0 0.0
    %561 = vmatpush1.xpose.msra.mxu0 0.0
    %562 = vmatprep.subr.mxu0 0.0
    %563 = vmatpush1.xpose.msra.mxu0 0.0
    %564 = vmatprep.subr.mxu0 0.0
    %565 = vmatpush1.xpose.msra.mxu0 0.0
    %566 = vmatprep.subr.mxu0 0.0
    %567 = vmatpush1.xpose.msra.mxu0 0.0
    %568 = vmatprep.subr.mxu0 0.0
    %569 = vmatpush1.xpose.msra.mxu0 0.0
    %570 = vmatprep.subr.mxu0 0.0
    %571 = vmatpush1.xpose.msra.mxu0 0.0
    %572 = vmatprep.subr.mxu0 0.0
    %573 = vmatpush1.xpose.msra.mxu0 0.0
    %574 = vmatprep.subr.mxu0 0.0
    %575 = vmatpush1.xpose.msra.mxu0 0.0
    %576 = vmatprep.subr.mxu0 0.0
    %577 = vmatpush1.xpose.msra.mxu0 0.0
    %578 = vmatprep.subr.mxu0 0.0
    %579 = vmatpush1.xpose.msra.mxu0 0.0
    %580 = vmatprep.subr.mxu0 0.0
    %581 = vmatpush1.xpose.msra.mxu0 0.0
    %582 = vmatprep.subr.mxu0 0.0
    %583 = vmatpush1.xpose.msra.mxu0 0.0
    %584 = vmatprep.subr.mxu0 0.0
    %585 = vmatpush1.xpose.msra.mxu0 0.0
    %586 = vmatprep.subr.mxu0 0.0
    %587 = vmatpush1.xpose.msra.mxu0 0.0
    %588 = vmatprep.subr.mxu0 0.0
    %589 = vmatpush1.xpose.msra.mxu0 0.0
    %590 = vmatprep.subr.mxu0 0.0
    %591 = vmatpush1.xpose.msra.mxu0 0.0
    %592 = vmatprep.subr.mxu0 0.0
    %593 = vmatpush1.xpose.msra.mxu0 0.0
    %594 = vmatprep.subr.mxu0 0.0
    %595 = vmatpush1.xpose.msra.mxu0 0.0
    %596 = vmatprep.subr.mxu0 0.0
    %597 = vmatpush1.xpose.msra.mxu0 0.0
    %598 = vmatprep.subr.mxu0 0.0
    %599 = vmatpush1.xpose.msra.mxu0 0.0
    %600 = vmatprep.subr.mxu0 0.0
    %601 = vmatpush1.xpose.msra.mxu0 0.0
    %602 = vmatprep.subr.mxu0 0.0
    %603 = vmatpush1.xpose.msra.mxu0 0.0
    %604 = vmatprep.subr.mxu0 0.0
    %605 = vmatpush1.xpose.msra.mxu0 0.0
    %606 = vmatprep.subr.mxu0 0.0
    %607 = vmatpush1.xpose.msra.mxu0 0.0
    %608 = vmatprep.mubr.f32.mxu0 0.0
    %609 = vmatmul.mubr.f32.gmra.mrb[0].mxu0 %v540
    %v610 = vpop.f32.mrb[0].mxu0
    %v611 = vadd.f32 0.0, %v610
    %v612 = vpop.f32.mrb[0].mxu0
    %613 = vdwg.mxu0
    %614 = vrot.lane.b32.xlu0 %v286, 96
    %v615 = vpop.permute.xlu0 %614
    %v617 = vsel %vm307, %v301, 0
    %v619 = vsel %vm307, %v615, 0
    %621 = vmatprep.subr.mxu0 0.0
    %622 = vmatpush1.xpose.msra.mxu0 %v619
    %623 = vmatprep.subr.mxu0 0.0
    %624 = vmatpush1.xpose.msra.mxu0 0.0
    %625 = vmatprep.subr.mxu0 0.0
    %626 = vmatpush1.xpose.msra.mxu0 0.0
    %627 = vmatprep.subr.mxu0 0.0
    %628 = vmatpush1.xpose.msra.mxu0 0.0
    %629 = vmatprep.subr.mxu0 0.0
    %630 = vmatpush1.xpose.msra.mxu0 0.0
    %631 = vmatprep.subr.mxu0 0.0
    %632 = vmatpush1.xpose.msra.mxu0 0.0
    %633 = vmatprep.subr.mxu0 0.0
    %634 = vmatpush1.xpose.msra.mxu0 0.0
    %635 = vmatprep.subr.mxu0 0.0
    %636 = vmatpush1.xpose.msra.mxu0 0.0
    %637 = vmatprep.subr.mxu0 0.0
    %638 = vmatpush1.xpose.msra.mxu0 0.0
    %639 = vmatprep.subr.mxu0 0.0
    %640 = vmatpush1.xpose.msra.mxu0 0.0
    %641 = vmatprep.subr.mxu0 0.0
    %642 = vmatpush1.xpose.msra.mxu0 0.0
    %643 = vmatprep.subr.mxu0 0.0
    %644 = vmatpush1.xpose.msra.mxu0 0.0
    %645 = vmatprep.subr.mxu0 0.0
    %646 = vmatpush1.xpose.msra.mxu0 0.0
    %647 = vmatprep.subr.mxu0 0.0
    %648 = vmatpush1.xpose.msra.mxu0 0.0
    %649 = vmatprep.subr.mxu0 0.0
    %650 = vmatpush1.xpose.msra.mxu0 0.0
    %651 = vmatprep.subr.mxu0 0.0
    %652 = vmatpush1.xpose.msra.mxu0 0.0
    %653 = vmatprep.subr.mxu0 0.0
    %654 = vmatpush1.xpose.msra.mxu0 0.0
    %655 = vmatprep.subr.mxu0 0.0
    %656 = vmatpush1.xpose.msra.mxu0 0.0
    %657 = vmatprep.subr.mxu0 0.0
    %658 = vmatpush1.xpose.msra.mxu0 0.0
    %659 = vmatprep.subr.mxu0 0.0
    %660 = vmatpush1.xpose.msra.mxu0 0.0
    %661 = vmatprep.subr.mxu0 0.0
    %662 = vmatpush1.xpose.msra.mxu0 0.0
    %663 = vmatprep.subr.mxu0 0.0
    %664 = vmatpush1.xpose.msra.mxu0 0.0
    %665 = vmatprep.subr.mxu0 0.0
    %666 = vmatpush1.xpose.msra.mxu0 0.0
    %667 = vmatprep.subr.mxu0 0.0
    %668 = vmatpush1.xpose.msra.mxu0 0.0
    %669 = vmatprep.subr.mxu0 0.0
    %670 = vmatpush1.xpose.msra.mxu0 0.0
    %671 = vmatprep.subr.mxu0 0.0
    %672 = vmatpush1.xpose.msra.mxu0 0.0
    %673 = vmatprep.subr.mxu0 0.0
    %674 = vmatpush1.xpose.msra.mxu0 0.0
    %675 = vmatprep.subr.mxu0 0.0
    %676 = vmatpush1.xpose.msra.mxu0 0.0
    %677 = vmatprep.subr.mxu0 0.0
    %678 = vmatpush1.xpose.msra.mxu0 0.0
    %679 = vmatprep.subr.mxu0 0.0
    %680 = vmatpush1.xpose.msra.mxu0 0.0
    %681 = vmatprep.subr.mxu0 0.0
    %682 = vmatpush1.xpose.msra.mxu0 0.0
    %683 = vmatprep.subr.mxu0 0.0
    %684 = vmatpush1.xpose.msra.mxu0 0.0
    %685 = vmatprep.mubr.f32.mxu0 0.0
    %686 = vmatmul.mubr.f32.gmra.mrb[0].mxu0 %v617
    %v687 = vpop.f32.mrb[0].mxu0
    %v688 = vadd.f32 0.0, %v687
    %v689 = vpop.f32.mrb[0].mxu0
    %690 = vdwg.mxu0
    %691 = vrot.lane.b32.xlu0 %v288, 96
    %v692 = vpop.permute.xlu0 %691
    %v694 = vsel %vm307, %v302, 0
    %v696 = vsel %vm307, %v692, 0
    %698 = vmatprep.subr.mxu0 0.0
    %699 = vmatpush1.xpose.msra.mxu0 %v696
    %700 = vmatprep.subr.mxu0 0.0
    %701 = vmatpush1.xpose.msra.mxu0 0.0
    %702 = vmatprep.subr.mxu0 0.0
    %703 = vmatpush1.xpose.msra.mxu0 0.0
    %704 = vmatprep.subr.mxu0 0.0
    %705 = vmatpush1.xpose.msra.mxu0 0.0
    %706 = vmatprep.subr.mxu0 0.0
    %707 = vmatpush1.xpose.msra.mxu0 0.0
    %708 = vmatprep.subr.mxu0 0.0
    %709 = vmatpush1.xpose.msra.mxu0 0.0
    %710 = vmatprep.subr.mxu0 0.0
    %711 = vmatpush1.xpose.msra.mxu0 0.0
    %712 = vmatprep.subr.mxu0 0.0
    %713 = vmatpush1.xpose.msra.mxu0 0.0
    %714 = vmatprep.subr.mxu0 0.0
    %715 = vmatpush1.xpose.msra.mxu0 0.0
    %716 = vmatprep.subr.mxu0 0.0
    %717 = vmatpush1.xpose.msra.mxu0 0.0
    %718 = vmatprep.subr.mxu0 0.0
    %719 = vmatpush1.xpose.msra.mxu0 0.0
    %720 = vmatprep.subr.mxu0 0.0
    %721 = vmatpush1.xpose.msra.mxu0 0.0
    %722 = vmatprep.subr.mxu0 0.0
    %723 = vmatpush1.xpose.msra.mxu0 0.0
    %724 = vmatprep.subr.mxu0 0.0
    %725 = vmatpush1.xpose.msra.mxu0 0.0
    %726 = vmatprep.subr.mxu0 0.0
    %727 = vmatpush1.xpose.msra.mxu0 0.0
    %728 = vmatprep.subr.mxu0 0.0
    %729 = vmatpush1.xpose.msra.mxu0 0.0
    %730 = vmatprep.subr.mxu0 0.0
    %731 = vmatpush1.xpose.msra.mxu0 0.0
    %732 = vmatprep.subr.mxu0 0.0
    %733 = vmatpush1.xpose.msra.mxu0 0.0
    %734 = vmatprep.subr.mxu0 0.0
    %735 = vmatpush1.xpose.msra.mxu0 0.0
    %736 = vmatprep.subr.mxu0 0.0
    %737 = vmatpush1.xpose.msra.mxu0 0.0
    %738 = vmatprep.subr.mxu0 0.0
    %739 = vmatpush1.xpose.msra.mxu0 0.0
    %740 = vmatprep.subr.mxu0 0.0
    %741 = vmatpush1.xpose.msra.mxu0 0.0
    %742 = vmatprep.subr.mxu0 0.0
    %743 = vmatpush1.xpose.msra.mxu0 0.0
    %744 = vmatprep.subr.mxu0 0.0
    %745 = vmatpush1.xpose.msra.mxu0 0.0
    %746 = vmatprep.subr.mxu0 0.0
    %747 = vmatpush1.xpose.msra.mxu0 0.0
    %748 = vmatprep.subr.mxu0 0.0
    %749 = vmatpush1.xpose.msra.mxu0 0.0
    %750 = vmatprep.subr.mxu0 0.0
    %751 = vmatpush1.xpose.msra.mxu0 0.0
    %752 = vmatprep.subr.mxu0 0.0
    %753 = vmatpush1.xpose.msra.mxu0 0.0
    %754 = vmatprep.subr.mxu0 0.0
    %755 = vmatpush1.xpose.msra.mxu0 0.0
    %756 = vmatprep.subr.mxu0 0.0
    %757 = vmatpush1.xpose.msra.mxu0 0.0
    %758 = vmatprep.subr.mxu0 0.0
    %759 = vmatpush1.xpose.msra.mxu0 0.0
    %760 = vmatprep.subr.mxu0 0.0
    %761 = vmatpush1.xpose.msra.mxu0 0.0
    %762 = vmatprep.mubr.f32.mxu0 0.0
    %763 = vmatmul.mubr.f32.gmra.mrb[0].mxu0 %v694
    %v764 = vpop.f32.mrb[0].mxu0
    %v765 = vadd.f32 0.0, %v764
    %v766 = vpop.f32.mrb[0].mxu0
    %767 = vdwg.mxu0
    %768 = vrot.lane.b32.xlu0 %v292, 96
    %v769 = vpop.permute.xlu0 %768
    %v771 = vsel %vm307, %v303, 0
    %v773 = vsel %vm307, %v769, 0
    %775 = vmatprep.subr.mxu0 0.0
    %776 = vmatpush1.xpose.msra.mxu0 %v773
    %777 = vmatprep.subr.mxu0 0.0
    %778 = vmatpush1.xpose.msra.mxu0 0.0
    %779 = vmatprep.subr.mxu0 0.0
    %780 = vmatpush1.xpose.msra.mxu0 0.0
    %781 = vmatprep.subr.mxu0 0.0
    %782 = vmatpush1.xpose.msra.mxu0 0.0
    %783 = vmatprep.subr.mxu0 0.0
    %784 = vmatpush1.xpose.msra.mxu0 0.0
    %785 = vmatprep.subr.mxu0 0.0
    %786 = vmatpush1.xpose.msra.mxu0 0.0
    %787 = vmatprep.subr.mxu0 0.0
    %788 = vmatpush1.xpose.msra.mxu0 0.0
    %789 = vmatprep.subr.mxu0 0.0
    %790 = vmatpush1.xpose.msra.mxu0 0.0
    %791 = vmatprep.subr.mxu0 0.0
    %792 = vmatpush1.xpose.msra.mxu0 0.0
    %793 = vmatprep.subr.mxu0 0.0
    %794 = vmatpush1.xpose.msra.mxu0 0.0
    %795 = vmatprep.subr.mxu0 0.0
    %796 = vmatpush1.xpose.msra.mxu0 0.0
    %797 = vmatprep.subr.mxu0 0.0
    %798 = vmatpush1.xpose.msra.mxu0 0.0
    %799 = vmatprep.subr.mxu0 0.0
    %800 = vmatpush1.xpose.msra.mxu0 0.0
    %801 = vmatprep.subr.mxu0 0.0
    %802 = vmatpush1.xpose.msra.mxu0 0.0
    %803 = vmatprep.subr.mxu0 0.0
    %804 = vmatpush1.xpose.msra.mxu0 0.0
    %805 = vmatprep.subr.mxu0 0.0
    %806 = vmatpush1.xpose.msra.mxu0 0.0
    %807 = vmatprep.subr.mxu0 0.0
    %808 = vmatpush1.xpose.msra.mxu0 0.0
    %809 = vmatprep.subr.mxu0 0.0
    %810 = vmatpush1.xpose.msra.mxu0 0.0
    %811 = vmatprep.subr.mxu0 0.0
    %812 = vmatpush1.xpose.msra.mxu0 0.0
    %813 = vmatprep.subr.mxu0 0.0
    %814 = vmatpush1.xpose.msra.mxu0 0.0
    %815 = vmatprep.subr.mxu0 0.0
    %816 = vmatpush1.xpose.msra.mxu0 0.0
    %817 = vmatprep.subr.mxu0 0.0
    %818 = vmatpush1.xpose.msra.mxu0 0.0
    %819 = vmatprep.subr.mxu0 0.0
    %820 = vmatpush1.xpose.msra.mxu0 0.0
    %821 = vmatprep.subr.mxu0 0.0
    %822 = vmatpush1.xpose.msra.mxu0 0.0
    %823 = vmatprep.subr.mxu0 0.0
    %824 = vmatpush1.xpose.msra.mxu0 0.0
    %825 = vmatprep.subr.mxu0 0.0
    %826 = vmatpush1.xpose.msra.mxu0 0.0
    %827 = vmatprep.subr.mxu0 0.0
    %828 = vmatpush1.xpose.msra.mxu0 0.0
    %829 = vmatprep.subr.mxu0 0.0
    %830 = vmatpush1.xpose.msra.mxu0 0.0
    %831 = vmatprep.subr.mxu0 0.0
    %832 = vmatpush1.xpose.msra.mxu0 0.0
    %833 = vmatprep.subr.mxu0 0.0
    %834 = vmatpush1.xpose.msra.mxu0 0.0
    %835 = vmatprep.subr.mxu0 0.0
    %836 = vmatpush1.xpose.msra.mxu0 0.0
    %837 = vmatprep.subr.mxu0 0.0
    %838 = vmatpush1.xpose.msra.mxu0 0.0
    %839 = vmatprep.mubr.f32.mxu0 0.0
    %840 = vmatmul.mubr.f32.gmra.mrb[0].mxu0 %v771
    %v841 = vpop.f32.mrb[0].mxu0
    %v842 = vadd.f32 0.0, %v841
    %v843 = vpop.f32.mrb[0].mxu0
    %844 = vdwg.mxu0
    %845 = vrot.lane.b32.xlu0 %v294, 96
    %v846 = vpop.permute.xlu0 %845
    %v848 = vsel %vm307, %v304, 0
    %v850 = vsel %vm307, %v846, 0
    %852 = vmatprep.subr.mxu0 0.0
    %853 = vmatpush1.xpose.msra.mxu0 %v850
    %854 = vmatprep.subr.mxu0 0.0
    %855 = vmatpush1.xpose.msra.mxu0 0.0
    %856 = vmatprep.subr.mxu0 0.0
    %857 = vmatpush1.xpose.msra.mxu0 0.0
    %858 = vmatprep.subr.mxu0 0.0
    %859 = vmatpush1.xpose.msra.mxu0 0.0
    %860 = vmatprep.subr.mxu0 0.0
    %861 = vmatpush1.xpose.msra.mxu0 0.0
    %862 = vmatprep.subr.mxu0 0.0
    %863 = vmatpush1.xpose.msra.mxu0 0.0
    %864 = vmatprep.subr.mxu0 0.0
    %865 = vmatpush1.xpose.msra.mxu0 0.0
    %866 = vmatprep.subr.mxu0 0.0
    %867 = vmatpush1.xpose.msra.mxu0 0.0
    %868 = vmatprep.subr.mxu0 0.0
    %869 = vmatpush1.xpose.msra.mxu0 0.0
    %870 = vmatprep.subr.mxu0 0.0
    %871 = vmatpush1.xpose.msra.mxu0 0.0
    %872 = vmatprep.subr.mxu0 0.0
    %873 = vmatpush1.xpose.msra.mxu0 0.0
    %874 = vmatprep.subr.mxu0 0.0
    %875 = vmatpush1.xpose.msra.mxu0 0.0
    %876 = vmatprep.subr.mxu0 0.0
    %877 = vmatpush1.xpose.msra.mxu0 0.0
    %878 = vmatprep.subr.mxu0 0.0
    %879 = vmatpush1.xpose.msra.mxu0 0.0
    %880 = vmatprep.subr.mxu0 0.0
    %881 = vmatpush1.xpose.msra.mxu0 0.0
    %882 = vmatprep.subr.mxu0 0.0
    %883 = vmatpush1.xpose.msra.mxu0 0.0
    %884 = vmatprep.subr.mxu0 0.0
    %885 = vmatpush1.xpose.msra.mxu0 0.0
    %886 = vmatprep.subr.mxu0 0.0
    %887 = vmatpush1.xpose.msra.mxu0 0.0
    %888 = vmatprep.subr.mxu0 0.0
    %889 = vmatpush1.xpose.msra.mxu0 0.0
    %890 = vmatprep.subr.mxu0 0.0
    %891 = vmatpush1.xpose.msra.mxu0 0.0
    %892 = vmatprep.subr.mxu0 0.0
    %893 = vmatpush1.xpose.msra.mxu0 0.0
    %894 = vmatprep.subr.mxu0 0.0
    %895 = vmatpush1.xpose.msra.mxu0 0.0
    %896 = vmatprep.subr.mxu0 0.0
    %897 = vmatpush1.xpose.msra.mxu0 0.0
    %898 = vmatprep.subr.mxu0 0.0
    %899 = vmatpush1.xpose.msra.mxu0 0.0
    %900 = vmatprep.subr.mxu0 0.0
    %901 = vmatpush1.xpose.msra.mxu0 0.0
    %902 = vmatprep.subr.mxu0 0.0
    %903 = vmatpush1.xpose.msra.mxu0 0.0
    %904 = vmatprep.subr.mxu0 0.0
    %905 = vmatpush1.xpose.msra.mxu0 0.0
    %906 = vmatprep.subr.mxu0 0.0
    %907 = vmatpush1.xpose.msra.mxu0 0.0
    %908 = vmatprep.subr.mxu0 0.0
    %909 = vmatpush1.xpose.msra.mxu0 0.0
    %910 = vmatprep.subr.mxu0 0.0
    %911 = vmatpush1.xpose.msra.mxu0 0.0
    %912 = vmatprep.subr.mxu0 0.0
    %913 = vmatpush1.xpose.msra.mxu0 0.0
    %914 = vmatprep.subr.mxu0 0.0
    %915 = vmatpush1.xpose.msra.mxu0 0.0
    %916 = vmatprep.mubr.f32.mxu0 0.0
    %917 = vmatmul.mubr.f32.gmra.mrb[0].mxu0 %v848
    %v918 = vpop.f32.mrb[0].mxu0
    %v919 = vadd.f32 0.0, %v918
    %v920 = vpop.f32.mrb[0].mxu0
    %921 = vdwg.mxu0
    %v922 = vsel %vm307, %v380, -inf
    %923 = vmax.xlane.f32.xlu0 %v922
    %v924 = vpop.xlane.xlu0 %923
    %v925 = vsel %vm307, %v457, -inf
    %926 = vmax.xlane.f32.xlu0 %v925
    %v927 = vpop.xlane.xlu0 %926
    %v928 = vsel %vm307, %v534, -inf
    %929 = vmax.xlane.f32.xlu0 %v928
    %v930 = vpop.xlane.xlu0 %929
    %v931 = vsel %vm307, %v611, -inf
    %932 = vmax.xlane.f32.xlu0 %v931
    %v933 = vpop.xlane.xlu0 %932
    %v934 = vsel %vm307, %v688, -inf
    %935 = vmax.xlane.f32.xlu0 %v934
    %v936 = vpop.xlane.xlu0 %935
    %v937 = vsel %vm307, %v765, -inf
    %938 = vmax.xlane.f32.xlu0 %v937
    %v939 = vpop.xlane.xlu0 %938
    %v940 = vsel %vm307, %v842, -inf
    %941 = vmax.xlane.f32.xlu0 %v940
    %v942 = vpop.xlane.xlu0 %941
    %v943 = vsel %vm307, %v919, -inf
    %944 = vmax.xlane.f32.xlu0 %v943
    %v945 = vpop.xlane.xlu0 %944
    %v946 = vsub.f32 %v380, %v924
    %v947 = vsub.f32 %v457, %v927
    %v948 = vsub.f32 %v534, %v930
    %v949 = vsub.f32 %v611, %v933
    %v950 = vsub.f32 %v688, %v936
    %v951 = vsub.f32 %v765, %v939
    %v952 = vsub.f32 %v842, %v942
    %v953 = vsub.f32 %v919, %v945
    %v954 = vmul.f32 %v946, 1.442695
    %v955 = vpow.pop %v954
    %v956 = vmul.f32 %v947, 1.442695
    %v957 = vpow.pop %v956
    %v958 = vmul.f32 %v948, 1.442695
    %v959 = vpow.pop %v958
    %v960 = vmul.f32 %v949, 1.442695
    %v961 = vpow.pop %v960
    %v962 = vmul.f32 %v950, 1.442695
    %v963 = vpow.pop %v962
    %v964 = vmul.f32 %v951, 1.442695
    %v965 = vpow.pop %v964
    %v966 = vmul.f32 %v952, 1.442695
    %v967 = vpow.pop %v966
    %v968 = vmul.f32 %v953, 1.442695
    %v969 = vpow.pop %v968
    %v970 = vsel %vm307, %v955, 0.0
    %971 = vadd.xlane.f32.xlu0 %v970
    %v972 = vpop.xlane.xlu0 %971
    %v973 = vsel %vm307, %v957, 0.0
    %974 = vadd.xlane.f32.xlu0 %v973
    %v975 = vpop.xlane.xlu0 %974
    %v976 = vsel %vm307, %v959, 0.0
    %977 = vadd.xlane.f32.xlu0 %v976
    %v978 = vpop.xlane.xlu0 %977
    %v979 = vsel %vm307, %v961, 0.0
    %980 = vadd.xlane.f32.xlu0 %v979
    %v981 = vpop.xlane.xlu0 %980
    %v982 = vsel %vm307, %v963, 0.0
    %983 = vadd.xlane.f32.xlu0 %v982
    %v984 = vpop.xlane.xlu0 %983
    %v985 = vsel %vm307, %v965, 0.0
    %986 = vadd.xlane.f32.xlu0 %v985
    %v987 = vpop.xlane.xlu0 %986
    %v988 = vsel %vm307, %v967, 0.0
    %989 = vadd.xlane.f32.xlu0 %v988
    %v990 = vpop.xlane.xlu0 %989
    %v991 = vsel %vm307, %v969, 0.0
    %992 = vadd.xlane.f32.xlu0 %v991
    %v993 = vpop.xlane.xlu0 %992
    %v994 = vrcp.pop %v972
    %v995 = vrcp.pop %v975
    %v996 = vrcp.pop %v978
    %v997 = vrcp.pop %v981
    %v998 = vrcp.pop %v984
    %v999 = vrcp.pop %v987
    %v1000 = vrcp.pop %v990
    %v1001 = vrcp.pop %v993
    %v1002 = vmul.f32 %v955, %v994
    %v1003 = vmul.f32 %v957, %v995
    %v1004 = vmul.f32 %v959, %v996
    %v1005 = vmul.f32 %v961, %v997
    %v1006 = vmul.f32 %v963, %v998
    %v1007 = vmul.f32 %v965, %v999
    %v1008 = vmul.f32 %v967, %v1000
    %v1009 = vmul.f32 %v969, %v1001
    %1010 = vrot.lane.b32.xlu0 %v269, 64
    %v1011 = vpop.permute.xlu0 %1010
    %v1014 = vsel %vm307, %v1002, 0
    %1016 = vmatprep.subr.mxu0 0.0
    %1017 = vmatpush1.msra.mxu0 %v1011
    %1018 = vmatprep.subr.mxu0 0.0
    %1019 = vmatpush1.msra.mxu0 0.0
    %1020 = vmatprep.subr.mxu0 0.0
    %1021 = vmatpush1.msra.mxu0 0.0
    %1022 = vmatprep.subr.mxu0 0.0
    %1023 = vmatpush1.msra.mxu0 0.0
    %1024 = vmatprep.subr.mxu0 0.0
    %1025 = vmatpush1.msra.mxu0 0.0
    %1026 = vmatprep.subr.mxu0 0.0
    %1027 = vmatpush1.msra.mxu0 0.0
    %1028 = vmatprep.subr.mxu0 0.0
    %1029 = vmatpush1.msra.mxu0 0.0
    %1030 = vmatprep.subr.mxu0 0.0
    %1031 = vmatpush1.msra.mxu0 0.0
    %1032 = vmatprep.subr.mxu0 0.0
    %1033 = vmatpush1.msra.mxu0 0.0
    %1034 = vmatprep.subr.mxu0 0.0
    %1035 = vmatpush1.msra.mxu0 0.0
    %1036 = vmatprep.subr.mxu0 0.0
    %1037 = vmatpush1.msra.mxu0 0.0
    %1038 = vmatprep.subr.mxu0 0.0
    %1039 = vmatpush1.msra.mxu0 0.0
    %1040 = vmatprep.subr.mxu0 0.0
    %1041 = vmatpush1.msra.mxu0 0.0
    %1042 = vmatprep.subr.mxu0 0.0
    %1043 = vmatpush1.msra.mxu0 0.0
    %1044 = vmatprep.subr.mxu0 0.0
    %1045 = vmatpush1.msra.mxu0 0.0
    %1046 = vmatprep.subr.mxu0 0.0
    %1047 = vmatpush1.msra.mxu0 0.0
    %1048 = vmatprep.subr.mxu0 0.0
    %1049 = vmatpush1.msra.mxu0 0.0
    %1050 = vmatprep.subr.mxu0 0.0
    %1051 = vmatpush1.msra.mxu0 0.0
    %1052 = vmatprep.subr.mxu0 0.0
    %1053 = vmatpush1.msra.mxu0 0.0
    %1054 = vmatprep.subr.mxu0 0.0
    %1055 = vmatpush1.msra.mxu0 0.0
    %1056 = vmatprep.subr.mxu0 0.0
    %1057 = vmatpush1.msra.mxu0 0.0
    %1058 = vmatprep.subr.mxu0 0.0
    %1059 = vmatpush1.msra.mxu0 0.0
    %1060 = vmatprep.subr.mxu0 0.0
    %1061 = vmatpush1.msra.mxu0 0.0
    %1062 = vmatprep.subr.mxu0 0.0
    %1063 = vmatpush1.msra.mxu0 0.0
    %1064 = vmatprep.subr.mxu0 0.0
    %1065 = vmatpush1.msra.mxu0 0.0
    %1066 = vmatprep.subr.mxu0 0.0
    %1067 = vmatpush1.msra.mxu0 0.0
    %1068 = vmatprep.subr.mxu0 0.0
    %1069 = vmatpush1.msra.mxu0 0.0
    %1070 = vmatprep.subr.mxu0 0.0
    %1071 = vmatpush1.msra.mxu0 0.0
    %1072 = vmatprep.subr.mxu0 0.0
    %1073 = vmatpush1.msra.mxu0 0.0
    %1074 = vmatprep.subr.mxu0 0.0
    %1075 = vmatpush1.msra.mxu0 0.0
    %1076 = vmatprep.subr.mxu0 0.0
    %1077 = vmatpush1.msra.mxu0 0.0
    %1078 = vmatprep.subr.mxu0 0.0
    %1079 = vmatpush1.msra.mxu0 0.0
    %1080 = vmatprep.mubr.f32.mxu0 0.0
    %1081 = vmatmul.mubr.f32.gmra.mrb[0].mxu0 %v1014
    %v1082 = vpop.f32.mrb[0].mxu0
    %v1083 = vadd.f32 0.0, %v1082
    %v1084 = vpop.f32.mrb[0].mxu0
    %1085 = vdwg.mxu0
    %1086 = vrot.lane.b32.xlu0 %v274, 64
    %v1087 = vpop.permute.xlu0 %1086
    %v1090 = vsel %vm307, %v1003, 0
    %1092 = vmatprep.subr.mxu0 0.0
    %1093 = vmatpush1.msra.mxu0 %v1087
    %1094 = vmatprep.subr.mxu0 0.0
    %1095 = vmatpush1.msra.mxu0 0.0
    %1096 = vmatprep.subr.mxu0 0.0
    %1097 = vmatpush1.msra.mxu0 0.0
    %1098 = vmatprep.subr.mxu0 0.0
    %1099 = vmatpush1.msra.mxu0 0.0
    %1100 = vmatprep.subr.mxu0 0.0
    %1101 = vmatpush1.msra.mxu0 0.0
    %1102 = vmatprep.subr.mxu0 0.0
    %1103 = vmatpush1.msra.mxu0 0.0
    %1104 = vmatprep.subr.mxu0 0.0
    %1105 = vmatpush1.msra.mxu0 0.0
    %1106 = vmatprep.subr.mxu0 0.0
    %1107 = vmatpush1.msra.mxu0 0.0
    %1108 = vmatprep.subr.mxu0 0.0
    %1109 = vmatpush1.msra.mxu0 0.0
    %1110 = vmatprep.subr.mxu0 0.0
    %1111 = vmatpush1.msra.mxu0 0.0
    %1112 = vmatprep.subr.mxu0 0.0
    %1113 = vmatpush1.msra.mxu0 0.0
    %1114 = vmatprep.subr.mxu0 0.0
    %1115 = vmatpush1.msra.mxu0 0.0
    %1116 = vmatprep.subr.mxu0 0.0
    %1117 = vmatpush1.msra.mxu0 0.0
    %1118 = vmatprep.subr.mxu0 0.0
    %1119 = vmatpush1.msra.mxu0 0.0
    %1120 = vmatprep.subr.mxu0 0.0
    %1121 = vmatpush1.msra.mxu0 0.0
    %1122 = vmatprep.subr.mxu0 0.0
    %1123 = vmatpush1.msra.mxu0 0.0
    %1124 = vmatprep.subr.mxu0 0.0
    %1125 = vmatpush1.msra.mxu0 0.0
    %1126 = vmatprep.subr.mxu0 0.0
    %1127 = vmatpush1.msra.mxu0 0.0
    %1128 = vmatprep.subr.mxu0 0.0
    %1129 = vmatpush1.msra.mxu0 0.0
    %1130 = vmatprep.subr.mxu0 0.0
    %1131 = vmatpush1.msra.mxu0 0.0
    %1132 = vmatprep.subr.mxu0 0.0
    %1133 = vmatpush1.msra.mxu0 0.0
    %1134 = vmatprep.subr.mxu0 0.0
    %1135 = vmatpush1.msra.mxu0 0.0
    %1136 = vmatprep.subr.mxu0 0.0
    %1137 = vmatpush1.msra.mxu0 0.0
    %1138 = vmatprep.subr.mxu0 0.0
    %1139 = vmatpush1.msra.mxu0 0.0
    %1140 = vmatprep.subr.mxu0 0.0
    %1141 = vmatpush1.msra.mxu0 0.0
    %1142 = vmatprep.subr.mxu0 0.0
    %1143 = vmatpush1.msra.mxu0 0.0
    %1144 = vmatprep.subr.mxu0 0.0
    %1145 = vmatpush1.msra.mxu0 0.0
    %1146 = vmatprep.subr.mxu0 0.0
    %1147 = vmatpush1.msra.mxu0 0.0
    %1148 = vmatprep.subr.mxu0 0.0
    %1149 = vmatpush1.msra.mxu0 0.0
    %1150 = vmatprep.subr.mxu0 0.0
    %1151 = vmatpush1.msra.mxu0 0.0
    %1152 = vmatprep.subr.mxu0 0.0
    %1153 = vmatpush1.msra.mxu0 0.0
    %1154 = vmatprep.subr.mxu0 0.0
    %1155 = vmatpush1.msra.mxu0 0.0
    %1156 = vmatprep.mubr.f32.mxu0 0.0
    %1157 = vmatmul.mubr.f32.gmra.mrb[0].mxu0 %v1090
    %v1158 = vpop.f32.mrb[0].mxu0
    %v1159 = vadd.f32 0.0, %v1158
    %v1160 = vpop.f32.mrb[0].mxu0
    %1161 = vdwg.mxu0
    %1162 = vrot.lane.b32.xlu0 %v280, 64
    %v1163 = vpop.permute.xlu0 %1162
    %v1166 = vsel %vm307, %v1004, 0
    %1168 = vmatprep.subr.mxu0 0.0
    %1169 = vmatpush1.msra.mxu0 %v1163
    %1170 = vmatprep.subr.mxu0 0.0
    %1171 = vmatpush1.msra.mxu0 0.0
    %1172 = vmatprep.subr.mxu0 0.0
    %1173 = vmatpush1.msra.mxu0 0.0
    %1174 = vmatprep.subr.mxu0 0.0
    %1175 = vmatpush1.msra.mxu0 0.0
    %1176 = vmatprep.subr.mxu0 0.0
    %1177 = vmatpush1.msra.mxu0 0.0
    %1178 = vmatprep.subr.mxu0 0.0
    %1179 = vmatpush1.msra.mxu0 0.0
    %1180 = vmatprep.subr.mxu0 0.0
    %1181 = vmatpush1.msra.mxu0 0.0
    %1182 = vmatprep.subr.mxu0 0.0
    %1183 = vmatpush1.msra.mxu0 0.0
    %1184 = vmatprep.subr.mxu0 0.0
    %1185 = vmatpush1.msra.mxu0 0.0
    %1186 = vmatprep.subr.mxu0 0.0
    %1187 = vmatpush1.msra.mxu0 0.0
    %1188 = vmatprep.subr.mxu0 0.0
    %1189 = vmatpush1.msra.mxu0 0.0
    %1190 = vmatprep.subr.mxu0 0.0
    %1191 = vmatpush1.msra.mxu0 0.0
    %1192 = vmatprep.subr.mxu0 0.0
    %1193 = vmatpush1.msra.mxu0 0.0
    %1194 = vmatprep.subr.mxu0 0.0
    %1195 = vmatpush1.msra.mxu0 0.0
    %1196 = vmatprep.subr.mxu0 0.0
    %1197 = vmatpush1.msra.mxu0 0.0
    %1198 = vmatprep.subr.mxu0 0.0
    %1199 = vmatpush1.msra.mxu0 0.0
    %1200 = vmatprep.subr.mxu0 0.0
    %1201 = vmatpush1.msra.mxu0 0.0
    %1202 = vmatprep.subr.mxu0 0.0
    %1203 = vmatpush1.msra.mxu0 0.0
    %1204 = vmatprep.subr.mxu0 0.0
    %1205 = vmatpush1.msra.mxu0 0.0
    %1206 = vmatprep.subr.mxu0 0.0
    %1207 = vmatpush1.msra.mxu0 0.0
    %1208 = vmatprep.subr.mxu0 0.0
    %1209 = vmatpush1.msra.mxu0 0.0
    %1210 = vmatprep.subr.mxu0 0.0
    %1211 = vmatpush1.msra.mxu0 0.0
    %1212 = vmatprep.subr.mxu0 0.0
    %1213 = vmatpush1.msra.mxu0 0.0
    %1214 = vmatprep.subr.mxu0 0.0
    %1215 = vmatpush1.msra.mxu0 0.0
    %1216 = vmatprep.subr.mxu0 0.0
    %1217 = vmatpush1.msra.mxu0 0.0
    %1218 = vmatprep.subr.mxu0 0.0
    %1219 = vmatpush1.msra.mxu0 0.0
    %1220 = vmatprep.subr.mxu0 0.0
    %1221 = vmatpush1.msra.mxu0 0.0
    %1222 = vmatprep.subr.mxu0 0.0
    %1223 = vmatpush1.msra.mxu0 0.0
    %1224 = vmatprep.subr.mxu0 0.0
    %1225 = vmatpush1.msra.mxu0 0.0
    %1226 = vmatprep.subr.mxu0 0.0
    %1227 = vmatpush1.msra.mxu0 0.0
    %1228 = vmatprep.subr.mxu0 0.0
    %1229 = vmatpush1.msra.mxu0 0.0
    %1230 = vmatprep.subr.mxu0 0.0
    %1231 = vmatpush1.msra.mxu0 0.0
    %1232 = vmatprep.mubr.f32.mxu0 0.0
    %1233 = vmatmul.mubr.f32.gmra.mrb[0].mxu0 %v1166
    %v1234 = vpop.f32.mrb[0].mxu0
    %v1235 = vadd.f32 0.0, %v1234
    %v1236 = vpop.f32.mrb[0].mxu0
    %1237 = vdwg.mxu0
    %1238 = vrot.lane.b32.xlu0 %v282, 64
    %v1239 = vpop.permute.xlu0 %1238
    %v1242 = vsel %vm307, %v1005, 0
    %1244 = vmatprep.subr.mxu0 0.0
    %1245 = vmatpush1.msra.mxu0 %v1239
    %1246 = vmatprep.subr.mxu0 0.0
    %1247 = vmatpush1.msra.mxu0 0.0
    %1248 = vmatprep.subr.mxu0 0.0
    %1249 = vmatpush1.msra.mxu0 0.0
    %1250 = vmatprep.subr.mxu0 0.0
    %1251 = vmatpush1.msra.mxu0 0.0
    %1252 = vmatprep.subr.mxu0 0.0
    %1253 = vmatpush1.msra.mxu0 0.0
    %1254 = vmatprep.subr.mxu0 0.0
    %1255 = vmatpush1.msra.mxu0 0.0
    %1256 = vmatprep.subr.mxu0 0.0
    %1257 = vmatpush1.msra.mxu0 0.0
    %1258 = vmatprep.subr.mxu0 0.0
    %1259 = vmatpush1.msra.mxu0 0.0
    %1260 = vmatprep.subr.mxu0 0.0
    %1261 = vmatpush1.msra.mxu0 0.0
    %1262 = vmatprep.subr.mxu0 0.0
    %1263 = vmatpush1.msra.mxu0 0.0
    %1264 = vmatprep.subr.mxu0 0.0
    %1265 = vmatpush1.msra.mxu0 0.0
    %1266 = vmatprep.subr.mxu0 0.0
    %1267 = vmatpush1.msra.mxu0 0.0
    %1268 = vmatprep.subr.mxu0 0.0
    %1269 = vmatpush1.msra.mxu0 0.0
    %1270 = vmatprep.subr.mxu0 0.0
    %1271 = vmatpush1.msra.mxu0 0.0
    %1272 = vmatprep.subr.mxu0 0.0
    %1273 = vmatpush1.msra.mxu0 0.0
    %1274 = vmatprep.subr.mxu0 0.0
    %1275 = vmatpush1.msra.mxu0 0.0
    %1276 = vmatprep.subr.mxu0 0.0
    %1277 = vmatpush1.msra.mxu0 0.0
    %1278 = vmatprep.subr.mxu0 0.0
    %1279 = vmatpush1.msra.mxu0 0.0
    %1280 = vmatprep.subr.mxu0 0.0
    %1281 = vmatpush1.msra.mxu0 0.0
    %1282 = vmatprep.subr.mxu0 0.0
    %1283 = vmatpush1.msra.mxu0 0.0
    %1284 = vmatprep.subr.mxu0 0.0
    %1285 = vmatpush1.msra.mxu0 0.0
    %1286 = vmatprep.subr.mxu0 0.0
    %1287 = vmatpush1.msra.mxu0 0.0
    %1288 = vmatprep.subr.mxu0 0.0
    %1289 = vmatpush1.msra.mxu0 0.0
    %1290 = vmatprep.subr.mxu0 0.0
    %1291 = vmatpush1.msra.mxu0 0.0
    %1292 = vmatprep.subr.mxu0 0.0
    %1293 = vmatpush1.msra.mxu0 0.0
    %1294 = vmatprep.subr.mxu0 0.0
    %1295 = vmatpush1.msra.mxu0 0.0
    %1296 = vmatprep.subr.mxu0 0.0
    %1297 = vmatpush1.msra.mxu0 0.0
    %1298 = vmatprep.subr.mxu0 0.0
    %1299 = vmatpush1.msra.mxu0 0.0
    %1300 = vmatprep.subr.mxu0 0.0
    %1301 = vmatpush1.msra.mxu0 0.0
    %1302 = vmatprep.subr.mxu0 0.0
    %1303 = vmatpush1.msra.mxu0 0.0
    %1304 = vmatprep.subr.mxu0 0.0
    %1305 = vmatpush1.msra.mxu0 0.0
    %1306 = vmatprep.subr.mxu0 0.0
    %1307 = vmatpush1.msra.mxu0 0.0
    %1308 = vmatprep.mubr.f32.mxu0 0.0
    %1309 = vmatmul.mubr.f32.gmra.mrb[0].mxu0 %v1242
    %v1310 = vpop.f32.mrb[0].mxu0
    %v1311 = vadd.f32 0.0, %v1310
    %v1312 = vpop.f32.mrb[0].mxu0
    %1313 = vdwg.mxu0
    %1314 = vrot.lane.b32.xlu0 %v286, 64
    %v1315 = vpop.permute.xlu0 %1314
    %v1318 = vsel %vm307, %v1006, 0
    %1320 = vmatprep.subr.mxu0 0.0
    %1321 = vmatpush1.msra.mxu0 %v1315
    %1322 = vmatprep.subr.mxu0 0.0
    %1323 = vmatpush1.msra.mxu0 0.0
    %1324 = vmatprep.subr.mxu0 0.0
    %1325 = vmatpush1.msra.mxu0 0.0
    %1326 = vmatprep.subr.mxu0 0.0
    %1327 = vmatpush1.msra.mxu0 0.0
    %1328 = vmatprep.subr.mxu0 0.0
    %1329 = vmatpush1.msra.mxu0 0.0
    %1330 = vmatprep.subr.mxu0 0.0
    %1331 = vmatpush1.msra.mxu0 0.0
    %1332 = vmatprep.subr.mxu0 0.0
    %1333 = vmatpush1.msra.mxu0 0.0
    %1334 = vmatprep.subr.mxu0 0.0
    %1335 = vmatpush1.msra.mxu0 0.0
    %1336 = vmatprep.subr.mxu0 0.0
    %1337 = vmatpush1.msra.mxu0 0.0
    %1338 = vmatprep.subr.mxu0 0.0
    %1339 = vmatpush1.msra.mxu0 0.0
    %1340 = vmatprep.subr.mxu0 0.0
    %1341 = vmatpush1.msra.mxu0 0.0
    %1342 = vmatprep.subr.mxu0 0.0
    %1343 = vmatpush1.msra.mxu0 0.0
    %1344 = vmatprep.subr.mxu0 0.0
    %1345 = vmatpush1.msra.mxu0 0.0
    %1346 = vmatprep.subr.mxu0 0.0
    %1347 = vmatpush1.msra.mxu0 0.0
    %1348 = vmatprep.subr.mxu0 0.0
    %1349 = vmatpush1.msra.mxu0 0.0
    %1350 = vmatprep.subr.mxu0 0.0
    %1351 = vmatpush1.msra.mxu0 0.0
    %1352 = vmatprep.subr.mxu0 0.0
    %1353 = vmatpush1.msra.mxu0 0.0
    %1354 = vmatprep.subr.mxu0 0.0
    %1355 = vmatpush1.msra.mxu0 0.0
    %1356 = vmatprep.subr.mxu0 0.0
    %1357 = vmatpush1.msra.mxu0 0.0
    %1358 = vmatprep.subr.mxu0 0.0
    %1359 = vmatpush1.msra.mxu0 0.0
    %1360 = vmatprep.subr.mxu0 0.0
    %1361 = vmatpush1.msra.mxu0 0.0
    %1362 = vmatprep.subr.mxu0 0.0
    %1363 = vmatpush1.msra.mxu0 0.0
    %1364 = vmatprep.subr.mxu0 0.0
    %1365 = vmatpush1.msra.mxu0 0.0
    %1366 = vmatprep.subr.mxu0 0.0
    %1367 = vmatpush1.msra.mxu0 0.0
    %1368 = vmatprep.subr.mxu0 0.0
    %1369 = vmatpush1.msra.mxu0 0.0
    %1370 = vmatprep.subr.mxu0 0.0
    %1371 = vmatpush1.msra.mxu0 0.0
    %1372 = vmatprep.subr.mxu0 0.0
    %1373 = vmatpush1.msra.mxu0 0.0
    %1374 = vmatprep.subr.mxu0 0.0
    %1375 = vmatpush1.msra.mxu0 0.0
    %1376 = vmatprep.subr.mxu0 0.0
    %1377 = vmatpush1.msra.mxu0 0.0
    %1378 = vmatprep.subr.mxu0 0.0
    %1379 = vmatpush1.msra.mxu0 0.0
    %1380 = vmatprep.subr.mxu0 0.0
    %1381 = vmatpush1.msra.mxu0 0.0
    %1382 = vmatprep.subr.mxu0 0.0
    %1383 = vmatpush1.msra.mxu0 0.0
    %1384 = vmatprep.mubr.f32.mxu0 0.0
    %1385 = vmatmul.mubr.f32.gmra.mrb[0].mxu0 %v1318
    %v1386 = vpop.f32.mrb[0].mxu0
    %v1387 = vadd.f32 0.0, %v1386
    %v1388 = vpop.f32.mrb[0].mxu0
    %1389 = vdwg.mxu0
    %1390 = vrot.lane.b32.xlu0 %v288, 64
    %v1391 = vpop.permute.xlu0 %1390
    %v1394 = vsel %vm307, %v1007, 0
    %1396 = vmatprep.subr.mxu0 0.0
    %1397 = vmatpush1.msra.mxu0 %v1391
    %1398 = vmatprep.subr.mxu0 0.0
    %1399 = vmatpush1.msra.mxu0 0.0
    %1400 = vmatprep.subr.mxu0 0.0
    %1401 = vmatpush1.msra.mxu0 0.0
    %1402 = vmatprep.subr.mxu0 0.0
    %1403 = vmatpush1.msra.mxu0 0.0
    %1404 = vmatprep.subr.mxu0 0.0
    %1405 = vmatpush1.msra.mxu0 0.0
    %1406 = vmatprep.subr.mxu0 0.0
    %1407 = vmatpush1.msra.mxu0 0.0
    %1408 = vmatprep.subr.mxu0 0.0
    %1409 = vmatpush1.msra.mxu0 0.0
    %1410 = vmatprep.subr.mxu0 0.0
    %1411 = vmatpush1.msra.mxu0 0.0
    %1412 = vmatprep.subr.mxu0 0.0
    %1413 = vmatpush1.msra.mxu0 0.0
    %1414 = vmatprep.subr.mxu0 0.0
    %1415 = vmatpush1.msra.mxu0 0.0
    %1416 = vmatprep.subr.mxu0 0.0
    %1417 = vmatpush1.msra.mxu0 0.0
    %1418 = vmatprep.subr.mxu0 0.0
    %1419 = vmatpush1.msra.mxu0 0.0
    %1420 = vmatprep.subr.mxu0 0.0
    %1421 = vmatpush1.msra.mxu0 0.0
    %1422 = vmatprep.subr.mxu0 0.0
    %1423 = vmatpush1.msra.mxu0 0.0
    %1424 = vmatprep.subr.mxu0 0.0
    %1425 = vmatpush1.msra.mxu0 0.0
    %1426 = vmatprep.subr.mxu0 0.0
    %1427 = vmatpush1.msra.mxu0 0.0
    %1428 = vmatprep.subr.mxu0 0.0
    %1429 = vmatpush1.msra.mxu0 0.0
    %1430 = vmatprep.subr.mxu0 0.0
    %1431 = vmatpush1.msra.mxu0 0.0
    %1432 = vmatprep.subr.mxu0 0.0
    %1433 = vmatpush1.msra.mxu0 0.0
    %1434 = vmatprep.subr.mxu0 0.0
    %1435 = vmatpush1.msra.mxu0 0.0
    %1436 = vmatprep.subr.mxu0 0.0
    %1437 = vmatpush1.msra.mxu0 0.0
    %1438 = vmatprep.subr.mxu0 0.0
    %1439 = vmatpush1.msra.mxu0 0.0
    %1440 = vmatprep.subr.mxu0 0.0
    %1441 = vmatpush1.msra.mxu0 0.0
    %1442 = vmatprep.subr.mxu0 0.0
    %1443 = vmatpush1.msra.mxu0 0.0
    %1444 = vmatprep.subr.mxu0 0.0
    %1445 = vmatpush1.msra.mxu0 0.0
    %1446 = vmatprep.subr.mxu0 0.0
    %1447 = vmatpush1.msra.mxu0 0.0
    %1448 = vmatprep.subr.mxu0 0.0
    %1449 = vmatpush1.msra.mxu0 0.0
    %1450 = vmatprep.subr.mxu0 0.0
    %1451 = vmatpush1.msra.mxu0 0.0
    %1452 = vmatprep.subr.mxu0 0.0
    %1453 = vmatpush1.msra.mxu0 0.0
    %1454 = vmatprep.subr.mxu0 0.0
    %1455 = vmatpush1.msra.mxu0 0.0
    %1456 = vmatprep.subr.mxu0 0.0
    %1457 = vmatpush1.msra.mxu0 0.0
    %1458 = vmatprep.subr.mxu0 0.0
    %1459 = vmatpush1.msra.mxu0 0.0
    %1460 = vmatprep.mubr.f32.mxu0 0.0
    %1461 = vmatmul.mubr.f32.gmra.mrb[0].mxu0 %v1394
    %v1462 = vpop.f32.mrb[0].mxu0
    %v1463 = vadd.f32 0.0, %v1462
    %v1464 = vpop.f32.mrb[0].mxu0
    %1465 = vdwg.mxu0
    %1466 = vrot.lane.b32.xlu0 %v292, 64
    %v1467 = vpop.permute.xlu0 %1466
    %v1470 = vsel %vm307, %v1008, 0
    %1472 = vmatprep.subr.mxu0 0.0
    %1473 = vmatpush1.msra.mxu0 %v1467
    %1474 = vmatprep.subr.mxu0 0.0
    %1475 = vmatpush1.msra.mxu0 0.0
    %1476 = vmatprep.subr.mxu0 0.0
    %1477 = vmatpush1.msra.mxu0 0.0
    %1478 = vmatprep.subr.mxu0 0.0
    %1479 = vmatpush1.msra.mxu0 0.0
    %1480 = vmatprep.subr.mxu0 0.0
    %1481 = vmatpush1.msra.mxu0 0.0
    %1482 = vmatprep.subr.mxu0 0.0
    %1483 = vmatpush1.msra.mxu0 0.0
    %1484 = vmatprep.subr.mxu0 0.0
    %1485 = vmatpush1.msra.mxu0 0.0
    %1486 = vmatprep.subr.mxu0 0.0
    %1487 = vmatpush1.msra.mxu0 0.0
    %1488 = vmatprep.subr.mxu0 0.0
    %1489 = vmatpush1.msra.mxu0 0.0
    %1490 = vmatprep.subr.mxu0 0.0
    %1491 = vmatpush1.msra.mxu0 0.0
    %1492 = vmatprep.subr.mxu0 0.0
    %1493 = vmatpush1.msra.mxu0 0.0
    %1494 = vmatprep.subr.mxu0 0.0
    %1495 = vmatpush1.msra.mxu0 0.0
    %1496 = vmatprep.subr.mxu0 0.0
    %1497 = vmatpush1.msra.mxu0 0.0
    %1498 = vmatprep.subr.mxu0 0.0
    %1499 = vmatpush1.msra.mxu0 0.0
    %1500 = vmatprep.subr.mxu0 0.0
    %1501 = vmatpush1.msra.mxu0 0.0
    %1502 = vmatprep.subr.mxu0 0.0
    %1503 = vmatpush1.msra.mxu0 0.0
    %1504 = vmatprep.subr.mxu0 0.0
    %1505 = vmatpush1.msra.mxu0 0.0
    %1506 = vmatprep.subr.mxu0 0.0
    %1507 = vmatpush1.msra.mxu0 0.0
    %1508 = vmatprep.subr.mxu0 0.0
    %1509 = vmatpush1.msra.mxu0 0.0
    %1510 = vmatprep.subr.mxu0 0.0
    %1511 = vmatpush1.msra.mxu0 0.0
    %1512 = vmatprep.subr.mxu0 0.0
    %1513 = vmatpush1.msra.mxu0 0.0
    %1514 = vmatprep.subr.mxu0 0.0
    %1515 = vmatpush1.msra.mxu0 0.0
    %1516 = vmatprep.subr.mxu0 0.0
    %1517 = vmatpush1.msra.mxu0 0.0
    %1518 = vmatprep.subr.mxu0 0.0
    %1519 = vmatpush1.msra.mxu0 0.0
    %1520 = vmatprep.subr.mxu0 0.0
    %1521 = vmatpush1.msra.mxu0 0.0
    %1522 = vmatprep.subr.mxu0 0.0
    %1523 = vmatpush1.msra.mxu0 0.0
    %1524 = vmatprep.subr.mxu0 0.0
    %1525 = vmatpush1.msra.mxu0 0.0
    %1526 = vmatprep.subr.mxu0 0.0
    %1527 = vmatpush1.msra.mxu0 0.0
    %1528 = vmatprep.subr.mxu0 0.0
    %1529 = vmatpush1.msra.mxu0 0.0
    %1530 = vmatprep.subr.mxu0 0.0
    %1531 = vmatpush1.msra.mxu0 0.0
    %1532 = vmatprep.subr.mxu0 0.0
    %1533 = vmatpush1.msra.mxu0 0.0
    %1534 = vmatprep.subr.mxu0 0.0
    %1535 = vmatpush1.msra.mxu0 0.0
    %1536 = vmatprep.mubr.f32.mxu0 0.0
    %1537 = vmatmul.mubr.f32.gmra.mrb[0].mxu0 %v1470
    %v1538 = vpop.f32.mrb[0].mxu0
    %v1539 = vadd.f32 0.0, %v1538
    %v1540 = vpop.f32.mrb[0].mxu0
    %1541 = vdwg.mxu0
    %1542 = vrot.lane.b32.xlu0 %v294, 64
    %v1543 = vpop.permute.xlu0 %1542
    %v1546 = vsel %vm307, %v1009, 0
    %1548 = vmatprep.subr.mxu0 0.0
    %1549 = vmatpush1.msra.mxu0 %v1543
    %1550 = vmatprep.subr.mxu0 0.0
    %1551 = vmatpush1.msra.mxu0 0.0
    %1552 = vmatprep.subr.mxu0 0.0
    %1553 = vmatpush1.msra.mxu0 0.0
    %1554 = vmatprep.subr.mxu0 0.0
    %1555 = vmatpush1.msra.mxu0 0.0
    %1556 = vmatprep.subr.mxu0 0.0
    %1557 = vmatpush1.msra.mxu0 0.0
    %1558 = vmatprep.subr.mxu0 0.0
    %1559 = vmatpush1.msra.mxu0 0.0
    %1560 = vmatprep.subr.mxu0 0.0
    %1561 = vmatpush1.msra.mxu0 0.0
    %1562 = vmatprep.subr.mxu0 0.0
    %1563 = vmatpush1.msra.mxu0 0.0
    %1564 = vmatprep.subr.mxu0 0.0
    %1565 = vmatpush1.msra.mxu0 0.0
    %1566 = vmatprep.subr.mxu0 0.0
    %1567 = vmatpush1.msra.mxu0 0.0
    %1568 = vmatprep.subr.mxu0 0.0
    %1569 = vmatpush1.msra.mxu0 0.0
    %1570 = vmatprep.subr.mxu0 0.0
    %1571 = vmatpush1.msra.mxu0 0.0
    %1572 = vmatprep.subr.mxu0 0.0
    %1573 = vmatpush1.msra.mxu0 0.0
    %1574 = vmatprep.subr.mxu0 0.0
    %1575 = vmatpush1.msra.mxu0 0.0
    %1576 = vmatprep.subr.mxu0 0.0
    %1577 = vmatpush1.msra.mxu0 0.0
    %1578 = vmatprep.subr.mxu0 0.0
    %1579 = vmatpush1.msra.mxu0 0.0
    %1580 = vmatprep.subr.mxu0 0.0
    %1581 = vmatpush1.msra.mxu0 0.0
    %1582 = vmatprep.subr.mxu0 0.0
    %1583 = vmatpush1.msra.mxu0 0.0
    %1584 = vmatprep.subr.mxu0 0.0
    %1585 = vmatpush1.msra.mxu0 0.0
    %1586 = vmatprep.subr.mxu0 0.0
    %1587 = vmatpush1.msra.mxu0 0.0
    %1588 = vmatprep.subr.mxu0 0.0
    %1589 = vmatpush1.msra.mxu0 0.0
    %1590 = vmatprep.subr.mxu0 0.0
    %1591 = vmatpush1.msra.mxu0 0.0
    %1592 = vmatprep.subr.mxu0 0.0
    %1593 = vmatpush1.msra.mxu0 0.0
    %1594 = vmatprep.subr.mxu0 0.0
    %1595 = vmatpush1.msra.mxu0 0.0
    %1596 = vmatprep.subr.mxu0 0.0
    %1597 = vmatpush1.msra.mxu0 0.0
    %1598 = vmatprep.subr.mxu0 0.0
    %1599 = vmatpush1.msra.mxu0 0.0
    %1600 = vmatprep.subr.mxu0 0.0
    %1601 = vmatpush1.msra.mxu0 0.0
    %1602 = vmatprep.subr.mxu0 0.0
    %1603 = vmatpush1.msra.mxu0 0.0
    %1604 = vmatprep.subr.mxu0 0.0
    %1605 = vmatpush1.msra.mxu0 0.0
    %1606 = vmatprep.subr.mxu0 0.0
    %1607 = vmatpush1.msra.mxu0 0.0
    %1608 = vmatprep.subr.mxu0 0.0
    %1609 = vmatpush1.msra.mxu0 0.0
    %1610 = vmatprep.subr.mxu0 0.0
    %1611 = vmatpush1.msra.mxu0 0.0
    %1612 = vmatprep.mubr.f32.mxu0 0.0
    %1613 = vmatmul.mubr.f32.gmra.mrb[0].mxu0 %v1546
    %v1614 = vpop.f32.mrb[0].mxu0
    %v1615 = vadd.f32 0.0, %v1614
    %v1616 = vpop.f32.mrb[0].mxu0
    %1617 = vdwg.mxu0
    %1620 = vrot.lane.b32.xlu0 %v1235, 8
    %v1621 = vpop.permute.xlu0 %1620
    %1622 = vrot.lane.b32.xlu0 %v1311, 8
    %v1623 = vpop.permute.xlu0 %1622
    %1628 = vrot.lane.b32.xlu0 %v1387, 16
    %v1629 = vpop.permute.xlu0 %1628
    %1630 = vrot.lane.b32.xlu0 %v1463, 16
    %v1631 = vpop.permute.xlu0 %1630
    %1636 = vrot.lane.b32.xlu0 %v1539, 24
    %v1637 = vpop.permute.xlu0 %1636
    %1638 = vrot.lane.b32.xlu0 %v1615, 24
    %v1639 = vpop.permute.xlu0 %1638
    %v1642 = vsel %vm307, %v1083, %v1621
    %v1643 = vsel %vm307, %v1159, %v1623
    %vm1644 = vcmask 130048
    %v1645 = vsel %vm1644, %v1642, %v1629
    %v1646 = vsel %vm1644, %v1643, %v1631
    %vm1647 = vcmask 195584
    %v1648 = vsel %vm1647, %v1645, %v1637
    %v1649 = vsel %vm1647, %v1646, %v1639
    %v1650 = vld [vmem:[%s3 + $0x98] sm:$0xff]
    %v1651 = vld [vmem:[%s3 + $0xa0] sm:$0xff]
    %v1652 = vld [vmem:[%s3 + $0xa8] sm:$0xff]
    %v1653 = vld [vmem:[%s3 + $0xb0] sm:$0xff]
    %v1654 = vld [vmem:[%s3 + $0x10a] sm:$0x1]
    %v1655 = vlaneseq
    %v1656 = vshrl.u32 %v1655, 7
    %v1657 = vsub.s32 0, %v1656
    %v1658 = vrot.slane %v1654, %v1657
    %v1660 = vsel %vm195, %v1648, 0
    %v1663 = vsel %vm195, %v1649, 0
    %1665 = vmatprep.subr.mxu0 0.0
    %1666 = vmatpush1.msra.mxu0 %v1650
    %1667 = vmatprep.subr.mxu0 0.0
    %1668 = vmatpush1.msra.mxu0 %v1651
    %1669 = vmatprep.subr.mxu0 0.0
    %1670 = vmatpush1.msra.mxu0 %v1652
    %1671 = vmatprep.subr.mxu0 0.0
    %1672 = vmatpush1.msra.mxu0 %v1653
    %1673 = vmatprep.subr.mxu0 0.0
    %1674 = vmatpush1.msra.mxu0 0.0
    %1675 = vmatprep.subr.mxu0 0.0
    %1676 = vmatpush1.msra.mxu0 0.0
    %1677 = vmatprep.subr.mxu0 0.0
    %1678 = vmatpush1.msra.mxu0 0.0
    %1679 = vmatprep.subr.mxu0 0.0
    %1680 = vmatpush1.msra.mxu0 0.0
    %1681 = vmatprep.subr.mxu0 0.0
    %1682 = vmatpush1.msra.mxu0 0.0
    %1683 = vmatprep.subr.mxu0 0.0
    %1684 = vmatpush1.msra.mxu0 0.0
    %1685 = vmatprep.subr.mxu0 0.0
    %1686 = vmatpush1.msra.mxu0 0.0
    %1687 = vmatprep.subr.mxu0 0.0
    %1688 = vmatpush1.msra.mxu0 0.0
    %1689 = vmatprep.subr.mxu0 0.0
    %1690 = vmatpush1.msra.mxu0 0.0
    %1691 = vmatprep.subr.mxu0 0.0
    %1692 = vmatpush1.msra.mxu0 0.0
    %1693 = vmatprep.subr.mxu0 0.0
    %1694 = vmatpush1.msra.mxu0 0.0
    %1695 = vmatprep.subr.mxu0 0.0
    %1696 = vmatpush1.msra.mxu0 0.0
    %1697 = vmatprep.subr.mxu0 0.0
    %1698 = vmatpush1.msra.mxu0 0.0
    %1699 = vmatprep.subr.mxu0 0.0
    %1700 = vmatpush1.msra.mxu0 0.0
    %1701 = vmatprep.subr.mxu0 0.0
    %1702 = vmatpush1.msra.mxu0 0.0
    %1703 = vmatprep.subr.mxu0 0.0
    %1704 = vmatpush1.msra.mxu0 0.0
    %1705 = vmatprep.subr.mxu0 0.0
    %1706 = vmatpush1.msra.mxu0 0.0
    %1707 = vmatprep.subr.mxu0 0.0
    %1708 = vmatpush1.msra.mxu0 0.0
    %1709 = vmatprep.subr.mxu0 0.0
    %1710 = vmatpush1.msra.mxu0 0.0
    %1711 = vmatprep.subr.mxu0 0.0
    %1712 = vmatpush1.msra.mxu0 0.0
    %1713 = vmatprep.subr.mxu0 0.0
    %1714 = vmatpush1.msra.mxu0 0.0
    %1715 = vmatprep.subr.mxu0 0.0
    %1716 = vmatpush1.msra.mxu0 0.0
    %1717 = vmatprep.subr.mxu0 0.0
    %1718 = vmatpush1.msra.mxu0 0.0
    %1719 = vmatprep.subr.mxu0 0.0
    %1720 = vmatpush1.msra.mxu0 0.0
    %1721 = vmatprep.subr.mxu0 0.0
    %1722 = vmatpush1.msra.mxu0 0.0
    %1723 = vmatprep.subr.mxu0 0.0
    %1724 = vmatpush1.msra.mxu0 0.0
    %1725 = vmatprep.subr.mxu0 0.0
    %1726 = vmatpush1.msra.mxu0 0.0
    %1727 = vmatprep.subr.mxu0 0.0
    %1728 = vmatpush1.msra.mxu0 0.0
    %1729 = vmatprep.mubr.f32.mxu0 0.0
    %1730 = vmatmul.mubr.f32.gmra.mrb[0].mxu0 %v1660
    %v1731 = vpop.f32.mrb[0].mxu0
    %v1732 = vadd.f32 %v1658, %v1731
    %v1733 = vpop.f32.mrb[0].mxu0
    %1734 = vmatprep.mubr.f32.mxu0 0.0
    %1735 = vmatmul.mubr.f32.gmra.mrb[0].mxu0 %v1663
    %v1736 = vpop.f32.mrb[0].mxu0
    %v1737 = vadd.f32 %v1658, %v1736
    %v1738 = vpop.f32.mrb[0].mxu0
    %1739 = vdwg.mxu0
    %v1740 = vld [vmem:[%s3 + $0x58] sm:$0xff]
    %v1741 = vld [vmem:[%s3 + $0x60] sm:$0xff]
    %v1742 = vld [vmem:[%s3 + $0x68] sm:$0xff]
    %v1743 = vld [vmem:[%s3 + $0x70] sm:$0xff]
    %v1744 = vld [vmem:[%s3 + $0x10b] sm:$0x1]
    %v1745 = vlaneseq
    %v1746 = vshrl.u32 %v1745, 7
    %v1747 = vsub.s32 0, %v1746
    %v1748 = vrot.slane %v1744, %v1747
    %v1750 = vsel %vm195, %v1732, 0
    %v1753 = vsel %vm195, %v1737, 0
    %1755 = vmatprep.subr.mxu0 0.0
    %1756 = vmatpush1.msra.mxu0 %v1740
    %1757 = vmatprep.subr.mxu0 0.0
    %1758 = vmatpush1.msra.mxu0 %v1741
    %1759 = vmatprep.subr.mxu0 0.0
    %1760 = vmatpush1.msra.mxu0 %v1742
    %1761 = vmatprep.subr.mxu0 0.0
    %1762 = vmatpush1.msra.mxu0 %v1743
    %1763 = vmatprep.subr.mxu0 0.0
    %1764 = vmatpush1.msra.mxu0 0.0
    %1765 = vmatprep.subr.mxu0 0.0
    %1766 = vmatpush1.msra.mxu0 0.0
    %1767 = vmatprep.subr.mxu0 0.0
    %1768 = vmatpush1.msra.mxu0 0.0
    %1769 = vmatprep.subr.mxu0 0.0
    %1770 = vmatpush1.msra.mxu0 0.0
    %1771 = vmatprep.subr.mxu0 0.0
    %1772 = vmatpush1.msra.mxu0 0.0
    %1773 = vmatprep.subr.mxu0 0.0
    %1774 = vmatpush1.msra.mxu0 0.0
    %1775 = vmatprep.subr.mxu0 0.0
    %1776 = vmatpush1.msra.mxu0 0.0
    %1777 = vmatprep.subr.mxu0 0.0
    %1778 = vmatpush1.msra.mxu0 0.0
    %1779 = vmatprep.subr.mxu0 0.0
    %1780 = vmatpush1.msra.mxu0 0.0
    %1781 = vmatprep.subr.mxu0 0.0
    %1782 = vmatpush1.msra.mxu0 0.0
    %1783 = vmatprep.subr.mxu0 0.0
    %1784 = vmatpush1.msra.mxu0 0.0
    %1785 = vmatprep.subr.mxu0 0.0
    %1786 = vmatpush1.msra.mxu0 0.0
    %1787 = vmatprep.subr.mxu0 0.0
    %1788 = vmatpush1.msra.mxu0 0.0
    %1789 = vmatprep.subr.mxu0 0.0
    %1790 = vmatpush1.msra.mxu0 0.0
    %1791 = vmatprep.subr.mxu0 0.0
    %1792 = vmatpush1.msra.mxu0 0.0
    %1793 = vmatprep.subr.mxu0 0.0
    %1794 = vmatpush1.msra.mxu0 0.0
    %1795 = vmatprep.subr.mxu0 0.0
    %1796 = vmatpush1.msra.mxu0 0.0
    %1797 = vmatprep.subr.mxu0 0.0
    %1798 = vmatpush1.msra.mxu0 0.0
    %1799 = vmatprep.subr.mxu0 0.0
    %1800 = vmatpush1.msra.mxu0 0.0
    %1801 = vmatprep.subr.mxu0 0.0
    %1802 = vmatpush1.msra.mxu0 0.0
    %1803 = vmatprep.subr.mxu0 0.0
    %1804 = vmatpush1.msra.mxu0 0.0
    %1805 = vmatprep.subr.mxu0 0.0
    %1806 = vmatpush1.msra.mxu0 0.0
    %1807 = vmatprep.subr.mxu0 0.0
    %1808 = vmatpush1.msra.mxu0 0.0
    %1809 = vmatprep.subr.mxu0 0.0
    %1810 = vmatpush1.msra.mxu0 0.0
    %1811 = vmatprep.subr.mxu0 0.0
    %1812 = vmatpush1.msra.mxu0 0.0
    %1813 = vmatprep.subr.mxu0 0.0
    %1814 = vmatpush1.msra.mxu0 0.0
    %1815 = vmatprep.subr.mxu0 0.0
    %1816 = vmatpush1.msra.mxu0 0.0
    %1817 = vmatprep.subr.mxu0 0.0
    %1818 = vmatpush1.msra.mxu0 0.0
    %1819 = vmatprep.mubr.f32.mxu0 0.0
    %1820 = vmatmul.mubr.f32.gmra.mrb[0].mxu0 %v1750
    %v1821 = vpop.f32.mrb[0].mxu0
    %v1822 = vadd.f32 %v1748, %v1821
    %v1823 = vpop.f32.mrb[0].mxu0
    %1824 = vmatprep.mubr.f32.mxu0 0.0
    %1825 = vmatmul.mubr.f32.gmra.mrb[0].mxu0 %v1753
    %v1826 = vpop.f32.mrb[0].mxu0
    %v1827 = vadd.f32 %v1748, %v1826
    %v1828 = vpop.f32.mrb[0].mxu0
    %1829 = vdwg.mxu0
    %v1830 = vld [vmem:[#allocation4] sm:$0xff]
    %v1831 = vld [vmem:[#allocation4 + $0x8] sm:$0xff]
    %v1832 = vld [vmem:[#allocation4 + $0x10] sm:$0xff]
    %v1833 = vld [vmem:[#allocation4 + $0x18] sm:$0xff]
    %v1834 = vld [vmem:[#allocation4 + $0x20] sm:$0xff]
    %v1835 = vld [vmem:[#allocation4 + $0x28] sm:$0xff]
    %v1836 = vld [vmem:[#allocation4 + $0x30] sm:$0xff]
    %v1837 = vld [vmem:[#allocation4 + $0x38] sm:$0xff]
    %v1838 = vld [vmem:[#allocation4 + $0x40] sm:$0xff]
    %v1839 = vld [vmem:[#allocation4 + $0x48] sm:$0xff]
    %v1840 = vld [vmem:[#allocation4 + $0x50] sm:$0xff]
    %v1841 = vld [vmem:[#allocation4 + $0x58] sm:$0xff]
    %v1842 = vld [vmem:[#allocation4 + $0x60] sm:$0xff]
    %v1843 = vld [vmem:[#allocation4 + $0x68] sm:$0xff]
    %v1844 = vld [vmem:[#allocation4 + $0x70] sm:$0xff]
    %v1845 = vld [vmem:[#allocation4 + $0x78] sm:$0xff]
    %v1846 = vld [vmem:[%s3 + $0x10c] sm:$0x1]
    %v1847 = vxor.u32 %v1822, 2147483648
    %v1848 = vxor.u32 %v1827, 2147483648
    %v1849 = vmul.f32 %v1847, 1.442695
    %v1850 = vpow.pop %v1849
    %v1851 = vmul.f32 %v1848, 1.442695
    %v1852 = vpow.pop %v1851
    %v1853 = vadd.f32 %v1850, 1.0
    %v1854 = vadd.f32 %v1852, 1.0
    %v1855 = vrcp.pop %v1853
    %v1856 = vmul.f32 1.0, %v1855
    %v1857 = vrcp.pop %v1854
    %v1858 = vmul.f32 1.0, %v1857
    %v1859 = vtanh.pop %v1822
    %v1860 = vtanh.pop %v1827
    %v1861 = vmul.f32 %v1856, 0.0
    %v1862 = vmul.f32 %v1858, 0.0
    %1865 = vrot.lane.b32.xlu0 %v1859, 32
    %v1866 = vpop.permute.xlu0 %1865
    %1867 = vrot.lane.b32.xlu0 %v1860, 32
    %v1868 = vpop.permute.xlu0 %1867
    %v1871 = vmul.f32 %v1856, %v1866
    %v1872 = vmul.f32 %v1858, %v1868
    %1875 = vrot.lane.b32.xlu0 %v1871, 32
    %v1876 = vpop.permute.xlu0 %1875
    %1877 = vrot.lane.b32.xlu0 %v1872, 32
    %v1878 = vpop.permute.xlu0 %1877
    %v1881 = vadd.f32 %v1861, %v1876
    %v1882 = vadd.f32 %v1862, %v1878
    %v1883 = vtanh.pop %v1881
    %v1884 = vtanh.pop %v1882
    %1887 = vrot.lane.b32.xlu0 %v1883, 32
    %v1888 = vpop.permute.xlu0 %1887
    %1889 = vrot.lane.b32.xlu0 %v1884, 32
    %v1890 = vpop.permute.xlu0 %1889
    %v1893 = vmul.f32 %v1856, %v1888
    %v1894 = vmul.f32 %v1858, %v1890
    %v1897 = vrot.slane %v1894, 7
    %vm1898 = vcmask 1041409
    %v1899 = vsel %vm1898, %v1897, %v1893
    %1900 = vrot.lane.b32.xlu0 %v1899, 64
    %v1901 = vpop.permute.xlu0 %1900
    %v1903 = vsel %vm195, %v1901, 0.0
    %vm1904 = vcmask 523264
    %v1906 = vsel %vm1904, %v1903, 0
    %1908 = vmatprep.subr.mxu0 %v1831
    %1909 = vmatpush1.msra.mxu0 %v1830
    %1910 = vmatprep.subr.mxu0 %v1833
    %1911 = vmatpush1.msra.mxu0 %v1832
    %1912 = vmatprep.subr.mxu0 %v1835
    %1913 = vmatpush1.msra.mxu0 %v1834
    %1914 = vmatprep.subr.mxu0 %v1837
    %1915 = vmatpush1.msra.mxu0 %v1836
    %1916 = vmatprep.subr.mxu0 %v1839
    %1917 = vmatpush1.msra.mxu0 %v1838
    %1918 = vmatprep.subr.mxu0 %v1841
    %1919 = vmatpush1.msra.mxu0 %v1840
    %1920 = vmatprep.subr.mxu0 %v1843
    %1921 = vmatpush1.msra.mxu0 %v1842
    %1922 = vmatprep.subr.mxu0 %v1845
    %1923 = vmatpush1.msra.mxu0 %v1844
    %1924 = vmatprep.subr.mxu0 0.0
    %1925 = vmatpush1.msra.mxu0 0.0
    %1926 = vmatprep.subr.mxu0 0.0
    %1927 = vmatpush1.msra.mxu0 0.0
    %1928 = vmatprep.subr.mxu0 0.0
    %1929 = vmatpush1.msra.mxu0 0.0
    %1930 = vmatprep.subr.mxu0 0.0
    %1931 = vmatpush1.msra.mxu0 0.0
    %1932 = vmatprep.subr.mxu0 0.0
    %1933 = vmatpush1.msra.mxu0 0.0
    %1934 = vmatprep.subr.mxu0 0.0
    %1935 = vmatpush1.msra.mxu0 0.0
    %1936 = vmatprep.subr.mxu0 0.0
    %1937 = vmatpush1.msra.mxu0 0.0
    %1938 = vmatprep.subr.mxu0 0.0
    %1939 = vmatpush1.msra.mxu0 0.0
    %1940 = vmatprep.subr.mxu0 0.0
    %1941 = vmatpush1.msra.mxu0 0.0
    %1942 = vmatprep.subr.mxu0 0.0
    %1943 = vmatpush1.msra.mxu0 0.0
    %1944 = vmatprep.subr.mxu0 0.0
    %1945 = vmatpush1.msra.mxu0 0.0
    %1946 = vmatprep.subr.mxu0 0.0
    %1947 = vmatpush1.msra.mxu0 0.0
    %1948 = vmatprep.subr.mxu0 0.0
    %1949 = vmatpush1.msra.mxu0 0.0
    %1950 = vmatprep.subr.mxu0 0.0
    %1951 = vmatpush1.msra.mxu0 0.0
    %1952 = vmatprep.subr.mxu0 0.0
    %1953 = vmatpush1.msra.mxu0 0.0
    %1954 = vmatprep.subr.mxu0 0.0
    %1955 = vmatpush1.msra.mxu0 0.0
    %1956 = vmatprep.subr.mxu0 0.0
    %1957 = vmatpush1.msra.mxu0 0.0
    %1958 = vmatprep.subr.mxu0 0.0
    %1959 = vmatpush1.msra.mxu0 0.0
    %1960 = vmatprep.subr.mxu0 0.0
    %1961 = vmatpush1.msra.mxu0 0.0
    %1962 = vmatprep.subr.mxu0 0.0
    %1963 = vmatpush1.msra.mxu0 0.0
    %1964 = vmatprep.subr.mxu0 0.0
    %1965 = vmatpush1.msra.mxu0 0.0
    %1966 = vmatprep.subr.mxu0 0.0
    %1967 = vmatpush1.msra.mxu0 0.0
    %1968 = vmatprep.subr.mxu0 0.0
    %1969 = vmatpush1.msra.mxu0 0.0
    %1970 = vmatprep.subr.mxu0 0.0
    %1971 = vmatpush1.msra.mxu0 0.0
    %1972 = vmatprep.mubr.f32.mxu0 0.0
    %1973 = vmatmul.mubr.f32.gmra.mrb[0].mxu0 %v1906
    %v1974 = vpop.f32.mrb[0].mxu0
    %v1975 = vadd.f32 0.0, %v1974
    %v1976 = vpop.f32.mrb[0].mxu0
    %v1977 = vadd.f32 0.0, %v1976
    %1978 = vdwg.mxu0
    %v1979 = vlaneseq
    %v1980 = vshrl.u32 %v1979, 7
    %v1981 = vsub.s32 0, %v1980
    %v1982 = vrot.slane %v1846, %v1981
    %v1983 = vadd.f32 %v1977, %v1982
    %v1984 = vxor.u32 %v1983, 2147483648
    %v1985 = vmul.f32 %v1984, 1.442695
    %v1986 = vpow.pop %v1985
    %v1987 = vadd.f32 %v1986, 1.0
    %v1988 = vrcp.pop %v1987
    %v1989 = vmul.f32 1.0, %v1988
    %v1990 = vtanh.pop %v1983
    %v1991 = vmul.f32 %v1989, 0.0
    %1993 = vrot.lane.b32.xlu0 %v1990, 32
    %v1994 = vpop.permute.xlu0 %1993
    %v1996 = vmul.f32 %v1989, %v1994
    %1998 = vrot.lane.b32.xlu0 %v1996, 32
    %v1999 = vpop.permute.xlu0 %1998
    %v2001 = vadd.f32 %v1991, %v1999
    %v2002 = vtanh.pop %v2001
    %2004 = vrot.lane.b32.xlu0 %v2002, 32
    %v2005 = vpop.permute.xlu0 %2004
    %v2007 = vmul.f32 %v1989, %v2005
    %v2010 = vrot.slane %v1822, 1
    %v2011 = vsel %vm1898, %v1827, %v2010
    %v2013 = vadd.f32 %v1975, %v2011
    %v2014 = vxor.u32 %v2013, 2147483648
    %v2015 = vmul.f32 %v2014, 1.442695
    %v2016 = vpow.pop %v2015
    %v2017 = vadd.f32 %v2016, 1.0
    %v2018 = vrcp.pop %v2017
    %v2019 = vmul.f32 1.0, %v2018
    %v2020 = vtanh.pop %v2013
    %v2023 = vrot.slane %v1882, 7
    %v2024 = vsel %vm1898, %v2023, %v1881
    %v2026 = vmul.f32 %v2019, %v2024
    %2028 = vrot.lane.b32.xlu0 %v2020, 32
    %v2029 = vpop.permute.xlu0 %2028
    %v2031 = vmul.f32 %v2019, %v2029
    %2033 = vrot.lane.b32.xlu0 %v2031, 32
    %v2034 = vpop.permute.xlu0 %2033
    %v2036 = vadd.f32 %v2026, %v2034
    %v2037 = vtanh.pop %v2036
    %2039 = vrot.lane.b32.xlu0 %v2037, 32
    %v2040 = vpop.permute.xlu0 %2039
    %v2042 = vmul.f32 %v2019, %v2040
    %2044 = vrot.lane.b32.xlu0 %v2042, 64
    %v2045 = vpop.permute.xlu0 %2044
    %2048 = vrot.lane.b32.xlu0 %v2007, 96
    %v2049 = vpop.permute.xlu0 %2048
    %v2051 = vsel %vm195, %v2045, %v2049
    %v2053 = vsel %vm1904, %v2051, 0
    %2055 = vmatprep.subr.mxu0 %v1831
    %2056 = vmatpush1.msra.mxu0 %v1830
    %2057 = vmatprep.subr.mxu0 %v1833
    %2058 = vmatpush1.msra.mxu0 %v1832
    %2059 = vmatprep.subr.mxu0 %v1835
    %2060 = vmatpush1.msra.mxu0 %v1834
    %2061 = vmatprep.subr.mxu0 %v1837
    %2062 = vmatpush1.msra.mxu0 %v1836
    %2063 = vmatprep.subr.mxu0 %v1839
    %2064 = vmatpush1.msra.mxu0 %v1838
    %2065 = vmatprep.subr.mxu0 %v1841
    %2066 = vmatpush1.msra.mxu0 %v1840
    %2067 = vmatprep.subr.mxu0 %v1843
    %2068 = vmatpush1.msra.mxu0 %v1842
    %2069 = vmatprep.subr.mxu0 %v1845
    %2070 = vmatpush1.msra.mxu0 %v1844
    %2071 = vmatprep.subr.mxu0 0.0
    %2072 = vmatpush1.msra.mxu0 0.0
    %2073 = vmatprep.subr.mxu0 0.0
    %2074 = vmatpush1.msra.mxu0 0.0
    %2075 = vmatprep.subr.mxu0 0.0
    %2076 = vmatpush1.msra.mxu0 0.0
    %2077 = vmatprep.subr.mxu0 0.0
    %2078 = vmatpush1.msra.mxu0 0.0
    %2079 = vmatprep.subr.mxu0 0.0
    %2080 = vmatpush1.msra.mxu0 0.0
    %2081 = vmatprep.subr.mxu0 0.0
    %2082 = vmatpush1.msra.mxu0 0.0
    %2083 = vmatprep.subr.mxu0 0.0
    %2084 = vmatpush1.msra.mxu0 0.0
    %2085 = vmatprep.subr.mxu0 0.0
    %2086 = vmatpush1.msra.mxu0 0.0
    %2087 = vmatprep.subr.mxu0 0.0
    %2088 = vmatpush1.msra.mxu0 0.0
    %2089 = vmatprep.subr.mxu0 0.0
    %2090 = vmatpush1.msra.mxu0 0.0
    %2091 = vmatprep.subr.mxu0 0.0
    %2092 = vmatpush1.msra.mxu0 0.0
    %2093 = vmatprep.subr.mxu0 0.0
    %2094 = vmatpush1.msra.mxu0 0.0
    %2095 = vmatprep.subr.mxu0 0.0
    %2096 = vmatpush1.msra.mxu0 0.0
    %2097 = vmatprep.subr.mxu0 0.0
    %2098 = vmatpush1.msra.mxu0 0.0
    %2099 = vmatprep.subr.mxu0 0.0
    %2100 = vmatpush1.msra.mxu0 0.0
    %2101 = vmatprep.subr.mxu0 0.0
    %2102 = vmatpush1.msra.mxu0 0.0
    %2103 = vmatprep.subr.mxu0 0.0
    %2104 = vmatpush1.msra.mxu0 0.0
    %2105 = vmatprep.subr.mxu0 0.0
    %2106 = vmatpush1.msra.mxu0 0.0
    %2107 = vmatprep.subr.mxu0 0.0
    %2108 = vmatpush1.msra.mxu0 0.0
    %2109 = vmatprep.subr.mxu0 0.0
    %2110 = vmatpush1.msra.mxu0 0.0
    %2111 = vmatprep.subr.mxu0 0.0
    %2112 = vmatpush1.msra.mxu0 0.0
    %2113 = vmatprep.subr.mxu0 0.0
    %2114 = vmatpush1.msra.mxu0 0.0
    %2115 = vmatprep.subr.mxu0 0.0
    %2116 = vmatpush1.msra.mxu0 0.0
    %2117 = vmatprep.subr.mxu0 0.0
    %2118 = vmatpush1.msra.mxu0 0.0
    %2119 = vmatprep.mubr.f32.mxu0 0.0
    %2120 = vmatmul.mubr.f32.gmra.mrb[0].mxu0 %v2053
    %v2121 = vpop.f32.mrb[0].mxu0
    %v2122 = vadd.f32 0.0, %v2121
    %v2123 = vpop.f32.mrb[0].mxu0
    %v2124 = vadd.f32 0.0, %v2123
    %2125 = vdwg.mxu0
    %v2126 = vadd.f32 %v2124, %v1982
    %v2127 = vxor.u32 %v2126, 2147483648
    %v2128 = vmul.f32 %v2127, 1.442695
    %v2129 = vpow.pop %v2128
    %v2130 = vadd.f32 %v2129, 1.0
    %v2131 = vrcp.pop %v2130
    %v2132 = vmul.f32 1.0, %v2131
    %v2133 = vtanh.pop %v2126
    %v2134 = vmul.f32 %v2132, %v2001
    %2136 = vrot.lane.b32.xlu0 %v2133, 32
    %v2137 = vpop.permute.xlu0 %2136
    %v2139 = vmul.f32 %v2132, %v2137
    %2141 = vrot.lane.b32.xlu0 %v2139, 32
    %v2142 = vpop.permute.xlu0 %2141
    %v2144 = vadd.f32 %v2134, %v2142
    %v2145 = vtanh.pop %v2144
    %2147 = vrot.lane.b32.xlu0 %v2145, 32
    %v2148 = vpop.permute.xlu0 %2147
    %v2150 = vmul.f32 %v2132, %v2148
    %v2151 = vrot.slane %v1822, 2
    %v2152 = vrot.slane %v1827, 1
    %v2153 = vsel %vm1898, %v2152, %v2151
    %v2155 = vadd.f32 %v2122, %v2153
    %v2156 = vxor.u32 %v2155, 2147483648
    %v2157 = vmul.f32 %v2156, 1.442695
    %v2158 = vpow.pop %v2157
    %v2159 = vadd.f32 %v2158, 1.0
    %v2160 = vrcp.pop %v2159
    %v2161 = vmul.f32 1.0, %v2160
    %v2162 = vtanh.pop %v2155
    %v2163 = vmul.f32 %v2161, %v2036
    %2165 = vrot.lane.b32.xlu0 %v2162, 32
    %v2166 = vpop.permute.xlu0 %2165
    %v2168 = vmul.f32 %v2161, %v2166
    %2170 = vrot.lane.b32.xlu0 %v2168, 32
    %v2171 = vpop.permute.xlu0 %2170
    %v2173 = vadd.f32 %v2163, %v2171
    %v2174 = vtanh.pop %v2173
    %2176 = vrot.lane.b32.xlu0 %v2174, 32
    %v2177 = vpop.permute.xlu0 %2176
    %v2179 = vmul.f32 %v2161, %v2177
    %2181 = vrot.lane.b32.xlu0 %v2179, 64
    %v2182 = vpop.permute.xlu0 %2181
    %2185 = vrot.lane.b32.xlu0 %v2150, 96
    %v2186 = vpop.permute.xlu0 %2185
    %v2188 = vsel %vm195, %v2182, %v2186
    %v2190 = vsel %vm1904, %v2188, 0
    %2192 = vmatprep.subr.mxu0 %v1831
    %2193 = vmatpush1.msra.mxu0 %v1830
    %2194 = vmatprep.subr.mxu0 %v1833
    %2195 = vmatpush1.msra.mxu0 %v1832
    %2196 = vmatprep.subr.mxu0 %v1835
    %2197 = vmatpush1.msra.mxu0 %v1834
    %2198 = vmatprep.subr.mxu0 %v1837
    %2199 = vmatpush1.msra.mxu0 %v1836
    %2200 = vmatprep.subr.mxu0 %v1839
    %2201 = vmatpush1.msra.mxu0 %v1838
    %2202 = vmatprep.subr.mxu0 %v1841
    %2203 = vmatpush1.msra.mxu0 %v1840
    %2204 = vmatprep.subr.mxu0 %v1843
    %2205 = vmatpush1.msra.mxu0 %v1842
    %2206 = vmatprep.subr.mxu0 %v1845
    %2207 = vmatpush1.msra.mxu0 %v1844
    %2208 = vmatprep.subr.mxu0 0.0
    %2209 = vmatpush1.msra.mxu0 0.0
    %2210 = vmatprep.subr.mxu0 0.0
    %2211 = vmatpush1.msra.mxu0 0.0
    %2212 = vmatprep.subr.mxu0 0.0
    %2213 = vmatpush1.msra.mxu0 0.0
    %2214 = vmatprep.subr.mxu0 0.0
    %2215 = vmatpush1.msra.mxu0 0.0
    %2216 = vmatprep.subr.mxu0 0.0
    %2217 = vmatpush1.msra.mxu0 0.0
    %2218 = vmatprep.subr.mxu0 0.0
    %2219 = vmatpush1.msra.mxu0 0.0
    %2220 = vmatprep.subr.mxu0 0.0
    %2221 = vmatpush1.msra.mxu0 0.0
    %2222 = vmatprep.subr.mxu0 0.0
    %2223 = vmatpush1.msra.mxu0 0.0
    %2224 = vmatprep.subr.mxu0 0.0
    %2225 = vmatpush1.msra.mxu0 0.0
    %2226 = vmatprep.subr.mxu0 0.0
    %2227 = vmatpush1.msra.mxu0 0.0
    %2228 = vmatprep.subr.mxu0 0.0
    %2229 = vmatpush1.msra.mxu0 0.0
    %2230 = vmatprep.subr.mxu0 0.0
    %2231 = vmatpush1.msra.mxu0 0.0
    %2232 = vmatprep.subr.mxu0 0.0
    %2233 = vmatpush1.msra.mxu0 0.0
    %2234 = vmatprep.subr.mxu0 0.0
    %2235 = vmatpush1.msra.mxu0 0.0
    %2236 = vmatprep.subr.mxu0 0.0
    %2237 = vmatpush1.msra.mxu0 0.0
    %2238 = vmatprep.subr.mxu0 0.0
    %2239 = vmatpush1.msra.mxu0 0.0
    %2240 = vmatprep.subr.mxu0 0.0
    %2241 = vmatpush1.msra.mxu0 0.0
    %2242 = vmatprep.subr.mxu0 0.0
    %2243 = vmatpush1.msra.mxu0 0.0
    %2244 = vmatprep.subr.mxu0 0.0
    %2245 = vmatpush1.msra.mxu0 0.0
    %2246 = vmatprep.subr.mxu0 0.0
    %2247 = vmatpush1.msra.mxu0 0.0
    %2248 = vmatprep.subr.mxu0 0.0
    %2249 = vmatpush1.msra.mxu0 0.0
    %2250 = vmatprep.subr.mxu0 0.0
    %2251 = vmatpush1.msra.mxu0 0.0
    %2252 = vmatprep.subr.mxu0 0.0
    %2253 = vmatpush1.msra.mxu0 0.0
    %2254 = vmatprep.subr.mxu0 0.0
    %2255 = vmatpush1.msra.mxu0 0.0
    %2256 = vmatprep.mubr.f32.mxu0 0.0
    %2257 = vmatmul.mubr.f32.gmra.mrb[0].mxu0 %v2190
    %v2258 = vpop.f32.mrb[0].mxu0
    %v2259 = vadd.f32 0.0, %v2258
    %v2260 = vpop.f32.mrb[0].mxu0
    %v2261 = vadd.f32 0.0, %v2260
    %2262 = vdwg.mxu0
    %v2263 = vadd.f32 %v2261, %v1982
    %v2264 = vxor.u32 %v2263, 2147483648
    %v2265 = vmul.f32 %v2264, 1.442695
    %v2266 = vpow.pop %v2265
    %v2267 = vadd.f32 %v2266, 1.0
    %v2268 = vrcp.pop %v2267
    %v2269 = vmul.f32 1.0, %v2268
    %v2270 = vtanh.pop %v2263
    %v2271 = vmul.f32 %v2269, %v2144
    %2273 = vrot.lane.b32.xlu0 %v2270, 32
    %v2274 = vpop.permute.xlu0 %2273
    %v2276 = vmul.f32 %v2269, %v2274
    %2278 = vrot.lane.b32.xlu0 %v2276, 32
    %v2279 = vpop.permute.xlu0 %2278
    %v2281 = vadd.f32 %v2271, %v2279
    %v2282 = vtanh.pop %v2281
    %2284 = vrot.lane.b32.xlu0 %v2282, 32
    %v2285 = vpop.permute.xlu0 %2284
    %v2287 = vmul.f32 %v2269, %v2285
    %v2288 = vrot.slane %v1822, 3
    %v2289 = vrot.slane %v1827, 2
    %v2290 = vsel %vm1898, %v2289, %v2288
    %v2292 = vadd.f32 %v2259, %v2290
    %v2293 = vxor.u32 %v2292, 2147483648
    %v2294 = vmul.f32 %v2293, 1.442695
    %v2295 = vpow.pop %v2294
    %v2296 = vadd.f32 %v2295, 1.0
    %v2297 = vrcp.pop %v2296
    %v2298 = vmul.f32 1.0, %v2297
    %v2299 = vtanh.pop %v2292
    %v2300 = vmul.f32 %v2298, %v2173
    %2302 = vrot.lane.b32.xlu0 %v2299, 32
    %v2303 = vpop.permute.xlu0 %2302
    %v2305 = vmul.f32 %v2298, %v2303
    %2307 = vrot.lane.b32.xlu0 %v2305, 32
    %v2308 = vpop.permute.xlu0 %2307
    %v2310 = vadd.f32 %v2300, %v2308
    %v2311 = vtanh.pop %v2310
    %2313 = vrot.lane.b32.xlu0 %v2311, 32
    %v2314 = vpop.permute.xlu0 %2313
    %v2316 = vmul.f32 %v2298, %v2314
    %2318 = vrot.lane.b32.xlu0 %v2316, 64
    %v2319 = vpop.permute.xlu0 %2318
    %2322 = vrot.lane.b32.xlu0 %v2287, 96
    %v2323 = vpop.permute.xlu0 %2322
    %v2325 = vsel %vm195, %v2319, %v2323
    %v2327 = vsel %vm1904, %v2325, 0
    %2329 = vmatprep.subr.mxu0 %v1831
    %2330 = vmatpush1.msra.mxu0 %v1830
    %2331 = vmatprep.subr.mxu0 %v1833
    %2332 = vmatpush1.msra.mxu0 %v1832
    %2333 = vmatprep.subr.mxu0 %v1835
    %2334 = vmatpush1.msra.mxu0 %v1834
    %2335 = vmatprep.subr.mxu0 %v1837
    %2336 = vmatpush1.msra.mxu0 %v1836
    %2337 = vmatprep.subr.mxu0 %v1839
    %2338 = vmatpush1.msra.mxu0 %v1838
    %2339 = vmatprep.subr.mxu0 %v1841
    %2340 = vmatpush1.msra.mxu0 %v1840
    %2341 = vmatprep.subr.mxu0 %v1843
    %2342 = vmatpush1.msra.mxu0 %v1842
    %2343 = vmatprep.subr.mxu0 %v1845
    %2344 = vmatpush1.msra.mxu0 %v1844
    %2345 = vmatprep.subr.mxu0 0.0
    %2346 = vmatpush1.msra.mxu0 0.0
    %2347 = vmatprep.subr.mxu0 0.0
    %2348 = vmatpush1.msra.mxu0 0.0
    %2349 = vmatprep.subr.mxu0 0.0
    %2350 = vmatpush1.msra.mxu0 0.0
    %2351 = vmatprep.subr.mxu0 0.0
    %2352 = vmatpush1.msra.mxu0 0.0
    %2353 = vmatprep.subr.mxu0 0.0
    %2354 = vmatpush1.msra.mxu0 0.0
    %2355 = vmatprep.subr.mxu0 0.0
    %2356 = vmatpush1.msra.mxu0 0.0
    %2357 = vmatprep.subr.mxu0 0.0
    %2358 = vmatpush1.msra.mxu0 0.0
    %2359 = vmatprep.subr.mxu0 0.0
    %2360 = vmatpush1.msra.mxu0 0.0
    %2361 = vmatprep.subr.mxu0 0.0
    %2362 = vmatpush1.msra.mxu0 0.0
    %2363 = vmatprep.subr.mxu0 0.0
    %2364 = vmatpush1.msra.mxu0 0.0
    %2365 = vmatprep.subr.mxu0 0.0
    %2366 = vmatpush1.msra.mxu0 0.0
    %2367 = vmatprep.subr.mxu0 0.0
    %2368 = vmatpush1.msra.mxu0 0.0
    %2369 = vmatprep.subr.mxu0 0.0
    %2370 = vmatpush1.msra.mxu0 0.0
    %2371 = vmatprep.subr.mxu0 0.0
    %2372 = vmatpush1.msra.mxu0 0.0
    %2373 = vmatprep.subr.mxu0 0.0
    %2374 = vmatpush1.msra.mxu0 0.0
    %2375 = vmatprep.subr.mxu0 0.0
    %2376 = vmatpush1.msra.mxu0 0.0
    %2377 = vmatprep.subr.mxu0 0.0
    %2378 = vmatpush1.msra.mxu0 0.0
    %2379 = vmatprep.subr.mxu0 0.0
    %2380 = vmatpush1.msra.mxu0 0.0
    %2381 = vmatprep.subr.mxu0 0.0
    %2382 = vmatpush1.msra.mxu0 0.0
    %2383 = vmatprep.subr.mxu0 0.0
    %2384 = vmatpush1.msra.mxu0 0.0
    %2385 = vmatprep.subr.mxu0 0.0
    %2386 = vmatpush1.msra.mxu0 0.0
    %2387 = vmatprep.subr.mxu0 0.0
    %2388 = vmatpush1.msra.mxu0 0.0
    %2389 = vmatprep.subr.mxu0 0.0
    %2390 = vmatpush1.msra.mxu0 0.0
    %2391 = vmatprep.subr.mxu0 0.0
    %2392 = vmatpush1.msra.mxu0 0.0
    %2393 = vmatprep.mubr.f32.mxu0 0.0
    %2394 = vmatmul.mubr.f32.gmra.mrb[0].mxu0 %v2327
    %v2395 = vpop.f32.mrb[0].mxu0
    %v2396 = vadd.f32 0.0, %v2395
    %v2397 = vpop.f32.mrb[0].mxu0
    %v2398 = vadd.f32 0.0, %v2397
    %2399 = vdwg.mxu0
    %v2400 = vadd.f32 %v2398, %v1982
    %v2401 = vxor.u32 %v2400, 2147483648
    %v2402 = vmul.f32 %v2401, 1.442695
    %v2403 = vpow.pop %v2402
    %v2404 = vadd.f32 %v2403, 1.0
    %v2405 = vrcp.pop %v2404
    %v2406 = vmul.f32 1.0, %v2405
    %v2407 = vtanh.pop %v2400
    %v2408 = vmul.f32 %v2406, %v2281
    %2410 = vrot.lane.b32.xlu0 %v2407, 32
    %v2411 = vpop.permute.xlu0 %2410
    %v2413 = vmul.f32 %v2406, %v2411
    %2415 = vrot.lane.b32.xlu0 %v2413, 32
    %v2416 = vpop.permute.xlu0 %2415
    %v2418 = vadd.f32 %v2408, %v2416
    %v2419 = vtanh.pop %v2418
    %2421 = vrot.lane.b32.xlu0 %v2419, 32
    %v2422 = vpop.permute.xlu0 %2421
    %v2424 = vmul.f32 %v2406, %v2422
    %v2425 = vrot.slane %v1822, 4
    %v2426 = vrot.slane %v1827, 3
    %v2427 = vsel %vm1898, %v2426, %v2425
    %v2429 = vadd.f32 %v2396, %v2427
    %v2430 = vxor.u32 %v2429, 2147483648
    %v2431 = vmul.f32 %v2430, 1.442695
    %v2432 = vpow.pop %v2431
    %v2433 = vadd.f32 %v2432, 1.0
    %v2434 = vrcp.pop %v2433
    %v2435 = vmul.f32 1.0, %v2434
    %v2436 = vtanh.pop %v2429
    %v2437 = vmul.f32 %v2435, %v2310
    %2439 = vrot.lane.b32.xlu0 %v2436, 32
    %v2440 = vpop.permute.xlu0 %2439
    %v2442 = vmul.f32 %v2435, %v2440
    %2444 = vrot.lane.b32.xlu0 %v2442, 32
    %v2445 = vpop.permute.xlu0 %2444
    %v2447 = vadd.f32 %v2437, %v2445
    %v2448 = vtanh.pop %v2447
    %2450 = vrot.lane.b32.xlu0 %v2448, 32
    %v2451 = vpop.permute.xlu0 %2450
    %v2453 = vmul.f32 %v2435, %v2451
    %2455 = vrot.lane.b32.xlu0 %v2453, 64
    %v2456 = vpop.permute.xlu0 %2455
    %2459 = vrot.lane.b32.xlu0 %v2424, 96
    %v2460 = vpop.permute.xlu0 %2459
    %v2462 = vsel %vm195, %v2456, %v2460
    %v2464 = vsel %vm1904, %v2462, 0
    %2466 = vmatprep.subr.mxu0 %v1831
    %2467 = vmatpush1.msra.mxu0 %v1830
    %2468 = vmatprep.subr.mxu0 %v1833
    %2469 = vmatpush1.msra.mxu0 %v1832
    %2470 = vmatprep.subr.mxu0 %v1835
    %2471 = vmatpush1.msra.mxu0 %v1834
    %2472 = vmatprep.subr.mxu0 %v1837
    %2473 = vmatpush1.msra.mxu0 %v1836
    %2474 = vmatprep.subr.mxu0 %v1839
    %2475 = vmatpush1.msra.mxu0 %v1838
    %2476 = vmatprep.subr.mxu0 %v1841
    %2477 = vmatpush1.msra.mxu0 %v1840
    %2478 = vmatprep.subr.mxu0 %v1843
    %2479 = vmatpush1.msra.mxu0 %v1842
    %2480 = vmatprep.subr.mxu0 %v1845
    %2481 = vmatpush1.msra.mxu0 %v1844
    %2482 = vmatprep.subr.mxu0 0.0
    %2483 = vmatpush1.msra.mxu0 0.0
    %2484 = vmatprep.subr.mxu0 0.0
    %2485 = vmatpush1.msra.mxu0 0.0
    %2486 = vmatprep.subr.mxu0 0.0
    %2487 = vmatpush1.msra.mxu0 0.0
    %2488 = vmatprep.subr.mxu0 0.0
    %2489 = vmatpush1.msra.mxu0 0.0
    %2490 = vmatprep.subr.mxu0 0.0
    %2491 = vmatpush1.msra.mxu0 0.0
    %2492 = vmatprep.subr.mxu0 0.0
    %2493 = vmatpush1.msra.mxu0 0.0
    %2494 = vmatprep.subr.mxu0 0.0
    %2495 = vmatpush1.msra.mxu0 0.0
    %2496 = vmatprep.subr.mxu0 0.0
    %2497 = vmatpush1.msra.mxu0 0.0
    %2498 = vmatprep.subr.mxu0 0.0
    %2499 = vmatpush1.msra.mxu0 0.0
    %2500 = vmatprep.subr.mxu0 0.0
    %2501 = vmatpush1.msra.mxu0 0.0
    %2502 = vmatprep.subr.mxu0 0.0
    %2503 = vmatpush1.msra.mxu0 0.0
    %2504 = vmatprep.subr.mxu0 0.0
    %2505 = vmatpush1.msra.mxu0 0.0
    %2506 = vmatprep.subr.mxu0 0.0
    %2507 = vmatpush1.msra.mxu0 0.0
    %2508 = vmatprep.subr.mxu0 0.0
    %2509 = vmatpush1.msra.mxu0 0.0
    %2510 = vmatprep.subr.mxu0 0.0
    %2511 = vmatpush1.msra.mxu0 0.0
    %2512 = vmatprep.subr.mxu0 0.0
    %2513 = vmatpush1.msra.mxu0 0.0
    %2514 = vmatprep.subr.mxu0 0.0
    %2515 = vmatpush1.msra.mxu0 0.0
    %2516 = vmatprep.subr.mxu0 0.0
    %2517 = vmatpush1.msra.mxu0 0.0
    %2518 = vmatprep.subr.mxu0 0.0
    %2519 = vmatpush1.msra.mxu0 0.0
    %2520 = vmatprep.subr.mxu0 0.0
    %2521 = vmatpush1.msra.mxu0 0.0
    %2522 = vmatprep.subr.mxu0 0.0
    %2523 = vmatpush1.msra.mxu0 0.0
    %2524 = vmatprep.subr.mxu0 0.0
    %2525 = vmatpush1.msra.mxu0 0.0
    %2526 = vmatprep.subr.mxu0 0.0
    %2527 = vmatpush1.msra.mxu0 0.0
    %2528 = vmatprep.subr.mxu0 0.0
    %2529 = vmatpush1.msra.mxu0 0.0
    %2530 = vmatprep.mubr.f32.mxu0 0.0
    %2531 = vmatmul.mubr.f32.gmra.mrb[0].mxu0 %v2464
    %v2532 = vpop.f32.mrb[0].mxu0
    %v2533 = vadd.f32 0.0, %v2532
    %v2534 = vpop.f32.mrb[0].mxu0
    %v2535 = vadd.f32 0.0, %v2534
    %2536 = vdwg.mxu0
    %v2537 = vadd.f32 %v2535, %v1982
    %v2538 = vxor.u32 %v2537, 2147483648
    %v2539 = vmul.f32 %v2538, 1.442695
    %v2540 = vpow.pop %v2539
    %v2541 = vadd.f32 %v2540, 1.0
    %v2542 = vrcp.pop %v2541
    %v2543 = vmul.f32 1.0, %v2542
    %v2544 = vtanh.pop %v2537
    %v2545 = vmul.f32 %v2543, %v2418
    %2547 = vrot.lane.b32.xlu0 %v2544, 32
    %v2548 = vpop.permute.xlu0 %2547
    %v2550 = vmul.f32 %v2543, %v2548
    %2552 = vrot.lane.b32.xlu0 %v2550, 32
    %v2553 = vpop.permute.xlu0 %2552
    %v2555 = vadd.f32 %v2545, %v2553
    %v2556 = vtanh.pop %v2555
    %2558 = vrot.lane.b32.xlu0 %v2556, 32
    %v2559 = vpop.permute.xlu0 %2558
    %v2561 = vmul.f32 %v2543, %v2559
    %v2562 = vrot.slane %v1822, 5
    %v2563 = vrot.slane %v1827, 4
    %v2564 = vsel %vm1898, %v2563, %v2562
    %v2566 = vadd.f32 %v2533, %v2564
    %v2567 = vxor.u32 %v2566, 2147483648
    %v2568 = vmul.f32 %v2567, 1.442695
    %v2569 = vpow.pop %v2568
    %v2570 = vadd.f32 %v2569, 1.0
    %v2571 = vrcp.pop %v2570
    %v2572 = vmul.f32 1.0, %v2571
    %v2573 = vtanh.pop %v2566
    %v2574 = vmul.f32 %v2572, %v2447
    %2576 = vrot.lane.b32.xlu0 %v2573, 32
    %v2577 = vpop.permute.xlu0 %2576
    %v2579 = vmul.f32 %v2572, %v2577
    %2581 = vrot.lane.b32.xlu0 %v2579, 32
    %v2582 = vpop.permute.xlu0 %2581
    %v2584 = vadd.f32 %v2574, %v2582
    %v2585 = vtanh.pop %v2584
    %2587 = vrot.lane.b32.xlu0 %v2585, 32
    %v2588 = vpop.permute.xlu0 %2587
    %v2590 = vmul.f32 %v2572, %v2588
    %2592 = vrot.lane.b32.xlu0 %v2590, 64
    %v2593 = vpop.permute.xlu0 %2592
    %2596 = vrot.lane.b32.xlu0 %v2561, 96
    %v2597 = vpop.permute.xlu0 %2596
    %v2599 = vsel %vm195, %v2593, %v2597
    %v2601 = vsel %vm1904, %v2599, 0
    %2603 = vmatprep.subr.mxu0 %v1831
    %2604 = vmatpush1.msra.mxu0 %v1830
    %2605 = vmatprep.subr.mxu0 %v1833
    %2606 = vmatpush1.msra.mxu0 %v1832
    %2607 = vmatprep.subr.mxu0 %v1835
    %2608 = vmatpush1.msra.mxu0 %v1834
    %2609 = vmatprep.subr.mxu0 %v1837
    %2610 = vmatpush1.msra.mxu0 %v1836
    %2611 = vmatprep.subr.mxu0 %v1839
    %2612 = vmatpush1.msra.mxu0 %v1838
    %2613 = vmatprep.subr.mxu0 %v1841
    %2614 = vmatpush1.msra.mxu0 %v1840
    %2615 = vmatprep.subr.mxu0 %v1843
    %2616 = vmatpush1.msra.mxu0 %v1842
    %2617 = vmatprep.subr.mxu0 %v1845
    %2618 = vmatpush1.msra.mxu0 %v1844
    %2619 = vmatprep.subr.mxu0 0.0
    %2620 = vmatpush1.msra.mxu0 0.0
    %2621 = vmatprep.subr.mxu0 0.0
    %2622 = vmatpush1.msra.mxu0 0.0
    %2623 = vmatprep.subr.mxu0 0.0
    %2624 = vmatpush1.msra.mxu0 0.0
    %2625 = vmatprep.subr.mxu0 0.0
    %2626 = vmatpush1.msra.mxu0 0.0
    %2627 = vmatprep.subr.mxu0 0.0
    %2628 = vmatpush1.msra.mxu0 0.0
    %2629 = vmatprep.subr.mxu0 0.0
    %2630 = vmatpush1.msra.mxu0 0.0
    %2631 = vmatprep.subr.mxu0 0.0
    %2632 = vmatpush1.msra.mxu0 0.0
    %2633 = vmatprep.subr.mxu0 0.0
    %2634 = vmatpush1.msra.mxu0 0.0
    %2635 = vmatprep.subr.mxu0 0.0
    %2636 = vmatpush1.msra.mxu0 0.0
    %2637 = vmatprep.subr.mxu0 0.0
    %2638 = vmatpush1.msra.mxu0 0.0
    %2639 = vmatprep.subr.mxu0 0.0
    %2640 = vmatpush1.msra.mxu0 0.0
    %2641 = vmatprep.subr.mxu0 0.0
    %2642 = vmatpush1.msra.mxu0 0.0
    %2643 = vmatprep.subr.mxu0 0.0
    %2644 = vmatpush1.msra.mxu0 0.0
    %2645 = vmatprep.subr.mxu0 0.0
    %2646 = vmatpush1.msra.mxu0 0.0
    %2647 = vmatprep.subr.mxu0 0.0
    %2648 = vmatpush1.msra.mxu0 0.0
    %2649 = vmatprep.subr.mxu0 0.0
    %2650 = vmatpush1.msra.mxu0 0.0
    %2651 = vmatprep.subr.mxu0 0.0
    %2652 = vmatpush1.msra.mxu0 0.0
    %2653 = vmatprep.subr.mxu0 0.0
    %2654 = vmatpush1.msra.mxu0 0.0
    %2655 = vmatprep.subr.mxu0 0.0
    %2656 = vmatpush1.msra.mxu0 0.0
    %2657 = vmatprep.subr.mxu0 0.0
    %2658 = vmatpush1.msra.mxu0 0.0
    %2659 = vmatprep.subr.mxu0 0.0
    %2660 = vmatpush1.msra.mxu0 0.0
    %2661 = vmatprep.subr.mxu0 0.0
    %2662 = vmatpush1.msra.mxu0 0.0
    %2663 = vmatprep.subr.mxu0 0.0
    %2664 = vmatpush1.msra.mxu0 0.0
    %2665 = vmatprep.subr.mxu0 0.0
    %2666 = vmatpush1.msra.mxu0 0.0
    %2667 = vmatprep.mubr.f32.mxu0 0.0
    %2668 = vmatmul.mubr.f32.gmra.mrb[0].mxu0 %v2601
    %v2669 = vpop.f32.mrb[0].mxu0
    %v2670 = vadd.f32 0.0, %v2669
    %v2671 = vpop.f32.mrb[0].mxu0
    %v2672 = vadd.f32 0.0, %v2671
    %2673 = vdwg.mxu0
    %v2674 = vadd.f32 %v2672, %v1982
    %v2675 = vxor.u32 %v2674, 2147483648
    %v2676 = vmul.f32 %v2675, 1.442695
    %v2677 = vpow.pop %v2676
    %v2678 = vadd.f32 %v2677, 1.0
    %v2679 = vrcp.pop %v2678
    %v2680 = vmul.f32 1.0, %v2679
    %v2681 = vtanh.pop %v2674
    %v2682 = vmul.f32 %v2680, %v2555
    %2684 = vrot.lane.b32.xlu0 %v2681, 32
    %v2685 = vpop.permute.xlu0 %2684
    %v2687 = vmul.f32 %v2680, %v2685
    %2689 = vrot.lane.b32.xlu0 %v2687, 32
    %v2690 = vpop.permute.xlu0 %2689
    %v2692 = vadd.f32 %v2682, %v2690
    %v2693 = vtanh.pop %v2692
    %2695 = vrot.lane.b32.xlu0 %v2693, 32
    %v2696 = vpop.permute.xlu0 %2695
    %v2698 = vmul.f32 %v2680, %v2696
    %v2699 = vrot.slane %v1822, 6
    %v2700 = vrot.slane %v1827, 5
    %v2701 = vsel %vm1898, %v2700, %v2699
    %v2703 = vadd.f32 %v2670, %v2701
    %v2704 = vxor.u32 %v2703, 2147483648
    %v2705 = vmul.f32 %v2704, 1.442695
    %v2706 = vpow.pop %v2705
    %v2707 = vadd.f32 %v2706, 1.0
    %v2708 = vrcp.pop %v2707
    %v2709 = vmul.f32 1.0, %v2708
    %v2710 = vtanh.pop %v2703
    %v2711 = vmul.f32 %v2709, %v2584
    %2713 = vrot.lane.b32.xlu0 %v2710, 32
    %v2714 = vpop.permute.xlu0 %2713
    %v2716 = vmul.f32 %v2709, %v2714
    %2718 = vrot.lane.b32.xlu0 %v2716, 32
    %v2719 = vpop.permute.xlu0 %2718
    %v2721 = vadd.f32 %v2711, %v2719
    %v2722 = vtanh.pop %v2721
    %2724 = vrot.lane.b32.xlu0 %v2722, 32
    %v2725 = vpop.permute.xlu0 %2724
    %v2727 = vmul.f32 %v2709, %v2725
    %2729 = vrot.lane.b32.xlu0 %v2727, 64
    %v2730 = vpop.permute.xlu0 %2729
    %2733 = vrot.lane.b32.xlu0 %v2698, 96
    %v2734 = vpop.permute.xlu0 %2733
    %v2736 = vsel %vm195, %v2730, %v2734
    %v2738 = vsel %vm1904, %v2736, 0
    %2740 = vmatprep.subr.mxu0 %v1831
    %2741 = vmatpush1.msra.mxu0 %v1830
    %2742 = vmatprep.subr.mxu0 %v1833
    %2743 = vmatpush1.msra.mxu0 %v1832
    %2744 = vmatprep.subr.mxu0 %v1835
    %2745 = vmatpush1.msra.mxu0 %v1834
    %2746 = vmatprep.subr.mxu0 %v1837
    %2747 = vmatpush1.msra.mxu0 %v1836
    %2748 = vmatprep.subr.mxu0 %v1839
    %2749 = vmatpush1.msra.mxu0 %v1838
    %2750 = vmatprep.subr.mxu0 %v1841
    %2751 = vmatpush1.msra.mxu0 %v1840
    %2752 = vmatprep.subr.mxu0 %v1843
    %2753 = vmatpush1.msra.mxu0 %v1842
    %2754 = vmatprep.subr.mxu0 %v1845
    %2755 = vmatpush1.msra.mxu0 %v1844
    %2756 = vmatprep.subr.mxu0 0.0
    %2757 = vmatpush1.msra.mxu0 0.0
    %2758 = vmatprep.subr.mxu0 0.0
    %2759 = vmatpush1.msra.mxu0 0.0
    %2760 = vmatprep.subr.mxu0 0.0
    %2761 = vmatpush1.msra.mxu0 0.0
    %2762 = vmatprep.subr.mxu0 0.0
    %2763 = vmatpush1.msra.mxu0 0.0
    %2764 = vmatprep.subr.mxu0 0.0
    %2765 = vmatpush1.msra.mxu0 0.0
    %2766 = vmatprep.subr.mxu0 0.0
    %2767 = vmatpush1.msra.mxu0 0.0
    %2768 = vmatprep.subr.mxu0 0.0
    %2769 = vmatpush1.msra.mxu0 0.0
    %2770 = vmatprep.subr.mxu0 0.0
    %2771 = vmatpush1.msra.mxu0 0.0
    %2772 = vmatprep.subr.mxu0 0.0
    %2773 = vmatpush1.msra.mxu0 0.0
    %2774 = vmatprep.subr.mxu0 0.0
    %2775 = vmatpush1.msra.mxu0 0.0
    %2776 = vmatprep.subr.mxu0 0.0
    %2777 = vmatpush1.msra.mxu0 0.0
    %2778 = vmatprep.subr.mxu0 0.0
    %2779 = vmatpush1.msra.mxu0 0.0
    %2780 = vmatprep.subr.mxu0 0.0
    %2781 = vmatpush1.msra.mxu0 0.0
    %2782 = vmatprep.subr.mxu0 0.0
    %2783 = vmatpush1.msra.mxu0 0.0
    %2784 = vmatprep.subr.mxu0 0.0
    %2785 = vmatpush1.msra.mxu0 0.0
    %2786 = vmatprep.subr.mxu0 0.0
    %2787 = vmatpush1.msra.mxu0 0.0
    %2788 = vmatprep.subr.mxu0 0.0
    %2789 = vmatpush1.msra.mxu0 0.0
    %2790 = vmatprep.subr.mxu0 0.0
    %2791 = vmatpush1.msra.mxu0 0.0
    %2792 = vmatprep.subr.mxu0 0.0
    %2793 = vmatpush1.msra.mxu0 0.0
    %2794 = vmatprep.subr.mxu0 0.0
    %2795 = vmatpush1.msra.mxu0 0.0
    %2796 = vmatprep.subr.mxu0 0.0
    %2797 = vmatpush1.msra.mxu0 0.0
    %2798 = vmatprep.subr.mxu0 0.0
    %2799 = vmatpush1.msra.mxu0 0.0
    %2800 = vmatprep.subr.mxu0 0.0
    %2801 = vmatpush1.msra.mxu0 0.0
    %2802 = vmatprep.subr.mxu0 0.0
    %2803 = vmatpush1.msra.mxu0 0.0
    %2804 = vmatprep.mubr.f32.mxu0 0.0
    %2805 = vmatmul.mubr.f32.gmra.mrb[0].mxu0 %v2738
    %v2806 = vpop.f32.mrb[0].mxu0
    %v2807 = vadd.f32 0.0, %v2806
    %v2808 = vpop.f32.mrb[0].mxu0
    %v2809 = vadd.f32 0.0, %v2808
    %2810 = vdwg.mxu0
    %v2811 = vadd.f32 %v2809, %v1982
    %v2812 = vxor.u32 %v2811, 2147483648
    %v2813 = vmul.f32 %v2812, 1.442695
    %v2814 = vpow.pop %v2813
    %v2815 = vadd.f32 %v2814, 1.0
    %v2816 = vrcp.pop %v2815
    %v2817 = vmul.f32 1.0, %v2816
    %v2818 = vtanh.pop %v2811
    %v2819 = vmul.f32 %v2817, %v2692
    %2821 = vrot.lane.b32.xlu0 %v2818, 32
    %v2822 = vpop.permute.xlu0 %2821
    %v2824 = vmul.f32 %v2817, %v2822
    %2826 = vrot.lane.b32.xlu0 %v2824, 32
    %v2827 = vpop.permute.xlu0 %2826
    %v2829 = vadd.f32 %v2819, %v2827
    %v2830 = vtanh.pop %v2829
    %2832 = vrot.lane.b32.xlu0 %v2830, 32
    %v2833 = vpop.permute.xlu0 %2832
    %v2835 = vmul.f32 %v2817, %v2833
    %v2836 = vrot.slane %v1822, 7
    %v2837 = vrot.slane %v1827, 6
    %v2838 = vsel %vm1898, %v2837, %v2836
    %v2840 = vadd.f32 %v2807, %v2838
    %v2841 = vxor.u32 %v2840, 2147483648
    %v2842 = vmul.f32 %v2841, 1.442695
    %v2843 = vpow.pop %v2842
    %v2844 = vadd.f32 %v2843, 1.0
    %v2845 = vrcp.pop %v2844
    %v2846 = vmul.f32 1.0, %v2845
    %v2847 = vtanh.pop %v2840
    %v2848 = vmul.f32 %v2846, %v2721
    %2850 = vrot.lane.b32.xlu0 %v2847, 32
    %v2851 = vpop.permute.xlu0 %2850
    %v2853 = vmul.f32 %v2846, %v2851
    %2855 = vrot.lane.b32.xlu0 %v2853, 32
    %v2856 = vpop.permute.xlu0 %2855
    %v2858 = vadd.f32 %v2848, %v2856
    %v2859 = vtanh.pop %v2858
    %2861 = vrot.lane.b32.xlu0 %v2859, 32
    %v2862 = vpop.permute.xlu0 %2861
    %v2864 = vmul.f32 %v2846, %v2862
    %2866 = vrot.lane.b32.xlu0 %v2864, 64
    %v2867 = vpop.permute.xlu0 %2866
    %2870 = vrot.lane.b32.xlu0 %v2835, 96
    %v2871 = vpop.permute.xlu0 %2870
    %v2873 = vsel %vm195, %v2867, %v2871
    %v2875 = vsel %vm1904, %v2873, 0
    %2877 = vmatprep.subr.mxu0 %v1831
    %2878 = vmatpush1.msra.mxu0 %v1830
    %2879 = vmatprep.subr.mxu0 %v1833
    %2880 = vmatpush1.msra.mxu0 %v1832
    %2881 = vmatprep.subr.mxu0 %v1835
    %2882 = vmatpush1.msra.mxu0 %v1834
    %2883 = vmatprep.subr.mxu0 %v1837
    %2884 = vmatpush1.msra.mxu0 %v1836
    %2885 = vmatprep.subr.mxu0 %v1839
    %2886 = vmatpush1.msra.mxu0 %v1838
    %2887 = vmatprep.subr.mxu0 %v1841
    %2888 = vmatpush1.msra.mxu0 %v1840
    %2889 = vmatprep.subr.mxu0 %v1843
    %2890 = vmatpush1.msra.mxu0 %v1842
    %2891 = vmatprep.subr.mxu0 %v1845
    %2892 = vmatpush1.msra.mxu0 %v1844
    %2893 = vmatprep.subr.mxu0 0.0
    %2894 = vmatpush1.msra.mxu0 0.0
    %2895 = vmatprep.subr.mxu0 0.0
    %2896 = vmatpush1.msra.mxu0 0.0
    %2897 = vmatprep.subr.mxu0 0.0
    %2898 = vmatpush1.msra.mxu0 0.0
    %2899 = vmatprep.subr.mxu0 0.0
    %2900 = vmatpush1.msra.mxu0 0.0
    %2901 = vmatprep.subr.mxu0 0.0
    %2902 = vmatpush1.msra.mxu0 0.0
    %2903 = vmatprep.subr.mxu0 0.0
    %2904 = vmatpush1.msra.mxu0 0.0
    %2905 = vmatprep.subr.mxu0 0.0
    %2906 = vmatpush1.msra.mxu0 0.0
    %2907 = vmatprep.subr.mxu0 0.0
    %2908 = vmatpush1.msra.mxu0 0.0
    %2909 = vmatprep.subr.mxu0 0.0
    %2910 = vmatpush1.msra.mxu0 0.0
    %2911 = vmatprep.subr.mxu0 0.0
    %2912 = vmatpush1.msra.mxu0 0.0
    %2913 = vmatprep.subr.mxu0 0.0
    %2914 = vmatpush1.msra.mxu0 0.0
    %2915 = vmatprep.subr.mxu0 0.0
    %2916 = vmatpush1.msra.mxu0 0.0
    %2917 = vmatprep.subr.mxu0 0.0
    %2918 = vmatpush1.msra.mxu0 0.0
    %2919 = vmatprep.subr.mxu0 0.0
    %2920 = vmatpush1.msra.mxu0 0.0
    %2921 = vmatprep.subr.mxu0 0.0
    %2922 = vmatpush1.msra.mxu0 0.0
    %2923 = vmatprep.subr.mxu0 0.0
    %2924 = vmatpush1.msra.mxu0 0.0
    %2925 = vmatprep.subr.mxu0 0.0
    %2926 = vmatpush1.msra.mxu0 0.0
    %2927 = vmatprep.subr.mxu0 0.0
    %2928 = vmatpush1.msra.mxu0 0.0
    %2929 = vmatprep.subr.mxu0 0.0
    %2930 = vmatpush1.msra.mxu0 0.0
    %2931 = vmatprep.subr.mxu0 0.0
    %2932 = vmatpush1.msra.mxu0 0.0
    %2933 = vmatprep.subr.mxu0 0.0
    %2934 = vmatpush1.msra.mxu0 0.0
    %2935 = vmatprep.subr.mxu0 0.0
    %2936 = vmatpush1.msra.mxu0 0.0
    %2937 = vmatprep.subr.mxu0 0.0
    %2938 = vmatpush1.msra.mxu0 0.0
    %2939 = vmatprep.subr.mxu0 0.0
    %2940 = vmatpush1.msra.mxu0 0.0
    %2941 = vmatprep.mubr.f32.mxu0 0.0
    %2942 = vmatmul.mubr.f32.gmra.mrb[0].mxu0 %v2875
    %v2943 = vpop.f32.mrb[0].mxu0
    %v2944 = vpop.f32.mrb[0].mxu0
    %v2945 = vadd.f32 0.0, %v2944
    %2946 = vdwg.mxu0
    %v2947 = vadd.f32 %v2945, %v1982
    %v2948 = vxor.u32 %v2947, 2147483648
    %v2949 = vmul.f32 %v2948, 1.442695
    %v2950 = vpow.pop %v2949
    %v2951 = vadd.f32 %v2950, 1.0
    %v2952 = vrcp.pop %v2951
    %v2953 = vmul.f32 1.0, %v2952
    %v2954 = vtanh.pop %v2947
    %v2955 = vmul.f32 %v2953, %v2829
    %2957 = vrot.lane.b32.xlu0 %v2954, 32
    %v2958 = vpop.permute.xlu0 %2957
    %v2960 = vmul.f32 %v2953, %v2958
    %2962 = vrot.lane.b32.xlu0 %v2960, 32
    %v2963 = vpop.permute.xlu0 %2962
    %v2965 = vadd.f32 %v2955, %v2963
    %v2966 = vtanh.pop %v2965
    %2968 = vrot.lane.b32.xlu0 %v2966, 32
    %v2969 = vpop.permute.xlu0 %2968
    %v2971 = vmul.f32 %v2953, %v2969
    %v2972 = vld [vmem:[%s3 + $0xb8] sm:$0xff]
    %v2973 = vld [vmem:[%s3 + $0xc0] sm:$0xff]
    %v2974 = vld [vmem:[%s3 + $0xc8] sm:$0xff]
    %v2975 = vld [vmem:[%s3 + $0xd0] sm:$0xff]
    %v2976 = vld [vmem:[%s3 + $0x10d] sm:$0x1]
    %v2977 = vlaneseq
    %v2978 = vshrl.u32 %v2977, 7
    %v2979 = vsub.s32 0, %v2978
    %v2980 = vrot.slane %v2976, %v2979
    %2982 = vrot.lane.b32.xlu0 %v2971, 64
    %v2983 = vpop.permute.xlu0 %2982
    %v2984 = vsel %vm195, %v2983, 0
    %2986 = vmatprep.subr.mxu0 0.0
    %2987 = vmatpush1.msra.mxu0 %v2972
    %2988 = vmatprep.subr.mxu0 0.0
    %2989 = vmatpush1.msra.mxu0 %v2973
    %2990 = vmatprep.subr.mxu0 0.0
    %2991 = vmatpush1.msra.mxu0 %v2974
    %2992 = vmatprep.subr.mxu0 0.0
    %2993 = vmatpush1.msra.mxu0 %v2975
    %2994 = vmatprep.subr.mxu0 0.0
    %2995 = vmatpush1.msra.mxu0 0.0
    %2996 = vmatprep.subr.mxu0 0.0
    %2997 = vmatpush1.msra.mxu0 0.0
    %2998 = vmatprep.subr.mxu0 0.0
    %2999 = vmatpush1.msra.mxu0 0.0
    %3000 = vmatprep.subr.mxu0 0.0
    %3001 = vmatpush1.msra.mxu0 0.0
    %3002 = vmatprep.subr.mxu0 0.0
    %3003 = vmatpush1.msra.mxu0 0.0
    %3004 = vmatprep.subr.mxu0 0.0
    %3005 = vmatpush1.msra.mxu0 0.0
    %3006 = vmatprep.subr.mxu0 0.0
    %3007 = vmatpush1.msra.mxu0 0.0
    %3008 = vmatprep.subr.mxu0 0.0
    %3009 = vmatpush1.msra.mxu0 0.0
    %3010 = vmatprep.subr.mxu0 0.0
    %3011 = vmatpush1.msra.mxu0 0.0
    %3012 = vmatprep.subr.mxu0 0.0
    %3013 = vmatpush1.msra.mxu0 0.0
    %3014 = vmatprep.subr.mxu0 0.0
    %3015 = vmatpush1.msra.mxu0 0.0
    %3016 = vmatprep.subr.mxu0 0.0
    %3017 = vmatpush1.msra.mxu0 0.0
    %3018 = vmatprep.subr.mxu0 0.0
    %3019 = vmatpush1.msra.mxu0 0.0
    %3020 = vmatprep.subr.mxu0 0.0
    %3021 = vmatpush1.msra.mxu0 0.0
    %3022 = vmatprep.subr.mxu0 0.0
    %3023 = vmatpush1.msra.mxu0 0.0
    %3024 = vmatprep.subr.mxu0 0.0
    %3025 = vmatpush1.msra.mxu0 0.0
    %3026 = vmatprep.subr.mxu0 0.0
    %3027 = vmatpush1.msra.mxu0 0.0
    %3028 = vmatprep.subr.mxu0 0.0
    %3029 = vmatpush1.msra.mxu0 0.0
    %3030 = vmatprep.subr.mxu0 0.0
    %3031 = vmatpush1.msra.mxu0 0.0
    %3032 = vmatprep.subr.mxu0 0.0
    %3033 = vmatpush1.msra.mxu0 0.0
    %3034 = vmatprep.subr.mxu0 0.0
    %3035 = vmatpush1.msra.mxu0 0.0
    %3036 = vmatprep.subr.mxu0 0.0
    %3037 = vmatpush1.msra.mxu0 0.0
    %3038 = vmatprep.subr.mxu0 0.0
    %3039 = vmatpush1.msra.mxu0 0.0
    %3040 = vmatprep.subr.mxu0 0.0
    %3041 = vmatpush1.msra.mxu0 0.0
    %3042 = vmatprep.subr.mxu0 0.0
    %3043 = vmatpush1.msra.mxu0 0.0
    %3044 = vmatprep.subr.mxu0 0.0
    %3045 = vmatpush1.msra.mxu0 0.0
    %3046 = vmatprep.subr.mxu0 0.0
    %3047 = vmatpush1.msra.mxu0 0.0
    %3048 = vmatprep.subr.mxu0 0.0
    %3049 = vmatpush1.msra.mxu0 0.0
    %3050 = vmatprep.mubr.f32.mxu0 0.0
    %3051 = vmatmul.mubr.f32.gmra.mrb[0].mxu0 %v2984
    %v3052 = vpop.f32.mrb[0].mxu0
    %v3053 = vadd.f32 %v2980, %v3052
    %v3054 = vpop.f32.mrb[0].mxu0
    %3055 = vdwg.mxu0
    %v3056 = vmul.f32 %v3053, 0.5
    %v3057 = vmul.f32 %v3056, 1.442695
    %v3058 = vpow.pop %v3057
    %v3059 = vld [vmem:[%s2] sm:$0x3]
    %3061 = vrot.lane.b32.xlu0 %v3059, 16
    %v3062 = vpop.permute.xlu0 %3061
    %v3064 = vmul.f32 %v3058, %v3062
    %3066 = vrot.lane.b32.xlu0 %v3064, 112
    %v3067 = vpop.permute.xlu0 %3066
    %v3069 = vadd.f32 %v3053, %v3067
    %v3070 = vld [vmem:[%s3 + $0xd8] sm:$0xff]
    %v3071 = vld [vmem:[%s3 + $0xe0] sm:$0xff]
    %v3072 = vld [vmem:[%s3 + $0x10e] sm:$0x1]
    %v3073 = vlaneseq
    %v3074 = vshrl.u32 %v3073, 7
    %v3075 = vsub.s32 0, %v3074
    %v3076 = vrot.slane %v3072, %v3075
    %v3078 = vsel %vm1644, %v3069, 0
    %3080 = vmatprep.subr.mxu0 0.0
    %3081 = vmatpush1.msra.mxu0 %v3070
    %3082 = vmatprep.subr.mxu0 0.0
    %3083 = vmatpush1.msra.mxu0 %v3071
    %3084 = vmatprep.subr.mxu0 0.0
    %3085 = vmatpush1.msra.mxu0 0.0
    %3086 = vmatprep.subr.mxu0 0.0
    %3087 = vmatpush1.msra.mxu0 0.0
    %3088 = vmatprep.subr.mxu0 0.0
    %3089 = vmatpush1.msra.mxu0 0.0
    %3090 = vmatprep.subr.mxu0 0.0
    %3091 = vmatpush1.msra.mxu0 0.0
    %3092 = vmatprep.subr.mxu0 0.0
    %3093 = vmatpush1.msra.mxu0 0.0
    %3094 = vmatprep.subr.mxu0 0.0
    %3095 = vmatpush1.msra.mxu0 0.0
    %3096 = vmatprep.subr.mxu0 0.0
    %3097 = vmatpush1.msra.mxu0 0.0
    %3098 = vmatprep.subr.mxu0 0.0
    %3099 = vmatpush1.msra.mxu0 0.0
    %3100 = vmatprep.subr.mxu0 0.0
    %3101 = vmatpush1.msra.mxu0 0.0
    %3102 = vmatprep.subr.mxu0 0.0
    %3103 = vmatpush1.msra.mxu0 0.0
    %3104 = vmatprep.subr.mxu0 0.0
    %3105 = vmatpush1.msra.mxu0 0.0
    %3106 = vmatprep.subr.mxu0 0.0
    %3107 = vmatpush1.msra.mxu0 0.0
    %3108 = vmatprep.subr.mxu0 0.0
    %3109 = vmatpush1.msra.mxu0 0.0
    %3110 = vmatprep.subr.mxu0 0.0
    %3111 = vmatpush1.msra.mxu0 0.0
    %3112 = vmatprep.subr.mxu0 0.0
    %3113 = vmatpush1.msra.mxu0 0.0
    %3114 = vmatprep.subr.mxu0 0.0
    %3115 = vmatpush1.msra.mxu0 0.0
    %3116 = vmatprep.subr.mxu0 0.0
    %3117 = vmatpush1.msra.mxu0 0.0
    %3118 = vmatprep.subr.mxu0 0.0
    %3119 = vmatpush1.msra.mxu0 0.0
    %3120 = vmatprep.subr.mxu0 0.0
    %3121 = vmatpush1.msra.mxu0 0.0
    %3122 = vmatprep.subr.mxu0 0.0
    %3123 = vmatpush1.msra.mxu0 0.0
    %3124 = vmatprep.subr.mxu0 0.0
    %3125 = vmatpush1.msra.mxu0 0.0
    %3126 = vmatprep.subr.mxu0 0.0
    %3127 = vmatpush1.msra.mxu0 0.0
    %3128 = vmatprep.subr.mxu0 0.0
    %3129 = vmatpush1.msra.mxu0 0.0
    %3130 = vmatprep.subr.mxu0 0.0
    %3131 = vmatpush1.msra.mxu0 0.0
    %3132 = vmatprep.subr.mxu0 0.0
    %3133 = vmatpush1.msra.mxu0 0.0
    %3134 = vmatprep.subr.mxu0 0.0
    %3135 = vmatpush1.msra.mxu0 0.0
    %3136 = vmatprep.subr.mxu0 0.0
    %3137 = vmatpush1.msra.mxu0 0.0
    %3138 = vmatprep.subr.mxu0 0.0
    %3139 = vmatpush1.msra.mxu0 0.0
    %3140 = vmatprep.subr.mxu0 0.0
    %3141 = vmatpush1.msra.mxu0 0.0
    %3142 = vmatprep.subr.mxu0 0.0
    %3143 = vmatpush1.msra.mxu0 0.0
    %3144 = vmatprep.mubr.f32.mxu0 0.0
    %3145 = vmatmul.mubr.f32.gmra.mrb[0].mxu0 %v3078
    %v3146 = vpop.f32.mrb[0].mxu0
    %v3147 = vadd.f32 %v3076, %v3146
    %v3148 = vpop.f32.mrb[0].mxu0
    %3149 = vdwg.mxu0
    %v3150 = vmax.f32 %v3147, 0.0
    %v3151 = vld [vmem:[%s3 + $0xe8] sm:$0xff]
    %v3152 = vld [vmem:[%s3 + $0xf0] sm:$0xff]
    %v3153 = vld [vmem:[%s3 + $0xf8] sm:$0xff]
    %v3154 = vld [vmem:[%s3 + $0x100] sm:$0xff]
    %v3155 = vld [vmem:[%s3 + $0x10f] sm:$0x1]
    %v3156 = vlaneseq
    %v3157 = vshrl.u32 %v3156, 7
    %v3158 = vsub.s32 0, %v3157
    %v3159 = vrot.slane %v3155, %v3158
    %v3161 = vsel %vm195, %v3150, 0
    %3163 = vmatprep.subr.mxu0 0.0
    %3164 = vmatpush1.msra.mxu0 %v3151
    %3165 = vmatprep.subr.mxu0 0.0
    %3166 = vmatpush1.msra.mxu0 %v3152
    %3167 = vmatprep.subr.mxu0 0.0
    %3168 = vmatpush1.msra.mxu0 %v3153
    %3169 = vmatprep.subr.mxu0 0.0
    %3170 = vmatpush1.msra.mxu0 %v3154
    %3171 = vmatprep.subr.mxu0 0.0
    %3172 = vmatpush1.msra.mxu0 0.0
    %3173 = vmatprep.subr.mxu0 0.0
    %3174 = vmatpush1.msra.mxu0 0.0
    %3175 = vmatprep.subr.mxu0 0.0
    %3176 = vmatpush1.msra.mxu0 0.0
    %3177 = vmatprep.subr.mxu0 0.0
    %3178 = vmatpush1.msra.mxu0 0.0
    %3179 = vmatprep.subr.mxu0 0.0
    %3180 = vmatpush1.msra.mxu0 0.0
    %3181 = vmatprep.subr.mxu0 0.0
    %3182 = vmatpush1.msra.mxu0 0.0
    %3183 = vmatprep.subr.mxu0 0.0
    %3184 = vmatpush1.msra.mxu0 0.0
    %3185 = vmatprep.subr.mxu0 0.0
    %3186 = vmatpush1.msra.mxu0 0.0
    %3187 = vmatprep.subr.mxu0 0.0
    %3188 = vmatpush1.msra.mxu0 0.0
    %3189 = vmatprep.subr.mxu0 0.0
    %3190 = vmatpush1.msra.mxu0 0.0
    %3191 = vmatprep.subr.mxu0 0.0
    %3192 = vmatpush1.msra.mxu0 0.0
    %3193 = vmatprep.subr.mxu0 0.0
    %3194 = vmatpush1.msra.mxu0 0.0
    %3195 = vmatprep.subr.mxu0 0.0
    %3196 = vmatpush1.msra.mxu0 0.0
    %3197 = vmatprep.subr.mxu0 0.0
    %3198 = vmatpush1.msra.mxu0 0.0
    %3199 = vmatprep.subr.mxu0 0.0
    %3200 = vmatpush1.msra.mxu0 0.0
    %3201 = vmatprep.subr.mxu0 0.0
    %3202 = vmatpush1.msra.mxu0 0.0
    %3203 = vmatprep.subr.mxu0 0.0
    %3204 = vmatpush1.msra.mxu0 0.0
    %3205 = vmatprep.subr.mxu0 0.0
    %3206 = vmatpush1.msra.mxu0 0.0
    %3207 = vmatprep.subr.mxu0 0.0
    %3208 = vmatpush1.msra.mxu0 0.0
    %3209 = vmatprep.subr.mxu0 0.0
    %3210 = vmatpush1.msra.mxu0 0.0
    %3211 = vmatprep.subr.mxu0 0.0
    %3212 = vmatpush1.msra.mxu0 0.0
    %3213 = vmatprep.subr.mxu0 0.0
    %3214 = vmatpush1.msra.mxu0 0.0
    %3215 = vmatprep.subr.mxu0 0.0
    %3216 = vmatpush1.msra.mxu0 0.0
    %3217 = vmatprep.subr.mxu0 0.0
    %3218 = vmatpush1.msra.mxu0 0.0
    %3219 = vmatprep.subr.mxu0 0.0
    %3220 = vmatpush1.msra.mxu0 0.0
    %3221 = vmatprep.subr.mxu0 0.0
    %3222 = vmatpush1.msra.mxu0 0.0
    %3223 = vmatprep.subr.mxu0 0.0
    %3224 = vmatpush1.msra.mxu0 0.0
    %3225 = vmatprep.subr.mxu0 0.0
    %3226 = vmatpush1.msra.mxu0 0.0
    %3227 = vmatprep.mubr.f32.mxu0 0.0
    %3228 = vmatmul.mubr.f32.gmra.mrb[0].mxu0 %v3161
    %v3229 = vpop.f32.mrb[0].mxu0
    %v3230 = vadd.f32 %v3159, %v3229
    %v3231 = vpop.f32.mrb[0].mxu0
    %3232 = vdwg.mxu0
    %v3233 = vld [vmem:[#allocation4 + $0x80] sm:$0xff]
    %v3234 = vld [vmem:[#allocation4 + $0x88] sm:$0xff]
    %v3235 = vld [vmem:[#allocation4 + $0x90] sm:$0xff]
    %v3236 = vld [vmem:[#allocation4 + $0x98] sm:$0xff]
    %v3237 = vld [vmem:[#allocation4 + $0xa0] sm:$0xff]
    %v3238 = vld [vmem:[#allocation4 + $0xa8] sm:$0xff]
    %v3239 = vld [vmem:[#allocation4 + $0xb0] sm:$0xff]
    %v3240 = vld [vmem:[#allocation4 + $0xb8] sm:$0xff]
    %v3241 = vld [vmem:[#allocation4 + $0xc0] sm:$0xff]
    %v3242 = vld [vmem:[#allocation4 + $0xc8] sm:$0xff]
    %v3243 = vld [vmem:[#allocation4 + $0xd0] sm:$0xff]
    %v3244 = vld [vmem:[#allocation4 + $0xd8] sm:$0xff]
    %v3245 = vld [vmem:[#allocation4 + $0xe0] sm:$0xff]
    %v3246 = vld [vmem:[#allocation4 + $0xe8] sm:$0xff]
    %v3247 = vld [vmem:[#allocation4 + $0xf0] sm:$0xff]
    %v3248 = vld [vmem:[#allocation4 + $0xf8] sm:$0xff]
    %v3249 = vld [vmem:[%s3 + $0x110] sm:$0x1]
    %s3250 = smul.u32 8, 33
    %s3251 = smul.u32 %s3250, 6
    %s3252 = sshll.u32 %s3251, 4
    %3253 = dma.done [#allocation3], %s3252
    %v3254 = vxor.u32 %v3230, 2147483648
    %v3255 = vmul.f32 %v3254, 1.442695
    %v3256 = vpow.pop %v3255
    %v3257 = vadd.f32 %v3256, 1.0
    %v3258 = vrcp.pop %v3257
    %v3259 = vmul.f32 1.0, %v3258
    %v3260 = vtanh.pop %v3230
    %v3261 = vmul.f32 %v3259, 0.0
    %3263 = vrot.lane.b32.xlu0 %v3260, 32
    %v3264 = vpop.permute.xlu0 %3263
    %v3266 = vmul.f32 %v3259, %v3264
    %3268 = vrot.lane.b32.xlu0 %v3266, 32
    %v3269 = vpop.permute.xlu0 %3268
    %v3271 = vadd.f32 %v3261, %v3269
    %v3272 = vtanh.pop %v3271
    %3274 = vrot.lane.b32.xlu0 %v3272, 32
    %v3275 = vpop.permute.xlu0 %3274
    %v3277 = vmul.f32 %v3259, %v3275
    %3279 = vrot.lane.b32.xlu0 %v3277, 64
    %v3280 = vpop.permute.xlu0 %3279
    %v3282 = vsel %vm195, %v3280, 0.0
    %v3284 = vsel %vm1904, %v3282, 0
    %3286 = vmatprep.subr.mxu0 %v3234
    %3287 = vmatpush1.msra.mxu0 %v3233
    %3288 = vmatprep.subr.mxu0 %v3236
    %3289 = vmatpush1.msra.mxu0 %v3235
    %3290 = vmatprep.subr.mxu0 %v3238
    %3291 = vmatpush1.msra.mxu0 %v3237
    %3292 = vmatprep.subr.mxu0 %v3240
    %3293 = vmatpush1.msra.mxu0 %v3239
    %3294 = vmatprep.subr.mxu0 %v3242
    %3295 = vmatpush1.msra.mxu0 %v3241
    %3296 = vmatprep.subr.mxu0 %v3244
    %3297 = vmatpush1.msra.mxu0 %v3243
    %3298 = vmatprep.subr.mxu0 %v3246
    %3299 = vmatpush1.msra.mxu0 %v3245
    %3300 = vmatprep.subr.mxu0 %v3248
    %3301 = vmatpush1.msra.mxu0 %v3247
    %3302 = vmatprep.subr.mxu0 0.0
    %3303 = vmatpush1.msra.mxu0 0.0
    %3304 = vmatprep.subr.mxu0 0.0
    %3305 = vmatpush1.msra.mxu0 0.0
    %3306 = vmatprep.subr.mxu0 0.0
    %3307 = vmatpush1.msra.mxu0 0.0
    %3308 = vmatprep.subr.mxu0 0.0
    %3309 = vmatpush1.msra.mxu0 0.0
    %3310 = vmatprep.subr.mxu0 0.0
    %3311 = vmatpush1.msra.mxu0 0.0
    %3312 = vmatprep.subr.mxu0 0.0
    %3313 = vmatpush1.msra.mxu0 0.0
    %3314 = vmatprep.subr.mxu0 0.0
    %3315 = vmatpush1.msra.mxu0 0.0
    %3316 = vmatprep.subr.mxu0 0.0
    %3317 = vmatpush1.msra.mxu0 0.0
    %3318 = vmatprep.subr.mxu0 0.0
    %3319 = vmatpush1.msra.mxu0 0.0
    %3320 = vmatprep.subr.mxu0 0.0
    %3321 = vmatpush1.msra.mxu0 0.0
    %3322 = vmatprep.subr.mxu0 0.0
    %3323 = vmatpush1.msra.mxu0 0.0
    %3324 = vmatprep.subr.mxu0 0.0
    %3325 = vmatpush1.msra.mxu0 0.0
    %3326 = vmatprep.subr.mxu0 0.0
    %3327 = vmatpush1.msra.mxu0 0.0
    %3328 = vmatprep.subr.mxu0 0.0
    %3329 = vmatpush1.msra.mxu0 0.0
    %3330 = vmatprep.subr.mxu0 0.0
    %3331 = vmatpush1.msra.mxu0 0.0
    %3332 = vmatprep.subr.mxu0 0.0
    %3333 = vmatpush1.msra.mxu0 0.0
    %3334 = vmatprep.subr.mxu0 0.0
    %3335 = vmatpush1.msra.mxu0 0.0
    %3336 = vmatprep.subr.mxu0 0.0
    %3337 = vmatpush1.msra.mxu0 0.0
    %3338 = vmatprep.subr.mxu0 0.0
    %3339 = vmatpush1.msra.mxu0 0.0
    %3340 = vmatprep.subr.mxu0 0.0
    %3341 = vmatpush1.msra.mxu0 0.0
    %3342 = vmatprep.subr.mxu0 0.0
    %3343 = vmatpush1.msra.mxu0 0.0
    %3344 = vmatprep.subr.mxu0 0.0
    %3345 = vmatpush1.msra.mxu0 0.0
    %3346 = vmatprep.subr.mxu0 0.0
    %3347 = vmatpush1.msra.mxu0 0.0
    %3348 = vmatprep.subr.mxu0 0.0
    %3349 = vmatpush1.msra.mxu0 0.0
    %3350 = vmatprep.mubr.f32.mxu0 0.0
    %3351 = vmatmul.mubr.f32.gmra.mrb[0].mxu0 %v3284
    %v3352 = vpop.f32.mrb[0].mxu0
    %v3353 = vadd.f32 0.0, %v3352
    %v3354 = vpop.f32.mrb[0].mxu0
    %v3355 = vadd.f32 0.0, %v3354
    %3356 = vdwg.mxu0
    %v3357 = vlaneseq
    %v3358 = vshrl.u32 %v3357, 7
    %v3359 = vsub.s32 0, %v3358
    %v3360 = vrot.slane %v3249, %v3359
    %v3361 = vadd.f32 %v3355, %v3360
    %v3362 = vxor.u32 %v3361, 2147483648
    %v3363 = vmul.f32 %v3362, 1.442695
    %v3364 = vpow.pop %v3363
    %v3365 = vadd.f32 %v3364, 1.0
    %v3366 = vrcp.pop %v3365
    %v3367 = vmul.f32 1.0, %v3366
    %v3368 = vtanh.pop %v3361
    %v3369 = vmul.f32 %v3367, 0.0
    %3371 = vrot.lane.b32.xlu0 %v3368, 32
    %v3372 = vpop.permute.xlu0 %3371
    %v3374 = vmul.f32 %v3367, %v3372
    %3376 = vrot.lane.b32.xlu0 %v3374, 32
    %v3377 = vpop.permute.xlu0 %3376
    %v3379 = vadd.f32 %v3369, %v3377
    %v3380 = vtanh.pop %v3379
    %3382 = vrot.lane.b32.xlu0 %v3380, 32
    %v3383 = vpop.permute.xlu0 %3382
    %v3385 = vmul.f32 %v3367, %v3383
    %v3386 = vld [vmem:[#allocation2] sm:$0xff]
    %v3387 = vld [vmem:[#allocation2 + $0x8] sm:$0xff]
    %v3388 = vld [vmem:[#allocation2 + $0x10] sm:$0xff]
    %v3389 = vld [vmem:[#allocation2 + $0x18] sm:$0xff]
    %v3390 = vld [vmem:[#allocation2 + $0x20] sm:$0xff]
    %v3391 = vld [vmem:[#allocation2 + $0x28] sm:$0xff]
    %v3392 = vld [vmem:[#allocation2 + $0x30] sm:$0xff]
    %v3393 = vld [vmem:[#allocation2 + $0x38] sm:$0xff]
    %v3394 = vld [vmem:[#allocation2 + $0x40] sm:$0xff]
    %v3395 = vld [vmem:[#allocation2 + $0x48] sm:$0xff]
    %v3396 = vld [vmem:[#allocation2 + $0x50] sm:$0xff]
    %v3397 = vld [vmem:[#allocation2 + $0x58] sm:$0xff]
    %v3398 = vld [vmem:[#allocation2 + $0x60] sm:$0xff]
    %v3399 = vld [vmem:[#allocation2 + $0x68] sm:$0xff]
    %v3400 = vld [vmem:[#allocation2 + $0x70] sm:$0xff]
    %v3401 = vld [vmem:[#allocation2 + $0x78] sm:$0xff]
    %v3402 = vld [vmem:[#allocation2 + $0x80] sm:$0xff]
    %v3403 = vld [vmem:[#allocation2 + $0x88] sm:$0xff]
    %v3404 = vld [vmem:[#allocation2 + $0x90] sm:$0xff]
    %v3405 = vld [vmem:[#allocation2 + $0x98] sm:$0xff]
    %v3406 = vld [vmem:[#allocation2 + $0xa0] sm:$0xff]
    %v3407 = vld [vmem:[#allocation2 + $0xa8] sm:$0xff]
    %v3408 = vld [vmem:[#allocation2 + $0xb0] sm:$0xff]
    %v3409 = vld [vmem:[#allocation2 + $0xb8] sm:$0xff]
    %v3410 = vadd.f32 %v3353, %v3230
    %v3411 = vxor.u32 %v3410, 2147483648
    %v3412 = vmul.f32 %v3411, 1.442695
    %v3413 = vpow.pop %v3412
    %v3414 = vadd.f32 %v3413, 1.0
    %v3415 = vrcp.pop %v3414
    %v3416 = vmul.f32 1.0, %v3415
    %v3417 = vtanh.pop %v3410
    %v3418 = vmul.f32 %v3416, %v3271
    %3420 = vrot.lane.b32.xlu0 %v3417, 32
    %v3421 = vpop.permute.xlu0 %3420
    %v3423 = vmul.f32 %v3416, %v3421
    %3425 = vrot.lane.b32.xlu0 %v3423, 32
    %v3426 = vpop.permute.xlu0 %3425
    %v3428 = vadd.f32 %v3418, %v3426
    %v3429 = vtanh.pop %v3428
    %3431 = vrot.lane.b32.xlu0 %v3429, 32
    %v3432 = vpop.permute.xlu0 %3431
    %v3434 = vmul.f32 %v3416, %v3432
    %3436 = vrot.lane.b32.xlu0 %v3434, 64
    %v3437 = vpop.permute.xlu0 %3436
    %3440 = vrot.lane.b32.xlu0 %v3385, 96
    %v3441 = vpop.permute.xlu0 %3440
    %v3443 = vsel %vm195, %v3437, %v3441
    %v3445 = vsel %vm1904, %v3443, 0
    %3447 = vmatprep.subr.mxu0 %v3234
    %3448 = vmatpush1.msra.mxu0 %v3233
    %3449 = vmatprep.subr.mxu0 %v3236
    %3450 = vmatpush1.msra.mxu0 %v3235
    %3451 = vmatprep.subr.mxu0 %v3238
    %3452 = vmatpush1.msra.mxu0 %v3237
    %3453 = vmatprep.subr.mxu0 %v3240
    %3454 = vmatpush1.msra.mxu0 %v3239
    %3455 = vmatprep.subr.mxu0 %v3242
    %3456 = vmatpush1.msra.mxu0 %v3241
    %3457 = vmatprep.subr.mxu0 %v3244
    %3458 = vmatpush1.msra.mxu0 %v3243
    %3459 = vmatprep.subr.mxu0 %v3246
    %3460 = vmatpush1.msra.mxu0 %v3245
    %3461 = vmatprep.subr.mxu0 %v3248
    %3462 = vmatpush1.msra.mxu0 %v3247
    %3463 = vmatprep.subr.mxu0 0.0
    %3464 = vmatpush1.msra.mxu0 0.0
    %3465 = vmatprep.subr.mxu0 0.0
    %3466 = vmatpush1.msra.mxu0 0.0
    %3467 = vmatprep.subr.mxu0 0.0
    %3468 = vmatpush1.msra.mxu0 0.0
    %3469 = vmatprep.subr.mxu0 0.0
    %3470 = vmatpush1.msra.mxu0 0.0
    %3471 = vmatprep.subr.mxu0 0.0
    %3472 = vmatpush1.msra.mxu0 0.0
    %3473 = vmatprep.subr.mxu0 0.0
    %3474 = vmatpush1.msra.mxu0 0.0
    %3475 = vmatprep.subr.mxu0 0.0
    %3476 = vmatpush1.msra.mxu0 0.0
    %3477 = vmatprep.subr.mxu0 0.0
    %3478 = vmatpush1.msra.mxu0 0.0
    %3479 = vmatprep.subr.mxu0 0.0
    %3480 = vmatpush1.msra.mxu0 0.0
    %3481 = vmatprep.subr.mxu0 0.0
    %3482 = vmatpush1.msra.mxu0 0.0
    %3483 = vmatprep.subr.mxu0 0.0
    %3484 = vmatpush1.msra.mxu0 0.0
    %3485 = vmatprep.subr.mxu0 0.0
    %3486 = vmatpush1.msra.mxu0 0.0
    %3487 = vmatprep.subr.mxu0 0.0
    %3488 = vmatpush1.msra.mxu0 0.0
    %3489 = vmatprep.subr.mxu0 0.0
    %3490 = vmatpush1.msra.mxu0 0.0
    %3491 = vmatprep.subr.mxu0 0.0
    %3492 = vmatpush1.msra.mxu0 0.0
    %3493 = vmatprep.subr.mxu0 0.0
    %3494 = vmatpush1.msra.mxu0 0.0
    %3495 = vmatprep.subr.mxu0 0.0
    %3496 = vmatpush1.msra.mxu0 0.0
    %3497 = vmatprep.subr.mxu0 0.0
    %3498 = vmatpush1.msra.mxu0 0.0
    %3499 = vmatprep.subr.mxu0 0.0
    %3500 = vmatpush1.msra.mxu0 0.0
    %3501 = vmatprep.subr.mxu0 0.0
    %3502 = vmatpush1.msra.mxu0 0.0
    %3503 = vmatprep.subr.mxu0 0.0
    %3504 = vmatpush1.msra.mxu0 0.0
    %3505 = vmatprep.subr.mxu0 0.0
    %3506 = vmatpush1.msra.mxu0 0.0
    %3507 = vmatprep.subr.mxu0 0.0
    %3508 = vmatpush1.msra.mxu0 0.0
    %3509 = vmatprep.subr.mxu0 0.0
    %3510 = vmatpush1.msra.mxu0 0.0
    %3511 = vmatprep.mubr.f32.mxu0 0.0
    %3512 = vmatmul.mubr.f32.gmra.mrb[0].mxu0 %v3445
    %v3513 = vpop.f32.mrb[0].mxu0
    %v3514 = vadd.f32 0.0, %v3513
    %v3515 = vpop.f32.mrb[0].mxu0
    %v3516 = vadd.f32 0.0, %v3515
    %3517 = vdwg.mxu0
    %v3518 = vadd.f32 %v3516, %v3360
    %v3519 = vxor.u32 %v3518, 2147483648
    %v3520 = vmul.f32 %v3519, 1.442695
    %v3521 = vpow.pop %v3520
    %v3522 = vadd.f32 %v3521, 1.0
    %v3523 = vrcp.pop %v3522
    %v3524 = vmul.f32 1.0, %v3523
    %v3525 = vtanh.pop %v3518
    %v3526 = vmul.f32 %v3524, %v3379
    %3528 = vrot.lane.b32.xlu0 %v3525, 32
    %v3529 = vpop.permute.xlu0 %3528
    %v3531 = vmul.f32 %v3524, %v3529
    %3533 = vrot.lane.b32.xlu0 %v3531, 32
    %v3534 = vpop.permute.xlu0 %3533
    %v3536 = vadd.f32 %v3526, %v3534
    %v3537 = vtanh.pop %v3536
    %3539 = vrot.lane.b32.xlu0 %v3537, 32
    %v3540 = vpop.permute.xlu0 %3539
    %v3542 = vmul.f32 %v3524, %v3540
    %v3543 = vld [vmem:[#allocation2 + $0xc0] sm:$0xff]
    %v3544 = vld [vmem:[#allocation2 + $0xc8] sm:$0xff]
    %v3545 = vld [vmem:[#allocation2 + $0xd0] sm:$0xff]
    %v3546 = vld [vmem:[#allocation2 + $0xd8] sm:$0xff]
    %v3547 = vld [vmem:[#allocation2 + $0xe0] sm:$0xff]
    %v3548 = vld [vmem:[#allocation2 + $0xe8] sm:$0xff]
    %v3549 = vld [vmem:[#allocation2 + $0xf0] sm:$0xff]
    %v3550 = vld [vmem:[#allocation2 + $0xf8] sm:$0xff]
    %v3551 = vld [vmem:[#allocation2 + $0x100] sm:$0xff]
    %v3552 = vld [vmem:[#allocation2 + $0x108] sm:$0xff]
    %v3553 = vld [vmem:[#allocation2 + $0x110] sm:$0xff]
    %v3554 = vld [vmem:[#allocation2 + $0x118] sm:$0xff]
    %v3555 = vld [vmem:[#allocation2 + $0x120] sm:$0xff]
    %v3556 = vld [vmem:[#allocation2 + $0x128] sm:$0xff]
    %v3557 = vld [vmem:[#allocation2 + $0x130] sm:$0xff]
    %v3558 = vld [vmem:[#allocation2 + $0x138] sm:$0xff]
    %v3559 = vld [vmem:[#allocation2 + $0x140] sm:$0xff]
    %v3560 = vld [vmem:[#allocation2 + $0x148] sm:$0xff]
    %v3561 = vld [vmem:[#allocation2 + $0x150] sm:$0xff]
    %v3562 = vld [vmem:[#allocation2 + $0x158] sm:$0xff]
    %v3563 = vld [vmem:[#allocation2 + $0x160] sm:$0xff]
    %v3564 = vld [vmem:[#allocation2 + $0x168] sm:$0xff]
    %v3565 = vld [vmem:[#allocation2 + $0x170] sm:$0xff]
    %v3566 = vld [vmem:[#allocation2 + $0x178] sm:$0xff]
    %3568 = vrot.lane.b32.xlu0 %v3542, 64
    %v3569 = vpop.permute.xlu0 %3568
    %v3570 = vsel %vm195, %v3569, 0
    %3572 = vmatprep.subr.mxu0 %v3544
    %3573 = vmatpush1.msra.mxu0 %v3543
    %3574 = vmatprep.subr.mxu0 %v3550
    %3575 = vmatpush1.msra.mxu0 %v3549
    %3576 = vmatprep.subr.mxu0 %v3556
    %3577 = vmatpush1.msra.mxu0 %v3555
    %3578 = vmatprep.subr.mxu0 %v3562
    %3579 = vmatpush1.msra.mxu0 %v3561
    %3580 = vmatprep.subr.mxu0 0.0
    %3581 = vmatpush1.msra.mxu0 0.0
    %3582 = vmatprep.subr.mxu0 0.0
    %3583 = vmatpush1.msra.mxu0 0.0
    %3584 = vmatprep.subr.mxu0 0.0
    %3585 = vmatpush1.msra.mxu0 0.0
    %3586 = vmatprep.subr.mxu0 0.0
    %3587 = vmatpush1.msra.mxu0 0.0
    %3588 = vmatprep.subr.mxu0 0.0
    %3589 = vmatpush1.msra.mxu0 0.0
    %3590 = vmatprep.subr.mxu0 0.0
    %3591 = vmatpush1.msra.mxu0 0.0
    %3592 = vmatprep.subr.mxu0 0.0
    %3593 = vmatpush1.msra.mxu0 0.0
    %3594 = vmatprep.subr.mxu0 0.0
    %3595 = vmatpush1.msra.mxu0 0.0
    %3596 = vmatprep.subr.mxu0 0.0
    %3597 = vmatpush1.msra.mxu0 0.0
    %3598 = vmatprep.subr.mxu0 0.0
    %3599 = vmatpush1.msra.mxu0 0.0
    %3600 = vmatprep.subr.mxu0 0.0
    %3601 = vmatpush1.msra.mxu0 0.0
    %3602 = vmatprep.subr.mxu0 0.0
    %3603 = vmatpush1.msra.mxu0 0.0
    %3604 = vmatprep.subr.mxu0 0.0
    %3605 = vmatpush1.msra.mxu0 0.0
    %3606 = vmatprep.subr.mxu0 0.0
    %3607 = vmatpush1.msra.mxu0 0.0
    %3608 = vmatprep.subr.mxu0 0.0
    %3609 = vmatpush1.msra.mxu0 0.0
    %3610 = vmatprep.subr.mxu0 0.0
    %3611 = vmatpush1.msra.mxu0 0.0
    %3612 = vmatprep.subr.mxu0 0.0
    %3613 = vmatpush1.msra.mxu0 0.0
    %3614 = vmatprep.subr.mxu0 0.0
    %3615 = vmatpush1.msra.mxu0 0.0
    %3616 = vmatprep.subr.mxu0 0.0
    %3617 = vmatpush1.msra.mxu0 0.0
    %3618 = vmatprep.subr.mxu0 0.0
    %3619 = vmatpush1.msra.mxu0 0.0
    %3620 = vmatprep.subr.mxu0 0.0
    %3621 = vmatpush1.msra.mxu0 0.0
    %3622 = vmatprep.subr.mxu0 0.0
    %3623 = vmatpush1.msra.mxu0 0.0
    %3624 = vmatprep.subr.mxu0 0.0
    %3625 = vmatpush1.msra.mxu0 0.0
    %3626 = vmatprep.subr.mxu0 0.0
    %3627 = vmatpush1.msra.mxu0 0.0
    %3628 = vmatprep.subr.mxu0 0.0
    %3629 = vmatpush1.msra.mxu0 0.0
    %3630 = vmatprep.subr.mxu0 0.0
    %3631 = vmatpush1.msra.mxu0 0.0
    %3632 = vmatprep.subr.mxu0 0.0
    %3633 = vmatpush1.msra.mxu0 0.0
    %3634 = vmatprep.subr.mxu0 0.0
    %3635 = vmatpush1.msra.mxu0 0.0
    %3636 = vmatprep.mubr.f32.mxu0 0.0
    %3637 = vmatmul.mubr.f32.gmra.mrb[0].mxu0 %v3570
    %v3638 = vpop.f32.mrb[0].mxu0
    %v3639 = vadd.f32 0.0, %v3638
    %v3640 = vpop.f32.mrb[0].mxu0
    %v3641 = vadd.f32 0.0, %v3640
    %3642 = vdwg.mxu0
    %3643 = vmatprep.subr.mxu0 %v3546
    %3644 = vmatpush1.msra.mxu0 %v3545
    %3645 = vmatprep.subr.mxu0 %v3552
    %3646 = vmatpush1.msra.mxu0 %v3551
    %3647 = vmatprep.subr.mxu0 %v3558
    %3648 = vmatpush1.msra.mxu0 %v3557
    %3649 = vmatprep.subr.mxu0 %v3564
    %3650 = vmatpush1.msra.mxu0 %v3563
    %3651 = vmatprep.subr.mxu0 0.0
    %3652 = vmatpush1.msra.mxu0 0.0
    %3653 = vmatprep.subr.mxu0 0.0
    %3654 = vmatpush1.msra.mxu0 0.0
    %3655 = vmatprep.subr.mxu0 0.0
    %3656 = vmatpush1.msra.mxu0 0.0
    %3657 = vmatprep.subr.mxu0 0.0
    %3658 = vmatpush1.msra.mxu0 0.0
    %3659 = vmatprep.subr.mxu0 0.0
    %3660 = vmatpush1.msra.mxu0 0.0
    %3661 = vmatprep.subr.mxu0 0.0
    %3662 = vmatpush1.msra.mxu0 0.0
    %3663 = vmatprep.subr.mxu0 0.0
    %3664 = vmatpush1.msra.mxu0 0.0
    %3665 = vmatprep.subr.mxu0 0.0
    %3666 = vmatpush1.msra.mxu0 0.0
    %3667 = vmatprep.subr.mxu0 0.0
    %3668 = vmatpush1.msra.mxu0 0.0
    %3669 = vmatprep.subr.mxu0 0.0
    %3670 = vmatpush1.msra.mxu0 0.0
    %3671 = vmatprep.subr.mxu0 0.0
    %3672 = vmatpush1.msra.mxu0 0.0
    %3673 = vmatprep.subr.mxu0 0.0
    %3674 = vmatpush1.msra.mxu0 0.0
    %3675 = vmatprep.subr.mxu0 0.0
    %3676 = vmatpush1.msra.mxu0 0.0
    %3677 = vmatprep.subr.mxu0 0.0
    %3678 = vmatpush1.msra.mxu0 0.0
    %3679 = vmatprep.subr.mxu0 0.0
    %3680 = vmatpush1.msra.mxu0 0.0
    %3681 = vmatprep.subr.mxu0 0.0
    %3682 = vmatpush1.msra.mxu0 0.0
    %3683 = vmatprep.subr.mxu0 0.0
    %3684 = vmatpush1.msra.mxu0 0.0
    %3685 = vmatprep.subr.mxu0 0.0
    %3686 = vmatpush1.msra.mxu0 0.0
    %3687 = vmatprep.subr.mxu0 0.0
    %3688 = vmatpush1.msra.mxu0 0.0
    %3689 = vmatprep.subr.mxu0 0.0
    %3690 = vmatpush1.msra.mxu0 0.0
    %3691 = vmatprep.subr.mxu0 0.0
    %3692 = vmatpush1.msra.mxu0 0.0
    %3693 = vmatprep.subr.mxu0 0.0
    %3694 = vmatpush1.msra.mxu0 0.0
    %3695 = vmatprep.subr.mxu0 0.0
    %3696 = vmatpush1.msra.mxu0 0.0
    %3697 = vmatprep.subr.mxu0 0.0
    %3698 = vmatpush1.msra.mxu0 0.0
    %3699 = vmatprep.subr.mxu0 0.0
    %3700 = vmatpush1.msra.mxu0 0.0
    %3701 = vmatprep.subr.mxu0 0.0
    %3702 = vmatpush1.msra.mxu0 0.0
    %3703 = vmatprep.subr.mxu0 0.0
    %3704 = vmatpush1.msra.mxu0 0.0
    %3705 = vmatprep.subr.mxu0 0.0
    %3706 = vmatpush1.msra.mxu0 0.0
    %3707 = vmatprep.mubr.f32.mxu0 0.0
    %3708 = vmatmul.mubr.f32.gmra.mrb[0].mxu0 %v3570
    %v3709 = vpop.f32.mrb[0].mxu0
    %v3710 = vadd.f32 0.0, %v3709
    %v3711 = vpop.f32.mrb[0].mxu0
    %v3712 = vadd.f32 0.0, %v3711
    %3713 = vdwg.mxu0
    %3714 = vmatprep.subr.mxu0 %v3548
    %3715 = vmatpush1.msra.mxu0 %v3547
    %3716 = vmatprep.subr.mxu0 %v3554
    %3717 = vmatpush1.msra.mxu0 %v3553
    %3718 = vmatprep.subr.mxu0 %v3560
    %3719 = vmatpush1.msra.mxu0 %v3559
    %3720 = vmatprep.subr.mxu0 %v3566
    %3721 = vmatpush1.msra.mxu0 %v3565
    %3722 = vmatprep.subr.mxu0 0.0
    %3723 = vmatpush1.msra.mxu0 0.0
    %3724 = vmatprep.subr.mxu0 0.0
    %3725 = vmatpush1.msra.mxu0 0.0
    %3726 = vmatprep.subr.mxu0 0.0
    %3727 = vmatpush1.msra.mxu0 0.0
    %3728 = vmatprep.subr.mxu0 0.0
    %3729 = vmatpush1.msra.mxu0 0.0
    %3730 = vmatprep.subr.mxu0 0.0
    %3731 = vmatpush1.msra.mxu0 0.0
    %3732 = vmatprep.subr.mxu0 0.0
    %3733 = vmatpush1.msra.mxu0 0.0
    %3734 = vmatprep.subr.mxu0 0.0
    %3735 = vmatpush1.msra.mxu0 0.0
    %3736 = vmatprep.subr.mxu0 0.0
    %3737 = vmatpush1.msra.mxu0 0.0
    %3738 = vmatprep.subr.mxu0 0.0
    %3739 = vmatpush1.msra.mxu0 0.0
    %3740 = vmatprep.subr.mxu0 0.0
    %3741 = vmatpush1.msra.mxu0 0.0
    %3742 = vmatprep.subr.mxu0 0.0
    %3743 = vmatpush1.msra.mxu0 0.0
    %3744 = vmatprep.subr.mxu0 0.0
    %3745 = vmatpush1.msra.mxu0 0.0
    %3746 = vmatprep.subr.mxu0 0.0
    %3747 = vmatpush1.msra.mxu0 0.0
    %3748 = vmatprep.subr.mxu0 0.0
    %3749 = vmatpush1.msra.mxu0 0.0
    %3750 = vmatprep.subr.mxu0 0.0
    %3751 = vmatpush1.msra.mxu0 0.0
    %3752 = vmatprep.subr.mxu0 0.0
    %3753 = vmatpush1.msra.mxu0 0.0
    %3754 = vmatprep.subr.mxu0 0.0
    %3755 = vmatpush1.msra.mxu0 0.0
    %3756 = vmatprep.subr.mxu0 0.0
    %3757 = vmatpush1.msra.mxu0 0.0
    %3758 = vmatprep.subr.mxu0 0.0
    %3759 = vmatpush1.msra.mxu0 0.0
    %3760 = vmatprep.subr.mxu0 0.0
    %3761 = vmatpush1.msra.mxu0 0.0
    %3762 = vmatprep.subr.mxu0 0.0
    %3763 = vmatpush1.msra.mxu0 0.0
    %3764 = vmatprep.subr.mxu0 0.0
    %3765 = vmatpush1.msra.mxu0 0.0
    %3766 = vmatprep.subr.mxu0 0.0
    %3767 = vmatpush1.msra.mxu0 0.0
    %3768 = vmatprep.subr.mxu0 0.0
    %3769 = vmatpush1.msra.mxu0 0.0
    %3770 = vmatprep.subr.mxu0 0.0
    %3771 = vmatpush1.msra.mxu0 0.0
    %3772 = vmatprep.subr.mxu0 0.0
    %3773 = vmatpush1.msra.mxu0 0.0
    %3774 = vmatprep.subr.mxu0 0.0
    %3775 = vmatpush1.msra.mxu0 0.0
    %3776 = vmatprep.subr.mxu0 0.0
    %3777 = vmatpush1.msra.mxu0 0.0
    %3778 = vmatprep.mubr.f32.mxu0 0.0
    %3779 = vmatmul.mubr.f32.gmra.mrb[0].mxu0 %v3570
    %v3780 = vpop.f32.mrb[0].mxu0
    %v3781 = vadd.f32 0.0, %v3780
    %v3782 = vpop.f32.mrb[0].mxu0
    %v3783 = vadd.f32 0.0, %v3782
    %3784 = vdwg.mxu0
    %3785 = vrot.lane.b32.xlu0 %v3385, 64
    %v3786 = vpop.permute.xlu0 %3785
    %v3787 = vsel %vm195, %v3786, 0
    %3789 = vmatprep.subr.mxu0 %v3387
    %3790 = vmatpush1.msra.mxu0 %v3386
    %3791 = vmatprep.subr.mxu0 %v3393
    %3792 = vmatpush1.msra.mxu0 %v3392
    %3793 = vmatprep.subr.mxu0 %v3399
    %3794 = vmatpush1.msra.mxu0 %v3398
    %3795 = vmatprep.subr.mxu0 %v3405
    %3796 = vmatpush1.msra.mxu0 %v3404
    %3797 = vmatprep.subr.mxu0 0.0
    %3798 = vmatpush1.msra.mxu0 0.0
    %3799 = vmatprep.subr.mxu0 0.0
    %3800 = vmatpush1.msra.mxu0 0.0
    %3801 = vmatprep.subr.mxu0 0.0
    %3802 = vmatpush1.msra.mxu0 0.0
    %3803 = vmatprep.subr.mxu0 0.0
    %3804 = vmatpush1.msra.mxu0 0.0
    %3805 = vmatprep.subr.mxu0 0.0
    %3806 = vmatpush1.msra.mxu0 0.0
    %3807 = vmatprep.subr.mxu0 0.0
    %3808 = vmatpush1.msra.mxu0 0.0
    %3809 = vmatprep.subr.mxu0 0.0
    %3810 = vmatpush1.msra.mxu0 0.0
    %3811 = vmatprep.subr.mxu0 0.0
    %3812 = vmatpush1.msra.mxu0 0.0
    %3813 = vmatprep.subr.mxu0 0.0
    %3814 = vmatpush1.msra.mxu0 0.0
    %3815 = vmatprep.subr.mxu0 0.0
    %3816 = vmatpush1.msra.mxu0 0.0
    %3817 = vmatprep.subr.mxu0 0.0
    %3818 = vmatpush1.msra.mxu0 0.0
    %3819 = vmatprep.subr.mxu0 0.0
    %3820 = vmatpush1.msra.mxu0 0.0
    %3821 = vmatprep.subr.mxu0 0.0
    %3822 = vmatpush1.msra.mxu0 0.0
    %3823 = vmatprep.subr.mxu0 0.0
    %3824 = vmatpush1.msra.mxu0 0.0
    %3825 = vmatprep.subr.mxu0 0.0
    %3826 = vmatpush1.msra.mxu0 0.0
    %3827 = vmatprep.subr.mxu0 0.0
    %3828 = vmatpush1.msra.mxu0 0.0
    %3829 = vmatprep.subr.mxu0 0.0
    %3830 = vmatpush1.msra.mxu0 0.0
    %3831 = vmatprep.subr.mxu0 0.0
    %3832 = vmatpush1.msra.mxu0 0.0
    %3833 = vmatprep.subr.mxu0 0.0
    %3834 = vmatpush1.msra.mxu0 0.0
    %3835 = vmatprep.subr.mxu0 0.0
    %3836 = vmatpush1.msra.mxu0 0.0
    %3837 = vmatprep.subr.mxu0 0.0
    %3838 = vmatpush1.msra.mxu0 0.0
    %3839 = vmatprep.subr.mxu0 0.0
    %3840 = vmatpush1.msra.mxu0 0.0
    %3841 = vmatprep.subr.mxu0 0.0
    %3842 = vmatpush1.msra.mxu0 0.0
    %3843 = vmatprep.subr.mxu0 0.0
    %3844 = vmatpush1.msra.mxu0 0.0
    %3845 = vmatprep.subr.mxu0 0.0
    %3846 = vmatpush1.msra.mxu0 0.0
    %3847 = vmatprep.subr.mxu0 0.0
    %3848 = vmatpush1.msra.mxu0 0.0
    %3849 = vmatprep.subr.mxu0 0.0
    %3850 = vmatpush1.msra.mxu0 0.0
    %3851 = vmatprep.subr.mxu0 0.0
    %3852 = vmatpush1.msra.mxu0 0.0
    %3853 = vmatprep.mubr.f32.mxu0 0.0
    %3854 = vmatmul.mubr.f32.gmra.mrb[0].mxu0 %v3787
    %v3855 = vpop.f32.mrb[0].mxu0
    %v3856 = vadd.f32 %v3639, %v3855
    %v3857 = vpop.f32.mrb[0].mxu0
    %v3858 = vadd.f32 %v3641, %v3857
    %3859 = vdwg.mxu0
    %3860 = vmatprep.subr.mxu0 %v3389
    %3861 = vmatpush1.msra.mxu0 %v3388
    %3862 = vmatprep.subr.mxu0 %v3395
    %3863 = vmatpush1.msra.mxu0 %v3394
    %3864 = vmatprep.subr.mxu0 %v3401
    %3865 = vmatpush1.msra.mxu0 %v3400
    %3866 = vmatprep.subr.mxu0 %v3407
    %3867 = vmatpush1.msra.mxu0 %v3406
    %3868 = vmatprep.subr.mxu0 0.0
    %3869 = vmatpush1.msra.mxu0 0.0
    %3870 = vmatprep.subr.mxu0 0.0
    %3871 = vmatpush1.msra.mxu0 0.0
    %3872 = vmatprep.subr.mxu0 0.0
    %3873 = vmatpush1.msra.mxu0 0.0
    %3874 = vmatprep.subr.mxu0 0.0
    %3875 = vmatpush1.msra.mxu0 0.0
    %3876 = vmatprep.subr.mxu0 0.0
    %3877 = vmatpush1.msra.mxu0 0.0
    %3878 = vmatprep.subr.mxu0 0.0
    %3879 = vmatpush1.msra.mxu0 0.0
    %3880 = vmatprep.subr.mxu0 0.0
    %3881 = vmatpush1.msra.mxu0 0.0
    %3882 = vmatprep.subr.mxu0 0.0
    %3883 = vmatpush1.msra.mxu0 0.0
    %3884 = vmatprep.subr.mxu0 0.0
    %3885 = vmatpush1.msra.mxu0 0.0
    %3886 = vmatprep.subr.mxu0 0.0
    %3887 = vmatpush1.msra.mxu0 0.0
    %3888 = vmatprep.subr.mxu0 0.0
    %3889 = vmatpush1.msra.mxu0 0.0
    %3890 = vmatprep.subr.mxu0 0.0
    %3891 = vmatpush1.msra.mxu0 0.0
    %3892 = vmatprep.subr.mxu0 0.0
    %3893 = vmatpush1.msra.mxu0 0.0
    %3894 = vmatprep.subr.mxu0 0.0
    %3895 = vmatpush1.msra.mxu0 0.0
    %3896 = vmatprep.subr.mxu0 0.0
    %3897 = vmatpush1.msra.mxu0 0.0
    %3898 = vmatprep.subr.mxu0 0.0
    %3899 = vmatpush1.msra.mxu0 0.0
    %3900 = vmatprep.subr.mxu0 0.0
    %3901 = vmatpush1.msra.mxu0 0.0
    %3902 = vmatprep.subr.mxu0 0.0
    %3903 = vmatpush1.msra.mxu0 0.0
    %3904 = vmatprep.subr.mxu0 0.0
    %3905 = vmatpush1.msra.mxu0 0.0
    %3906 = vmatprep.subr.mxu0 0.0
    %3907 = vmatpush1.msra.mxu0 0.0
    %3908 = vmatprep.subr.mxu0 0.0
    %3909 = vmatpush1.msra.mxu0 0.0
    %3910 = vmatprep.subr.mxu0 0.0
    %3911 = vmatpush1.msra.mxu0 0.0
    %3912 = vmatprep.subr.mxu0 0.0
    %3913 = vmatpush1.msra.mxu0 0.0
    %3914 = vmatprep.subr.mxu0 0.0
    %3915 = vmatpush1.msra.mxu0 0.0
    %3916 = vmatprep.subr.mxu0 0.0
    %3917 = vmatpush1.msra.mxu0 0.0
    %3918 = vmatprep.subr.mxu0 0.0
    %3919 = vmatpush1.msra.mxu0 0.0
    %3920 = vmatprep.subr.mxu0 0.0
    %3921 = vmatpush1.msra.mxu0 0.0
    %3922 = vmatprep.subr.mxu0 0.0
    %3923 = vmatpush1.msra.mxu0 0.0
    %3924 = vmatprep.mubr.f32.mxu0 0.0
    %3925 = vmatmul.mubr.f32.gmra.mrb[0].mxu0 %v3787
    %v3926 = vpop.f32.mrb[0].mxu0
    %v3927 = vadd.f32 %v3710, %v3926
    %v3928 = vpop.f32.mrb[0].mxu0
    %v3929 = vadd.f32 %v3712, %v3928
    %3930 = vdwg.mxu0
    %3931 = vmatprep.subr.mxu0 %v3391
    %3932 = vmatpush1.msra.mxu0 %v3390
    %3933 = vmatprep.subr.mxu0 %v3397
    %3934 = vmatpush1.msra.mxu0 %v3396
    %3935 = vmatprep.subr.mxu0 %v3403
    %3936 = vmatpush1.msra.mxu0 %v3402
    %3937 = vmatprep.subr.mxu0 %v3409
    %3938 = vmatpush1.msra.mxu0 %v3408
    %3939 = vmatprep.subr.mxu0 0.0
    %3940 = vmatpush1.msra.mxu0 0.0
    %3941 = vmatprep.subr.mxu0 0.0
    %3942 = vmatpush1.msra.mxu0 0.0
    %3943 = vmatprep.subr.mxu0 0.0
    %3944 = vmatpush1.msra.mxu0 0.0
    %3945 = vmatprep.subr.mxu0 0.0
    %3946 = vmatpush1.msra.mxu0 0.0
    %3947 = vmatprep.subr.mxu0 0.0
    %3948 = vmatpush1.msra.mxu0 0.0
    %3949 = vmatprep.subr.mxu0 0.0
    %3950 = vmatpush1.msra.mxu0 0.0
    %3951 = vmatprep.subr.mxu0 0.0
    %3952 = vmatpush1.msra.mxu0 0.0
    %3953 = vmatprep.subr.mxu0 0.0
    %3954 = vmatpush1.msra.mxu0 0.0
    %3955 = vmatprep.subr.mxu0 0.0
    %3956 = vmatpush1.msra.mxu0 0.0
    %3957 = vmatprep.subr.mxu0 0.0
    %3958 = vmatpush1.msra.mxu0 0.0
    %3959 = vmatprep.subr.mxu0 0.0
    %3960 = vmatpush1.msra.mxu0 0.0
    %3961 = vmatprep.subr.mxu0 0.0
    %3962 = vmatpush1.msra.mxu0 0.0
    %3963 = vmatprep.subr.mxu0 0.0
    %3964 = vmatpush1.msra.mxu0 0.0
    %3965 = vmatprep.subr.mxu0 0.0
    %3966 = vmatpush1.msra.mxu0 0.0
    %3967 = vmatprep.subr.mxu0 0.0
    %3968 = vmatpush1.msra.mxu0 0.0
    %3969 = vmatprep.subr.mxu0 0.0
    %3970 = vmatpush1.msra.mxu0 0.0
    %3971 = vmatprep.subr.mxu0 0.0
    %3972 = vmatpush1.msra.mxu0 0.0
    %3973 = vmatprep.subr.mxu0 0.0
    %3974 = vmatpush1.msra.mxu0 0.0
    %3975 = vmatprep.subr.mxu0 0.0
    %3976 = vmatpush1.msra.mxu0 0.0
    %3977 = vmatprep.subr.mxu0 0.0
    %3978 = vmatpush1.msra.mxu0 0.0
    %3979 = vmatprep.subr.mxu0 0.0
    %3980 = vmatpush1.msra.mxu0 0.0
    %3981 = vmatprep.subr.mxu0 0.0
    %3982 = vmatpush1.msra.mxu0 0.0
    %3983 = vmatprep.subr.mxu0 0.0
    %3984 = vmatpush1.msra.mxu0 0.0
    %3985 = vmatprep.subr.mxu0 0.0
    %3986 = vmatpush1.msra.mxu0 0.0
    %3987 = vmatprep.subr.mxu0 0.0
    %3988 = vmatpush1.msra.mxu0 0.0
    %3989 = vmatprep.subr.mxu0 0.0
    %3990 = vmatpush1.msra.mxu0 0.0
    %3991 = vmatprep.subr.mxu0 0.0
    %3992 = vmatpush1.msra.mxu0 0.0
    %3993 = vmatprep.subr.mxu0 0.0
    %3994 = vmatpush1.msra.mxu0 0.0
    %3995 = vmatprep.mubr.f32.mxu0 0.0
    %3996 = vmatmul.mubr.f32.gmra.mrb[0].mxu0 %v3787
    %v3997 = vpop.f32.mrb[0].mxu0
    %v3998 = vadd.f32 %v3781, %v3997
    %v3999 = vpop.f32.mrb[0].mxu0
    %v4000 = vadd.f32 %v3783, %v3999
    %4001 = vdwg.mxu0
    %v4002 = vadd.f32 %v3514, %v3230
    %v4003 = vxor.u32 %v4002, 2147483648
    %v4004 = vmul.f32 %v4003, 1.442695
    %v4005 = vpow.pop %v4004
    %v4006 = vadd.f32 %v4005, 1.0
    %v4007 = vrcp.pop %v4006
    %v4008 = vmul.f32 1.0, %v4007
    %v4009 = vtanh.pop %v4002
    %v4010 = vmul.f32 %v4008, %v3428
    %4012 = vrot.lane.b32.xlu0 %v4009, 32
    %v4013 = vpop.permute.xlu0 %4012
    %v4015 = vmul.f32 %v4008, %v4013
    %4017 = vrot.lane.b32.xlu0 %v4015, 32
    %v4018 = vpop.permute.xlu0 %4017
    %v4020 = vadd.f32 %v4010, %v4018
    %v4021 = vtanh.pop %v4020
    %4023 = vrot.lane.b32.xlu0 %v4021, 32
    %v4024 = vpop.permute.xlu0 %4023
    %v4026 = vmul.f32 %v4008, %v4024
    %4028 = vrot.lane.b32.xlu0 %v4026, 64
    %v4029 = vpop.permute.xlu0 %4028
    %4031 = vrot.lane.b32.xlu0 %v3542, 96
    %v4032 = vpop.permute.xlu0 %4031
    %v4034 = vsel %vm195, %v4029, %v4032
    %v4036 = vsel %vm1904, %v4034, 0
    %4038 = vmatprep.subr.mxu0 %v3234
    %4039 = vmatpush1.msra.mxu0 %v3233
    %4040 = vmatprep.subr.mxu0 %v3236
    %4041 = vmatpush1.msra.mxu0 %v3235
    %4042 = vmatprep.subr.mxu0 %v3238
    %4043 = vmatpush1.msra.mxu0 %v3237
    %4044 = vmatprep.subr.mxu0 %v3240
    %4045 = vmatpush1.msra.mxu0 %v3239
    %4046 = vmatprep.subr.mxu0 %v3242
    %4047 = vmatpush1.msra.mxu0 %v3241
    %4048 = vmatprep.subr.mxu0 %v3244
    %4049 = vmatpush1.msra.mxu0 %v3243
    %4050 = vmatprep.subr.mxu0 %v3246
    %4051 = vmatpush1.msra.mxu0 %v3245
    %4052 = vmatprep.subr.mxu0 %v3248
    %4053 = vmatpush1.msra.mxu0 %v3247
    %4054 = vmatprep.subr.mxu0 0.0
    %4055 = vmatpush1.msra.mxu0 0.0
    %4056 = vmatprep.subr.mxu0 0.0
    %4057 = vmatpush1.msra.mxu0 0.0
    %4058 = vmatprep.subr.mxu0 0.0
    %4059 = vmatpush1.msra.mxu0 0.0
    %4060 = vmatprep.subr.mxu0 0.0
    %4061 = vmatpush1.msra.mxu0 0.0
    %4062 = vmatprep.subr.mxu0 0.0
    %4063 = vmatpush1.msra.mxu0 0.0
    %4064 = vmatprep.subr.mxu0 0.0
    %4065 = vmatpush1.msra.mxu0 0.0
    %4066 = vmatprep.subr.mxu0 0.0
    %4067 = vmatpush1.msra.mxu0 0.0
    %4068 = vmatprep.subr.mxu0 0.0
    %4069 = vmatpush1.msra.mxu0 0.0
    %4070 = vmatprep.subr.mxu0 0.0
    %4071 = vmatpush1.msra.mxu0 0.0
    %4072 = vmatprep.subr.mxu0 0.0
    %4073 = vmatpush1.msra.mxu0 0.0
    %4074 = vmatprep.subr.mxu0 0.0
    %4075 = vmatpush1.msra.mxu0 0.0
    %4076 = vmatprep.subr.mxu0 0.0
    %4077 = vmatpush1.msra.mxu0 0.0
    %4078 = vmatprep.subr.mxu0 0.0
    %4079 = vmatpush1.msra.mxu0 0.0
    %4080 = vmatprep.subr.mxu0 0.0
    %4081 = vmatpush1.msra.mxu0 0.0
    %4082 = vmatprep.subr.mxu0 0.0
    %4083 = vmatpush1.msra.mxu0 0.0
    %4084 = vmatprep.subr.mxu0 0.0
    %4085 = vmatpush1.msra.mxu0 0.0
    %4086 = vmatprep.subr.mxu0 0.0
    %4087 = vmatpush1.msra.mxu0 0.0
    %4088 = vmatprep.subr.mxu0 0.0
    %4089 = vmatpush1.msra.mxu0 0.0
    %4090 = vmatprep.subr.mxu0 0.0
    %4091 = vmatpush1.msra.mxu0 0.0
    %4092 = vmatprep.subr.mxu0 0.0
    %4093 = vmatpush1.msra.mxu0 0.0
    %4094 = vmatprep.subr.mxu0 0.0
    %4095 = vmatpush1.msra.mxu0 0.0
    %4096 = vmatprep.subr.mxu0 0.0
    %4097 = vmatpush1.msra.mxu0 0.0
    %4098 = vmatprep.subr.mxu0 0.0
    %4099 = vmatpush1.msra.mxu0 0.0
    %4100 = vmatprep.subr.mxu0 0.0
    %4101 = vmatpush1.msra.mxu0 0.0
    %4102 = vmatprep.mubr.f32.mxu0 0.0
    %4103 = vmatmul.mubr.f32.gmra.mrb[0].mxu0 %v4036
    %v4104 = vpop.f32.mrb[0].mxu0
    %v4105 = vadd.f32 0.0, %v4104
    %v4106 = vpop.f32.mrb[0].mxu0
    %v4107 = vadd.f32 0.0, %v4106
    %4108 = vdwg.mxu0
    %v4109 = vadd.f32 %v4107, %v3360
    %v4110 = vxor.u32 %v4109, 2147483648
    %v4111 = vmul.f32 %v4110, 1.442695
    %v4112 = vpow.pop %v4111
    %v4113 = vadd.f32 %v4112, 1.0
    %v4114 = vrcp.pop %v4113
    %v4115 = vmul.f32 1.0, %v4114
    %v4116 = vtanh.pop %v4109
    %v4117 = vmul.f32 %v4115, %v3536
    %4119 = vrot.lane.b32.xlu0 %v4116, 32
    %v4120 = vpop.permute.xlu0 %4119
    %v4122 = vmul.f32 %v4115, %v4120
    %4124 = vrot.lane.b32.xlu0 %v4122, 32
    %v4125 = vpop.permute.xlu0 %4124
    %v4127 = vadd.f32 %v4117, %v4125
    %v4128 = vtanh.pop %v4127
    %4130 = vrot.lane.b32.xlu0 %v4128, 32
    %v4131 = vpop.permute.xlu0 %4130
    %v4133 = vmul.f32 %v4115, %v4131
    %v4134 = vld [vmem:[#allocation2 + $0x180] sm:$0xff]
    %v4135 = vld [vmem:[#allocation2 + $0x188] sm:$0xff]
    %v4136 = vld [vmem:[#allocation2 + $0x190] sm:$0xff]
    %v4137 = vld [vmem:[#allocation2 + $0x198] sm:$0xff]
    %v4138 = vld [vmem:[#allocation2 + $0x1a0] sm:$0xff]
    %v4139 = vld [vmem:[#allocation2 + $0x1a8] sm:$0xff]
    %v4140 = vld [vmem:[#allocation2 + $0x1b0] sm:$0xff]
    %v4141 = vld [vmem:[#allocation2 + $0x1b8] sm:$0xff]
    %v4142 = vld [vmem:[#allocation2 + $0x1c0] sm:$0xff]
    %v4143 = vld [vmem:[#allocation2 + $0x1c8] sm:$0xff]
    %v4144 = vld [vmem:[#allocation2 + $0x1d0] sm:$0xff]
    %v4145 = vld [vmem:[#allocation2 + $0x1d8] sm:$0xff]
    %v4146 = vld [vmem:[#allocation2 + $0x1e0] sm:$0xff]
    %v4147 = vld [vmem:[#allocation2 + $0x1e8] sm:$0xff]
    %v4148 = vld [vmem:[#allocation2 + $0x1f0] sm:$0xff]
    %v4149 = vld [vmem:[#allocation2 + $0x1f8] sm:$0xff]
    %v4150 = vld [vmem:[#allocation2 + $0x200] sm:$0xff]
    %v4151 = vld [vmem:[#allocation2 + $0x208] sm:$0xff]
    %v4152 = vld [vmem:[#allocation2 + $0x210] sm:$0xff]
    %v4153 = vld [vmem:[#allocation2 + $0x218] sm:$0xff]
    %v4154 = vld [vmem:[#allocation2 + $0x220] sm:$0xff]
    %v4155 = vld [vmem:[#allocation2 + $0x228] sm:$0xff]
    %v4156 = vld [vmem:[#allocation2 + $0x230] sm:$0xff]
    %v4157 = vld [vmem:[#allocation2 + $0x238] sm:$0xff]
    %4159 = vrot.lane.b32.xlu0 %v4133, 64
    %v4160 = vpop.permute.xlu0 %4159
    %v4161 = vsel %vm195, %v4160, 0
    %4163 = vmatprep.subr.mxu0 %v4135
    %4164 = vmatpush1.msra.mxu0 %v4134
    %4165 = vmatprep.subr.mxu0 %v4141
    %4166 = vmatpush1.msra.mxu0 %v4140
    %4167 = vmatprep.subr.mxu0 %v4147
    %4168 = vmatpush1.msra.mxu0 %v4146
    %4169 = vmatprep.subr.mxu0 %v4153
    %4170 = vmatpush1.msra.mxu0 %v4152
    %4171 = vmatprep.subr.mxu0 0.0
    %4172 = vmatpush1.msra.mxu0 0.0
    %4173 = vmatprep.subr.mxu0 0.0
    %4174 = vmatpush1.msra.mxu0 0.0
    %4175 = vmatprep.subr.mxu0 0.0
    %4176 = vmatpush1.msra.mxu0 0.0
    %4177 = vmatprep.subr.mxu0 0.0
    %4178 = vmatpush1.msra.mxu0 0.0
    %4179 = vmatprep.subr.mxu0 0.0
    %4180 = vmatpush1.msra.mxu0 0.0
    %4181 = vmatprep.subr.mxu0 0.0
    %4182 = vmatpush1.msra.mxu0 0.0
    %4183 = vmatprep.subr.mxu0 0.0
    %4184 = vmatpush1.msra.mxu0 0.0
    %4185 = vmatprep.subr.mxu0 0.0
    %4186 = vmatpush1.msra.mxu0 0.0
    %4187 = vmatprep.subr.mxu0 0.0
    %4188 = vmatpush1.msra.mxu0 0.0
    %4189 = vmatprep.subr.mxu0 0.0
    %4190 = vmatpush1.msra.mxu0 0.0
    %4191 = vmatprep.subr.mxu0 0.0
    %4192 = vmatpush1.msra.mxu0 0.0
    %4193 = vmatprep.subr.mxu0 0.0
    %4194 = vmatpush1.msra.mxu0 0.0
    %4195 = vmatprep.subr.mxu0 0.0
    %4196 = vmatpush1.msra.mxu0 0.0
    %4197 = vmatprep.subr.mxu0 0.0
    %4198 = vmatpush1.msra.mxu0 0.0
    %4199 = vmatprep.subr.mxu0 0.0
    %4200 = vmatpush1.msra.mxu0 0.0
    %4201 = vmatprep.subr.mxu0 0.0
    %4202 = vmatpush1.msra.mxu0 0.0
    %4203 = vmatprep.subr.mxu0 0.0
    %4204 = vmatpush1.msra.mxu0 0.0
    %4205 = vmatprep.subr.mxu0 0.0
    %4206 = vmatpush1.msra.mxu0 0.0
    %4207 = vmatprep.subr.mxu0 0.0
    %4208 = vmatpush1.msra.mxu0 0.0
    %4209 = vmatprep.subr.mxu0 0.0
    %4210 = vmatpush1.msra.mxu0 0.0
    %4211 = vmatprep.subr.mxu0 0.0
    %4212 = vmatpush1.msra.mxu0 0.0
    %4213 = vmatprep.subr.mxu0 0.0
    %4214 = vmatpush1.msra.mxu0 0.0
    %4215 = vmatprep.subr.mxu0 0.0
    %4216 = vmatpush1.msra.mxu0 0.0
    %4217 = vmatprep.subr.mxu0 0.0
    %4218 = vmatpush1.msra.mxu0 0.0
    %4219 = vmatprep.subr.mxu0 0.0
    %4220 = vmatpush1.msra.mxu0 0.0
    %4221 = vmatprep.subr.mxu0 0.0
    %4222 = vmatpush1.msra.mxu0 0.0
    %4223 = vmatprep.subr.mxu0 0.0
    %4224 = vmatpush1.msra.mxu0 0.0
    %4225 = vmatprep.subr.mxu0 0.0
    %4226 = vmatpush1.msra.mxu0 0.0
    %4227 = vmatprep.mubr.f32.mxu0 0.0
    %4228 = vmatmul.mubr.f32.gmra.mrb[0].mxu0 %v4161
    %v4229 = vpop.f32.mrb[0].mxu0
    %v4230 = vadd.f32 0.0, %v4229
    %v4231 = vpop.f32.mrb[0].mxu0
    %v4232 = vadd.f32 0.0, %v4231
    %4233 = vdwg.mxu0
    %4234 = vmatprep.subr.mxu0 %v4137
    %4235 = vmatpush1.msra.mxu0 %v4136
    %4236 = vmatprep.subr.mxu0 %v4143
    %4237 = vmatpush1.msra.mxu0 %v4142
    %4238 = vmatprep.subr.mxu0 %v4149
    %4239 = vmatpush1.msra.mxu0 %v4148
    %4240 = vmatprep.subr.mxu0 %v4155
    %4241 = vmatpush1.msra.mxu0 %v4154
    %4242 = vmatprep.subr.mxu0 0.0
    %4243 = vmatpush1.msra.mxu0 0.0
    %4244 = vmatprep.subr.mxu0 0.0
    %4245 = vmatpush1.msra.mxu0 0.0
    %4246 = vmatprep.subr.mxu0 0.0
    %4247 = vmatpush1.msra.mxu0 0.0
    %4248 = vmatprep.subr.mxu0 0.0
    %4249 = vmatpush1.msra.mxu0 0.0
    %4250 = vmatprep.subr.mxu0 0.0
    %4251 = vmatpush1.msra.mxu0 0.0
    %4252 = vmatprep.subr.mxu0 0.0
    %4253 = vmatpush1.msra.mxu0 0.0
    %4254 = vmatprep.subr.mxu0 0.0
    %4255 = vmatpush1.msra.mxu0 0.0
    %4256 = vmatprep.subr.mxu0 0.0
    %4257 = vmatpush1.msra.mxu0 0.0
    %4258 = vmatprep.subr.mxu0 0.0
    %4259 = vmatpush1.msra.mxu0 0.0
    %4260 = vmatprep.subr.mxu0 0.0
    %4261 = vmatpush1.msra.mxu0 0.0
    %4262 = vmatprep.subr.mxu0 0.0
    %4263 = vmatpush1.msra.mxu0 0.0
    %4264 = vmatprep.subr.mxu0 0.0
    %4265 = vmatpush1.msra.mxu0 0.0
    %4266 = vmatprep.subr.mxu0 0.0
    %4267 = vmatpush1.msra.mxu0 0.0
    %4268 = vmatprep.subr.mxu0 0.0
    %4269 = vmatpush1.msra.mxu0 0.0
    %4270 = vmatprep.subr.mxu0 0.0
    %4271 = vmatpush1.msra.mxu0 0.0
    %4272 = vmatprep.subr.mxu0 0.0
    %4273 = vmatpush1.msra.mxu0 0.0
    %4274 = vmatprep.subr.mxu0 0.0
    %4275 = vmatpush1.msra.mxu0 0.0
    %4276 = vmatprep.subr.mxu0 0.0
    %4277 = vmatpush1.msra.mxu0 0.0
    %4278 = vmatprep.subr.mxu0 0.0
    %4279 = vmatpush1.msra.mxu0 0.0
    %4280 = vmatprep.subr.mxu0 0.0
    %4281 = vmatpush1.msra.mxu0 0.0
    %4282 = vmatprep.subr.mxu0 0.0
    %4283 = vmatpush1.msra.mxu0 0.0
    %4284 = vmatprep.subr.mxu0 0.0
    %4285 = vmatpush1.msra.mxu0 0.0
    %4286 = vmatprep.subr.mxu0 0.0
    %4287 = vmatpush1.msra.mxu0 0.0
    %4288 = vmatprep.subr.mxu0 0.0
    %4289 = vmatpush1.msra.mxu0 0.0
    %4290 = vmatprep.subr.mxu0 0.0
    %4291 = vmatpush1.msra.mxu0 0.0
    %4292 = vmatprep.subr.mxu0 0.0
    %4293 = vmatpush1.msra.mxu0 0.0
    %4294 = vmatprep.subr.mxu0 0.0
    %4295 = vmatpush1.msra.mxu0 0.0
    %4296 = vmatprep.subr.mxu0 0.0
    %4297 = vmatpush1.msra.mxu0 0.0
    %4298 = vmatprep.mubr.f32.mxu0 0.0
    %4299 = vmatmul.mubr.f32.gmra.mrb[0].mxu0 %v4161
    %v4300 = vpop.f32.mrb[0].mxu0
    %v4301 = vadd.f32 0.0, %v4300
    %v4302 = vpop.f32.mrb[0].mxu0
    %v4303 = vadd.f32 0.0, %v4302
    %4304 = vdwg.mxu0
    %4305 = vmatprep.subr.mxu0 %v4139
    %4306 = vmatpush1.msra.mxu0 %v4138
    %4307 = vmatprep.subr.mxu0 %v4145
    %4308 = vmatpush1.msra.mxu0 %v4144
    %4309 = vmatprep.subr.mxu0 %v4151
    %4310 = vmatpush1.msra.mxu0 %v4150
    %4311 = vmatprep.subr.mxu0 %v4157
    %4312 = vmatpush1.msra.mxu0 %v4156
    %4313 = vmatprep.subr.mxu0 0.0
    %4314 = vmatpush1.msra.mxu0 0.0
    %4315 = vmatprep.subr.mxu0 0.0
    %4316 = vmatpush1.msra.mxu0 0.0
    %4317 = vmatprep.subr.mxu0 0.0
    %4318 = vmatpush1.msra.mxu0 0.0
    %4319 = vmatprep.subr.mxu0 0.0
    %4320 = vmatpush1.msra.mxu0 0.0
    %4321 = vmatprep.subr.mxu0 0.0
    %4322 = vmatpush1.msra.mxu0 0.0
    %4323 = vmatprep.subr.mxu0 0.0
    %4324 = vmatpush1.msra.mxu0 0.0
    %4325 = vmatprep.subr.mxu0 0.0
    %4326 = vmatpush1.msra.mxu0 0.0
    %4327 = vmatprep.subr.mxu0 0.0
    %4328 = vmatpush1.msra.mxu0 0.0
    %4329 = vmatprep.subr.mxu0 0.0
    %4330 = vmatpush1.msra.mxu0 0.0
    %4331 = vmatprep.subr.mxu0 0.0
    %4332 = vmatpush1.msra.mxu0 0.0
    %4333 = vmatprep.subr.mxu0 0.0
    %4334 = vmatpush1.msra.mxu0 0.0
    %4335 = vmatprep.subr.mxu0 0.0
    %4336 = vmatpush1.msra.mxu0 0.0
    %4337 = vmatprep.subr.mxu0 0.0
    %4338 = vmatpush1.msra.mxu0 0.0
    %4339 = vmatprep.subr.mxu0 0.0
    %4340 = vmatpush1.msra.mxu0 0.0
    %4341 = vmatprep.subr.mxu0 0.0
    %4342 = vmatpush1.msra.mxu0 0.0
    %4343 = vmatprep.subr.mxu0 0.0
    %4344 = vmatpush1.msra.mxu0 0.0
    %4345 = vmatprep.subr.mxu0 0.0
    %4346 = vmatpush1.msra.mxu0 0.0
    %4347 = vmatprep.subr.mxu0 0.0
    %4348 = vmatpush1.msra.mxu0 0.0
    %4349 = vmatprep.subr.mxu0 0.0
    %4350 = vmatpush1.msra.mxu0 0.0
    %4351 = vmatprep.subr.mxu0 0.0
    %4352 = vmatpush1.msra.mxu0 0.0
    %4353 = vmatprep.subr.mxu0 0.0
    %4354 = vmatpush1.msra.mxu0 0.0
    %4355 = vmatprep.subr.mxu0 0.0
    %4356 = vmatpush1.msra.mxu0 0.0
    %4357 = vmatprep.subr.mxu0 0.0
    %4358 = vmatpush1.msra.mxu0 0.0
    %4359 = vmatprep.subr.mxu0 0.0
    %4360 = vmatpush1.msra.mxu0 0.0
    %4361 = vmatprep.subr.mxu0 0.0
    %4362 = vmatpush1.msra.mxu0 0.0
    %4363 = vmatprep.subr.mxu0 0.0
    %4364 = vmatpush1.msra.mxu0 0.0
    %4365 = vmatprep.subr.mxu0 0.0
    %4366 = vmatpush1.msra.mxu0 0.0
    %4367 = vmatprep.subr.mxu0 0.0
    %4368 = vmatpush1.msra.mxu0 0.0
    %4369 = vmatprep.mubr.f32.mxu0 0.0
    %4370 = vmatmul.mubr.f32.gmra.mrb[0].mxu0 %v4161
    %v4371 = vpop.f32.mrb[0].mxu0
    %v4372 = vadd.f32 0.0, %v4371
    %v4373 = vpop.f32.mrb[0].mxu0
    %v4374 = vadd.f32 0.0, %v4373
    %4375 = vdwg.mxu0
    %v4376 = vadd.f32 %v3856, %v4230
    %v4377 = vadd.f32 %v3858, %v4232
    %v4378 = vadd.f32 %v3927, %v4301
    %v4379 = vadd.f32 %v3929, %v4303
    %v4380 = vadd.f32 %v3998, %v4372
    %v4381 = vadd.f32 %v4000, %v4374
    %v4382 = vadd.f32 %v4105, %v3230
    %v4383 = vxor.u32 %v4382, 2147483648
    %v4384 = vmul.f32 %v4383, 1.442695
    %v4385 = vpow.pop %v4384
    %v4386 = vadd.f32 %v4385, 1.0
    %v4387 = vrcp.pop %v4386
    %v4388 = vmul.f32 1.0, %v4387
    %v4389 = vtanh.pop %v4382
    %v4390 = vmul.f32 %v4388, %v4020
    %4392 = vrot.lane.b32.xlu0 %v4389, 32
    %v4393 = vpop.permute.xlu0 %4392
    %v4395 = vmul.f32 %v4388, %v4393
    %4397 = vrot.lane.b32.xlu0 %v4395, 32
    %v4398 = vpop.permute.xlu0 %4397
    %v4400 = vadd.f32 %v4390, %v4398
    %v4401 = vtanh.pop %v4400
    %4403 = vrot.lane.b32.xlu0 %v4401, 32
    %v4404 = vpop.permute.xlu0 %4403
    %v4406 = vmul.f32 %v4388, %v4404
    %4408 = vrot.lane.b32.xlu0 %v4406, 64
    %v4409 = vpop.permute.xlu0 %4408
    %4411 = vrot.lane.b32.xlu0 %v4133, 96
    %v4412 = vpop.permute.xlu0 %4411
    %v4414 = vsel %vm195, %v4409, %v4412
    %v4416 = vsel %vm1904, %v4414, 0
    %4418 = vmatprep.subr.mxu0 %v3234
    %4419 = vmatpush1.msra.mxu0 %v3233
    %4420 = vmatprep.subr.mxu0 %v3236
    %4421 = vmatpush1.msra.mxu0 %v3235
    %4422 = vmatprep.subr.mxu0 %v3238
    %4423 = vmatpush1.msra.mxu0 %v3237
    %4424 = vmatprep.subr.mxu0 %v3240
    %4425 = vmatpush1.msra.mxu0 %v3239
    %4426 = vmatprep.subr.mxu0 %v3242
    %4427 = vmatpush1.msra.mxu0 %v3241
    %4428 = vmatprep.subr.mxu0 %v3244
    %4429 = vmatpush1.msra.mxu0 %v3243
    %4430 = vmatprep.subr.mxu0 %v3246
    %4431 = vmatpush1.msra.mxu0 %v3245
    %4432 = vmatprep.subr.mxu0 %v3248
    %4433 = vmatpush1.msra.mxu0 %v3247
    %4434 = vmatprep.subr.mxu0 0.0
    %4435 = vmatpush1.msra.mxu0 0.0
    %4436 = vmatprep.subr.mxu0 0.0
    %4437 = vmatpush1.msra.mxu0 0.0
    %4438 = vmatprep.subr.mxu0 0.0
    %4439 = vmatpush1.msra.mxu0 0.0
    %4440 = vmatprep.subr.mxu0 0.0
    %4441 = vmatpush1.msra.mxu0 0.0
    %4442 = vmatprep.subr.mxu0 0.0
    %4443 = vmatpush1.msra.mxu0 0.0
    %4444 = vmatprep.subr.mxu0 0.0
    %4445 = vmatpush1.msra.mxu0 0.0
    %4446 = vmatprep.subr.mxu0 0.0
    %4447 = vmatpush1.msra.mxu0 0.0
    %4448 = vmatprep.subr.mxu0 0.0
    %4449 = vmatpush1.msra.mxu0 0.0
    %4450 = vmatprep.subr.mxu0 0.0
    %4451 = vmatpush1.msra.mxu0 0.0
    %4452 = vmatprep.subr.mxu0 0.0
    %4453 = vmatpush1.msra.mxu0 0.0
    %4454 = vmatprep.subr.mxu0 0.0
    %4455 = vmatpush1.msra.mxu0 0.0
    %4456 = vmatprep.subr.mxu0 0.0
    %4457 = vmatpush1.msra.mxu0 0.0
    %4458 = vmatprep.subr.mxu0 0.0
    %4459 = vmatpush1.msra.mxu0 0.0
    %4460 = vmatprep.subr.mxu0 0.0
    %4461 = vmatpush1.msra.mxu0 0.0
    %4462 = vmatprep.subr.mxu0 0.0
    %4463 = vmatpush1.msra.mxu0 0.0
    %4464 = vmatprep.subr.mxu0 0.0
    %4465 = vmatpush1.msra.mxu0 0.0
    %4466 = vmatprep.subr.mxu0 0.0
    %4467 = vmatpush1.msra.mxu0 0.0
    %4468 = vmatprep.subr.mxu0 0.0
    %4469 = vmatpush1.msra.mxu0 0.0
    %4470 = vmatprep.subr.mxu0 0.0
    %4471 = vmatpush1.msra.mxu0 0.0
    %4472 = vmatprep.subr.mxu0 0.0
    %4473 = vmatpush1.msra.mxu0 0.0
    %4474 = vmatprep.subr.mxu0 0.0
    %4475 = vmatpush1.msra.mxu0 0.0
    %4476 = vmatprep.subr.mxu0 0.0
    %4477 = vmatpush1.msra.mxu0 0.0
    %4478 = vmatprep.subr.mxu0 0.0
    %4479 = vmatpush1.msra.mxu0 0.0
    %4480 = vmatprep.subr.mxu0 0.0
    %4481 = vmatpush1.msra.mxu0 0.0
    %4482 = vmatprep.mubr.f32.mxu0 0.0
    %4483 = vmatmul.mubr.f32.gmra.mrb[0].mxu0 %v4416
    %v4484 = vpop.f32.mrb[0].mxu0
    %v4485 = vadd.f32 0.0, %v4484
    %v4486 = vpop.f32.mrb[0].mxu0
    %v4487 = vadd.f32 0.0, %v4486
    %4488 = vdwg.mxu0
    %v4489 = vadd.f32 %v4487, %v3360
    %v4490 = vxor.u32 %v4489, 2147483648
    %v4491 = vmul.f32 %v4490, 1.442695
    %v4492 = vpow.pop %v4491
    %v4493 = vadd.f32 %v4492, 1.0
    %v4494 = vrcp.pop %v4493
    %v4495 = vmul.f32 1.0, %v4494
    %v4496 = vtanh.pop %v4489
    %v4497 = vmul.f32 %v4495, %v4127
    %4499 = vrot.lane.b32.xlu0 %v4496, 32
    %v4500 = vpop.permute.xlu0 %4499
    %v4502 = vmul.f32 %v4495, %v4500
    %4504 = vrot.lane.b32.xlu0 %v4502, 32
    %v4505 = vpop.permute.xlu0 %4504
    %v4507 = vadd.f32 %v4497, %v4505
    %v4508 = vtanh.pop %v4507
    %4510 = vrot.lane.b32.xlu0 %v4508, 32
    %v4511 = vpop.permute.xlu0 %4510
    %v4513 = vmul.f32 %v4495, %v4511
    %v4514 = vld [vmem:[#allocation2 + $0x240] sm:$0xff]
    %v4515 = vld [vmem:[#allocation2 + $0x248] sm:$0xff]
    %v4516 = vld [vmem:[#allocation2 + $0x250] sm:$0xff]
    %v4517 = vld [vmem:[#allocation2 + $0x258] sm:$0xff]
    %v4518 = vld [vmem:[#allocation2 + $0x260] sm:$0xff]
    %v4519 = vld [vmem:[#allocation2 + $0x268] sm:$0xff]
    %v4520 = vld [vmem:[#allocation2 + $0x270] sm:$0xff]
    %v4521 = vld [vmem:[#allocation2 + $0x278] sm:$0xff]
    %v4522 = vld [vmem:[#allocation2 + $0x280] sm:$0xff]
    %v4523 = vld [vmem:[#allocation2 + $0x288] sm:$0xff]
    %v4524 = vld [vmem:[#allocation2 + $0x290] sm:$0xff]
    %v4525 = vld [vmem:[#allocation2 + $0x298] sm:$0xff]
    %v4526 = vld [vmem:[#allocation2 + $0x2a0] sm:$0xff]
    %v4527 = vld [vmem:[#allocation2 + $0x2a8] sm:$0xff]
    %v4528 = vld [vmem:[#allocation2 + $0x2b0] sm:$0xff]
    %v4529 = vld [vmem:[#allocation2 + $0x2b8] sm:$0xff]
    %v4530 = vld [vmem:[#allocation2 + $0x2c0] sm:$0xff]
    %v4531 = vld [vmem:[#allocation2 + $0x2c8] sm:$0xff]
    %v4532 = vld [vmem:[#allocation2 + $0x2d0] sm:$0xff]
    %v4533 = vld [vmem:[#allocation2 + $0x2d8] sm:$0xff]
    %v4534 = vld [vmem:[#allocation2 + $0x2e0] sm:$0xff]
    %v4535 = vld [vmem:[#allocation2 + $0x2e8] sm:$0xff]
    %v4536 = vld [vmem:[#allocation2 + $0x2f0] sm:$0xff]
    %v4537 = vld [vmem:[#allocation2 + $0x2f8] sm:$0xff]
    %4539 = vrot.lane.b32.xlu0 %v4513, 64
    %v4540 = vpop.permute.xlu0 %4539
    %v4541 = vsel %vm195, %v4540, 0
    %4543 = vmatprep.subr.mxu0 %v4515
    %4544 = vmatpush1.msra.mxu0 %v4514
    %4545 = vmatprep.subr.mxu0 %v4521
    %4546 = vmatpush1.msra.mxu0 %v4520
    %4547 = vmatprep.subr.mxu0 %v4527
    %4548 = vmatpush1.msra.mxu0 %v4526
    %4549 = vmatprep.subr.mxu0 %v4533
    %4550 = vmatpush1.msra.mxu0 %v4532
    %4551 = vmatprep.subr.mxu0 0.0
    %4552 = vmatpush1.msra.mxu0 0.0
    %4553 = vmatprep.subr.mxu0 0.0
    %4554 = vmatpush1.msra.mxu0 0.0
    %4555 = vmatprep.subr.mxu0 0.0
    %4556 = vmatpush1.msra.mxu0 0.0
    %4557 = vmatprep.subr.mxu0 0.0
    %4558 = vmatpush1.msra.mxu0 0.0
    %4559 = vmatprep.subr.mxu0 0.0
    %4560 = vmatpush1.msra.mxu0 0.0
    %4561 = vmatprep.subr.mxu0 0.0
    %4562 = vmatpush1.msra.mxu0 0.0
    %4563 = vmatprep.subr.mxu0 0.0
    %4564 = vmatpush1.msra.mxu0 0.0
    %4565 = vmatprep.subr.mxu0 0.0
    %4566 = vmatpush1.msra.mxu0 0.0
    %4567 = vmatprep.subr.mxu0 0.0
    %4568 = vmatpush1.msra.mxu0 0.0
    %4569 = vmatprep.subr.mxu0 0.0
    %4570 = vmatpush1.msra.mxu0 0.0
    %4571 = vmatprep.subr.mxu0 0.0
    %4572 = vmatpush1.msra.mxu0 0.0
    %4573 = vmatprep.subr.mxu0 0.0
    %4574 = vmatpush1.msra.mxu0 0.0
    %4575 = vmatprep.subr.mxu0 0.0
    %4576 = vmatpush1.msra.mxu0 0.0
    %4577 = vmatprep.subr.mxu0 0.0
    %4578 = vmatpush1.msra.mxu0 0.0
    %4579 = vmatprep.subr.mxu0 0.0
    %4580 = vmatpush1.msra.mxu0 0.0
    %4581 = vmatprep.subr.mxu0 0.0
    %4582 = vmatpush1.msra.mxu0 0.0
    %4583 = vmatprep.subr.mxu0 0.0
    %4584 = vmatpush1.msra.mxu0 0.0
    %4585 = vmatprep.subr.mxu0 0.0
    %4586 = vmatpush1.msra.mxu0 0.0
    %4587 = vmatprep.subr.mxu0 0.0
    %4588 = vmatpush1.msra.mxu0 0.0
    %4589 = vmatprep.subr.mxu0 0.0
    %4590 = vmatpush1.msra.mxu0 0.0
    %4591 = vmatprep.subr.mxu0 0.0
    %4592 = vmatpush1.msra.mxu0 0.0
    %4593 = vmatprep.subr.mxu0 0.0
    %4594 = vmatpush1.msra.mxu0 0.0
    %4595 = vmatprep.subr.mxu0 0.0
    %4596 = vmatpush1.msra.mxu0 0.0
    %4597 = vmatprep.subr.mxu0 0.0
    %4598 = vmatpush1.msra.mxu0 0.0
    %4599 = vmatprep.subr.mxu0 0.0
    %4600 = vmatpush1.msra.mxu0 0.0
    %4601 = vmatprep.subr.mxu0 0.0
    %4602 = vmatpush1.msra.mxu0 0.0
    %4603 = vmatprep.subr.mxu0 0.0
    %4604 = vmatpush1.msra.mxu0 0.0
    %4605 = vmatprep.subr.mxu0 0.0
    %4606 = vmatpush1.msra.mxu0 0.0
    %4607 = vmatprep.mubr.f32.mxu0 0.0
    %4608 = vmatmul.mubr.f32.gmra.mrb[0].mxu0 %v4541
    %v4609 = vpop.f32.mrb[0].mxu0
    %v4610 = vadd.f32 0.0, %v4609
    %v4611 = vpop.f32.mrb[0].mxu0
    %v4612 = vadd.f32 0.0, %v4611
    %4613 = vdwg.mxu0
    %4614 = vmatprep.subr.mxu0 %v4517
    %4615 = vmatpush1.msra.mxu0 %v4516
    %4616 = vmatprep.subr.mxu0 %v4523
    %4617 = vmatpush1.msra.mxu0 %v4522
    %4618 = vmatprep.subr.mxu0 %v4529
    %4619 = vmatpush1.msra.mxu0 %v4528
    %4620 = vmatprep.subr.mxu0 %v4535
    %4621 = vmatpush1.msra.mxu0 %v4534
    %4622 = vmatprep.subr.mxu0 0.0
    %4623 = vmatpush1.msra.mxu0 0.0
    %4624 = vmatprep.subr.mxu0 0.0
    %4625 = vmatpush1.msra.mxu0 0.0
    %4626 = vmatprep.subr.mxu0 0.0
    %4627 = vmatpush1.msra.mxu0 0.0
    %4628 = vmatprep.subr.mxu0 0.0
    %4629 = vmatpush1.msra.mxu0 0.0
    %4630 = vmatprep.subr.mxu0 0.0
    %4631 = vmatpush1.msra.mxu0 0.0
    %4632 = vmatprep.subr.mxu0 0.0
    %4633 = vmatpush1.msra.mxu0 0.0
    %4634 = vmatprep.subr.mxu0 0.0
    %4635 = vmatpush1.msra.mxu0 0.0
    %4636 = vmatprep.subr.mxu0 0.0
    %4637 = vmatpush1.msra.mxu0 0.0
    %4638 = vmatprep.subr.mxu0 0.0
    %4639 = vmatpush1.msra.mxu0 0.0
    %4640 = vmatprep.subr.mxu0 0.0
    %4641 = vmatpush1.msra.mxu0 0.0
    %4642 = vmatprep.subr.mxu0 0.0
    %4643 = vmatpush1.msra.mxu0 0.0
    %4644 = vmatprep.subr.mxu0 0.0
    %4645 = vmatpush1.msra.mxu0 0.0
    %4646 = vmatprep.subr.mxu0 0.0
    %4647 = vmatpush1.msra.mxu0 0.0
    %4648 = vmatprep.subr.mxu0 0.0
    %4649 = vmatpush1.msra.mxu0 0.0
    %4650 = vmatprep.subr.mxu0 0.0
    %4651 = vmatpush1.msra.mxu0 0.0
    %4652 = vmatprep.subr.mxu0 0.0
    %4653 = vmatpush1.msra.mxu0 0.0
    %4654 = vmatprep.subr.mxu0 0.0
    %4655 = vmatpush1.msra.mxu0 0.0
    %4656 = vmatprep.subr.mxu0 0.0
    %4657 = vmatpush1.msra.mxu0 0.0
    %4658 = vmatprep.subr.mxu0 0.0
    %4659 = vmatpush1.msra.mxu0 0.0
    %4660 = vmatprep.subr.mxu0 0.0
    %4661 = vmatpush1.msra.mxu0 0.0
    %4662 = vmatprep.subr.mxu0 0.0
    %4663 = vmatpush1.msra.mxu0 0.0
    %4664 = vmatprep.subr.mxu0 0.0
    %4665 = vmatpush1.msra.mxu0 0.0
    %4666 = vmatprep.subr.mxu0 0.0
    %4667 = vmatpush1.msra.mxu0 0.0
    %4668 = vmatprep.subr.mxu0 0.0
    %4669 = vmatpush1.msra.mxu0 0.0
    %4670 = vmatprep.subr.mxu0 0.0
    %4671 = vmatpush1.msra.mxu0 0.0
    %4672 = vmatprep.subr.mxu0 0.0
    %4673 = vmatpush1.msra.mxu0 0.0
    %4674 = vmatprep.subr.mxu0 0.0
    %4675 = vmatpush1.msra.mxu0 0.0
    %4676 = vmatprep.subr.mxu0 0.0
    %4677 = vmatpush1.msra.mxu0 0.0
    %4678 = vmatprep.mubr.f32.mxu0 0.0
    %4679 = vmatmul.mubr.f32.gmra.mrb[0].mxu0 %v4541
    %v4680 = vpop.f32.mrb[0].mxu0
    %v4681 = vadd.f32 0.0, %v4680
    %v4682 = vpop.f32.mrb[0].mxu0
    %v4683 = vadd.f32 0.0, %v4682
    %4684 = vdwg.mxu0
    %4685 = vmatprep.subr.mxu0 %v4519
    %4686 = vmatpush1.msra.mxu0 %v4518
    %4687 = vmatprep.subr.mxu0 %v4525
    %4688 = vmatpush1.msra.mxu0 %v4524
    %4689 = vmatprep.subr.mxu0 %v4531
    %4690 = vmatpush1.msra.mxu0 %v4530
    %4691 = vmatprep.subr.mxu0 %v4537
    %4692 = vmatpush1.msra.mxu0 %v4536
    %4693 = vmatprep.subr.mxu0 0.0
    %4694 = vmatpush1.msra.mxu0 0.0
    %4695 = vmatprep.subr.mxu0 0.0
    %4696 = vmatpush1.msra.mxu0 0.0
    %4697 = vmatprep.subr.mxu0 0.0
    %4698 = vmatpush1.msra.mxu0 0.0
    %4699 = vmatprep.subr.mxu0 0.0
    %4700 = vmatpush1.msra.mxu0 0.0
    %4701 = vmatprep.subr.mxu0 0.0
    %4702 = vmatpush1.msra.mxu0 0.0
    %4703 = vmatprep.subr.mxu0 0.0
    %4704 = vmatpush1.msra.mxu0 0.0
    %4705 = vmatprep.subr.mxu0 0.0
    %4706 = vmatpush1.msra.mxu0 0.0
    %4707 = vmatprep.subr.mxu0 0.0
    %4708 = vmatpush1.msra.mxu0 0.0
    %4709 = vmatprep.subr.mxu0 0.0
    %4710 = vmatpush1.msra.mxu0 0.0
    %4711 = vmatprep.subr.mxu0 0.0
    %4712 = vmatpush1.msra.mxu0 0.0
    %4713 = vmatprep.subr.mxu0 0.0
    %4714 = vmatpush1.msra.mxu0 0.0
    %4715 = vmatprep.subr.mxu0 0.0
    %4716 = vmatpush1.msra.mxu0 0.0
    %4717 = vmatprep.subr.mxu0 0.0
    %4718 = vmatpush1.msra.mxu0 0.0
    %4719 = vmatprep.subr.mxu0 0.0
    %4720 = vmatpush1.msra.mxu0 0.0
    %4721 = vmatprep.subr.mxu0 0.0
    %4722 = vmatpush1.msra.mxu0 0.0
    %4723 = vmatprep.subr.mxu0 0.0
    %4724 = vmatpush1.msra.mxu0 0.0
    %4725 = vmatprep.subr.mxu0 0.0
    %4726 = vmatpush1.msra.mxu0 0.0
    %4727 = vmatprep.subr.mxu0 0.0
    %4728 = vmatpush1.msra.mxu0 0.0
    %4729 = vmatprep.subr.mxu0 0.0
    %4730 = vmatpush1.msra.mxu0 0.0
    %4731 = vmatprep.subr.mxu0 0.0
    %4732 = vmatpush1.msra.mxu0 0.0
    %4733 = vmatprep.subr.mxu0 0.0
    %4734 = vmatpush1.msra.mxu0 0.0
    %4735 = vmatprep.subr.mxu0 0.0
    %4736 = vmatpush1.msra.mxu0 0.0
    %4737 = vmatprep.subr.mxu0 0.0
    %4738 = vmatpush1.msra.mxu0 0.0
    %4739 = vmatprep.subr.mxu0 0.0
    %4740 = vmatpush1.msra.mxu0 0.0
    %4741 = vmatprep.subr.mxu0 0.0
    %4742 = vmatpush1.msra.mxu0 0.0
    %4743 = vmatprep.subr.mxu0 0.0
    %4744 = vmatpush1.msra.mxu0 0.0
    %4745 = vmatprep.subr.mxu0 0.0
    %4746 = vmatpush1.msra.mxu0 0.0
    %4747 = vmatprep.subr.mxu0 0.0
    %4748 = vmatpush1.msra.mxu0 0.0
    %4749 = vmatprep.mubr.f32.mxu0 0.0
    %4750 = vmatmul.mubr.f32.gmra.mrb[0].mxu0 %v4541
    %v4751 = vpop.f32.mrb[0].mxu0
    %v4752 = vadd.f32 0.0, %v4751
    %v4753 = vpop.f32.mrb[0].mxu0
    %v4754 = vadd.f32 0.0, %v4753
    %4755 = vdwg.mxu0
    %v4756 = vadd.f32 %v4376, %v4610
    %v4757 = vadd.f32 %v4377, %v4612
    %v4758 = vadd.f32 %v4378, %v4681
    %v4759 = vadd.f32 %v4379, %v4683
    %v4760 = vadd.f32 %v4380, %v4752
    %v4761 = vadd.f32 %v4381, %v4754
    %v4762 = vadd.f32 %v4485, %v3230
    %v4763 = vxor.u32 %v4762, 2147483648
    %v4764 = vmul.f32 %v4763, 1.442695
    %v4765 = vpow.pop %v4764
    %v4766 = vadd.f32 %v4765, 1.0
    %v4767 = vrcp.pop %v4766
    %v4768 = vmul.f32 1.0, %v4767
    %v4769 = vtanh.pop %v4762
    %v4770 = vmul.f32 %v4768, %v4400
    %4772 = vrot.lane.b32.xlu0 %v4769, 32
    %v4773 = vpop.permute.xlu0 %4772
    %v4775 = vmul.f32 %v4768, %v4773
    %4777 = vrot.lane.b32.xlu0 %v4775, 32
    %v4778 = vpop.permute.xlu0 %4777
    %v4780 = vadd.f32 %v4770, %v4778
    %v4781 = vtanh.pop %v4780
    %4783 = vrot.lane.b32.xlu0 %v4781, 32
    %v4784 = vpop.permute.xlu0 %4783
    %v4786 = vmul.f32 %v4768, %v4784
    %4788 = vrot.lane.b32.xlu0 %v4786, 64
    %v4789 = vpop.permute.xlu0 %4788
    %4791 = vrot.lane.b32.xlu0 %v4513, 96
    %v4792 = vpop.permute.xlu0 %4791
    %v4794 = vsel %vm195, %v4789, %v4792
    %v4796 = vsel %vm1904, %v4794, 0
    %4798 = vmatprep.subr.mxu0 %v3234
    %4799 = vmatpush1.msra.mxu0 %v3233
    %4800 = vmatprep.subr.mxu0 %v3236
    %4801 = vmatpush1.msra.mxu0 %v3235
    %4802 = vmatprep.subr.mxu0 %v3238
    %4803 = vmatpush1.msra.mxu0 %v3237
    %4804 = vmatprep.subr.mxu0 %v3240
    %4805 = vmatpush1.msra.mxu0 %v3239
    %4806 = vmatprep.subr.mxu0 %v3242
    %4807 = vmatpush1.msra.mxu0 %v3241
    %4808 = vmatprep.subr.mxu0 %v3244
    %4809 = vmatpush1.msra.mxu0 %v3243
    %4810 = vmatprep.subr.mxu0 %v3246
    %4811 = vmatpush1.msra.mxu0 %v3245
    %4812 = vmatprep.subr.mxu0 %v3248
    %4813 = vmatpush1.msra.mxu0 %v3247
    %4814 = vmatprep.subr.mxu0 0.0
    %4815 = vmatpush1.msra.mxu0 0.0
    %4816 = vmatprep.subr.mxu0 0.0
    %4817 = vmatpush1.msra.mxu0 0.0
    %4818 = vmatprep.subr.mxu0 0.0
    %4819 = vmatpush1.msra.mxu0 0.0
    %4820 = vmatprep.subr.mxu0 0.0
    %4821 = vmatpush1.msra.mxu0 0.0
    %4822 = vmatprep.subr.mxu0 0.0
    %4823 = vmatpush1.msra.mxu0 0.0
    %4824 = vmatprep.subr.mxu0 0.0
    %4825 = vmatpush1.msra.mxu0 0.0
    %4826 = vmatprep.subr.mxu0 0.0
    %4827 = vmatpush1.msra.mxu0 0.0
    %4828 = vmatprep.subr.mxu0 0.0
    %4829 = vmatpush1.msra.mxu0 0.0
    %4830 = vmatprep.subr.mxu0 0.0
    %4831 = vmatpush1.msra.mxu0 0.0
    %4832 = vmatprep.subr.mxu0 0.0
    %4833 = vmatpush1.msra.mxu0 0.0
    %4834 = vmatprep.subr.mxu0 0.0
    %4835 = vmatpush1.msra.mxu0 0.0
    %4836 = vmatprep.subr.mxu0 0.0
    %4837 = vmatpush1.msra.mxu0 0.0
    %4838 = vmatprep.subr.mxu0 0.0
    %4839 = vmatpush1.msra.mxu0 0.0
    %4840 = vmatprep.subr.mxu0 0.0
    %4841 = vmatpush1.msra.mxu0 0.0
    %4842 = vmatprep.subr.mxu0 0.0
    %4843 = vmatpush1.msra.mxu0 0.0
    %4844 = vmatprep.subr.mxu0 0.0
    %4845 = vmatpush1.msra.mxu0 0.0
    %4846 = vmatprep.subr.mxu0 0.0
    %4847 = vmatpush1.msra.mxu0 0.0
    %4848 = vmatprep.subr.mxu0 0.0
    %4849 = vmatpush1.msra.mxu0 0.0
    %4850 = vmatprep.subr.mxu0 0.0
    %4851 = vmatpush1.msra.mxu0 0.0
    %4852 = vmatprep.subr.mxu0 0.0
    %4853 = vmatpush1.msra.mxu0 0.0
    %4854 = vmatprep.subr.mxu0 0.0
    %4855 = vmatpush1.msra.mxu0 0.0
    %4856 = vmatprep.subr.mxu0 0.0
    %4857 = vmatpush1.msra.mxu0 0.0
    %4858 = vmatprep.subr.mxu0 0.0
    %4859 = vmatpush1.msra.mxu0 0.0
    %4860 = vmatprep.subr.mxu0 0.0
    %4861 = vmatpush1.msra.mxu0 0.0
    %4862 = vmatprep.mubr.f32.mxu0 0.0
    %4863 = vmatmul.mubr.f32.gmra.mrb[0].mxu0 %v4796
    %v4864 = vpop.f32.mrb[0].mxu0
    %v4865 = vadd.f32 0.0, %v4864
    %v4866 = vpop.f32.mrb[0].mxu0
    %v4867 = vadd.f32 0.0, %v4866
    %4868 = vdwg.mxu0
    %v4869 = vadd.f32 %v4867, %v3360
    %v4870 = vxor.u32 %v4869, 2147483648
    %v4871 = vmul.f32 %v4870, 1.442695
    %v4872 = vpow.pop %v4871
    %v4873 = vadd.f32 %v4872, 1.0
    %v4874 = vrcp.pop %v4873
    %v4875 = vmul.f32 1.0, %v4874
    %v4876 = vtanh.pop %v4869
    %v4877 = vmul.f32 %v4875, %v4507
    %4879 = vrot.lane.b32.xlu0 %v4876, 32
    %v4880 = vpop.permute.xlu0 %4879
    %v4882 = vmul.f32 %v4875, %v4880
    %4884 = vrot.lane.b32.xlu0 %v4882, 32
    %v4885 = vpop.permute.xlu0 %4884
    %v4887 = vadd.f32 %v4877, %v4885
    %v4888 = vtanh.pop %v4887
    %4890 = vrot.lane.b32.xlu0 %v4888, 32
    %v4891 = vpop.permute.xlu0 %4890
    %v4893 = vmul.f32 %v4875, %v4891
    %v4894 = vld [vmem:[#allocation2 + $0x300] sm:$0xff]
    %v4895 = vld [vmem:[#allocation2 + $0x308] sm:$0xff]
    %v4896 = vld [vmem:[#allocation2 + $0x310] sm:$0xff]
    %v4897 = vld [vmem:[#allocation2 + $0x318] sm:$0xff]
    %v4898 = vld [vmem:[#allocation2 + $0x320] sm:$0xff]
    %v4899 = vld [vmem:[#allocation2 + $0x328] sm:$0xff]
    %v4900 = vld [vmem:[#allocation2 + $0x330] sm:$0xff]
    %v4901 = vld [vmem:[#allocation2 + $0x338] sm:$0xff]
    %v4902 = vld [vmem:[#allocation2 + $0x340] sm:$0xff]
    %v4903 = vld [vmem:[#allocation2 + $0x348] sm:$0xff]
    %v4904 = vld [vmem:[#allocation2 + $0x350] sm:$0xff]
    %v4905 = vld [vmem:[#allocation2 + $0x358] sm:$0xff]
    %v4906 = vld [vmem:[#allocation2 + $0x360] sm:$0xff]
    %v4907 = vld [vmem:[#allocation2 + $0x368] sm:$0xff]
    %v4908 = vld [vmem:[#allocation2 + $0x370] sm:$0xff]
    %v4909 = vld [vmem:[#allocation2 + $0x378] sm:$0xff]
    %v4910 = vld [vmem:[#allocation2 + $0x380] sm:$0xff]
    %v4911 = vld [vmem:[#allocation2 + $0x388] sm:$0xff]
    %v4912 = vld [vmem:[#allocation2 + $0x390] sm:$0xff]
    %v4913 = vld [vmem:[#allocation2 + $0x398] sm:$0xff]
    %v4914 = vld [vmem:[#allocation2 + $0x3a0] sm:$0xff]
    %v4915 = vld [vmem:[#allocation2 + $0x3a8] sm:$0xff]
    %v4916 = vld [vmem:[#allocation2 + $0x3b0] sm:$0xff]
    %v4917 = vld [vmem:[#allocation2 + $0x3b8] sm:$0xff]
    %4919 = vrot.lane.b32.xlu0 %v4893, 64
    %v4920 = vpop.permute.xlu0 %4919
    %v4921 = vsel %vm195, %v4920, 0
    %4923 = vmatprep.subr.mxu0 %v4895
    %4924 = vmatpush1.msra.mxu0 %v4894
    %4925 = vmatprep.subr.mxu0 %v4901
    %4926 = vmatpush1.msra.mxu0 %v4900
    %4927 = vmatprep.subr.mxu0 %v4907
    %4928 = vmatpush1.msra.mxu0 %v4906
    %4929 = vmatprep.subr.mxu0 %v4913
    %4930 = vmatpush1.msra.mxu0 %v4912
    %4931 = vmatprep.subr.mxu0 0.0
    %4932 = vmatpush1.msra.mxu0 0.0
    %4933 = vmatprep.subr.mxu0 0.0
    %4934 = vmatpush1.msra.mxu0 0.0
    %4935 = vmatprep.subr.mxu0 0.0
    %4936 = vmatpush1.msra.mxu0 0.0
    %4937 = vmatprep.subr.mxu0 0.0
    %4938 = vmatpush1.msra.mxu0 0.0
    %4939 = vmatprep.subr.mxu0 0.0
    %4940 = vmatpush1.msra.mxu0 0.0
    %4941 = vmatprep.subr.mxu0 0.0
    %4942 = vmatpush1.msra.mxu0 0.0
    %4943 = vmatprep.subr.mxu0 0.0
    %4944 = vmatpush1.msra.mxu0 0.0
    %4945 = vmatprep.subr.mxu0 0.0
    %4946 = vmatpush1.msra.mxu0 0.0
    %4947 = vmatprep.subr.mxu0 0.0
    %4948 = vmatpush1.msra.mxu0 0.0
    %4949 = vmatprep.subr.mxu0 0.0
    %4950 = vmatpush1.msra.mxu0 0.0
    %4951 = vmatprep.subr.mxu0 0.0
    %4952 = vmatpush1.msra.mxu0 0.0
    %4953 = vmatprep.subr.mxu0 0.0
    %4954 = vmatpush1.msra.mxu0 0.0
    %4955 = vmatprep.subr.mxu0 0.0
    %4956 = vmatpush1.msra.mxu0 0.0
    %4957 = vmatprep.subr.mxu0 0.0
    %4958 = vmatpush1.msra.mxu0 0.0
    %4959 = vmatprep.subr.mxu0 0.0
    %4960 = vmatpush1.msra.mxu0 0.0
    %4961 = vmatprep.subr.mxu0 0.0
    %4962 = vmatpush1.msra.mxu0 0.0
    %4963 = vmatprep.subr.mxu0 0.0
    %4964 = vmatpush1.msra.mxu0 0.0
    %4965 = vmatprep.subr.mxu0 0.0
    %4966 = vmatpush1.msra.mxu0 0.0
    %4967 = vmatprep.subr.mxu0 0.0
    %4968 = vmatpush1.msra.mxu0 0.0
    %4969 = vmatprep.subr.mxu0 0.0
    %4970 = vmatpush1.msra.mxu0 0.0
    %4971 = vmatprep.subr.mxu0 0.0
    %4972 = vmatpush1.msra.mxu0 0.0
    %4973 = vmatprep.subr.mxu0 0.0
    %4974 = vmatpush1.msra.mxu0 0.0
    %4975 = vmatprep.subr.mxu0 0.0
    %4976 = vmatpush1.msra.mxu0 0.0
    %4977 = vmatprep.subr.mxu0 0.0
    %4978 = vmatpush1.msra.mxu0 0.0
    %4979 = vmatprep.subr.mxu0 0.0
    %4980 = vmatpush1.msra.mxu0 0.0
    %4981 = vmatprep.subr.mxu0 0.0
    %4982 = vmatpush1.msra.mxu0 0.0
    %4983 = vmatprep.subr.mxu0 0.0
    %4984 = vmatpush1.msra.mxu0 0.0
    %4985 = vmatprep.subr.mxu0 0.0
    %4986 = vmatpush1.msra.mxu0 0.0
    %4987 = vmatprep.mubr.f32.mxu0 0.0
    %4988 = vmatmul.mubr.f32.gmra.mrb[0].mxu0 %v4921
    %v4989 = vpop.f32.mrb[0].mxu0
    %v4990 = vadd.f32 0.0, %v4989
    %v4991 = vpop.f32.mrb[0].mxu0
    %v4992 = vadd.f32 0.0, %v4991
    %4993 = vdwg.mxu0
    %4994 = vmatprep.subr.mxu0 %v4897
    %4995 = vmatpush1.msra.mxu0 %v4896
    %4996 = vmatprep.subr.mxu0 %v4903
    %4997 = vmatpush1.msra.mxu0 %v4902
    %4998 = vmatprep.subr.mxu0 %v4909
    %4999 = vmatpush1.msra.mxu0 %v4908
    %5000 = vmatprep.subr.mxu0 %v4915
    %5001 = vmatpush1.msra.mxu0 %v4914
    %5002 = vmatprep.subr.mxu0 0.0
    %5003 = vmatpush1.msra.mxu0 0.0
    %5004 = vmatprep.subr.mxu0 0.0
    %5005 = vmatpush1.msra.mxu0 0.0
    %5006 = vmatprep.subr.mxu0 0.0
    %5007 = vmatpush1.msra.mxu0 0.0
    %5008 = vmatprep.subr.mxu0 0.0
    %5009 = vmatpush1.msra.mxu0 0.0
    %5010 = vmatprep.subr.mxu0 0.0
    %5011 = vmatpush1.msra.mxu0 0.0
    %5012 = vmatprep.subr.mxu0 0.0
    %5013 = vmatpush1.msra.mxu0 0.0
    %5014 = vmatprep.subr.mxu0 0.0
    %5015 = vmatpush1.msra.mxu0 0.0
    %5016 = vmatprep.subr.mxu0 0.0
    %5017 = vmatpush1.msra.mxu0 0.0
    %5018 = vmatprep.subr.mxu0 0.0
    %5019 = vmatpush1.msra.mxu0 0.0
    %5020 = vmatprep.subr.mxu0 0.0
    %5021 = vmatpush1.msra.mxu0 0.0
    %5022 = vmatprep.subr.mxu0 0.0
    %5023 = vmatpush1.msra.mxu0 0.0
    %5024 = vmatprep.subr.mxu0 0.0
    %5025 = vmatpush1.msra.mxu0 0.0
    %5026 = vmatprep.subr.mxu0 0.0
    %5027 = vmatpush1.msra.mxu0 0.0
    %5028 = vmatprep.subr.mxu0 0.0
    %5029 = vmatpush1.msra.mxu0 0.0
    %5030 = vmatprep.subr.mxu0 0.0
    %5031 = vmatpush1.msra.mxu0 0.0
    %5032 = vmatprep.subr.mxu0 0.0
    %5033 = vmatpush1.msra.mxu0 0.0
    %5034 = vmatprep.subr.mxu0 0.0
    %5035 = vmatpush1.msra.mxu0 0.0
    %5036 = vmatprep.subr.mxu0 0.0
    %5037 = vmatpush1.msra.mxu0 0.0
    %5038 = vmatprep.subr.mxu0 0.0
    %5039 = vmatpush1.msra.mxu0 0.0
    %5040 = vmatprep.subr.mxu0 0.0
    %5041 = vmatpush1.msra.mxu0 0.0
    %5042 = vmatprep.subr.mxu0 0.0
    %5043 = vmatpush1.msra.mxu0 0.0
    %5044 = vmatprep.subr.mxu0 0.0
    %5045 = vmatpush1.msra.mxu0 0.0
    %5046 = vmatprep.subr.mxu0 0.0
    %5047 = vmatpush1.msra.mxu0 0.0
    %5048 = vmatprep.subr.mxu0 0.0
    %5049 = vmatpush1.msra.mxu0 0.0
    %5050 = vmatprep.subr.mxu0 0.0
    %5051 = vmatpush1.msra.mxu0 0.0
    %5052 = vmatprep.subr.mxu0 0.0
    %5053 = vmatpush1.msra.mxu0 0.0
    %5054 = vmatprep.subr.mxu0 0.0
    %5055 = vmatpush1.msra.mxu0 0.0
    %5056 = vmatprep.subr.mxu0 0.0
    %5057 = vmatpush1.msra.mxu0 0.0
    %5058 = vmatprep.mubr.f32.mxu0 0.0
    %5059 = vmatmul.mubr.f32.gmra.mrb[0].mxu0 %v4921
    %v5060 = vpop.f32.mrb[0].mxu0
    %v5061 = vadd.f32 0.0, %v5060
    %v5062 = vpop.f32.mrb[0].mxu0
    %v5063 = vadd.f32 0.0, %v5062
    %5064 = vdwg.mxu0
    %5065 = vmatprep.subr.mxu0 %v4899
    %5066 = vmatpush1.msra.mxu0 %v4898
    %5067 = vmatprep.subr.mxu0 %v4905
    %5068 = vmatpush1.msra.mxu0 %v4904
    %5069 = vmatprep.subr.mxu0 %v4911
    %5070 = vmatpush1.msra.mxu0 %v4910
    %5071 = vmatprep.subr.mxu0 %v4917
    %5072 = vmatpush1.msra.mxu0 %v4916
    %5073 = vmatprep.subr.mxu0 0.0
    %5074 = vmatpush1.msra.mxu0 0.0
    %5075 = vmatprep.subr.mxu0 0.0
    %5076 = vmatpush1.msra.mxu0 0.0
    %5077 = vmatprep.subr.mxu0 0.0
    %5078 = vmatpush1.msra.mxu0 0.0
    %5079 = vmatprep.subr.mxu0 0.0
    %5080 = vmatpush1.msra.mxu0 0.0
    %5081 = vmatprep.subr.mxu0 0.0
    %5082 = vmatpush1.msra.mxu0 0.0
    %5083 = vmatprep.subr.mxu0 0.0
    %5084 = vmatpush1.msra.mxu0 0.0
    %5085 = vmatprep.subr.mxu0 0.0
    %5086 = vmatpush1.msra.mxu0 0.0
    %5087 = vmatprep.subr.mxu0 0.0
    %5088 = vmatpush1.msra.mxu0 0.0
    %5089 = vmatprep.subr.mxu0 0.0
    %5090 = vmatpush1.msra.mxu0 0.0
    %5091 = vmatprep.subr.mxu0 0.0
    %5092 = vmatpush1.msra.mxu0 0.0
    %5093 = vmatprep.subr.mxu0 0.0
    %5094 = vmatpush1.msra.mxu0 0.0
    %5095 = vmatprep.subr.mxu0 0.0
    %5096 = vmatpush1.msra.mxu0 0.0
    %5097 = vmatprep.subr.mxu0 0.0
    %5098 = vmatpush1.msra.mxu0 0.0
    %5099 = vmatprep.subr.mxu0 0.0
    %5100 = vmatpush1.msra.mxu0 0.0
    %5101 = vmatprep.subr.mxu0 0.0
    %5102 = vmatpush1.msra.mxu0 0.0
    %5103 = vmatprep.subr.mxu0 0.0
    %5104 = vmatpush1.msra.mxu0 0.0
    %5105 = vmatprep.subr.mxu0 0.0
    %5106 = vmatpush1.msra.mxu0 0.0
    %5107 = vmatprep.subr.mxu0 0.0
    %5108 = vmatpush1.msra.mxu0 0.0
    %5109 = vmatprep.subr.mxu0 0.0
    %5110 = vmatpush1.msra.mxu0 0.0
    %5111 = vmatprep.subr.mxu0 0.0
    %5112 = vmatpush1.msra.mxu0 0.0
    %5113 = vmatprep.subr.mxu0 0.0
    %5114 = vmatpush1.msra.mxu0 0.0
    %5115 = vmatprep.subr.mxu0 0.0
    %5116 = vmatpush1.msra.mxu0 0.0
    %5117 = vmatprep.subr.mxu0 0.0
    %5118 = vmatpush1.msra.mxu0 0.0
    %5119 = vmatprep.subr.mxu0 0.0
    %5120 = vmatpush1.msra.mxu0 0.0
    %5121 = vmatprep.subr.mxu0 0.0
    %5122 = vmatpush1.msra.mxu0 0.0
    %5123 = vmatprep.subr.mxu0 0.0
    %5124 = vmatpush1.msra.mxu0 0.0
    %5125 = vmatprep.subr.mxu0 0.0
    %5126 = vmatpush1.msra.mxu0 0.0
    %5127 = vmatprep.subr.mxu0 0.0
    %5128 = vmatpush1.msra.mxu0 0.0
    %5129 = vmatprep.mubr.f32.mxu0 0.0
    %5130 = vmatmul.mubr.f32.gmra.mrb[0].mxu0 %v4921
    %v5131 = vpop.f32.mrb[0].mxu0
    %v5132 = vadd.f32 0.0, %v5131
    %v5133 = vpop.f32.mrb[0].mxu0
    %v5134 = vadd.f32 0.0, %v5133
    %5135 = vdwg.mxu0
    %v5136 = vadd.f32 %v4756, %v4990
    %v5137 = vadd.f32 %v4757, %v4992
    %v5138 = vadd.f32 %v4758, %v5061
    %v5139 = vadd.f32 %v4759, %v5063
    %v5140 = vadd.f32 %v4760, %v5132
    %v5141 = vadd.f32 %v4761, %v5134
    %v5142 = vadd.f32 %v4865, %v3230
    %v5143 = vxor.u32 %v5142, 2147483648
    %v5144 = vmul.f32 %v5143, 1.442695
    %v5145 = vpow.pop %v5144
    %v5146 = vadd.f32 %v5145, 1.0
    %v5147 = vrcp.pop %v5146
    %v5148 = vmul.f32 1.0, %v5147
    %v5149 = vtanh.pop %v5142
    %v5150 = vmul.f32 %v5148, %v4780
    %5152 = vrot.lane.b32.xlu0 %v5149, 32
    %v5153 = vpop.permute.xlu0 %5152
    %v5155 = vmul.f32 %v5148, %v5153
    %5157 = vrot.lane.b32.xlu0 %v5155, 32
    %v5158 = vpop.permute.xlu0 %5157
    %v5160 = vadd.f32 %v5150, %v5158
    %v5161 = vtanh.pop %v5160
    %5163 = vrot.lane.b32.xlu0 %v5161, 32
    %v5164 = vpop.permute.xlu0 %5163
    %v5166 = vmul.f32 %v5148, %v5164
    %5168 = vrot.lane.b32.xlu0 %v5166, 64
    %v5169 = vpop.permute.xlu0 %5168
    %5171 = vrot.lane.b32.xlu0 %v4893, 96
    %v5172 = vpop.permute.xlu0 %5171
    %v5174 = vsel %vm195, %v5169, %v5172
    %v5176 = vsel %vm1904, %v5174, 0
    %5178 = vmatprep.subr.mxu0 %v3234
    %5179 = vmatpush1.msra.mxu0 %v3233
    %5180 = vmatprep.subr.mxu0 %v3236
    %5181 = vmatpush1.msra.mxu0 %v3235
    %5182 = vmatprep.subr.mxu0 %v3238
    %5183 = vmatpush1.msra.mxu0 %v3237
    %5184 = vmatprep.subr.mxu0 %v3240
    %5185 = vmatpush1.msra.mxu0 %v3239
    %5186 = vmatprep.subr.mxu0 %v3242
    %5187 = vmatpush1.msra.mxu0 %v3241
    %5188 = vmatprep.subr.mxu0 %v3244
    %5189 = vmatpush1.msra.mxu0 %v3243
    %5190 = vmatprep.subr.mxu0 %v3246
    %5191 = vmatpush1.msra.mxu0 %v3245
    %5192 = vmatprep.subr.mxu0 %v3248
    %5193 = vmatpush1.msra.mxu0 %v3247
    %5194 = vmatprep.subr.mxu0 0.0
    %5195 = vmatpush1.msra.mxu0 0.0
    %5196 = vmatprep.subr.mxu0 0.0
    %5197 = vmatpush1.msra.mxu0 0.0
    %5198 = vmatprep.subr.mxu0 0.0
    %5199 = vmatpush1.msra.mxu0 0.0
    %5200 = vmatprep.subr.mxu0 0.0
    %5201 = vmatpush1.msra.mxu0 0.0
    %5202 = vmatprep.subr.mxu0 0.0
    %5203 = vmatpush1.msra.mxu0 0.0
    %5204 = vmatprep.subr.mxu0 0.0
    %5205 = vmatpush1.msra.mxu0 0.0
    %5206 = vmatprep.subr.mxu0 0.0
    %5207 = vmatpush1.msra.mxu0 0.0
    %5208 = vmatprep.subr.mxu0 0.0
    %5209 = vmatpush1.msra.mxu0 0.0
    %5210 = vmatprep.subr.mxu0 0.0
    %5211 = vmatpush1.msra.mxu0 0.0
    %5212 = vmatprep.subr.mxu0 0.0
    %5213 = vmatpush1.msra.mxu0 0.0
    %5214 = vmatprep.subr.mxu0 0.0
    %5215 = vmatpush1.msra.mxu0 0.0
    %5216 = vmatprep.subr.mxu0 0.0
    %5217 = vmatpush1.msra.mxu0 0.0
    %5218 = vmatprep.subr.mxu0 0.0
    %5219 = vmatpush1.msra.mxu0 0.0
    %5220 = vmatprep.subr.mxu0 0.0
    %5221 = vmatpush1.msra.mxu0 0.0
    %5222 = vmatprep.subr.mxu0 0.0
    %5223 = vmatpush1.msra.mxu0 0.0
    %5224 = vmatprep.subr.mxu0 0.0
    %5225 = vmatpush1.msra.mxu0 0.0
    %5226 = vmatprep.subr.mxu0 0.0
    %5227 = vmatpush1.msra.mxu0 0.0
    %5228 = vmatprep.subr.mxu0 0.0
    %5229 = vmatpush1.msra.mxu0 0.0
    %5230 = vmatprep.subr.mxu0 0.0
    %5231 = vmatpush1.msra.mxu0 0.0
    %5232 = vmatprep.subr.mxu0 0.0
    %5233 = vmatpush1.msra.mxu0 0.0
    %5234 = vmatprep.subr.mxu0 0.0
    %5235 = vmatpush1.msra.mxu0 0.0
    %5236 = vmatprep.subr.mxu0 0.0
    %5237 = vmatpush1.msra.mxu0 0.0
    %5238 = vmatprep.subr.mxu0 0.0
    %5239 = vmatpush1.msra.mxu0 0.0
    %5240 = vmatprep.subr.mxu0 0.0
    %5241 = vmatpush1.msra.mxu0 0.0
    %5242 = vmatprep.mubr.f32.mxu0 0.0
    %5243 = vmatmul.mubr.f32.gmra.mrb[0].mxu0 %v5176
    %v5244 = vpop.f32.mrb[0].mxu0
    %v5245 = vadd.f32 0.0, %v5244
    %v5246 = vpop.f32.mrb[0].mxu0
    %v5247 = vadd.f32 0.0, %v5246
    %5248 = vdwg.mxu0
    %v5249 = vadd.f32 %v5247, %v3360
    %v5250 = vxor.u32 %v5249, 2147483648
    %v5251 = vmul.f32 %v5250, 1.442695
    %v5252 = vpow.pop %v5251
    %v5253 = vadd.f32 %v5252, 1.0
    %v5254 = vrcp.pop %v5253
    %v5255 = vmul.f32 1.0, %v5254
    %v5256 = vtanh.pop %v5249
    %v5257 = vmul.f32 %v5255, %v4887
    %5259 = vrot.lane.b32.xlu0 %v5256, 32
    %v5260 = vpop.permute.xlu0 %5259
    %v5262 = vmul.f32 %v5255, %v5260
    %5264 = vrot.lane.b32.xlu0 %v5262, 32
    %v5265 = vpop.permute.xlu0 %5264
    %v5267 = vadd.f32 %v5257, %v5265
    %v5268 = vtanh.pop %v5267
    %5270 = vrot.lane.b32.xlu0 %v5268, 32
    %v5271 = vpop.permute.xlu0 %5270
    %v5273 = vmul.f32 %v5255, %v5271
    %v5274 = vld [vmem:[#allocation2 + $0x3c0] sm:$0xff]
    %v5275 = vld [vmem:[#allocation2 + $0x3c8] sm:$0xff]
    %v5276 = vld [vmem:[#allocation2 + $0x3d0] sm:$0xff]
    %v5277 = vld [vmem:[#allocation2 + $0x3d8] sm:$0xff]
    %v5278 = vld [vmem:[#allocation2 + $0x3e0] sm:$0xff]
    %v5279 = vld [vmem:[#allocation2 + $0x3e8] sm:$0xff]
    %v5280 = vld [vmem:[#allocation2 + $0x3f0] sm:$0xff]
    %v5281 = vld [vmem:[#allocation2 + $0x3f8] sm:$0xff]
    %v5282 = vld [vmem:[#allocation2 + $0x400] sm:$0xff]
    %v5283 = vld [vmem:[#allocation2 + $0x408] sm:$0xff]
    %v5284 = vld [vmem:[#allocation2 + $0x410] sm:$0xff]
    %v5285 = vld [vmem:[#allocation2 + $0x418] sm:$0xff]
    %v5286 = vld [vmem:[#allocation2 + $0x420] sm:$0xff]
    %v5287 = vld [vmem:[#allocation2 + $0x428] sm:$0xff]
    %v5288 = vld [vmem:[#allocation2 + $0x430] sm:$0xff]
    %v5289 = vld [vmem:[#allocation2 + $0x438] sm:$0xff]
    %v5290 = vld [vmem:[#allocation2 + $0x440] sm:$0xff]
    %v5291 = vld [vmem:[#allocation2 + $0x448] sm:$0xff]
    %v5292 = vld [vmem:[#allocation2 + $0x450] sm:$0xff]
    %v5293 = vld [vmem:[#allocation2 + $0x458] sm:$0xff]
    %v5294 = vld [vmem:[#allocation2 + $0x460] sm:$0xff]
    %v5295 = vld [vmem:[#allocation2 + $0x468] sm:$0xff]
    %v5296 = vld [vmem:[#allocation2 + $0x470] sm:$0xff]
    %v5297 = vld [vmem:[#allocation2 + $0x478] sm:$0xff]
    %5299 = vrot.lane.b32.xlu0 %v5273, 64
    %v5300 = vpop.permute.xlu0 %5299
    %v5301 = vsel %vm195, %v5300, 0
    %5303 = vmatprep.subr.mxu0 %v5275
    %5304 = vmatpush1.msra.mxu0 %v5274
    %5305 = vmatprep.subr.mxu0 %v5281
    %5306 = vmatpush1.msra.mxu0 %v5280
    %5307 = vmatprep.subr.mxu0 %v5287
    %5308 = vmatpush1.msra.mxu0 %v5286
    %5309 = vmatprep.subr.mxu0 %v5293
    %5310 = vmatpush1.msra.mxu0 %v5292
    %5311 = vmatprep.subr.mxu0 0.0
    %5312 = vmatpush1.msra.mxu0 0.0
    %5313 = vmatprep.subr.mxu0 0.0
    %5314 = vmatpush1.msra.mxu0 0.0
    %5315 = vmatprep.subr.mxu0 0.0
    %5316 = vmatpush1.msra.mxu0 0.0
    %5317 = vmatprep.subr.mxu0 0.0
    %5318 = vmatpush1.msra.mxu0 0.0
    %5319 = vmatprep.subr.mxu0 0.0
    %5320 = vmatpush1.msra.mxu0 0.0
    %5321 = vmatprep.subr.mxu0 0.0
    %5322 = vmatpush1.msra.mxu0 0.0
    %5323 = vmatprep.subr.mxu0 0.0
    %5324 = vmatpush1.msra.mxu0 0.0
    %5325 = vmatprep.subr.mxu0 0.0
    %5326 = vmatpush1.msra.mxu0 0.0
    %5327 = vmatprep.subr.mxu0 0.0
    %5328 = vmatpush1.msra.mxu0 0.0
    %5329 = vmatprep.subr.mxu0 0.0
    %5330 = vmatpush1.msra.mxu0 0.0
    %5331 = vmatprep.subr.mxu0 0.0
    %5332 = vmatpush1.msra.mxu0 0.0
    %5333 = vmatprep.subr.mxu0 0.0
    %5334 = vmatpush1.msra.mxu0 0.0
    %5335 = vmatprep.subr.mxu0 0.0
    %5336 = vmatpush1.msra.mxu0 0.0
    %5337 = vmatprep.subr.mxu0 0.0
    %5338 = vmatpush1.msra.mxu0 0.0
    %5339 = vmatprep.subr.mxu0 0.0
    %5340 = vmatpush1.msra.mxu0 0.0
    %5341 = vmatprep.subr.mxu0 0.0
    %5342 = vmatpush1.msra.mxu0 0.0
    %5343 = vmatprep.subr.mxu0 0.0
    %5344 = vmatpush1.msra.mxu0 0.0
    %5345 = vmatprep.subr.mxu0 0.0
    %5346 = vmatpush1.msra.mxu0 0.0
    %5347 = vmatprep.subr.mxu0 0.0
    %5348 = vmatpush1.msra.mxu0 0.0
    %5349 = vmatprep.subr.mxu0 0.0
    %5350 = vmatpush1.msra.mxu0 0.0
    %5351 = vmatprep.subr.mxu0 0.0
    %5352 = vmatpush1.msra.mxu0 0.0
    %5353 = vmatprep.subr.mxu0 0.0
    %5354 = vmatpush1.msra.mxu0 0.0
    %5355 = vmatprep.subr.mxu0 0.0
    %5356 = vmatpush1.msra.mxu0 0.0
    %5357 = vmatprep.subr.mxu0 0.0
    %5358 = vmatpush1.msra.mxu0 0.0
    %5359 = vmatprep.subr.mxu0 0.0
    %5360 = vmatpush1.msra.mxu0 0.0
    %5361 = vmatprep.subr.mxu0 0.0
    %5362 = vmatpush1.msra.mxu0 0.0
    %5363 = vmatprep.subr.mxu0 0.0
    %5364 = vmatpush1.msra.mxu0 0.0
    %5365 = vmatprep.subr.mxu0 0.0
    %5366 = vmatpush1.msra.mxu0 0.0
    %5367 = vmatprep.mubr.f32.mxu0 0.0
    %5368 = vmatmul.mubr.f32.gmra.mrb[0].mxu0 %v5301
    %v5369 = vpop.f32.mrb[0].mxu0
    %v5370 = vadd.f32 0.0, %v5369
    %v5371 = vpop.f32.mrb[0].mxu0
    %v5372 = vadd.f32 0.0, %v5371
    %5373 = vdwg.mxu0
    %5374 = vmatprep.subr.mxu0 %v5277
    %5375 = vmatpush1.msra.mxu0 %v5276
    %5376 = vmatprep.subr.mxu0 %v5283
    %5377 = vmatpush1.msra.mxu0 %v5282
    %5378 = vmatprep.subr.mxu0 %v5289
    %5379 = vmatpush1.msra.mxu0 %v5288
    %5380 = vmatprep.subr.mxu0 %v5295
    %5381 = vmatpush1.msra.mxu0 %v5294
    %5382 = vmatprep.subr.mxu0 0.0
    %5383 = vmatpush1.msra.mxu0 0.0
    %5384 = vmatprep.subr.mxu0 0.0
    %5385 = vmatpush1.msra.mxu0 0.0
    %5386 = vmatprep.subr.mxu0 0.0
    %5387 = vmatpush1.msra.mxu0 0.0
    %5388 = vmatprep.subr.mxu0 0.0
    %5389 = vmatpush1.msra.mxu0 0.0
    %5390 = vmatprep.subr.mxu0 0.0
    %5391 = vmatpush1.msra.mxu0 0.0
    %5392 = vmatprep.subr.mxu0 0.0
    %5393 = vmatpush1.msra.mxu0 0.0
    %5394 = vmatprep.subr.mxu0 0.0
    %5395 = vmatpush1.msra.mxu0 0.0
    %5396 = vmatprep.subr.mxu0 0.0
    %5397 = vmatpush1.msra.mxu0 0.0
    %5398 = vmatprep.subr.mxu0 0.0
    %5399 = vmatpush1.msra.mxu0 0.0
    %5400 = vmatprep.subr.mxu0 0.0
    %5401 = vmatpush1.msra.mxu0 0.0
    %5402 = vmatprep.subr.mxu0 0.0
    %5403 = vmatpush1.msra.mxu0 0.0
    %5404 = vmatprep.subr.mxu0 0.0
    %5405 = vmatpush1.msra.mxu0 0.0
    %5406 = vmatprep.subr.mxu0 0.0
    %5407 = vmatpush1.msra.mxu0 0.0
    %5408 = vmatprep.subr.mxu0 0.0
    %5409 = vmatpush1.msra.mxu0 0.0
    %5410 = vmatprep.subr.mxu0 0.0
    %5411 = vmatpush1.msra.mxu0 0.0
    %5412 = vmatprep.subr.mxu0 0.0
    %5413 = vmatpush1.msra.mxu0 0.0
    %5414 = vmatprep.subr.mxu0 0.0
    %5415 = vmatpush1.msra.mxu0 0.0
    %5416 = vmatprep.subr.mxu0 0.0
    %5417 = vmatpush1.msra.mxu0 0.0
    %5418 = vmatprep.subr.mxu0 0.0
    %5419 = vmatpush1.msra.mxu0 0.0
    %5420 = vmatprep.subr.mxu0 0.0
    %5421 = vmatpush1.msra.mxu0 0.0
    %5422 = vmatprep.subr.mxu0 0.0
    %5423 = vmatpush1.msra.mxu0 0.0
    %5424 = vmatprep.subr.mxu0 0.0
    %5425 = vmatpush1.msra.mxu0 0.0
    %5426 = vmatprep.subr.mxu0 0.0
    %5427 = vmatpush1.msra.mxu0 0.0
    %5428 = vmatprep.subr.mxu0 0.0
    %5429 = vmatpush1.msra.mxu0 0.0
    %5430 = vmatprep.subr.mxu0 0.0
    %5431 = vmatpush1.msra.mxu0 0.0
    %5432 = vmatprep.subr.mxu0 0.0
    %5433 = vmatpush1.msra.mxu0 0.0
    %5434 = vmatprep.subr.mxu0 0.0
    %5435 = vmatpush1.msra.mxu0 0.0
    %5436 = vmatprep.subr.mxu0 0.0
    %5437 = vmatpush1.msra.mxu0 0.0
    %5438 = vmatprep.mubr.f32.mxu0 0.0
    %5439 = vmatmul.mubr.f32.gmra.mrb[0].mxu0 %v5301
    %v5440 = vpop.f32.mrb[0].mxu0
    %v5441 = vadd.f32 0.0, %v5440
    %v5442 = vpop.f32.mrb[0].mxu0
    %v5443 = vadd.f32 0.0, %v5442
    %5444 = vdwg.mxu0
    %5445 = vmatprep.subr.mxu0 %v5279
    %5446 = vmatpush1.msra.mxu0 %v5278
    %5447 = vmatprep.subr.mxu0 %v5285
    %5448 = vmatpush1.msra.mxu0 %v5284
    %5449 = vmatprep.subr.mxu0 %v5291
    %5450 = vmatpush1.msra.mxu0 %v5290
    %5451 = vmatprep.subr.mxu0 %v5297
    %5452 = vmatpush1.msra.mxu0 %v5296
    %5453 = vmatprep.subr.mxu0 0.0
    %5454 = vmatpush1.msra.mxu0 0.0
    %5455 = vmatprep.subr.mxu0 0.0
    %5456 = vmatpush1.msra.mxu0 0.0
    %5457 = vmatprep.subr.mxu0 0.0
    %5458 = vmatpush1.msra.mxu0 0.0
    %5459 = vmatprep.subr.mxu0 0.0
    %5460 = vmatpush1.msra.mxu0 0.0
    %5461 = vmatprep.subr.mxu0 0.0
    %5462 = vmatpush1.msra.mxu0 0.0
    %5463 = vmatprep.subr.mxu0 0.0
    %5464 = vmatpush1.msra.mxu0 0.0
    %5465 = vmatprep.subr.mxu0 0.0
    %5466 = vmatpush1.msra.mxu0 0.0
    %5467 = vmatprep.subr.mxu0 0.0
    %5468 = vmatpush1.msra.mxu0 0.0
    %5469 = vmatprep.subr.mxu0 0.0
    %5470 = vmatpush1.msra.mxu0 0.0
    %5471 = vmatprep.subr.mxu0 0.0
    %5472 = vmatpush1.msra.mxu0 0.0
    %5473 = vmatprep.subr.mxu0 0.0
    %5474 = vmatpush1.msra.mxu0 0.0
    %5475 = vmatprep.subr.mxu0 0.0
    %5476 = vmatpush1.msra.mxu0 0.0
    %5477 = vmatprep.subr.mxu0 0.0
    %5478 = vmatpush1.msra.mxu0 0.0
    %5479 = vmatprep.subr.mxu0 0.0
    %5480 = vmatpush1.msra.mxu0 0.0
    %5481 = vmatprep.subr.mxu0 0.0
    %5482 = vmatpush1.msra.mxu0 0.0
    %5483 = vmatprep.subr.mxu0 0.0
    %5484 = vmatpush1.msra.mxu0 0.0
    %5485 = vmatprep.subr.mxu0 0.0
    %5486 = vmatpush1.msra.mxu0 0.0
    %5487 = vmatprep.subr.mxu0 0.0
    %5488 = vmatpush1.msra.mxu0 0.0
    %5489 = vmatprep.subr.mxu0 0.0
    %5490 = vmatpush1.msra.mxu0 0.0
    %5491 = vmatprep.subr.mxu0 0.0
    %5492 = vmatpush1.msra.mxu0 0.0
    %5493 = vmatprep.subr.mxu0 0.0
    %5494 = vmatpush1.msra.mxu0 0.0
    %5495 = vmatprep.subr.mxu0 0.0
    %5496 = vmatpush1.msra.mxu0 0.0
    %5497 = vmatprep.subr.mxu0 0.0
    %5498 = vmatpush1.msra.mxu0 0.0
    %5499 = vmatprep.subr.mxu0 0.0
    %5500 = vmatpush1.msra.mxu0 0.0
    %5501 = vmatprep.subr.mxu0 0.0
    %5502 = vmatpush1.msra.mxu0 0.0
    %5503 = vmatprep.subr.mxu0 0.0
    %5504 = vmatpush1.msra.mxu0 0.0
    %5505 = vmatprep.subr.mxu0 0.0
    %5506 = vmatpush1.msra.mxu0 0.0
    %5507 = vmatprep.subr.mxu0 0.0
    %5508 = vmatpush1.msra.mxu0 0.0
    %5509 = vmatprep.mubr.f32.mxu0 0.0
    %5510 = vmatmul.mubr.f32.gmra.mrb[0].mxu0 %v5301
    %v5511 = vpop.f32.mrb[0].mxu0
    %v5512 = vadd.f32 0.0, %v5511
    %v5513 = vpop.f32.mrb[0].mxu0
    %v5514 = vadd.f32 0.0, %v5513
    %5515 = vdwg.mxu0
    %v5516 = vadd.f32 %v5136, %v5370
    %v5517 = vadd.f32 %v5137, %v5372
    %v5518 = vadd.f32 %v5138, %v5441
    %v5519 = vadd.f32 %v5139, %v5443
    %v5520 = vadd.f32 %v5140, %v5512
    %v5521 = vadd.f32 %v5141, %v5514
    %v5522 = vadd.f32 %v5245, %v3230
    %v5523 = vxor.u32 %v5522, 2147483648
    %v5524 = vmul.f32 %v5523, 1.442695
    %v5525 = vpow.pop %v5524
    %v5526 = vadd.f32 %v5525, 1.0
    %v5527 = vrcp.pop %v5526
    %v5528 = vmul.f32 1.0, %v5527
    %v5529 = vtanh.pop %v5522
    %v5530 = vmul.f32 %v5528, %v5160
    %5532 = vrot.lane.b32.xlu0 %v5529, 32
    %v5533 = vpop.permute.xlu0 %5532
    %v5535 = vmul.f32 %v5528, %v5533
    %5537 = vrot.lane.b32.xlu0 %v5535, 32
    %v5538 = vpop.permute.xlu0 %5537
    %v5540 = vadd.f32 %v5530, %v5538
    %v5541 = vtanh.pop %v5540
    %5543 = vrot.lane.b32.xlu0 %v5541, 32
    %v5544 = vpop.permute.xlu0 %5543
    %v5546 = vmul.f32 %v5528, %v5544
    %5548 = vrot.lane.b32.xlu0 %v5546, 64
    %v5549 = vpop.permute.xlu0 %5548
    %5551 = vrot.lane.b32.xlu0 %v5273, 96
    %v5552 = vpop.permute.xlu0 %5551
    %v5554 = vsel %vm195, %v5549, %v5552
    %v5556 = vsel %vm1904, %v5554, 0
    %5558 = vmatprep.subr.mxu0 %v3234
    %5559 = vmatpush1.msra.mxu0 %v3233
    %5560 = vmatprep.subr.mxu0 %v3236
    %5561 = vmatpush1.msra.mxu0 %v3235
    %5562 = vmatprep.subr.mxu0 %v3238
    %5563 = vmatpush1.msra.mxu0 %v3237
    %5564 = vmatprep.subr.mxu0 %v3240
    %5565 = vmatpush1.msra.mxu0 %v3239
    %5566 = vmatprep.subr.mxu0 %v3242
    %5567 = vmatpush1.msra.mxu0 %v3241
    %5568 = vmatprep.subr.mxu0 %v3244
    %5569 = vmatpush1.msra.mxu0 %v3243
    %5570 = vmatprep.subr.mxu0 %v3246
    %5571 = vmatpush1.msra.mxu0 %v3245
    %5572 = vmatprep.subr.mxu0 %v3248
    %5573 = vmatpush1.msra.mxu0 %v3247
    %5574 = vmatprep.subr.mxu0 0.0
    %5575 = vmatpush1.msra.mxu0 0.0
    %5576 = vmatprep.subr.mxu0 0.0
    %5577 = vmatpush1.msra.mxu0 0.0
    %5578 = vmatprep.subr.mxu0 0.0
    %5579 = vmatpush1.msra.mxu0 0.0
    %5580 = vmatprep.subr.mxu0 0.0
    %5581 = vmatpush1.msra.mxu0 0.0
    %5582 = vmatprep.subr.mxu0 0.0
    %5583 = vmatpush1.msra.mxu0 0.0
    %5584 = vmatprep.subr.mxu0 0.0
    %5585 = vmatpush1.msra.mxu0 0.0
    %5586 = vmatprep.subr.mxu0 0.0
    %5587 = vmatpush1.msra.mxu0 0.0
    %5588 = vmatprep.subr.mxu0 0.0
    %5589 = vmatpush1.msra.mxu0 0.0
    %5590 = vmatprep.subr.mxu0 0.0
    %5591 = vmatpush1.msra.mxu0 0.0
    %5592 = vmatprep.subr.mxu0 0.0
    %5593 = vmatpush1.msra.mxu0 0.0
    %5594 = vmatprep.subr.mxu0 0.0
    %5595 = vmatpush1.msra.mxu0 0.0
    %5596 = vmatprep.subr.mxu0 0.0
    %5597 = vmatpush1.msra.mxu0 0.0
    %5598 = vmatprep.subr.mxu0 0.0
    %5599 = vmatpush1.msra.mxu0 0.0
    %5600 = vmatprep.subr.mxu0 0.0
    %5601 = vmatpush1.msra.mxu0 0.0
    %5602 = vmatprep.subr.mxu0 0.0
    %5603 = vmatpush1.msra.mxu0 0.0
    %5604 = vmatprep.subr.mxu0 0.0
    %5605 = vmatpush1.msra.mxu0 0.0
    %5606 = vmatprep.subr.mxu0 0.0
    %5607 = vmatpush1.msra.mxu0 0.0
    %5608 = vmatprep.subr.mxu0 0.0
    %5609 = vmatpush1.msra.mxu0 0.0
    %5610 = vmatprep.subr.mxu0 0.0
    %5611 = vmatpush1.msra.mxu0 0.0
    %5612 = vmatprep.subr.mxu0 0.0
    %5613 = vmatpush1.msra.mxu0 0.0
    %5614 = vmatprep.subr.mxu0 0.0
    %5615 = vmatpush1.msra.mxu0 0.0
    %5616 = vmatprep.subr.mxu0 0.0
    %5617 = vmatpush1.msra.mxu0 0.0
    %5618 = vmatprep.subr.mxu0 0.0
    %5619 = vmatpush1.msra.mxu0 0.0
    %5620 = vmatprep.subr.mxu0 0.0
    %5621 = vmatpush1.msra.mxu0 0.0
    %5622 = vmatprep.mubr.f32.mxu0 0.0
    %5623 = vmatmul.mubr.f32.gmra.mrb[0].mxu0 %v5556
    %v5624 = vpop.f32.mrb[0].mxu0
    %v5625 = vadd.f32 0.0, %v5624
    %v5626 = vpop.f32.mrb[0].mxu0
    %v5627 = vadd.f32 0.0, %v5626
    %5628 = vdwg.mxu0
    %v5629 = vadd.f32 %v5627, %v3360
    %v5630 = vxor.u32 %v5629, 2147483648
    %v5631 = vmul.f32 %v5630, 1.442695
    %v5632 = vpow.pop %v5631
    %v5633 = vadd.f32 %v5632, 1.0
    %v5634 = vrcp.pop %v5633
    %v5635 = vmul.f32 1.0, %v5634
    %v5636 = vtanh.pop %v5629
    %v5637 = vmul.f32 %v5635, %v5267
    %5639 = vrot.lane.b32.xlu0 %v5636, 32
    %v5640 = vpop.permute.xlu0 %5639
    %v5642 = vmul.f32 %v5635, %v5640
    %5644 = vrot.lane.b32.xlu0 %v5642, 32
    %v5645 = vpop.permute.xlu0 %5644
    %v5647 = vadd.f32 %v5637, %v5645
    %v5648 = vtanh.pop %v5647
    %5650 = vrot.lane.b32.xlu0 %v5648, 32
    %v5651 = vpop.permute.xlu0 %5650
    %v5653 = vmul.f32 %v5635, %v5651
    %v5654 = vld [vmem:[#allocation2 + $0x480] sm:$0xff]
    %v5655 = vld [vmem:[#allocation2 + $0x488] sm:$0xff]
    %v5656 = vld [vmem:[#allocation2 + $0x490] sm:$0xff]
    %v5657 = vld [vmem:[#allocation2 + $0x498] sm:$0xff]
    %v5658 = vld [vmem:[#allocation2 + $0x4a0] sm:$0xff]
    %v5659 = vld [vmem:[#allocation2 + $0x4a8] sm:$0xff]
    %v5660 = vld [vmem:[#allocation2 + $0x4b0] sm:$0xff]
    %v5661 = vld [vmem:[#allocation2 + $0x4b8] sm:$0xff]
    %v5662 = vld [vmem:[#allocation2 + $0x4c0] sm:$0xff]
    %v5663 = vld [vmem:[#allocation2 + $0x4c8] sm:$0xff]
    %v5664 = vld [vmem:[#allocation2 + $0x4d0] sm:$0xff]
    %v5665 = vld [vmem:[#allocation2 + $0x4d8] sm:$0xff]
    %v5666 = vld [vmem:[#allocation2 + $0x4e0] sm:$0xff]
    %v5667 = vld [vmem:[#allocation2 + $0x4e8] sm:$0xff]
    %v5668 = vld [vmem:[#allocation2 + $0x4f0] sm:$0xff]
    %v5669 = vld [vmem:[#allocation2 + $0x4f8] sm:$0xff]
    %v5670 = vld [vmem:[#allocation2 + $0x500] sm:$0xff]
    %v5671 = vld [vmem:[#allocation2 + $0x508] sm:$0xff]
    %v5672 = vld [vmem:[#allocation2 + $0x510] sm:$0xff]
    %v5673 = vld [vmem:[#allocation2 + $0x518] sm:$0xff]
    %v5674 = vld [vmem:[#allocation2 + $0x520] sm:$0xff]
    %v5675 = vld [vmem:[#allocation2 + $0x528] sm:$0xff]
    %v5676 = vld [vmem:[#allocation2 + $0x530] sm:$0xff]
    %v5677 = vld [vmem:[#allocation2 + $0x538] sm:$0xff]
    %5679 = vrot.lane.b32.xlu0 %v5653, 64
    %v5680 = vpop.permute.xlu0 %5679
    %v5681 = vsel %vm195, %v5680, 0
    %5683 = vmatprep.subr.mxu0 %v5655
    %5684 = vmatpush1.msra.mxu0 %v5654
    %5685 = vmatprep.subr.mxu0 %v5661
    %5686 = vmatpush1.msra.mxu0 %v5660
    %5687 = vmatprep.subr.mxu0 %v5667
    %5688 = vmatpush1.msra.mxu0 %v5666
    %5689 = vmatprep.subr.mxu0 %v5673
    %5690 = vmatpush1.msra.mxu0 %v5672
    %5691 = vmatprep.subr.mxu0 0.0
    %5692 = vmatpush1.msra.mxu0 0.0
    %5693 = vmatprep.subr.mxu0 0.0
    %5694 = vmatpush1.msra.mxu0 0.0
    %5695 = vmatprep.subr.mxu0 0.0
    %5696 = vmatpush1.msra.mxu0 0.0
    %5697 = vmatprep.subr.mxu0 0.0
    %5698 = vmatpush1.msra.mxu0 0.0
    %5699 = vmatprep.subr.mxu0 0.0
    %5700 = vmatpush1.msra.mxu0 0.0
    %5701 = vmatprep.subr.mxu0 0.0
    %5702 = vmatpush1.msra.mxu0 0.0
    %5703 = vmatprep.subr.mxu0 0.0
    %5704 = vmatpush1.msra.mxu0 0.0
    %5705 = vmatprep.subr.mxu0 0.0
    %5706 = vmatpush1.msra.mxu0 0.0
    %5707 = vmatprep.subr.mxu0 0.0
    %5708 = vmatpush1.msra.mxu0 0.0
    %5709 = vmatprep.subr.mxu0 0.0
    %5710 = vmatpush1.msra.mxu0 0.0
    %5711 = vmatprep.subr.mxu0 0.0
    %5712 = vmatpush1.msra.mxu0 0.0
    %5713 = vmatprep.subr.mxu0 0.0
    %5714 = vmatpush1.msra.mxu0 0.0
    %5715 = vmatprep.subr.mxu0 0.0
    %5716 = vmatpush1.msra.mxu0 0.0
    %5717 = vmatprep.subr.mxu0 0.0
    %5718 = vmatpush1.msra.mxu0 0.0
    %5719 = vmatprep.subr.mxu0 0.0
    %5720 = vmatpush1.msra.mxu0 0.0
    %5721 = vmatprep.subr.mxu0 0.0
    %5722 = vmatpush1.msra.mxu0 0.0
    %5723 = vmatprep.subr.mxu0 0.0
    %5724 = vmatpush1.msra.mxu0 0.0
    %5725 = vmatprep.subr.mxu0 0.0
    %5726 = vmatpush1.msra.mxu0 0.0
    %5727 = vmatprep.subr.mxu0 0.0
    %5728 = vmatpush1.msra.mxu0 0.0
    %5729 = vmatprep.subr.mxu0 0.0
    %5730 = vmatpush1.msra.mxu0 0.0
    %5731 = vmatprep.subr.mxu0 0.0
    %5732 = vmatpush1.msra.mxu0 0.0
    %5733 = vmatprep.subr.mxu0 0.0
    %5734 = vmatpush1.msra.mxu0 0.0
    %5735 = vmatprep.subr.mxu0 0.0
    %5736 = vmatpush1.msra.mxu0 0.0
    %5737 = vmatprep.subr.mxu0 0.0
    %5738 = vmatpush1.msra.mxu0 0.0
    %5739 = vmatprep.subr.mxu0 0.0
    %5740 = vmatpush1.msra.mxu0 0.0
    %5741 = vmatprep.subr.mxu0 0.0
    %5742 = vmatpush1.msra.mxu0 0.0
    %5743 = vmatprep.subr.mxu0 0.0
    %5744 = vmatpush1.msra.mxu0 0.0
    %5745 = vmatprep.subr.mxu0 0.0
    %5746 = vmatpush1.msra.mxu0 0.0
    %5747 = vmatprep.mubr.f32.mxu0 0.0
    %5748 = vmatmul.mubr.f32.gmra.mrb[0].mxu0 %v5681
    %v5749 = vpop.f32.mrb[0].mxu0
    %v5750 = vadd.f32 0.0, %v5749
    %v5751 = vpop.f32.mrb[0].mxu0
    %v5752 = vadd.f32 0.0, %v5751
    %5753 = vdwg.mxu0
    %5754 = vmatprep.subr.mxu0 %v5657
    %5755 = vmatpush1.msra.mxu0 %v5656
    %5756 = vmatprep.subr.mxu0 %v5663
    %5757 = vmatpush1.msra.mxu0 %v5662
    %5758 = vmatprep.subr.mxu0 %v5669
    %5759 = vmatpush1.msra.mxu0 %v5668
    %5760 = vmatprep.subr.mxu0 %v5675
    %5761 = vmatpush1.msra.mxu0 %v5674
    %5762 = vmatprep.subr.mxu0 0.0
    %5763 = vmatpush1.msra.mxu0 0.0
    %5764 = vmatprep.subr.mxu0 0.0
    %5765 = vmatpush1.msra.mxu0 0.0
    %5766 = vmatprep.subr.mxu0 0.0
    %5767 = vmatpush1.msra.mxu0 0.0
    %5768 = vmatprep.subr.mxu0 0.0
    %5769 = vmatpush1.msra.mxu0 0.0
    %5770 = vmatprep.subr.mxu0 0.0
    %5771 = vmatpush1.msra.mxu0 0.0
    %5772 = vmatprep.subr.mxu0 0.0
    %5773 = vmatpush1.msra.mxu0 0.0
    %5774 = vmatprep.subr.mxu0 0.0
    %5775 = vmatpush1.msra.mxu0 0.0
    %5776 = vmatprep.subr.mxu0 0.0
    %5777 = vmatpush1.msra.mxu0 0.0
    %5778 = vmatprep.subr.mxu0 0.0
    %5779 = vmatpush1.msra.mxu0 0.0
    %5780 = vmatprep.subr.mxu0 0.0
    %5781 = vmatpush1.msra.mxu0 0.0
    %5782 = vmatprep.subr.mxu0 0.0
    %5783 = vmatpush1.msra.mxu0 0.0
    %5784 = vmatprep.subr.mxu0 0.0
    %5785 = vmatpush1.msra.mxu0 0.0
    %5786 = vmatprep.subr.mxu0 0.0
    %5787 = vmatpush1.msra.mxu0 0.0
    %5788 = vmatprep.subr.mxu0 0.0
    %5789 = vmatpush1.msra.mxu0 0.0
    %5790 = vmatprep.subr.mxu0 0.0
    %5791 = vmatpush1.msra.mxu0 0.0
    %5792 = vmatprep.subr.mxu0 0.0
    %5793 = vmatpush1.msra.mxu0 0.0
    %5794 = vmatprep.subr.mxu0 0.0
    %5795 = vmatpush1.msra.mxu0 0.0
    %5796 = vmatprep.subr.mxu0 0.0
    %5797 = vmatpush1.msra.mxu0 0.0
    %5798 = vmatprep.subr.mxu0 0.0
    %5799 = vmatpush1.msra.mxu0 0.0
    %5800 = vmatprep.subr.mxu0 0.0
    %5801 = vmatpush1.msra.mxu0 0.0
    %5802 = vmatprep.subr.mxu0 0.0
    %5803 = vmatpush1.msra.mxu0 0.0
    %5804 = vmatprep.subr.mxu0 0.0
    %5805 = vmatpush1.msra.mxu0 0.0
    %5806 = vmatprep.subr.mxu0 0.0
    %5807 = vmatpush1.msra.mxu0 0.0
    %5808 = vmatprep.subr.mxu0 0.0
    %5809 = vmatpush1.msra.mxu0 0.0
    %5810 = vmatprep.subr.mxu0 0.0
    %5811 = vmatpush1.msra.mxu0 0.0
    %5812 = vmatprep.subr.mxu0 0.0
    %5813 = vmatpush1.msra.mxu0 0.0
    %5814 = vmatprep.subr.mxu0 0.0
    %5815 = vmatpush1.msra.mxu0 0.0
    %5816 = vmatprep.subr.mxu0 0.0
    %5817 = vmatpush1.msra.mxu0 0.0
    %5818 = vmatprep.mubr.f32.mxu0 0.0
    %5819 = vmatmul.mubr.f32.gmra.mrb[0].mxu0 %v5681
    %v5820 = vpop.f32.mrb[0].mxu0
    %v5821 = vadd.f32 0.0, %v5820
    %v5822 = vpop.f32.mrb[0].mxu0
    %v5823 = vadd.f32 0.0, %v5822
    %5824 = vdwg.mxu0
    %5825 = vmatprep.subr.mxu0 %v5659
    %5826 = vmatpush1.msra.mxu0 %v5658
    %5827 = vmatprep.subr.mxu0 %v5665
    %5828 = vmatpush1.msra.mxu0 %v5664
    %5829 = vmatprep.subr.mxu0 %v5671
    %5830 = vmatpush1.msra.mxu0 %v5670
    %5831 = vmatprep.subr.mxu0 %v5677
    %5832 = vmatpush1.msra.mxu0 %v5676
    %5833 = vmatprep.subr.mxu0 0.0
    %5834 = vmatpush1.msra.mxu0 0.0
    %5835 = vmatprep.subr.mxu0 0.0
    %5836 = vmatpush1.msra.mxu0 0.0
    %5837 = vmatprep.subr.mxu0 0.0
    %5838 = vmatpush1.msra.mxu0 0.0
    %5839 = vmatprep.subr.mxu0 0.0
    %5840 = vmatpush1.msra.mxu0 0.0
    %5841 = vmatprep.subr.mxu0 0.0
    %5842 = vmatpush1.msra.mxu0 0.0
    %5843 = vmatprep.subr.mxu0 0.0
    %5844 = vmatpush1.msra.mxu0 0.0
    %5845 = vmatprep.subr.mxu0 0.0
    %5846 = vmatpush1.msra.mxu0 0.0
    %5847 = vmatprep.subr.mxu0 0.0
    %5848 = vmatpush1.msra.mxu0 0.0
    %5849 = vmatprep.subr.mxu0 0.0
    %5850 = vmatpush1.msra.mxu0 0.0
    %5851 = vmatprep.subr.mxu0 0.0
    %5852 = vmatpush1.msra.mxu0 0.0
    %5853 = vmatprep.subr.mxu0 0.0
    %5854 = vmatpush1.msra.mxu0 0.0
    %5855 = vmatprep.subr.mxu0 0.0
    %5856 = vmatpush1.msra.mxu0 0.0
    %5857 = vmatprep.subr.mxu0 0.0
    %5858 = vmatpush1.msra.mxu0 0.0
    %5859 = vmatprep.subr.mxu0 0.0
    %5860 = vmatpush1.msra.mxu0 0.0
    %5861 = vmatprep.subr.mxu0 0.0
    %5862 = vmatpush1.msra.mxu0 0.0
    %5863 = vmatprep.subr.mxu0 0.0
    %5864 = vmatpush1.msra.mxu0 0.0
    %5865 = vmatprep.subr.mxu0 0.0
    %5866 = vmatpush1.msra.mxu0 0.0
    %5867 = vmatprep.subr.mxu0 0.0
    %5868 = vmatpush1.msra.mxu0 0.0
    %5869 = vmatprep.subr.mxu0 0.0
    %5870 = vmatpush1.msra.mxu0 0.0
    %5871 = vmatprep.subr.mxu0 0.0
    %5872 = vmatpush1.msra.mxu0 0.0
    %5873 = vmatprep.subr.mxu0 0.0
    %5874 = vmatpush1.msra.mxu0 0.0
    %5875 = vmatprep.subr.mxu0 0.0
    %5876 = vmatpush1.msra.mxu0 0.0
    %5877 = vmatprep.subr.mxu0 0.0
    %5878 = vmatpush1.msra.mxu0 0.0
    %5879 = vmatprep.subr.mxu0 0.0
    %5880 = vmatpush1.msra.mxu0 0.0
    %5881 = vmatprep.subr.mxu0 0.0
    %5882 = vmatpush1.msra.mxu0 0.0
    %5883 = vmatprep.subr.mxu0 0.0
    %5884 = vmatpush1.msra.mxu0 0.0
    %5885 = vmatprep.subr.mxu0 0.0
    %5886 = vmatpush1.msra.mxu0 0.0
    %5887 = vmatprep.subr.mxu0 0.0
    %5888 = vmatpush1.msra.mxu0 0.0
    %5889 = vmatprep.mubr.f32.mxu0 0.0
    %5890 = vmatmul.mubr.f32.gmra.mrb[0].mxu0 %v5681
    %v5891 = vpop.f32.mrb[0].mxu0
    %v5892 = vadd.f32 0.0, %v5891
    %v5893 = vpop.f32.mrb[0].mxu0
    %v5894 = vadd.f32 0.0, %v5893
    %5895 = vdwg.mxu0
    %v5896 = vadd.f32 %v5516, %v5750
    %v5897 = vadd.f32 %v5517, %v5752
    %v5898 = vadd.f32 %v5518, %v5821
    %v5899 = vadd.f32 %v5519, %v5823
    %v5900 = vadd.f32 %v5520, %v5892
    %v5901 = vadd.f32 %v5521, %v5894
    %v5902 = vadd.f32 %v5625, %v3230
    %v5903 = vxor.u32 %v5902, 2147483648
    %v5904 = vmul.f32 %v5903, 1.442695
    %v5905 = vpow.pop %v5904
    %v5906 = vadd.f32 %v5905, 1.0
    %v5907 = vrcp.pop %v5906
    %v5908 = vmul.f32 1.0, %v5907
    %v5909 = vtanh.pop %v5902
    %v5910 = vmul.f32 %v5908, %v5540
    %5912 = vrot.lane.b32.xlu0 %v5909, 32
    %v5913 = vpop.permute.xlu0 %5912
    %v5915 = vmul.f32 %v5908, %v5913
    %5917 = vrot.lane.b32.xlu0 %v5915, 32
    %v5918 = vpop.permute.xlu0 %5917
    %v5920 = vadd.f32 %v5910, %v5918
    %v5921 = vtanh.pop %v5920
    %5923 = vrot.lane.b32.xlu0 %v5921, 32
    %v5924 = vpop.permute.xlu0 %5923
    %v5926 = vmul.f32 %v5908, %v5924
    %5928 = vrot.lane.b32.xlu0 %v5926, 64
    %v5929 = vpop.permute.xlu0 %5928
    %5931 = vrot.lane.b32.xlu0 %v5653, 96
    %v5932 = vpop.permute.xlu0 %5931
    %v5934 = vsel %vm195, %v5929, %v5932
    %v5936 = vsel %vm1904, %v5934, 0
    %5938 = vmatprep.subr.mxu0 %v3234
    %5939 = vmatpush1.msra.mxu0 %v3233
    %5940 = vmatprep.subr.mxu0 %v3236
    %5941 = vmatpush1.msra.mxu0 %v3235
    %5942 = vmatprep.subr.mxu0 %v3238
    %5943 = vmatpush1.msra.mxu0 %v3237
    %5944 = vmatprep.subr.mxu0 %v3240
    %5945 = vmatpush1.msra.mxu0 %v3239
    %5946 = vmatprep.subr.mxu0 %v3242
    %5947 = vmatpush1.msra.mxu0 %v3241
    %5948 = vmatprep.subr.mxu0 %v3244
    %5949 = vmatpush1.msra.mxu0 %v3243
    %5950 = vmatprep.subr.mxu0 %v3246
    %5951 = vmatpush1.msra.mxu0 %v3245
    %5952 = vmatprep.subr.mxu0 %v3248
    %5953 = vmatpush1.msra.mxu0 %v3247
    %5954 = vmatprep.subr.mxu0 0.0
    %5955 = vmatpush1.msra.mxu0 0.0
    %5956 = vmatprep.subr.mxu0 0.0
    %5957 = vmatpush1.msra.mxu0 0.0
    %5958 = vmatprep.subr.mxu0 0.0
    %5959 = vmatpush1.msra.mxu0 0.0
    %5960 = vmatprep.subr.mxu0 0.0
    %5961 = vmatpush1.msra.mxu0 0.0
    %5962 = vmatprep.subr.mxu0 0.0
    %5963 = vmatpush1.msra.mxu0 0.0
    %5964 = vmatprep.subr.mxu0 0.0
    %5965 = vmatpush1.msra.mxu0 0.0
    %5966 = vmatprep.subr.mxu0 0.0
    %5967 = vmatpush1.msra.mxu0 0.0
    %5968 = vmatprep.subr.mxu0 0.0
    %5969 = vmatpush1.msra.mxu0 0.0
    %5970 = vmatprep.subr.mxu0 0.0
    %5971 = vmatpush1.msra.mxu0 0.0
    %5972 = vmatprep.subr.mxu0 0.0
    %5973 = vmatpush1.msra.mxu0 0.0
    %5974 = vmatprep.subr.mxu0 0.0
    %5975 = vmatpush1.msra.mxu0 0.0
    %5976 = vmatprep.subr.mxu0 0.0
    %5977 = vmatpush1.msra.mxu0 0.0
    %5978 = vmatprep.subr.mxu0 0.0
    %5979 = vmatpush1.msra.mxu0 0.0
    %5980 = vmatprep.subr.mxu0 0.0
    %5981 = vmatpush1.msra.mxu0 0.0
    %5982 = vmatprep.subr.mxu0 0.0
    %5983 = vmatpush1.msra.mxu0 0.0
    %5984 = vmatprep.subr.mxu0 0.0
    %5985 = vmatpush1.msra.mxu0 0.0
    %5986 = vmatprep.subr.mxu0 0.0
    %5987 = vmatpush1.msra.mxu0 0.0
    %5988 = vmatprep.subr.mxu0 0.0
    %5989 = vmatpush1.msra.mxu0 0.0
    %5990 = vmatprep.subr.mxu0 0.0
    %5991 = vmatpush1.msra.mxu0 0.0
    %5992 = vmatprep.subr.mxu0 0.0
    %5993 = vmatpush1.msra.mxu0 0.0
    %5994 = vmatprep.subr.mxu0 0.0
    %5995 = vmatpush1.msra.mxu0 0.0
    %5996 = vmatprep.subr.mxu0 0.0
    %5997 = vmatpush1.msra.mxu0 0.0
    %5998 = vmatprep.subr.mxu0 0.0
    %5999 = vmatpush1.msra.mxu0 0.0
    %6000 = vmatprep.subr.mxu0 0.0
    %6001 = vmatpush1.msra.mxu0 0.0
    %6002 = vmatprep.mubr.f32.mxu0 0.0
    %6003 = vmatmul.mubr.f32.gmra.mrb[0].mxu0 %v5936
    %v6004 = vpop.f32.mrb[0].mxu0
    %v6005 = vpop.f32.mrb[0].mxu0
    %v6006 = vadd.f32 0.0, %v6005
    %6007 = vdwg.mxu0
    %v6008 = vadd.f32 %v6006, %v3360
    %v6009 = vxor.u32 %v6008, 2147483648
    %v6010 = vmul.f32 %v6009, 1.442695
    %v6011 = vpow.pop %v6010
    %v6012 = vadd.f32 %v6011, 1.0
    %v6013 = vrcp.pop %v6012
    %v6014 = vmul.f32 1.0, %v6013
    %v6015 = vtanh.pop %v6008
    %v6016 = vmul.f32 %v6014, %v5647
    %6018 = vrot.lane.b32.xlu0 %v6015, 32
    %v6019 = vpop.permute.xlu0 %6018
    %v6021 = vmul.f32 %v6014, %v6019
    %6023 = vrot.lane.b32.xlu0 %v6021, 32
    %v6024 = vpop.permute.xlu0 %6023
    %v6026 = vadd.f32 %v6016, %v6024
    %v6027 = vtanh.pop %v6026
    %6029 = vrot.lane.b32.xlu0 %v6027, 32
    %v6030 = vpop.permute.xlu0 %6029
    %v6032 = vmul.f32 %v6014, %v6030
    %v6033 = vld [vmem:[#allocation2 + $0x540] sm:$0xff]
    %v6034 = vld [vmem:[#allocation2 + $0x548] sm:$0xff]
    %v6035 = vld [vmem:[#allocation2 + $0x550] sm:$0xff]
    %v6036 = vld [vmem:[#allocation2 + $0x558] sm:$0xff]
    %v6037 = vld [vmem:[#allocation2 + $0x560] sm:$0xff]
    %v6038 = vld [vmem:[#allocation2 + $0x568] sm:$0xff]
    %v6039 = vld [vmem:[#allocation2 + $0x570] sm:$0xff]
    %v6040 = vld [vmem:[#allocation2 + $0x578] sm:$0xff]
    %v6041 = vld [vmem:[#allocation2 + $0x580] sm:$0xff]
    %v6042 = vld [vmem:[#allocation2 + $0x588] sm:$0xff]
    %v6043 = vld [vmem:[#allocation2 + $0x590] sm:$0xff]
    %v6044 = vld [vmem:[#allocation2 + $0x598] sm:$0xff]
    %v6045 = vld [vmem:[#allocation2 + $0x5a0] sm:$0xff]
    %v6046 = vld [vmem:[#allocation2 + $0x5a8] sm:$0xff]
    %v6047 = vld [vmem:[#allocation2 + $0x5b0] sm:$0xff]
    %v6048 = vld [vmem:[#allocation2 + $0x5b8] sm:$0xff]
    %v6049 = vld [vmem:[#allocation2 + $0x5c0] sm:$0xff]
    %v6050 = vld [vmem:[#allocation2 + $0x5c8] sm:$0xff]
    %v6051 = vld [vmem:[#allocation2 + $0x5d0] sm:$0xff]
    %v6052 = vld [vmem:[#allocation2 + $0x5d8] sm:$0xff]
    %v6053 = vld [vmem:[#allocation2 + $0x5e0] sm:$0xff]
    %v6054 = vld [vmem:[#allocation2 + $0x5e8] sm:$0xff]
    %v6055 = vld [vmem:[#allocation2 + $0x5f0] sm:$0xff]
    %v6056 = vld [vmem:[#allocation2 + $0x5f8] sm:$0xff]
    %6058 = vrot.lane.b32.xlu0 %v6032, 64
    %v6059 = vpop.permute.xlu0 %6058
    %v6060 = vsel %vm195, %v6059, 0
    %6062 = vmatprep.subr.mxu0 %v6034
    %6063 = vmatpush1.msra.mxu0 %v6033
    %6064 = vmatprep.subr.mxu0 %v6040
    %6065 = vmatpush1.msra.mxu0 %v6039
    %6066 = vmatprep.subr.mxu0 %v6046
    %6067 = vmatpush1.msra.mxu0 %v6045
    %6068 = vmatprep.subr.mxu0 %v6052
    %6069 = vmatpush1.msra.mxu0 %v6051
    %6070 = vmatprep.subr.mxu0 0.0
    %6071 = vmatpush1.msra.mxu0 0.0
    %6072 = vmatprep.subr.mxu0 0.0
    %6073 = vmatpush1.msra.mxu0 0.0
    %6074 = vmatprep.subr.mxu0 0.0
    %6075 = vmatpush1.msra.mxu0 0.0
    %6076 = vmatprep.subr.mxu0 0.0
    %6077 = vmatpush1.msra.mxu0 0.0
    %6078 = vmatprep.subr.mxu0 0.0
    %6079 = vmatpush1.msra.mxu0 0.0
    %6080 = vmatprep.subr.mxu0 0.0
    %6081 = vmatpush1.msra.mxu0 0.0
    %6082 = vmatprep.subr.mxu0 0.0
    %6083 = vmatpush1.msra.mxu0 0.0
    %6084 = vmatprep.subr.mxu0 0.0
    %6085 = vmatpush1.msra.mxu0 0.0
    %6086 = vmatprep.subr.mxu0 0.0
    %6087 = vmatpush1.msra.mxu0 0.0
    %6088 = vmatprep.subr.mxu0 0.0
    %6089 = vmatpush1.msra.mxu0 0.0
    %6090 = vmatprep.subr.mxu0 0.0
    %6091 = vmatpush1.msra.mxu0 0.0
    %6092 = vmatprep.subr.mxu0 0.0
    %6093 = vmatpush1.msra.mxu0 0.0
    %6094 = vmatprep.subr.mxu0 0.0
    %6095 = vmatpush1.msra.mxu0 0.0
    %6096 = vmatprep.subr.mxu0 0.0
    %6097 = vmatpush1.msra.mxu0 0.0
    %6098 = vmatprep.subr.mxu0 0.0
    %6099 = vmatpush1.msra.mxu0 0.0
    %6100 = vmatprep.subr.mxu0 0.0
    %6101 = vmatpush1.msra.mxu0 0.0
    %6102 = vmatprep.subr.mxu0 0.0
    %6103 = vmatpush1.msra.mxu0 0.0
    %6104 = vmatprep.subr.mxu0 0.0
    %6105 = vmatpush1.msra.mxu0 0.0
    %6106 = vmatprep.subr.mxu0 0.0
    %6107 = vmatpush1.msra.mxu0 0.0
    %6108 = vmatprep.subr.mxu0 0.0
    %6109 = vmatpush1.msra.mxu0 0.0
    %6110 = vmatprep.subr.mxu0 0.0
    %6111 = vmatpush1.msra.mxu0 0.0
    %6112 = vmatprep.subr.mxu0 0.0
    %6113 = vmatpush1.msra.mxu0 0.0
    %6114 = vmatprep.subr.mxu0 0.0
    %6115 = vmatpush1.msra.mxu0 0.0
    %6116 = vmatprep.subr.mxu0 0.0
    %6117 = vmatpush1.msra.mxu0 0.0
    %6118 = vmatprep.subr.mxu0 0.0
    %6119 = vmatpush1.msra.mxu0 0.0
    %6120 = vmatprep.subr.mxu0 0.0
    %6121 = vmatpush1.msra.mxu0 0.0
    %6122 = vmatprep.subr.mxu0 0.0
    %6123 = vmatpush1.msra.mxu0 0.0
    %6124 = vmatprep.subr.mxu0 0.0
    %6125 = vmatpush1.msra.mxu0 0.0
    %6126 = vmatprep.mubr.f32.mxu0 0.0
    %6127 = vmatmul.mubr.f32.gmra.mrb[0].mxu0 %v6060
    %v6128 = vpop.f32.mrb[0].mxu0
    %v6129 = vadd.f32 0.0, %v6128
    %v6130 = vpop.f32.mrb[0].mxu0
    %v6131 = vadd.f32 0.0, %v6130
    %6132 = vdwg.mxu0
    %6133 = vmatprep.subr.mxu0 %v6036
    %6134 = vmatpush1.msra.mxu0 %v6035
    %6135 = vmatprep.subr.mxu0 %v6042
    %6136 = vmatpush1.msra.mxu0 %v6041
    %6137 = vmatprep.subr.mxu0 %v6048
    %6138 = vmatpush1.msra.mxu0 %v6047
    %6139 = vmatprep.subr.mxu0 %v6054
    %6140 = vmatpush1.msra.mxu0 %v6053
    %6141 = vmatprep.subr.mxu0 0.0
    %6142 = vmatpush1.msra.mxu0 0.0
    %6143 = vmatprep.subr.mxu0 0.0
    %6144 = vmatpush1.msra.mxu0 0.0
    %6145 = vmatprep.subr.mxu0 0.0
    %6146 = vmatpush1.msra.mxu0 0.0
    %6147 = vmatprep.subr.mxu0 0.0
    %6148 = vmatpush1.msra.mxu0 0.0
    %6149 = vmatprep.subr.mxu0 0.0
    %6150 = vmatpush1.msra.mxu0 0.0
    %6151 = vmatprep.subr.mxu0 0.0
    %6152 = vmatpush1.msra.mxu0 0.0
    %6153 = vmatprep.subr.mxu0 0.0
    %6154 = vmatpush1.msra.mxu0 0.0
    %6155 = vmatprep.subr.mxu0 0.0
    %6156 = vmatpush1.msra.mxu0 0.0
    %6157 = vmatprep.subr.mxu0 0.0
    %6158 = vmatpush1.msra.mxu0 0.0
    %6159 = vmatprep.subr.mxu0 0.0
    %6160 = vmatpush1.msra.mxu0 0.0
    %6161 = vmatprep.subr.mxu0 0.0
    %6162 = vmatpush1.msra.mxu0 0.0
    %6163 = vmatprep.subr.mxu0 0.0
    %6164 = vmatpush1.msra.mxu0 0.0
    %6165 = vmatprep.subr.mxu0 0.0
    %6166 = vmatpush1.msra.mxu0 0.0
    %6167 = vmatprep.subr.mxu0 0.0
    %6168 = vmatpush1.msra.mxu0 0.0
    %6169 = vmatprep.subr.mxu0 0.0
    %6170 = vmatpush1.msra.mxu0 0.0
    %6171 = vmatprep.subr.mxu0 0.0
    %6172 = vmatpush1.msra.mxu0 0.0
    %6173 = vmatprep.subr.mxu0 0.0
    %6174 = vmatpush1.msra.mxu0 0.0
    %6175 = vmatprep.subr.mxu0 0.0
    %6176 = vmatpush1.msra.mxu0 0.0
    %6177 = vmatprep.subr.mxu0 0.0
    %6178 = vmatpush1.msra.mxu0 0.0
    %6179 = vmatprep.subr.mxu0 0.0
    %6180 = vmatpush1.msra.mxu0 0.0
    %6181 = vmatprep.subr.mxu0 0.0
    %6182 = vmatpush1.msra.mxu0 0.0
    %6183 = vmatprep.subr.mxu0 0.0
    %6184 = vmatpush1.msra.mxu0 0.0
    %6185 = vmatprep.subr.mxu0 0.0
    %6186 = vmatpush1.msra.mxu0 0.0
    %6187 = vmatprep.subr.mxu0 0.0
    %6188 = vmatpush1.msra.mxu0 0.0
    %6189 = vmatprep.subr.mxu0 0.0
    %6190 = vmatpush1.msra.mxu0 0.0
    %6191 = vmatprep.subr.mxu0 0.0
    %6192 = vmatpush1.msra.mxu0 0.0
    %6193 = vmatprep.subr.mxu0 0.0
    %6194 = vmatpush1.msra.mxu0 0.0
    %6195 = vmatprep.subr.mxu0 0.0
    %6196 = vmatpush1.msra.mxu0 0.0
    %6197 = vmatprep.mubr.f32.mxu0 0.0
    %6198 = vmatmul.mubr.f32.gmra.mrb[0].mxu0 %v6060
    %v6199 = vpop.f32.mrb[0].mxu0
    %v6200 = vadd.f32 0.0, %v6199
    %v6201 = vpop.f32.mrb[0].mxu0
    %v6202 = vadd.f32 0.0, %v6201
    %6203 = vdwg.mxu0
    %6204 = vmatprep.subr.mxu0 %v6038
    %6205 = vmatpush1.msra.mxu0 %v6037
    %6206 = vmatprep.subr.mxu0 %v6044
    %6207 = vmatpush1.msra.mxu0 %v6043
    %6208 = vmatprep.subr.mxu0 %v6050
    %6209 = vmatpush1.msra.mxu0 %v6049
    %6210 = vmatprep.subr.mxu0 %v6056
    %6211 = vmatpush1.msra.mxu0 %v6055
    %6212 = vmatprep.subr.mxu0 0.0
    %6213 = vmatpush1.msra.mxu0 0.0
    %6214 = vmatprep.subr.mxu0 0.0
    %6215 = vmatpush1.msra.mxu0 0.0
    %6216 = vmatprep.subr.mxu0 0.0
    %6217 = vmatpush1.msra.mxu0 0.0
    %6218 = vmatprep.subr.mxu0 0.0
    %6219 = vmatpush1.msra.mxu0 0.0
    %6220 = vmatprep.subr.mxu0 0.0
    %6221 = vmatpush1.msra.mxu0 0.0
    %6222 = vmatprep.subr.mxu0 0.0
    %6223 = vmatpush1.msra.mxu0 0.0
    %6224 = vmatprep.subr.mxu0 0.0
    %6225 = vmatpush1.msra.mxu0 0.0
    %6226 = vmatprep.subr.mxu0 0.0
    %6227 = vmatpush1.msra.mxu0 0.0
    %6228 = vmatprep.subr.mxu0 0.0
    %6229 = vmatpush1.msra.mxu0 0.0
    %6230 = vmatprep.subr.mxu0 0.0
    %6231 = vmatpush1.msra.mxu0 0.0
    %6232 = vmatprep.subr.mxu0 0.0
    %6233 = vmatpush1.msra.mxu0 0.0
    %6234 = vmatprep.subr.mxu0 0.0
    %6235 = vmatpush1.msra.mxu0 0.0
    %6236 = vmatprep.subr.mxu0 0.0
    %6237 = vmatpush1.msra.mxu0 0.0
    %6238 = vmatprep.subr.mxu0 0.0
    %6239 = vmatpush1.msra.mxu0 0.0
    %6240 = vmatprep.subr.mxu0 0.0
    %6241 = vmatpush1.msra.mxu0 0.0
    %6242 = vmatprep.subr.mxu0 0.0
    %6243 = vmatpush1.msra.mxu0 0.0
    %6244 = vmatprep.subr.mxu0 0.0
    %6245 = vmatpush1.msra.mxu0 0.0
    %6246 = vmatprep.subr.mxu0 0.0
    %6247 = vmatpush1.msra.mxu0 0.0
    %6248 = vmatprep.subr.mxu0 0.0
    %6249 = vmatpush1.msra.mxu0 0.0
    %6250 = vmatprep.subr.mxu0 0.0
    %6251 = vmatpush1.msra.mxu0 0.0
    %6252 = vmatprep.subr.mxu0 0.0
    %6253 = vmatpush1.msra.mxu0 0.0
    %6254 = vmatprep.subr.mxu0 0.0
    %6255 = vmatpush1.msra.mxu0 0.0
    %6256 = vmatprep.subr.mxu0 0.0
    %6257 = vmatpush1.msra.mxu0 0.0
    %6258 = vmatprep.subr.mxu0 0.0
    %6259 = vmatpush1.msra.mxu0 0.0
    %6260 = vmatprep.subr.mxu0 0.0
    %6261 = vmatpush1.msra.mxu0 0.0
    %6262 = vmatprep.subr.mxu0 0.0
    %6263 = vmatpush1.msra.mxu0 0.0
    %6264 = vmatprep.subr.mxu0 0.0
    %6265 = vmatpush1.msra.mxu0 0.0
    %6266 = vmatprep.subr.mxu0 0.0
    %6267 = vmatpush1.msra.mxu0 0.0
    %6268 = vmatprep.mubr.f32.mxu0 0.0
    %6269 = vmatmul.mubr.f32.gmra.mrb[0].mxu0 %v6060
    %v6270 = vpop.f32.mrb[0].mxu0
    %v6271 = vadd.f32 0.0, %v6270
    %v6272 = vpop.f32.mrb[0].mxu0
    %v6273 = vadd.f32 0.0, %v6272
    %6274 = vdwg.mxu0
    %v6275 = vadd.f32 %v5896, %v6129
    %v6276 = vadd.f32 %v5897, %v6131
    %v6277 = vadd.f32 %v5898, %v6200
    %v6278 = vadd.f32 %v5899, %v6202
    %v6279 = vadd.f32 %v5900, %v6271
    %v6280 = vadd.f32 %v5901, %v6273
    %s6281 = scalar_lea.vmem [#allocation2], 1536
    %v6282 = vld [vmem:[%s6281] ss:$8 sm:$0xf]
    %v6283 = vld [vmem:[%s6281] ss:$8 sm:$0x30]
    %v6284 = vor.u32 %v6282, %v6283
    %v6286 = vlaneseq
    %v6287 = vshrl.u32 %v6286, 7
    %v6288 = vsub.s32 0, %v6287
    %v6289 = vrot.slane %v6284, %v6288
    %v6290 = vlaneseq
    %v6291 = vshrl.u32 %v6290, 7
    %v6292 = vsub.s32 1, %v6291
    %v6293 = vrot.slane %v6284, %v6292
    %v6294 = vlaneseq
    %v6295 = vshrl.u32 %v6294, 7
    %v6296 = vsub.s32 2, %v6295
    %v6297 = vrot.slane %v6284, %v6296
    %v6298 = vlaneseq
    %v6299 = vshrl.u32 %v6298, 7
    %v6300 = vsub.s32 3, %v6299
    %v6301 = vrot.slane %v6284, %v6300
    %v6302 = vlaneseq
    %v6303 = vshrl.u32 %v6302, 7
    %v6304 = vsub.s32 4, %v6303
    %v6305 = vrot.slane %v6284, %v6304
    %v6306 = vlaneseq
    %v6307 = vshrl.u32 %v6306, 7
    %v6308 = vsub.s32 5, %v6307
    %v6309 = vrot.slane %v6284, %v6308
    %v6316 = vadd.f32 %v6275, %v6289
    %v6317 = vadd.f32 %v6276, %v6293
    %v6318 = vadd.f32 %v6277, %v6297
    %v6319 = vadd.f32 %v6278, %v6301
    %v6320 = vadd.f32 %v6279, %v6305
    %v6321 = vadd.f32 %v6280, %v6309
    %6323 = vrot.lane.b32.xlu0 %v3053, 56
    %v6324 = vpop.permute.xlu0 %6323
    %vm6326 = vcmask 457728
    %v6327 = vsel %vm6326, %v6321, %v6324
    %vm6328 = vcmask 719872
    %v6329 = vsel %vm6328, %v6327, 0.0
    %v6336 = vcombine.low %v6316, %v6317
    %v6337 = vcombine.low %v6318, %v6319
    %v6339 = vunpack.c.l.s4 1983009808
    %v6340 = vunpack.c.0.s8 %v6339
    %v6341 = vlaneseq
    %v6342 = vshrl.u32 %v6341, 7
    %v6343 = vsub.s32 %v6340, %v6342
    %v6344 = vrot.slane %v6336, %v6343
    %v6346 = vunpack.c.l.s4 1983009808
    %v6347 = vunpack.c.0.s8 %v6346
    %v6348 = vlaneseq
    %v6349 = vshrl.u32 %v6348, 7
    %v6350 = vsub.s32 %v6347, %v6349
    %v6351 = vrot.slane %v6337, %v6350
    %v6352 = vcombine.low %v6344, %v6351
    %v6353 = vcombine.low %v6320, %v6329
    %v6355 = vunpack.c.l.s4 1983009808
    %v6356 = vunpack.c.0.s8 %v6355
    %v6357 = vlaneseq
    %v6358 = vshrl.u32 %v6357, 7
    %v6359 = vsub.s32 %v6356, %v6358
    %v6360 = vrot.slane %v6353, %v6359
    %6363 = vst [vmem:[%s6] sm:$0xff] %v6352
    %6364 = vst [vmem:[%s6 + $0x8] sm:$0xf] %v6360
    // Predicated region
    $region30: #{vae_forward.1} parent=1 // pred_check
      _
    $region31: #{vae_forward.1} parent=1 // pred_check_branch
      %6366 = sbr.rel (0) target = $region33
    $region32: #{vae_forward.1} parent=1 // pred_region
      _
    $region33: #{vae_forward.1} parent=1 // pred_fallthru
      _
    // Predicated region
    $region34: #{vae_forward.1} parent=1 // pred_check
      _
    $region35: #{vae_forward.1} parent=1 // pred_check_branch
      %6368 = sbr.rel (0) target = $region37
    $region36: #{vae_forward.1} parent=1 // pred_region
      _
    $region37: #{vae_forward.1} parent=1 // pred_fallthru
      _
    %6369 = vsyncpa [#allocation5], 1
  %6370 = vsyncmov [#allocation3]
  %s6371 = vpop.sfrf %6370
  %p6372 = scmp.eq.s32.totalorder %s6371, 0
  %p6373 = pneg %p6372
  %6375 = shalt.err (%p6373)

</llo_original>
